<compile_context>
chip_gen: v7x
topology: tpu7x:2x2x1
jax: 0.10.0
libtpu: 0.0.40
codegen_flags: <defaults>
</compile_context>

<pallas_src>
import math

import jax
import jax.numpy as jnp
from jax.experimental import pallas as pl
from jax.experimental.pallas import tpu as pltpu

ECG_SAMP = 512
LEADS_OUT = 8
LEADS_IN = 2
Z_DIM = ECG_SAMP * LEADS_IN      # 1024  (prod of imgz_shape)
IMG_DIM = ECG_SAMP * LEADS_OUT   # 4096  (prod of img_shape)
BN_EPS = 0.8                     # nn.BatchNorm1d(out_feat, 0.8) -> eps = 0.8

HALF = IMG_DIM // 2              # output columns per grid step (per TC on v7x)
TN = 512                         # w5 streaming chunk width (output columns)
CHUNKS_PER_STEP = HALF // TN     # 4
N_CHUNKS = IMG_DIM // TN         # 8
W5_IN = 1024

# ----------------------------------------------------------------------------
# Packed small-vector layout (layers 1-4): [b1, b2, g2, bt2, b3, g3, bt3, b4, g4, bt4]
# Every segment size / offset is a multiple of 128 -> lane-aligned static slices.
# ----------------------------------------------------------------------------
_VEC_SEGMENTS = [
    ("b1", 128),
    ("b2", 256), ("g2", 256), ("bt2", 256),
    ("b3", 512), ("g3", 512), ("bt3", 512),
    ("b4", 1024), ("g4", 1024), ("bt4", 1024),
]
_VEC_OFFSETS = {}
_off = 0
for _name, _size in _VEC_SEGMENTS:
    _VEC_OFFSETS[_name] = (_off, _off + _size)
    _off += _size
VEC_LEN = _off  # 5504 = 43 * 128


def _vseg(vec_ref, name):
    lo, hi = _VEC_OFFSETS[name]
    return vec_ref[:, lo:hi]          # static, lane-aligned slice of the (1, 5504) ref


def _leaky_relu(x, slope=0.2):
    return jnp.where(x > 0, x, slope * x)


def _batchnorm_train(x, gamma, beta, eps):
    # Training-mode BatchNorm1d (what a fresh nn.Module forward uses):
    # batch mean + biased batch variance over the batch axis.
    mean = jnp.mean(x, axis=0, keepdims=True)
    var = jnp.mean(jnp.square(x - mean), axis=0, keepdims=True)
    return (x - mean) * jax.lax.rsqrt(var + eps) * gamma + beta


def generator_kernel(z_ref, w1_ref, w2_ref, w3_ref, w4_ref,
                     w5_hbm_ref,            # (N_CHUNKS, 1024, TN) int8, stays in HBM
                     vec_ref,               # (1, VEC_LEN) f32 packed biases/BN params
                     b5_ref, s5_ref,        # (1, HALF) f32 bias / dequant scale halves
                     out_ref,               # (B, HALF) f32
                     w5_buf, w5_sem):       # VMEM (2, 1024, TN) int8 + 2 DMA sems
    j = pl.program_id(0)                    # which output half (one per TC on v7x)
    base = j * CHUNKS_PER_STEP

    def w5_copy(c, slot):
        return pltpu.make_async_copy(w5_hbm_ref.at[base + c],
                                     w5_buf.at[slot], w5_sem.at[slot])

    # Kick off the first w5 chunk immediately so it overlaps layers 1..4.
    w5_copy(0, 0).start()

    x = z_ref[...]

    # block(1024, 128, normalize=False): Linear + LeakyReLU
    h = jnp.dot(x.astype(jnp.bfloat16), w1_ref[...],
                preferred_element_type=jnp.float32) + _vseg(vec_ref, "b1")
    h = _leaky_relu(h)

    # block(128, 256): Linear + BatchNorm1d + LeakyReLU
    h = jnp.dot(h.astype(jnp.bfloat16), w2_ref[...],
                preferred_element_type=jnp.float32) + _vseg(vec_ref, "b2")
    h = _leaky_relu(_batchnorm_train(h, _vseg(vec_ref, "g2"),
                                     _vseg(vec_ref, "bt2"), BN_EPS))

    # block(256, 512)
    h = jnp.dot(h.astype(jnp.bfloat16), w3_ref[...],
                preferred_element_type=jnp.float32) + _vseg(vec_ref, "b3")
    h = _leaky_relu(_batchnorm_train(h, _vseg(vec_ref, "g3"),
                                     _vseg(vec_ref, "bt3"), BN_EPS))

    # block(512, 1024)
    h = jnp.dot(h.astype(jnp.bfloat16), w4_ref[...],
                preferred_element_type=jnp.float32) + _vseg(vec_ref, "b4")
    h = _leaky_relu(_batchnorm_train(h, _vseg(vec_ref, "g4"),
                                     _vseg(vec_ref, "bt4"), BN_EPS))

    h5 = h.astype(jnp.bfloat16)   # hoisted: reused by every w5 chunk

    # Linear(1024, 4096) + Tanh, streamed over TN-wide double-buffered w5 chunks.
    for c in range(CHUNKS_PER_STEP):          # static, fully unrolled (4 iters)
        slot = c & 1
        if c + 1 < CHUNKS_PER_STEP:
            w5_copy(c + 1, 1 - slot).start()  # prefetch next chunk into other slot
        w5_copy(c, slot).wait()
        # int8 -> f32 -> bf16 widen (exact for values in [-127, 127]); the per-column
        # dequant scale is folded after the f32-accumulated dot, before the bias.
        wq = w5_buf[slot].astype(jnp.float32).astype(jnp.bfloat16)
        acc = jnp.dot(h5, wq, preferred_element_type=jnp.float32)
        col = slice(c * TN, (c + 1) * TN)     # static, lane-aligned column window
        out_ref[:, col] = jnp.tanh(acc * s5_ref[:, col] + b5_ref[:, col])


def init_params(key):
    """PyTorch-default-style init: U(-1/sqrt(fan_in), 1/sqrt(fan_in)) for Linear
    weight/bias (stored as (in, out), i.e. W_pt.T so the kernel does x @ W);
    gamma=1, beta=0 for BatchNorm.  Returns kernel-ready params (bf16 w1-w4,
    int8+scales w5, packed vec) plus the same pieces for a pure-JAX reference."""
    dims = [(Z_DIM, 128), (128, 256), (256, 512), (512, 1024), (1024, IMG_DIM)]
    ws, bs = [], []
    for fan_in, fan_out in dims:
        key, kw, kb = jax.random.split(key, 3)
        bound = 1.0 / math.sqrt(fan_in)
        ws.append(jax.random.uniform(kw, (fan_in, fan_out), jnp.float32, -bound, bound))
        bs.append(jax.random.uniform(kb, (1, fan_out), jnp.float32, -bound, bound))
    gammas = [jnp.ones((1, d), jnp.float32) for d in (256, 512, 1024)]
    betas = [jnp.zeros((1, d), jnp.float32) for d in (256, 512, 1024)]

    # Layers 1-4 weights in bf16 (halves their HBM traffic; native MXU dtype).
    w_bf16 = [w.astype(jnp.bfloat16) for w in ws[:4]]

    # w5: symmetric per-output-column int8 quantization (scale applied post-dot).
    amax = jnp.max(jnp.abs(ws[4]), axis=0, keepdims=True)
    scale5 = (jnp.maximum(amax, 1e-8) / 127.0).astype(jnp.float32)        # (1, 4096)
    w5_q = jnp.clip(jnp.round(ws[4] / scale5), -127, 127).astype(jnp.int8)
    # Pre-chunk along output columns so each DMA is one contiguous (1024, TN) block.
    w5_chunks = w5_q.reshape(W5_IN, N_CHUNKS, TN).transpose(1, 0, 2)      # (8,1024,512)

    vec = jnp.concatenate(
        [bs[0],
         bs[1], gammas[0], betas[0],
         bs[2], gammas[1], betas[1],
         bs[3], gammas[2], betas[2]], axis=1)
    assert vec.shape == (1, VEC_LEN)

    kernel_params = dict(w1=w_bf16[0], w2=w_bf16[1], w3=w_bf16[2], w4=w_bf16[3],
                         w5q=w5_chunks, vec=vec, b5=bs[4], s5=scale5)
    ref_params = dict(w_bf16=w_bf16, w5_q=w5_q, scale5=scale5,
                      bs=bs, gammas=gammas, betas=betas)
    return kernel_params, ref_params


@jax.jit
def generator_forward(z, kp):
    B = z.shape[0]
    flat = pl.pallas_call(
        generator_kernel,
        out_shape=jax.ShapeDtypeStruct((B, IMG_DIM), jnp.float32),
        grid=(2,),
        in_specs=[
            pl.BlockSpec((B, Z_DIM), lambda j: (0, 0)),      # z
            pl.BlockSpec((Z_DIM, 128), lambda j: (0, 0)),    # w1 (bf16)
            pl.BlockSpec((128, 256), lambda j: (0, 0)),      # w2 (bf16)
            pl.BlockSpec((256, 512), lambda j: (0, 0)),      # w3 (bf16)
            pl.BlockSpec((512, 1024), lambda j: (0, 0)),     # w4 (bf16)
            pl.BlockSpec(memory_space=pl.ANY),               # w5 int8 chunks (HBM, manual DMA)
            pl.BlockSpec((1, VEC_LEN), lambda j: (0, 0)),    # packed biases / BN params
            pl.BlockSpec((1, HALF), lambda j: (0, j)),       # b5 half
            pl.BlockSpec((1, HALF), lambda j: (0, j)),       # w5 dequant scale half
        ],
        out_specs=pl.BlockSpec((B, HALF), lambda j: (0, j)),
        scratch_shapes=[
            pltpu.VMEM((2, W5_IN, TN), jnp.int8),            # w5 chunk double buffer (1 MB)
            pltpu.SemaphoreType.DMA((2,)),                   # one DMA sem per slot
        ],
        compiler_params=pltpu.CompilerParams(
            dimension_semantics=("parallel",)),              # v7x: one output half per TC
    )(z, kp["w1"], kp["w2"], kp["w3"], kp["w4"], kp["w5q"], kp["vec"],
      kp["b5"], kp["s5"])
    # img.view(B, ecg_leads_out, ecg_samp)
    return flat.reshape(B, LEADS_OUT, ECG_SAMP)


def reference_forward(z, rp):
    """Pure-JAX forward with the exact same bf16/int8 parameters (numerics check)."""
    def block(h, w, b, gamma=None, beta=None):
        h = jnp.dot(h.astype(jnp.bfloat16), w, preferred_element_type=jnp.float32) + b
        if gamma is not None:
            h = _batchnorm_train(h, gamma, beta, BN_EPS)
        return _leaky_relu(h)

    w, bs, g, bt = rp["w_bf16"], rp["bs"], rp["gammas"], rp["betas"]
    h = block(z, w[0], bs[0])
    h = block(h, w[1], bs[1], g[0], bt[0])
    h = block(h, w[2], bs[2], g[1], bt[1])
    h = block(h, w[3], bs[3], g[2], bt[2])
    acc = jnp.dot(h.astype(jnp.bfloat16), rp["w5_q"].astype(jnp.bfloat16),
                  preferred_element_type=jnp.float32)
    y = jnp.tanh(acc * rp["scale5"] + bs[4])
    return y.reshape(z.shape[0], LEADS_OUT, ECG_SAMP)


if __name__ == "__main__":
    key = jax.random.PRNGKey(0)
    kz, kp_key = jax.random.split(key)
    kernel_params, ref_params = init_params(kp_key)

    B = 8  # small batch; feature dims are fixed by the module (1024 -> ... -> 4096)
    z = jax.random.normal(kz, (B, Z_DIM), dtype=jnp.float32)

    img = generator_forward(z, kernel_params)
    img = jax.block_until_ready(img)

    assert img.shape == (B, LEADS_OUT, ECG_SAMP), img.shape
    assert bool(jnp.all(jnp.isfinite(img)))

    # Numerics check vs. a pure-JAX forward using identical (bf16 / int8) params.
    ref = jax.block_until_ready(reference_forward(z, ref_params))
    max_err = float(jnp.max(jnp.abs(img - ref)))
    assert max_err < 5e-2, f"max abs err vs reference: {max_err}"

    print("KERNEL_OK")
</pallas_src>

<mosaic_0001>
module attributes {stable_mosaic.version = 11 : i64} {
  func.func @generator_kernel(%arg0: i32, %arg1: memref<8x1024xf32, #tpu.memory_space<vmem>>, %arg2: memref<1024x128xbf16, #tpu.memory_space<vmem>>, %arg3: memref<128x256xbf16, #tpu.memory_space<vmem>>, %arg4: memref<256x512xbf16, #tpu.memory_space<vmem>>, %arg5: memref<512x1024xbf16, #tpu.memory_space<vmem>>, %arg6: memref<8x1024x512xi8, #tpu.memory_space<any>>, %arg7: memref<1x5504xf32, #tpu.memory_space<vmem>>, %arg8: memref<1x2048xf32, #tpu.memory_space<vmem>>, %arg9: memref<1x2048xf32, #tpu.memory_space<vmem>>, %arg10: memref<8x2048xf32, #tpu.memory_space<vmem>>, %arg11: memref<2x1024x512xi8, #tpu.memory_space<vmem>>, %arg12: memref<2x!tpu.dma_semaphore, #tpu.memory_space<semaphore_mem>>) attributes {dimension_semantics = [#tpu.dimension_semantics<parallel>], iteration_bounds = array<i64: 2>, scalar_prefetch = 0 : i64, scratch_operands = 2 : i64, tpu.core_type = #tpu.core_type<tc>, window_params = [{pipeline_mode = #tpu.pipeline_mode<synchronous>, transform_indices = @transform_0, window_bounds = array<i64: 8, 1024>}, {pipeline_mode = #tpu.pipeline_mode<synchronous>, transform_indices = @transform_1, window_bounds = array<i64: 1024, 128>}, {pipeline_mode = #tpu.pipeline_mode<synchronous>, transform_indices = @transform_2, window_bounds = array<i64: 128, 256>}, {pipeline_mode = #tpu.pipeline_mode<synchronous>, transform_indices = @transform_3, window_bounds = array<i64: 256, 512>}, {pipeline_mode = #tpu.pipeline_mode<synchronous>, transform_indices = @transform_4, window_bounds = array<i64: 512, 1024>}, {}, {pipeline_mode = #tpu.pipeline_mode<synchronous>, transform_indices = @transform_6, window_bounds = array<i64: 1, 5504>}, {transform_indices = @transform_7, window_bounds = array<i64: 1, 2048>}, {transform_indices = @transform_8, window_bounds = array<i64: 1, 2048>}, {transform_indices = @transform_9, window_bounds = array<i64: 8, 2048>}]} {
    %c4_i32 = arith.constant 4 : i32
    %0 = arith.muli %arg0, %c4_i32 : i32
    %c0_i32 = arith.constant 0 : i32
    %1 = arith.addi %0, %c0_i32 : i32
    %c0_i32_0 = arith.constant 0 : i32
    %c0_i32_1 = arith.constant 0 : i32
    %c0_i32_2 = arith.constant 0 : i32
    %c0_i32_3 = arith.constant 0 : i32
    %2 = tpu.memref_slice %arg6[%1, %c0_i32_2, %c0_i32_3] : memref<8x1024x512xi8, #tpu.memory_space<any>> -> memref<1x1024x512xi8, #tpu.memory_space<any>>
    %3 = tpu.memref_squeeze %2 : memref<1x1024x512xi8, #tpu.memory_space<any>> -> memref<1024x512xi8, #tpu.memory_space<any>>
    %c0_i32_4 = arith.constant 0 : i32
    %c0_i32_5 = arith.constant 0 : i32
    %4 = tpu.memref_slice %arg11[%c0_i32_0, %c0_i32_4, %c0_i32_5] : memref<2x1024x512xi8, #tpu.memory_space<vmem>> -> memref<1x1024x512xi8, #tpu.memory_space<vmem>>
    %5 = tpu.memref_squeeze %4 : memref<1x1024x512xi8, #tpu.memory_space<vmem>> -> memref<1024x512xi8, #tpu.memory_space<vmem>>
    %6 = tpu.memref_slice %arg12[%c0_i32_1] : memref<2x!tpu.dma_semaphore, #tpu.memory_space<semaphore_mem>> -> memref<1x!tpu.dma_semaphore, #tpu.memory_space<semaphore_mem>>
    %7 = tpu.memref_squeeze %6 : memref<1x!tpu.dma_semaphore, #tpu.memory_space<semaphore_mem>> -> memref<!tpu.dma_semaphore, #tpu.memory_space<semaphore_mem>>
    tpu.enqueue_dma source(%3 : memref<1024x512xi8, #tpu.memory_space<any>>) target(%5 : memref<1024x512xi8, #tpu.memory_space<vmem>>) target_semaphore(%7 : memref<!tpu.dma_semaphore, #tpu.memory_space<semaphore_mem>>)
    %c0 = arith.constant 0 : index
    %c0_6 = arith.constant 0 : index
    %8 = vector.load %arg1[%c0, %c0_6] : memref<8x1024xf32, #tpu.memory_space<vmem>>, vector<8x1024xf32>
    %9 = arith.truncf %8 : vector<8x1024xf32> to vector<8x1024xbf16>
    %c0_7 = arith.constant 0 : index
    %c0_8 = arith.constant 0 : index
    %10 = vector.load %arg2[%c0_7, %c0_8] : memref<1024x128xbf16, #tpu.memory_space<vmem>>, vector<1024x128xbf16>
    %cst = arith.constant dense<0.000000e+00> : vector<8x128xf32>
    %11 = tpu.matmul %9, %10, %cst {dimension_numbers = #tpu.dot_dimension_numbers<[1], [0], [0], [1], [0, 0, 1, 1], [], []>} : vector<8x1024xbf16>, vector<1024x128xbf16>, vector<8x128xf32> -> vector<8x128xf32>
    %c0_9 = arith.constant 0 : index
    %c0_10 = arith.constant 0 : index
    %12 = vector.load %arg7[%c0_9, %c0_10] : memref<1x5504xf32, #tpu.memory_space<vmem>>, vector<1x128xf32>
    %13 = vector.broadcast %12 : vector<1x128xf32> to vector<8x128xf32>
    %14 = arith.addf %11, %13 : vector<8x128xf32>
    %cst_11 = arith.constant 0.000000e+00 : f32
    %15 = vector.broadcast %cst_11 : f32 to vector<8x128xf32>
    %16 = arith.cmpf ogt, %14, %15 : vector<8x128xf32>
    %cst_12 = arith.constant 2.000000e-01 : f32
    %17 = vector.broadcast %cst_12 : f32 to vector<8x128xf32>
    %18 = arith.mulf %17, %14 : vector<8x128xf32>
    %19 = arith.select %16, %14, %18 : vector<8x128xi1>, vector<8x128xf32>
    %20 = arith.truncf %19 : vector<8x128xf32> to vector<8x128xbf16>
    %c0_13 = arith.constant 0 : index
    %c0_14 = arith.constant 0 : index
    %21 = vector.load %arg3[%c0_13, %c0_14] : memref<128x256xbf16, #tpu.memory_space<vmem>>, vector<128x256xbf16>
    %cst_15 = arith.constant dense<0.000000e+00> : vector<8x256xf32>
    %22 = tpu.matmul %20, %21, %cst_15 {dimension_numbers = #tpu.dot_dimension_numbers<[1], [0], [0], [1], [0, 0, 1, 1], [], []>} : vector<8x128xbf16>, vector<128x256xbf16>, vector<8x256xf32> -> vector<8x256xf32>
    %c0_16 = arith.constant 0 : index
    %c128 = arith.constant 128 : index
    %23 = vector.load %arg7[%c0_16, %c128] : memref<1x5504xf32, #tpu.memory_space<vmem>>, vector<1x256xf32>
    %24 = vector.broadcast %23 : vector<1x256xf32> to vector<8x256xf32>
    %25 = arith.addf %22, %24 : vector<8x256xf32>
    %c0_17 = arith.constant 0 : index
    %c384 = arith.constant 384 : index
    %26 = vector.load %arg7[%c0_17, %c384] : memref<1x5504xf32, #tpu.memory_space<vmem>>, vector<1x256xf32>
    %c0_18 = arith.constant 0 : index
    %c640 = arith.constant 640 : index
    %27 = vector.load %arg7[%c0_18, %c640] : memref<1x5504xf32, #tpu.memory_space<vmem>>, vector<1x256xf32>
    %cst_19 = arith.constant dense<0.000000e+00> : vector<256xf32>
    %28 = vector.multi_reduction <add>, %25, %cst_19 [0] : vector<8x256xf32> to vector<256xf32>
    %29 = vector.shape_cast %28 : vector<256xf32> to vector<1x256xf32>
    %cst_20 = arith.constant 8.000000e+00 : f32
    %30 = vector.broadcast %cst_20 : f32 to vector<1x256xf32>
    %31 = arith.divf %29, %30 : vector<1x256xf32>
    %32 = vector.broadcast %31 : vector<1x256xf32> to vector<8x256xf32>
    %33 = arith.subf %25, %32 : vector<8x256xf32>
    %34 = arith.mulf %33, %33 : vector<8x256xf32>
    %cst_21 = arith.constant dense<0.000000e+00> : vector<256xf32>
    %35 = vector.multi_reduction <add>, %34, %cst_21 [0] : vector<8x256xf32> to vector<256xf32>
    %36 = vector.shape_cast %35 : vector<256xf32> to vector<1x256xf32>
    %cst_22 = arith.constant 8.000000e+00 : f32
    %37 = vector.broadcast %cst_22 : f32 to vector<1x256xf32>
    %38 = arith.divf %36, %37 : vector<1x256xf32>
    %39 = vector.broadcast %31 : vector<1x256xf32> to vector<8x256xf32>
    %40 = arith.subf %25, %39 : vector<8x256xf32>
    %cst_23 = arith.constant 8.000000e-01 : f32
    %41 = vector.broadcast %cst_23 : f32 to vector<1x256xf32>
    %42 = arith.addf %38, %41 : vector<1x256xf32>
    %43 = math.rsqrt %42 : vector<1x256xf32>
    %44 = vector.broadcast %43 : vector<1x256xf32> to vector<8x256xf32>
    %45 = arith.mulf %40, %44 : vector<8x256xf32>
    %46 = vector.broadcast %26 : vector<1x256xf32> to vector<8x256xf32>
    %47 = arith.mulf %45, %46 : vector<8x256xf32>
    %48 = vector.broadcast %27 : vector<1x256xf32> to vector<8x256xf32>
    %49 = arith.addf %47, %48 : vector<8x256xf32>
    %cst_24 = arith.constant 0.000000e+00 : f32
    %50 = vector.broadcast %cst_24 : f32 to vector<8x256xf32>
    %51 = arith.cmpf ogt, %49, %50 : vector<8x256xf32>
    %cst_25 = arith.constant 2.000000e-01 : f32
    %52 = vector.broadcast %cst_25 : f32 to vector<8x256xf32>
    %53 = arith.mulf %52, %49 : vector<8x256xf32>
    %54 = arith.select %51, %49, %53 : vector<8x256xi1>, vector<8x256xf32>
    %55 = arith.truncf %54 : vector<8x256xf32> to vector<8x256xbf16>
    %c0_26 = arith.constant 0 : index
    %c0_27 = arith.constant 0 : index
    %56 = vector.load %arg4[%c0_26, %c0_27] : memref<256x512xbf16, #tpu.memory_space<vmem>>, vector<256x512xbf16>
    %cst_28 = arith.constant dense<0.000000e+00> : vector<8x512xf32>
    %57 = tpu.matmul %55, %56, %cst_28 {dimension_numbers = #tpu.dot_dimension_numbers<[1], [0], [0], [1], [0, 0, 1, 1], [], []>} : vector<8x256xbf16>, vector<256x512xbf16>, vector<8x512xf32> -> vector<8x512xf32>
    %c0_29 = arith.constant 0 : index
    %c896 = arith.constant 896 : index
    %58 = vector.load %arg7[%c0_29, %c896] : memref<1x5504xf32, #tpu.memory_space<vmem>>, vector<1x512xf32>
    %59 = vector.broadcast %58 : vector<1x512xf32> to vector<8x512xf32>
    %60 = arith.addf %57, %59 : vector<8x512xf32>
    %c0_30 = arith.constant 0 : index
    %c1408 = arith.constant 1408 : index
    %61 = vector.load %arg7[%c0_30, %c1408] : memref<1x5504xf32, #tpu.memory_space<vmem>>, vector<1x512xf32>
    %c0_31 = arith.constant 0 : index
    %c1920 = arith.constant 1920 : index
    %62 = vector.load %arg7[%c0_31, %c1920] : memref<1x5504xf32, #tpu.memory_space<vmem>>, vector<1x512xf32>
    %cst_32 = arith.constant dense<0.000000e+00> : vector<512xf32>
    %63 = vector.multi_reduction <add>, %60, %cst_32 [0] : vector<8x512xf32> to vector<512xf32>
    %64 = vector.shape_cast %63 : vector<512xf32> to vector<1x512xf32>
    %cst_33 = arith.constant 8.000000e+00 : f32
    %65 = vector.broadcast %cst_33 : f32 to vector<1x512xf32>
    %66 = arith.divf %64, %65 : vector<1x512xf32>
    %67 = vector.broadcast %66 : vector<1x512xf32> to vector<8x512xf32>
    %68 = arith.subf %60, %67 : vector<8x512xf32>
    %69 = arith.mulf %68, %68 : vector<8x512xf32>
    %cst_34 = arith.constant dense<0.000000e+00> : vector<512xf32>
    %70 = vector.multi_reduction <add>, %69, %cst_34 [0] : vector<8x512xf32> to vector<512xf32>
    %71 = vector.shape_cast %70 : vector<512xf32> to vector<1x512xf32>
    %cst_35 = arith.constant 8.000000e+00 : f32
    %72 = vector.broadcast %cst_35 : f32 to vector<1x512xf32>
    %73 = arith.divf %71, %72 : vector<1x512xf32>
    %74 = vector.broadcast %66 : vector<1x512xf32> to vector<8x512xf32>
    %75 = arith.subf %60, %74 : vector<8x512xf32>
    %cst_36 = arith.constant 8.000000e-01 : f32
    %76 = vector.broadcast %cst_36 : f32 to vector<1x512xf32>
    %77 = arith.addf %73, %76 : vector<1x512xf32>
    %78 = math.rsqrt %77 : vector<1x512xf32>
    %79 = vector.broadcast %78 : vector<1x512xf32> to vector<8x512xf32>
    %80 = arith.mulf %75, %79 : vector<8x512xf32>
    %81 = vector.broadcast %61 : vector<1x512xf32> to vector<8x512xf32>
    %82 = arith.mulf %80, %81 : vector<8x512xf32>
    %83 = vector.broadcast %62 : vector<1x512xf32> to vector<8x512xf32>
    %84 = arith.addf %82, %83 : vector<8x512xf32>
    %cst_37 = arith.constant 0.000000e+00 : f32
    %85 = vector.broadcast %cst_37 : f32 to vector<8x512xf32>
    %86 = arith.cmpf ogt, %84, %85 : vector<8x512xf32>
    %cst_38 = arith.constant 2.000000e-01 : f32
    %87 = vector.broadcast %cst_38 : f32 to vector<8x512xf32>
    %88 = arith.mulf %87, %84 : vector<8x512xf32>
    %89 = arith.select %86, %84, %88 : vector<8x512xi1>, vector<8x512xf32>
    %90 = arith.truncf %89 : vector<8x512xf32> to vector<8x512xbf16>
    %c0_39 = arith.constant 0 : index
    %c0_40 = arith.constant 0 : index
    %91 = vector.load %arg5[%c0_39, %c0_40] : memref<512x1024xbf16, #tpu.memory_space<vmem>>, vector<512x1024xbf16>
    %cst_41 = arith.constant dense<0.000000e+00> : vector<8x1024xf32>
    %92 = tpu.matmul %90, %91, %cst_41 {dimension_numbers = #tpu.dot_dimension_numbers<[1], [0], [0], [1], [0, 0, 1, 1], [], []>} : vector<8x512xbf16>, vector<512x1024xbf16>, vector<8x1024xf32> -> vector<8x1024xf32>
    %c0_42 = arith.constant 0 : index
    %c2432 = arith.constant 2432 : index
    %93 = vector.load %arg7[%c0_42, %c2432] : memref<1x5504xf32, #tpu.memory_space<vmem>>, vector<1x1024xf32>
    %94 = vector.broadcast %93 : vector<1x1024xf32> to vector<8x1024xf32>
    %95 = arith.addf %92, %94 : vector<8x1024xf32>
    %c0_43 = arith.constant 0 : index
    %c3456 = arith.constant 3456 : index
    %96 = vector.load %arg7[%c0_43, %c3456] : memref<1x5504xf32, #tpu.memory_space<vmem>>, vector<1x1024xf32>
    %c0_44 = arith.constant 0 : index
    %c4480 = arith.constant 4480 : index
    %97 = vector.load %arg7[%c0_44, %c4480] : memref<1x5504xf32, #tpu.memory_space<vmem>>, vector<1x1024xf32>
    %cst_45 = arith.constant dense<0.000000e+00> : vector<1024xf32>
    %98 = vector.multi_reduction <add>, %95, %cst_45 [0] : vector<8x1024xf32> to vector<1024xf32>
    %99 = vector.shape_cast %98 : vector<1024xf32> to vector<1x1024xf32>
    %cst_46 = arith.constant 8.000000e+00 : f32
    %100 = vector.broadcast %cst_46 : f32 to vector<1x1024xf32>
    %101 = arith.divf %99, %100 : vector<1x1024xf32>
    %102 = vector.broadcast %101 : vector<1x1024xf32> to vector<8x1024xf32>
    %103 = arith.subf %95, %102 : vector<8x1024xf32>
    %104 = arith.mulf %103, %103 : vector<8x1024xf32>
    %cst_47 = arith.constant dense<0.000000e+00> : vector<1024xf32>
    %105 = vector.multi_reduction <add>, %104, %cst_47 [0] : vector<8x1024xf32> to vector<1024xf32>
    %106 = vector.shape_cast %105 : vector<1024xf32> to vector<1x1024xf32>
    %cst_48 = arith.constant 8.000000e+00 : f32
    %107 = vector.broadcast %cst_48 : f32 to vector<1x1024xf32>
    %108 = arith.divf %106, %107 : vector<1x1024xf32>
    %109 = vector.broadcast %101 : vector<1x1024xf32> to vector<8x1024xf32>
    %110 = arith.subf %95, %109 : vector<8x1024xf32>
    %cst_49 = arith.constant 8.000000e-01 : f32
    %111 = vector.broadcast %cst_49 : f32 to vector<1x1024xf32>
    %112 = arith.addf %108, %111 : vector<1x1024xf32>
    %113 = math.rsqrt %112 : vector<1x1024xf32>
    %114 = vector.broadcast %113 : vector<1x1024xf32> to vector<8x1024xf32>
    %115 = arith.mulf %110, %114 : vector<8x1024xf32>
    %116 = vector.broadcast %96 : vector<1x1024xf32> to vector<8x1024xf32>
    %117 = arith.mulf %115, %116 : vector<8x1024xf32>
    %118 = vector.broadcast %97 : vector<1x1024xf32> to vector<8x1024xf32>
    %119 = arith.addf %117, %118 : vector<8x1024xf32>
    %cst_50 = arith.constant 0.000000e+00 : f32
    %120 = vector.broadcast %cst_50 : f32 to vector<8x1024xf32>
    %121 = arith.cmpf ogt, %119, %120 : vector<8x1024xf32>
    %cst_51 = arith.constant 2.000000e-01 : f32
    %122 = vector.broadcast %cst_51 : f32 to vector<8x1024xf32>
    %123 = arith.mulf %122, %119 : vector<8x1024xf32>
    %124 = arith.select %121, %119, %123 : vector<8x1024xi1>, vector<8x1024xf32>
    %125 = arith.truncf %124 : vector<8x1024xf32> to vector<8x1024xbf16>
    %c1_i32 = arith.constant 1 : i32
    %126 = arith.addi %0, %c1_i32 : i32
    %c1_i32_52 = arith.constant 1 : i32
    %c1_i32_53 = arith.constant 1 : i32
    %c0_i32_54 = arith.constant 0 : i32
    %c0_i32_55 = arith.constant 0 : i32
    %127 = tpu.memref_slice %arg6[%126, %c0_i32_54, %c0_i32_55] : memref<8x1024x512xi8, #tpu.memory_space<any>> -> memref<1x1024x512xi8, #tpu.memory_space<any>>
    %128 = tpu.memref_squeeze %127 : memref<1x1024x512xi8, #tpu.memory_space<any>> -> memref<1024x512xi8, #tpu.memory_space<any>>
    %c0_i32_56 = arith.constant 0 : i32
    %c0_i32_57 = arith.constant 0 : i32
    %129 = tpu.memref_slice %arg11[%c1_i32_52, %c0_i32_56, %c0_i32_57] : memref<2x1024x512xi8, #tpu.memory_space<vmem>> -> memref<1x1024x512xi8, #tpu.memory_space<vmem>>
    %130 = tpu.memref_squeeze %129 : memref<1x1024x512xi8, #tpu.memory_space<vmem>> -> memref<1024x512xi8, #tpu.memory_space<vmem>>
    %131 = tpu.memref_slice %arg12[%c1_i32_53] : memref<2x!tpu.dma_semaphore, #tpu.memory_space<semaphore_mem>> -> memref<1x!tpu.dma_semaphore, #tpu.memory_space<semaphore_mem>>
    %132 = tpu.memref_squeeze %131 : memref<1x!tpu.dma_semaphore, #tpu.memory_space<semaphore_mem>> -> memref<!tpu.dma_semaphore, #tpu.memory_space<semaphore_mem>>
    tpu.enqueue_dma source(%128 : memref<1024x512xi8, #tpu.memory_space<any>>) target(%130 : memref<1024x512xi8, #tpu.memory_space<vmem>>) target_semaphore(%132 : memref<!tpu.dma_semaphore, #tpu.memory_space<semaphore_mem>>)
    %c0_i32_58 = arith.constant 0 : i32
    %133 = arith.addi %0, %c0_i32_58 : i32
    %c0_i32_59 = arith.constant 0 : i32
    %c0_i32_60 = arith.constant 0 : i32
    %c0_i32_61 = arith.constant 0 : i32
    %c0_i32_62 = arith.constant 0 : i32
    %134 = tpu.memref_slice %arg6[%133, %c0_i32_61, %c0_i32_62] : memref<8x1024x512xi8, #tpu.memory_space<any>> -> memref<1x1024x512xi8, #tpu.memory_space<any>>
    %135 = tpu.memref_squeeze %134 : memref<1x1024x512xi8, #tpu.memory_space<any>> -> memref<1024x512xi8, #tpu.memory_space<any>>
    %c0_i32_63 = arith.constant 0 : i32
    %c0_i32_64 = arith.constant 0 : i32
    %136 = tpu.memref_slice %arg11[%c0_i32_59, %c0_i32_63, %c0_i32_64] : memref<2x1024x512xi8, #tpu.memory_space<vmem>> -> memref<1x1024x512xi8, #tpu.memory_space<vmem>>
    %137 = tpu.memref_squeeze %136 : memref<1x1024x512xi8, #tpu.memory_space<vmem>> -> memref<1024x512xi8, #tpu.memory_space<vmem>>
    %138 = tpu.memref_slice %arg12[%c0_i32_60] : memref<2x!tpu.dma_semaphore, #tpu.memory_space<semaphore_mem>> -> memref<1x!tpu.dma_semaphore, #tpu.memory_space<semaphore_mem>>
    %139 = tpu.memref_squeeze %138 : memref<1x!tpu.dma_semaphore, #tpu.memory_space<semaphore_mem>> -> memref<!tpu.dma_semaphore, #tpu.memory_space<semaphore_mem>>
    tpu.wait_dma2 semaphore(%139 : memref<!tpu.dma_semaphore, #tpu.memory_space<semaphore_mem>>) src(%135 : memref<1024x512xi8, #tpu.memory_space<any>>) dst(%137 : memref<1024x512xi8, #tpu.memory_space<vmem>>)
    %c0_65 = arith.constant 0 : index
    %c0_66 = arith.constant 0 : index
    %c0_67 = arith.constant 0 : index
    %140 = vector.load %arg11[%c0_65, %c0_66, %c0_67] : memref<2x1024x512xi8, #tpu.memory_space<vmem>>, vector<1x1024x512xi8>
    %141 = vector.shape_cast %140 : vector<1x1024x512xi8> to vector<1024x512xi8>
    %142 = arith.sitofp %141 : vector<1024x512xi8> to vector<1024x512xf32>
    %143 = arith.truncf %142 : vector<1024x512xf32> to vector<1024x512xbf16>
    %cst_68 = arith.constant dense<0.000000e+00> : vector<8x512xf32>
    %144 = tpu.matmul %125, %143, %cst_68 {dimension_numbers = #tpu.dot_dimension_numbers<[1], [0], [0], [1], [0, 0, 1, 1], [], []>} : vector<8x1024xbf16>, vector<1024x512xbf16>, vector<8x512xf32> -> vector<8x512xf32>
    %c0_69 = arith.constant 0 : index
    %c0_70 = arith.constant 0 : index
    %145 = vector.load %arg9[%c0_69, %c0_70] : memref<1x2048xf32, #tpu.memory_space<vmem>>, vector<1x512xf32>
    %146 = vector.broadcast %145 : vector<1x512xf32> to vector<8x512xf32>
    %147 = arith.mulf %144, %146 : vector<8x512xf32>
    %c0_71 = arith.constant 0 : index
    %c0_72 = arith.constant 0 : index
    %148 = vector.load %arg8[%c0_71, %c0_72] : memref<1x2048xf32, #tpu.memory_space<vmem>>, vector<1x512xf32>
    %149 = vector.broadcast %148 : vector<1x512xf32> to vector<8x512xf32>
    %150 = arith.addf %147, %149 : vector<8x512xf32>
    %151 = math.tanh %150 : vector<8x512xf32>
    %c0_73 = arith.constant 0 : index
    %c0_74 = arith.constant 0 : index
    %152 = vector.load %arg10[%c0_73, %c0_74] : memref<8x2048xf32, #tpu.memory_space<vmem>>, vector<8x512xf32>
    tpu.vector_store %arg10[%c0_73, %c0_74], %151 {strides = array<i32>} : memref<8x2048xf32, #tpu.memory_space<vmem>>, vector<8x512xf32>,
    %c2_i32 = arith.constant 2 : i32
    %153 = arith.addi %0, %c2_i32 : i32
    %c0_i32_75 = arith.constant 0 : i32
    %c0_i32_76 = arith.constant 0 : i32
    %c0_i32_77 = arith.constant 0 : i32
    %c0_i32_78 = arith.constant 0 : i32
    %154 = tpu.memref_slice %arg6[%153, %c0_i32_77, %c0_i32_78] : memref<8x1024x512xi8, #tpu.memory_space<any>> -> memref<1x1024x512xi8, #tpu.memory_space<any>>
    %155 = tpu.memref_squeeze %154 : memref<1x1024x512xi8, #tpu.memory_space<any>> -> memref<1024x512xi8, #tpu.memory_space<any>>
    %c0_i32_79 = arith.constant 0 : i32
    %c0_i32_80 = arith.constant 0 : i32
    %156 = tpu.memref_slice %arg11[%c0_i32_75, %c0_i32_79, %c0_i32_80] : memref<2x1024x512xi8, #tpu.memory_space<vmem>> -> memref<1x1024x512xi8, #tpu.memory_space<vmem>>
    %157 = tpu.memref_squeeze %156 : memref<1x1024x512xi8, #tpu.memory_space<vmem>> -> memref<1024x512xi8, #tpu.memory_space<vmem>>
    %158 = tpu.memref_slice %arg12[%c0_i32_76] : memref<2x!tpu.dma_semaphore, #tpu.memory_space<semaphore_mem>> -> memref<1x!tpu.dma_semaphore, #tpu.memory_space<semaphore_mem>>
    %159 = tpu.memref_squeeze %158 : memref<1x!tpu.dma_semaphore, #tpu.memory_space<semaphore_mem>> -> memref<!tpu.dma_semaphore, #tpu.memory_space<semaphore_mem>>
    tpu.enqueue_dma source(%155 : memref<1024x512xi8, #tpu.memory_space<any>>) target(%157 : memref<1024x512xi8, #tpu.memory_space<vmem>>) target_semaphore(%159 : memref<!tpu.dma_semaphore, #tpu.memory_space<semaphore_mem>>)
    %c1_i32_81 = arith.constant 1 : i32
    %160 = arith.addi %0, %c1_i32_81 : i32
    %c1_i32_82 = arith.constant 1 : i32
    %c1_i32_83 = arith.constant 1 : i32
    %c0_i32_84 = arith.constant 0 : i32
    %c0_i32_85 = arith.constant 0 : i32
    %161 = tpu.memref_slice %arg6[%160, %c0_i32_84, %c0_i32_85] : memref<8x1024x512xi8, #tpu.memory_space<any>> -> memref<1x1024x512xi8, #tpu.memory_space<any>>
    %162 = tpu.memref_squeeze %161 : memref<1x1024x512xi8, #tpu.memory_space<any>> -> memref<1024x512xi8, #tpu.memory_space<any>>
    %c0_i32_86 = arith.constant 0 : i32
    %c0_i32_87 = arith.constant 0 : i32
    %163 = tpu.memref_slice %arg11[%c1_i32_82, %c0_i32_86, %c0_i32_87] : memref<2x1024x512xi8, #tpu.memory_space<vmem>> -> memref<1x1024x512xi8, #tpu.memory_space<vmem>>
    %164 = tpu.memref_squeeze %163 : memref<1x1024x512xi8, #tpu.memory_space<vmem>> -> memref<1024x512xi8, #tpu.memory_space<vmem>>
    %165 = tpu.memref_slice %arg12[%c1_i32_83] : memref<2x!tpu.dma_semaphore, #tpu.memory_space<semaphore_mem>> -> memref<1x!tpu.dma_semaphore, #tpu.memory_space<semaphore_mem>>
    %166 = tpu.memref_squeeze %165 : memref<1x!tpu.dma_semaphore, #tpu.memory_space<semaphore_mem>> -> memref<!tpu.dma_semaphore, #tpu.memory_space<semaphore_mem>>
    tpu.wait_dma2 semaphore(%166 : memref<!tpu.dma_semaphore, #tpu.memory_space<semaphore_mem>>) src(%162 : memref<1024x512xi8, #tpu.memory_space<any>>) dst(%164 : memref<1024x512xi8, #tpu.memory_space<vmem>>)
    %c1 = arith.constant 1 : index
    %c0_88 = arith.constant 0 : index
    %c0_89 = arith.constant 0 : index
    %167 = vector.load %arg11[%c1, %c0_88, %c0_89] : memref<2x1024x512xi8, #tpu.memory_space<vmem>>, vector<1x1024x512xi8>
    %168 = vector.shape_cast %167 : vector<1x1024x512xi8> to vector<1024x512xi8>
    %169 = arith.sitofp %168 : vector<1024x512xi8> to vector<1024x512xf32>
    %170 = arith.truncf %169 : vector<1024x512xf32> to vector<1024x512xbf16>
    %cst_90 = arith.constant dense<0.000000e+00> : vector<8x512xf32>
    %171 = tpu.matmul %125, %170, %cst_90 {dimension_numbers = #tpu.dot_dimension_numbers<[1], [0], [0], [1], [0, 0, 1, 1], [], []>} : vector<8x1024xbf16>, vector<1024x512xbf16>, vector<8x512xf32> -> vector<8x512xf32>
    %c0_91 = arith.constant 0 : index
    %c512 = arith.constant 512 : index
    %172 = vector.load %arg9[%c0_91, %c512] : memref<1x2048xf32, #tpu.memory_space<vmem>>, vector<1x512xf32>
    %173 = vector.broadcast %172 : vector<1x512xf32> to vector<8x512xf32>
    %174 = arith.mulf %171, %173 : vector<8x512xf32>
    %c0_92 = arith.constant 0 : index
    %c512_93 = arith.constant 512 : index
    %175 = vector.load %arg8[%c0_92, %c512_93] : memref<1x2048xf32, #tpu.memory_space<vmem>>, vector<1x512xf32>
    %176 = vector.broadcast %175 : vector<1x512xf32> to vector<8x512xf32>
    %177 = arith.addf %174, %176 : vector<8x512xf32>
    %178 = math.tanh %177 : vector<8x512xf32>
    %c0_94 = arith.constant 0 : index
    %c512_95 = arith.constant 512 : index
    %179 = vector.load %arg10[%c0_94, %c512_95] : memref<8x2048xf32, #tpu.memory_space<vmem>>, vector<8x512xf32>
    tpu.vector_store %arg10[%c0_94, %c512_95], %178 {strides = array<i32>} : memref<8x2048xf32, #tpu.memory_space<vmem>>, vector<8x512xf32>,
    %c3_i32 = arith.constant 3 : i32
    %180 = arith.addi %0, %c3_i32 : i32
    %c1_i32_96 = arith.constant 1 : i32
    %c1_i32_97 = arith.constant 1 : i32
    %c0_i32_98 = arith.constant 0 : i32
    %c0_i32_99 = arith.constant 0 : i32
    %181 = tpu.memref_slice %arg6[%180, %c0_i32_98, %c0_i32_99] : memref<8x1024x512xi8, #tpu.memory_space<any>> -> memref<1x1024x512xi8, #tpu.memory_space<any>>
    %182 = tpu.memref_squeeze %181 : memref<1x1024x512xi8, #tpu.memory_space<any>> -> memref<1024x512xi8, #tpu.memory_space<any>>
    %c0_i32_100 = arith.constant 0 : i32
    %c0_i32_101 = arith.constant 0 : i32
    %183 = tpu.memref_slice %arg11[%c1_i32_96, %c0_i32_100, %c0_i32_101] : memref<2x1024x512xi8, #tpu.memory_space<vmem>> -> memref<1x1024x512xi8, #tpu.memory_space<vmem>>
    %184 = tpu.memref_squeeze %183 : memref<1x1024x512xi8, #tpu.memory_space<vmem>> -> memref<1024x512xi8, #tpu.memory_space<vmem>>
    %185 = tpu.memref_slice %arg12[%c1_i32_97] : memref<2x!tpu.dma_semaphore, #tpu.memory_space<semaphore_mem>> -> memref<1x!tpu.dma_semaphore, #tpu.memory_space<semaphore_mem>>
    %186 = tpu.memref_squeeze %185 : memref<1x!tpu.dma_semaphore, #tpu.memory_space<semaphore_mem>> -> memref<!tpu.dma_semaphore, #tpu.memory_space<semaphore_mem>>
    tpu.enqueue_dma source(%182 : memref<1024x512xi8, #tpu.memory_space<any>>) target(%184 : memref<1024x512xi8, #tpu.memory_space<vmem>>) target_semaphore(%186 : memref<!tpu.dma_semaphore, #tpu.memory_space<semaphore_mem>>)
    %c2_i32_102 = arith.constant 2 : i32
    %187 = arith.addi %0, %c2_i32_102 : i32
    %c0_i32_103 = arith.constant 0 : i32
    %c0_i32_104 = arith.constant 0 : i32
    %c0_i32_105 = arith.constant 0 : i32
    %c0_i32_106 = arith.constant 0 : i32
    %188 = tpu.memref_slice %arg6[%187, %c0_i32_105, %c0_i32_106] : memref<8x1024x512xi8, #tpu.memory_space<any>> -> memref<1x1024x512xi8, #tpu.memory_space<any>>
    %189 = tpu.memref_squeeze %188 : memref<1x1024x512xi8, #tpu.memory_space<any>> -> memref<1024x512xi8, #tpu.memory_space<any>>
    %c0_i32_107 = arith.constant 0 : i32
    %c0_i32_108 = arith.constant 0 : i32
    %190 = tpu.memref_slice %arg11[%c0_i32_103, %c0_i32_107, %c0_i32_108] : memref<2x1024x512xi8, #tpu.memory_space<vmem>> -> memref<1x1024x512xi8, #tpu.memory_space<vmem>>
    %191 = tpu.memref_squeeze %190 : memref<1x1024x512xi8, #tpu.memory_space<vmem>> -> memref<1024x512xi8, #tpu.memory_space<vmem>>
    %192 = tpu.memref_slice %arg12[%c0_i32_104] : memref<2x!tpu.dma_semaphore, #tpu.memory_space<semaphore_mem>> -> memref<1x!tpu.dma_semaphore, #tpu.memory_space<semaphore_mem>>
    %193 = tpu.memref_squeeze %192 : memref<1x!tpu.dma_semaphore, #tpu.memory_space<semaphore_mem>> -> memref<!tpu.dma_semaphore, #tpu.memory_space<semaphore_mem>>
    tpu.wait_dma2 semaphore(%193 : memref<!tpu.dma_semaphore, #tpu.memory_space<semaphore_mem>>) src(%189 : memref<1024x512xi8, #tpu.memory_space<any>>) dst(%191 : memref<1024x512xi8, #tpu.memory_space<vmem>>)
    %c0_109 = arith.constant 0 : index
    %c0_110 = arith.constant 0 : index
    %c0_111 = arith.constant 0 : index
    %194 = vector.load %arg11[%c0_109, %c0_110, %c0_111] : memref<2x1024x512xi8, #tpu.memory_space<vmem>>, vector<1x1024x512xi8>
    %195 = vector.shape_cast %194 : vector<1x1024x512xi8> to vector<1024x512xi8>
    %196 = arith.sitofp %195 : vector<1024x512xi8> to vector<1024x512xf32>
    %197 = arith.truncf %196 : vector<1024x512xf32> to vector<1024x512xbf16>
    %cst_112 = arith.constant dense<0.000000e+00> : vector<8x512xf32>
    %198 = tpu.matmul %125, %197, %cst_112 {dimension_numbers = #tpu.dot_dimension_numbers<[1], [0], [0], [1], [0, 0, 1, 1], [], []>} : vector<8x1024xbf16>, vector<1024x512xbf16>, vector<8x512xf32> -> vector<8x512xf32>
    %c0_113 = arith.constant 0 : index
    %c1024 = arith.constant 1024 : index
    %199 = vector.load %arg9[%c0_113, %c1024] : memref<1x2048xf32, #tpu.memory_space<vmem>>, vector<1x512xf32>
    %200 = vector.broadcast %199 : vector<1x512xf32> to vector<8x512xf32>
    %201 = arith.mulf %198, %200 : vector<8x512xf32>
    %c0_114 = arith.constant 0 : index
    %c1024_115 = arith.constant 1024 : index
    %202 = vector.load %arg8[%c0_114, %c1024_115] : memref<1x2048xf32, #tpu.memory_space<vmem>>, vector<1x512xf32>
    %203 = vector.broadcast %202 : vector<1x512xf32> to vector<8x512xf32>
    %204 = arith.addf %201, %203 : vector<8x512xf32>
    %205 = math.tanh %204 : vector<8x512xf32>
    %c0_116 = arith.constant 0 : index
    %c1024_117 = arith.constant 1024 : index
    %206 = vector.load %arg10[%c0_116, %c1024_117] : memref<8x2048xf32, #tpu.memory_space<vmem>>, vector<8x512xf32>
    tpu.vector_store %arg10[%c0_116, %c1024_117], %205 {strides = array<i32>} : memref<8x2048xf32, #tpu.memory_space<vmem>>, vector<8x512xf32>,
    %c3_i32_118 = arith.constant 3 : i32
    %207 = arith.addi %0, %c3_i32_118 : i32
    %c1_i32_119 = arith.constant 1 : i32
    %c1_i32_120 = arith.constant 1 : i32
    %c0_i32_121 = arith.constant 0 : i32
    %c0_i32_122 = arith.constant 0 : i32
    %208 = tpu.memref_slice %arg6[%207, %c0_i32_121, %c0_i32_122] : memref<8x1024x512xi8, #tpu.memory_space<any>> -> memref<1x1024x512xi8, #tpu.memory_space<any>>
    %209 = tpu.memref_squeeze %208 : memref<1x1024x512xi8, #tpu.memory_space<any>> -> memref<1024x512xi8, #tpu.memory_space<any>>
    %c0_i32_123 = arith.constant 0 : i32
    %c0_i32_124 = arith.constant 0 : i32
    %210 = tpu.memref_slice %arg11[%c1_i32_119, %c0_i32_123, %c0_i32_124] : memref<2x1024x512xi8, #tpu.memory_space<vmem>> -> memref<1x1024x512xi8, #tpu.memory_space<vmem>>
    %211 = tpu.memref_squeeze %210 : memref<1x1024x512xi8, #tpu.memory_space<vmem>> -> memref<1024x512xi8, #tpu.memory_space<vmem>>
    %212 = tpu.memref_slice %arg12[%c1_i32_120] : memref<2x!tpu.dma_semaphore, #tpu.memory_space<semaphore_mem>> -> memref<1x!tpu.dma_semaphore, #tpu.memory_space<semaphore_mem>>
    %213 = tpu.memref_squeeze %212 : memref<1x!tpu.dma_semaphore, #tpu.memory_space<semaphore_mem>> -> memref<!tpu.dma_semaphore, #tpu.memory_space<semaphore_mem>>
    tpu.wait_dma2 semaphore(%213 : memref<!tpu.dma_semaphore, #tpu.memory_space<semaphore_mem>>) src(%209 : memref<1024x512xi8, #tpu.memory_space<any>>) dst(%211 : memref<1024x512xi8, #tpu.memory_space<vmem>>)
    %c1_125 = arith.constant 1 : index
    %c0_126 = arith.constant 0 : index
    %c0_127 = arith.constant 0 : index
    %214 = vector.load %arg11[%c1_125, %c0_126, %c0_127] : memref<2x1024x512xi8, #tpu.memory_space<vmem>>, vector<1x1024x512xi8>
    %215 = vector.shape_cast %214 : vector<1x1024x512xi8> to vector<1024x512xi8>
    %216 = arith.sitofp %215 : vector<1024x512xi8> to vector<1024x512xf32>
    %217 = arith.truncf %216 : vector<1024x512xf32> to vector<1024x512xbf16>
    %cst_128 = arith.constant dense<0.000000e+00> : vector<8x512xf32>
    %218 = tpu.matmul %125, %217, %cst_128 {dimension_numbers = #tpu.dot_dimension_numbers<[1], [0], [0], [1], [0, 0, 1, 1], [], []>} : vector<8x1024xbf16>, vector<1024x512xbf16>, vector<8x512xf32> -> vector<8x512xf32>
    %c0_129 = arith.constant 0 : index
    %c1536 = arith.constant 1536 : index
    %219 = vector.load %arg9[%c0_129, %c1536] : memref<1x2048xf32, #tpu.memory_space<vmem>>, vector<1x512xf32>
    %220 = vector.broadcast %219 : vector<1x512xf32> to vector<8x512xf32>
    %221 = arith.mulf %218, %220 : vector<8x512xf32>
    %c0_130 = arith.constant 0 : index
    %c1536_131 = arith.constant 1536 : index
    %222 = vector.load %arg8[%c0_130, %c1536_131] : memref<1x2048xf32, #tpu.memory_space<vmem>>, vector<1x512xf32>
    %223 = vector.broadcast %222 : vector<1x512xf32> to vector<8x512xf32>
    %224 = arith.addf %221, %223 : vector<8x512xf32>
    %225 = math.tanh %224 : vector<8x512xf32>
    %c0_132 = arith.constant 0 : index
    %c1536_133 = arith.constant 1536 : index
    %226 = vector.load %arg10[%c0_132, %c1536_133] : memref<8x2048xf32, #tpu.memory_space<vmem>>, vector<8x512xf32>
    tpu.vector_store %arg10[%c0_132, %c1536_133], %225 {strides = array<i32>} : memref<8x2048xf32, #tpu.memory_space<vmem>>, vector<8x512xf32>,
    return
  }
  func.func @transform_0(%arg0: i32) -> (i32, i32) {
    %c0_i32 = arith.constant 0 : i32
    %c0_i32_0 = arith.constant 0 : i32
    %c0_i32_1 = arith.constant 0 : i32
    return %c0_i32, %c0_i32_0 : i32, i32
  }
  func.func @transform_1(%arg0: i32) -> (i32, i32) {
    %c0_i32 = arith.constant 0 : i32
    %c0_i32_0 = arith.constant 0 : i32
    %c0_i32_1 = arith.constant 0 : i32
    return %c0_i32, %c0_i32_0 : i32, i32
  }
  func.func @transform_2(%arg0: i32) -> (i32, i32) {
    %c0_i32 = arith.constant 0 : i32
    %c0_i32_0 = arith.constant 0 : i32
    %c0_i32_1 = arith.constant 0 : i32
    return %c0_i32, %c0_i32_0 : i32, i32
  }
  func.func @transform_3(%arg0: i32) -> (i32, i32) {
    %c0_i32 = arith.constant 0 : i32
    %c0_i32_0 = arith.constant 0 : i32
    %c0_i32_1 = arith.constant 0 : i32
    return %c0_i32, %c0_i32_0 : i32, i32
  }
  func.func @transform_4(%arg0: i32) -> (i32, i32) {
    %c0_i32 = arith.constant 0 : i32
    %c0_i32_0 = arith.constant 0 : i32
    %c0_i32_1 = arith.constant 0 : i32
    return %c0_i32, %c0_i32_0 : i32, i32
  }
  func.func @transform_6(%arg0: i32) -> (i32, i32) {
    %c0_i32 = arith.constant 0 : i32
    %c0_i32_0 = arith.constant 0 : i32
    %c0_i32_1 = arith.constant 0 : i32
    return %c0_i32, %c0_i32_0 : i32, i32
  }
  func.func @transform_7(%arg0: i32) -> (i32, i32) {
    %c0_i32 = arith.constant 0 : i32
    %c0_i32_0 = arith.constant 0 : i32
    return %c0_i32, %arg0 : i32, i32
  }
  func.func @transform_8(%arg0: i32) -> (i32, i32) {
    %c0_i32 = arith.constant 0 : i32
    %c0_i32_0 = arith.constant 0 : i32
    return %c0_i32, %arg0 : i32, i32
  }
  func.func @transform_9(%arg0: i32) -> (i32, i32) {
    %c0_i32 = arith.constant 0 : i32
    %c0_i32_0 = arith.constant 0 : i32
    return %c0_i32, %arg0 : i32, i32
  }
}

</mosaic_0001>

<llo_original>
// kernel: generator_forward.1
$region0: #{generator_forward.1}
  #allocation0 [shape = 'u32[]', space=smem, size = 0x4, offset = 0x4, fixed_abs, tag = 'smem constant byte address 0x4 - core index']
  #allocation1 [shape = 'u32[144,128]{1,0:T(1,128)}', space=vmem, size = 0x12000, scoped, tag = 'internal scratch']
  #allocation2 [shape = 's8[2,1024,512]{2,1,0:T(32,128)(4,1)}', space=vmem, size = 0x100000, scoped, tag = 'scratch operand']
  #allocation3 [shape = 's32[2]{0}', space=sflag, size = 0x8, scoped, tag = 'scratch operand']
  #allocation16 [shape = 's32[]', space=sflag, size = 0x4, offset = 0, fixed_abs, tag = 'sflag constant byte address 0x0 - dummy sync flag']
  #allocation17 [shape = 's32[]', space=sflag, size = 0x4, offset = 0, fixed_abs, tag = 'sflag constant byte address 0x0 - dummy sync flag']
  #allocation18 [shape = 'u32[]', space=smem, size = 0x4, offset = 0x44, fixed_abs, tag = 'smem constant byte address 0x44 - assertion arg 0']
  #allocation19 [shape = 'u32[]', space=smem, size = 0x4, offset = 0x48, fixed_abs, tag = 'smem constant byte address 0x48 - assertion arg 1']
  #allocation20 [shape = 's32[]', space=sflag, size = 0x4, offset = 0, fixed_abs, tag = 'sflag constant byte address 0x0 - dummy sync flag']
  #allocation21 [shape = 's32[]', space=sflag, size = 0x4, offset = 0, fixed_abs, tag = 'sflag constant byte address 0x0 - dummy sync flag']
  #allocation22 [shape = 's32[]', space=sflag, size = 0x4, offset = 0, fixed_abs, tag = 'sflag constant byte address 0x0 - dummy sync flag']
  #allocation23 [shape = 's32[]', space=sflag, size = 0x4, offset = 0, fixed_abs, tag = 'sflag constant byte address 0x0 - dummy sync flag']
  #allocation24 [shape = 's32[]', space=sflag, size = 0x4, offset = 0, fixed_abs, tag = 'sflag constant byte address 0x0 - dummy sync flag']
  #allocation25 [shape = 's32[]', space=sflag, size = 0x4, offset = 0, fixed_abs, tag = 'sflag constant byte address 0x0 - dummy sync flag']
  %s0 = inlined_call_operand.hbm [shape: f32[8,1024], index: 0, kind: input, shape index: {}]
  %s1 = inlined_call_operand.hbm [shape: bf16[1024,128], index: 1, kind: input, shape index: {}]
  %s2 = inlined_call_operand.hbm [shape: bf16[128,256], index: 2, kind: input, shape index: {}]
  %s3 = inlined_call_operand.hbm [shape: bf16[256,512], index: 3, kind: input, shape index: {}]
  %s4 = inlined_call_operand.hbm [shape: bf16[512,1024], index: 4, kind: input, shape index: {}]
  %s5 = inlined_call_operand.hbm [shape: s8[8,1024,512], index: 5, kind: input, shape index: {}]
  %s6 = inlined_call_operand.hbm [shape: f32[1,5504], index: 6, kind: input, shape index: {}]
  %s7 = inlined_call_operand.hbm [shape: f32[1,4096], index: 7, kind: input, shape index: {}]
  %s8 = inlined_call_operand.hbm [shape: f32[1,4096], index: 8, kind: input, shape index: {}]
  %s9 = inlined_call_operand.vmem [shape: f32[8,4096], index: 9, kind: output, shape index: {}]
  %s10 = sld [smem:[#allocation0]]
  $region113: #{generator_forward.1} parent=0
    _
  %s12 = ssub.s32 1, %s10
  %s13 = scalar_select 0, %s12, %s10
  $region1: #{generator_forward.1} parent=0
    #allocation4 [shape = 'u8[32768]{0}', space=vmem, size = 0x8000, scoped, tag = 'input window, operand 0, single buffered']
    #allocation5 [shape = 's32[2]{0}', space=sflag, size = 0x8, scoped, tag = 'scoped memory for generator_forward.1']
    #allocation6 [shape = 'u8[262144]{0}', space=vmem, size = 0x40000, scoped, tag = 'input window, operand 1, single buffered']
    #allocation7 [shape = 's32[1]{0}', space=sflag, size = 0x4, scoped, tag = 'scoped memory for generator_forward.1']
    #allocation8 [shape = 'u8[65536]{0}', space=vmem, size = 0x10000, scoped, tag = 'input window, operand 2, single buffered']
    #allocation9 [shape = 'u8[262144]{0}', space=vmem, size = 0x40000, scoped, tag = 'input window, operand 3, single buffered']
    #allocation10 [shape = 's32[1]{0}', space=sflag, size = 0x4, scoped, tag = 'scoped memory for generator_forward.1']
    #allocation11 [shape = 'u8[1048576]{0}', space=vmem, size = 0x100000, scoped, tag = 'input window, operand 4, single buffered']
    #allocation12 [shape = 'u8[22016]{0}', space=vmem, size = 0x5800, scoped, tag = 'input window, operand 6, single buffered']
    #allocation13 [shape = 's32[1]{0}', space=sflag, size = 0x4, scoped, tag = 'scoped memory for generator_forward.1']
    #allocation14 [shape = 'u8[16384]{0}', space=vmem, size = 0x4000, scoped, tag = 'input window, operand 7']
    #allocation15 [shape = 'u8[16384]{0}', space=vmem, size = 0x4000, scoped, tag = 'input window, operand 8']
    %14 = vsyncpa [#allocation5], 0
    %15 = vsyncpa [#allocation7], 0
    %16 = vsyncpa [#allocation10], 0
    %17 = vsyncpa [#allocation13], 0
    loop: start=0, step=1, limit=4
    $region2: #{generator_forward.1} parent=1 // loop_pre_header
      _
    $region3: #{generator_forward.1} parent=1 // loop_header
      %s19 = sphi 0, %s23
      %p20 = scmp.ge.s32.totalorder %s19, 4
      %s27 = sphi 0, %s27
      %s29 = sphi 0, %s27
      %s30 = sphi 0, %s29
      %s44 = sphi 0, %s30
      %s48 = sphi 0, %s48
      %s50 = sphi 0, %s48
      %s51 = sphi 0, %s50
      %s65 = sphi 0, %s51
      %s69 = sphi 0, %s69
      %s71 = sphi 0, %s69
      %s72 = sphi 0, %s71
      %s86 = sphi 0, %s72
      %s90 = sphi 0, %s90
      %s92 = sphi 0, %s90
      %s93 = sphi 0, %s92
      %s107 = sphi 0, %s93
      %s111 = sphi 0, %s111
      %s113 = sphi 0, %s111
      %s114 = sphi 0, %s113
      %s128 = sphi 0, %s114
      %s132 = sphi 0, %s132
      %s134 = sphi 0, %s132
      %s135 = sphi 0, %s134
      %s149 = sphi 0, %s135
      %s155 = sphi 0, %s157
      %s158 = sphi 0, %s155
      %s159 = sphi 0, %s158
      %s175 = sphi 0, %s159
      %s181 = sphi 0, %s183
      %s184 = sphi 0, %s181
      %s185 = sphi 0, %s184
      %s201 = sphi 0, %s185
      %s207 = sphi 0, %s209
      %s210 = sphi 0, %s207
      %s211 = sphi 0, %s210
      %s227 = sphi 0, %s211
    $region4: #{generator_forward.1} parent=1 // loop_header_branch
      %22 = sbr.rel (%p20) target = $region8
    $region5: #{generator_forward.1} parent=1 // loop_body
      %s24 = ssub.s32 %s19, 1
      %s25 = ssub.s32 %s19, 2
      %s26 = sadd.s32 %s19, 1
      %s28 = sadd.s32 %s27, 1
      %p31 = scmp.eq.s32.totalorder %s19, 1
      %p32 = scmp.ne.s32.totalorder %s27, %s29
      %p33 = scmp.eq.s32.totalorder %s19, 0
      %p34 = por %p32, %p33
      %p35 = scmp.ne.s32.totalorder %s27, %s29
      %p36 = scmp.eq.s32.totalorder %s24, 1
      %p37 = por %p35, %p36
      %p38 = scmp.ne.s32.totalorder %s29, %s30
      %p39 = scmp.eq.s32.totalorder %s24, 0
      %p40 = por %p38, %p39
      %p41 = scmp.ne.s32.totalorder %s29, %s30
      %p42 = scmp.eq.s32.totalorder %s25, 1
      %p43 = por %p41, %p42
      %p45 = scmp.ne.s32.totalorder %s30, %s44
      %p46 = scmp.eq.s32.totalorder %s25, 0
      %p47 = por %p45, %p46
      %s49 = sadd.s32 %s48, 1
      %p52 = scmp.eq.s32.totalorder %s19, 1
      %p53 = scmp.ne.s32.totalorder %s48, %s50
      %p54 = scmp.eq.s32.totalorder %s19, 0
      %p55 = por %p53, %p54
      %p56 = scmp.ne.s32.totalorder %s48, %s50
      %p57 = scmp.eq.s32.totalorder %s24, 1
      %p58 = por %p56, %p57
      %p59 = scmp.ne.s32.totalorder %s50, %s51
      %p60 = scmp.eq.s32.totalorder %s24, 0
      %p61 = por %p59, %p60
      %p62 = scmp.ne.s32.totalorder %s50, %s51
      %p63 = scmp.eq.s32.totalorder %s25, 1
      %p64 = por %p62, %p63
      %p66 = scmp.ne.s32.totalorder %s51, %s65
      %p67 = scmp.eq.s32.totalorder %s25, 0
      %p68 = por %p66, %p67
      %s70 = sadd.s32 %s69, 1
      %p73 = scmp.eq.s32.totalorder %s19, 1
      %p74 = scmp.ne.s32.totalorder %s69, %s71
      %p75 = scmp.eq.s32.totalorder %s19, 0
      %p76 = por %p74, %p75
      %p77 = scmp.ne.s32.totalorder %s69, %s71
      %p78 = scmp.eq.s32.totalorder %s24, 1
      %p79 = por %p77, %p78
      %p80 = scmp.ne.s32.totalorder %s71, %s72
      %p81 = scmp.eq.s32.totalorder %s24, 0
      %p82 = por %p80, %p81
      %p83 = scmp.ne.s32.totalorder %s71, %s72
      %p84 = scmp.eq.s32.totalorder %s25, 1
      %p85 = por %p83, %p84
      %p87 = scmp.ne.s32.totalorder %s72, %s86
      %p88 = scmp.eq.s32.totalorder %s25, 0
      %p89 = por %p87, %p88
      %s91 = sadd.s32 %s90, 1
      %p94 = scmp.eq.s32.totalorder %s19, 1
      %p95 = scmp.ne.s32.totalorder %s90, %s92
      %p96 = scmp.eq.s32.totalorder %s19, 0
      %p97 = por %p95, %p96
      %p98 = scmp.ne.s32.totalorder %s90, %s92
      %p99 = scmp.eq.s32.totalorder %s24, 1
      %p100 = por %p98, %p99
      %p101 = scmp.ne.s32.totalorder %s92, %s93
      %p102 = scmp.eq.s32.totalorder %s24, 0
      %p103 = por %p101, %p102
      %p104 = scmp.ne.s32.totalorder %s92, %s93
      %p105 = scmp.eq.s32.totalorder %s25, 1
      %p106 = por %p104, %p105
      %p108 = scmp.ne.s32.totalorder %s93, %s107
      %p109 = scmp.eq.s32.totalorder %s25, 0
      %p110 = por %p108, %p109
      %s112 = sadd.s32 %s111, 1
      %p115 = scmp.eq.s32.totalorder %s19, 1
      %p116 = scmp.ne.s32.totalorder %s111, %s113
      %p117 = scmp.eq.s32.totalorder %s19, 0
      %p118 = por %p116, %p117
      %p119 = scmp.ne.s32.totalorder %s111, %s113
      %p120 = scmp.eq.s32.totalorder %s24, 1
      %p121 = por %p119, %p120
      %p122 = scmp.ne.s32.totalorder %s113, %s114
      %p123 = scmp.eq.s32.totalorder %s24, 0
      %p124 = por %p122, %p123
      %p125 = scmp.ne.s32.totalorder %s113, %s114
      %p126 = scmp.eq.s32.totalorder %s25, 1
      %p127 = por %p125, %p126
      %p129 = scmp.ne.s32.totalorder %s114, %s128
      %p130 = scmp.eq.s32.totalorder %s25, 0
      %p131 = por %p129, %p130
      %s133 = sadd.s32 %s132, 1
      %p136 = scmp.eq.s32.totalorder %s19, 1
      %p137 = scmp.ne.s32.totalorder %s132, %s134
      %p138 = scmp.eq.s32.totalorder %s19, 0
      %p139 = por %p137, %p138
      %p140 = scmp.ne.s32.totalorder %s132, %s134
      %p141 = scmp.eq.s32.totalorder %s24, 1
      %p142 = por %p140, %p141
      %p143 = scmp.ne.s32.totalorder %s134, %s135
      %p144 = scmp.eq.s32.totalorder %s24, 0
      %p145 = por %p143, %p144
      %p146 = scmp.ne.s32.totalorder %s134, %s135
      %p147 = scmp.eq.s32.totalorder %s25, 1
      %p148 = por %p146, %p147
      %p150 = scmp.ne.s32.totalorder %s135, %s149
      %p151 = scmp.eq.s32.totalorder %s25, 0
      %p152 = por %p150, %p151
      %s153 = ssub.s32 %s19, %s26
      %p154 = scmp.eq.s32.totalorder %s153, 0
      %s156 = sadd.s32 %s155, 1
      %s157 = scalar_select %p154, %s155, %s156
      %p160 = pneg %p154
      %p161 = scmp.eq.s32.totalorder %s19, 1
      %p162 = por %p160, %p161
      %p163 = scmp.ne.s32.totalorder %s155, %s158
      %p164 = scmp.eq.s32.totalorder %s19, 0
      %p165 = por %p163, %p164
      %p166 = scmp.ne.s32.totalorder %s155, %s158
      %p167 = scmp.eq.s32.totalorder %s24, 1
      %p168 = por %p166, %p167
      %p169 = scmp.ne.s32.totalorder %s158, %s159
      %p170 = scmp.eq.s32.totalorder %s24, 0
      %p171 = por %p169, %p170
      %p172 = scmp.ne.s32.totalorder %s158, %s159
      %p173 = scmp.eq.s32.totalorder %s25, 1
      %p174 = por %p172, %p173
      %p176 = scmp.ne.s32.totalorder %s159, %s175
      %p177 = scmp.eq.s32.totalorder %s25, 0
      %p178 = por %p176, %p177
      %s179 = ssub.s32 %s19, %s26
      %p180 = scmp.eq.s32.totalorder %s179, 0
      %s182 = sadd.s32 %s181, 1
      %s183 = scalar_select %p180, %s181, %s182
      %p186 = pneg %p180
      %p187 = scmp.eq.s32.totalorder %s19, 1
      %p188 = por %p186, %p187
      %p189 = scmp.ne.s32.totalorder %s181, %s184
      %p190 = scmp.eq.s32.totalorder %s19, 0
      %p191 = por %p189, %p190
      %p192 = scmp.ne.s32.totalorder %s181, %s184
      %p193 = scmp.eq.s32.totalorder %s24, 1
      %p194 = por %p192, %p193
      %p195 = scmp.ne.s32.totalorder %s184, %s185
      %p196 = scmp.eq.s32.totalorder %s24, 0
      %p197 = por %p195, %p196
      %p198 = scmp.ne.s32.totalorder %s184, %s185
      %p199 = scmp.eq.s32.totalorder %s25, 1
      %p200 = por %p198, %p199
      %p202 = scmp.ne.s32.totalorder %s185, %s201
      %p203 = scmp.eq.s32.totalorder %s25, 0
      %p204 = por %p202, %p203
      %s205 = ssub.s32 %s19, %s26
      %p206 = scmp.eq.s32.totalorder %s205, 0
      %s208 = sadd.s32 %s207, 1
      %s209 = scalar_select %p206, %s207, %s208
      %p212 = pneg %p206
      %p213 = scmp.eq.s32.totalorder %s19, 1
      %p214 = por %p212, %p213
      %p215 = scmp.ne.s32.totalorder %s207, %s210
      %p216 = scmp.eq.s32.totalorder %s19, 0
      %p217 = por %p215, %p216
      %p218 = scmp.ne.s32.totalorder %s207, %s210
      %p219 = scmp.eq.s32.totalorder %s24, 1
      %p220 = por %p218, %p219
      %p221 = scmp.ne.s32.totalorder %s210, %s211
      %p222 = scmp.eq.s32.totalorder %s24, 0
      %p223 = por %p221, %p222
      %p224 = scmp.ne.s32.totalorder %s210, %s211
      %p225 = scmp.eq.s32.totalorder %s25, 1
      %p226 = por %p224, %p225
      %p228 = scmp.ne.s32.totalorder %s211, %s227
      %p229 = scmp.eq.s32.totalorder %s25, 0
      %p230 = por %p228, %p229
      %p231 = scmp.le.s32.totalorder 1, %s19
      %p232 = scmp.lt.s32.totalorder %s19, 3
      %p233 = pnand %p231, %p232
      %p234 = pneg %p233
      // Predicated region
      $region9: #{generator_forward.1} parent=5 // pred_check
        _
      $region10: #{generator_forward.1} parent=5 // pred_check_branch
        %236 = sbr.rel (%p233) target = $region12
      $region11: #{generator_forward.1} parent=5 // pred_region
        %s237 = ssub.s32 %s19, 1
        // Predicated region
        $region13: #{generator_forward.1} parent=11 // pred_check
          %p238 = pneg %p40
        $region14: #{generator_forward.1} parent=11 // pred_check_branch
          %240 = sbr.rel (%p238) target = $region16
        $region15: #{generator_forward.1} parent=11 // pred_region
          %s242 = ssub.s32 1024, 1024
          %243 = vsyncadd [#allocation5], %s242
          %s245 = sshll.u32 [#allocation4], 4
          %s246 = int_to_ptr.vmem [resolvable:$true] %s245
          %248 = dma.hbm_to_vmem [thread:$0]  %s0, 1024, %s246, [#allocation5]
        $region16: #{generator_forward.1} parent=11 // pred_fallthru
          _
        // Predicated region
        $region17: #{generator_forward.1} parent=11 // pred_check
          %p249 = pneg %p61
        $region18: #{generator_forward.1} parent=11 // pred_check_branch
          %251 = sbr.rel (%p249) target = $region20
        $region19: #{generator_forward.1} parent=11 // pred_region
          %s253 = ssub.s32 8192, 8192
          %254 = vsyncadd [#allocation7], %s253
          %s255 = sshll.u32 [#allocation6], 4
          %s256 = int_to_ptr.vmem [resolvable:$true] %s255
          %261 = dma.hbm_to_vmem [thread:$0]  %s1, 8192, %s256, [#allocation7], 64, 64, 4
        $region20: #{generator_forward.1} parent=11 // pred_fallthru
          _
        // Predicated region
        $region21: #{generator_forward.1} parent=11 // pred_check
          %p262 = pneg %p82
        $region22: #{generator_forward.1} parent=11 // pred_check_branch
          %264 = sbr.rel (%p262) target = $region24
        $region23: #{generator_forward.1} parent=11 // pred_region
          %s266 = ssub.s32 2048, 2048
          %267 = vsyncadd [#allocation7], %s266
          %s268 = sshll.u32 [#allocation8], 4
          %s269 = int_to_ptr.vmem [resolvable:$true] %s268
          %274 = dma.hbm_to_vmem [thread:$0]  %s2, 2048, %s269, [#allocation7], 128, 128, 8
        $region24: #{generator_forward.1} parent=11 // pred_fallthru
          _
        // Predicated region
        $region25: #{generator_forward.1} parent=11 // pred_check
          %p275 = pneg %p103
        $region26: #{generator_forward.1} parent=11 // pred_check_branch
          %277 = sbr.rel (%p275) target = $region28
        $region27: #{generator_forward.1} parent=11 // pred_region
          %s279 = ssub.s32 8192, 8192
          %280 = vsyncadd [#allocation10], %s279
          %s281 = sshll.u32 [#allocation9], 4
          %s282 = int_to_ptr.vmem [resolvable:$true] %s281
          %287 = dma.hbm_to_vmem [thread:$0]  %s3, 8192, %s282, [#allocation10], 256, 256, 16
        $region28: #{generator_forward.1} parent=11 // pred_fallthru
          _
        // Predicated region
        $region29: #{generator_forward.1} parent=11 // pred_check
          %p288 = pneg %p124
        $region30: #{generator_forward.1} parent=11 // pred_check_branch
          %290 = sbr.rel (%p288) target = $region32
        $region31: #{generator_forward.1} parent=11 // pred_region
          %s292 = ssub.s32 32768, 32768
          %293 = vsyncadd [#allocation10], %s292
          %s294 = sshll.u32 [#allocation11], 4
          %s295 = int_to_ptr.vmem [resolvable:$true] %s294
          %300 = dma.hbm_to_vmem [thread:$0]  %s4, 32768, %s295, [#allocation10], 512, 512, 32
        $region32: #{generator_forward.1} parent=11 // pred_fallthru
          _
        // Predicated region
        $region33: #{generator_forward.1} parent=11 // pred_check
          %p301 = pneg %p145
        $region34: #{generator_forward.1} parent=11 // pred_check_branch
          %303 = sbr.rel (%p301) target = $region36
        $region35: #{generator_forward.1} parent=11 // pred_region
          %s305 = ssub.s32 688, 688
          %306 = vsyncadd [#allocation13], %s305
          %s308 = sshll.u32 [#allocation12], 4
          %s309 = int_to_ptr.vmem [resolvable:$true] %s308
          %311 = dma.hbm_to_vmem [thread:$0]  %s6, 688, %s309, [#allocation13]
        $region36: #{generator_forward.1} parent=11 // pred_fallthru
          _
      $region12: #{generator_forward.1} parent=5 // pred_fallthru
        _
      %p312 = scmp.lt.s32.totalorder %s19, 2
      // Predicated region
      $region37: #{generator_forward.1} parent=5 // pred_check
        %p313 = pneg %p312
      $region38: #{generator_forward.1} parent=5 // pred_check_branch
        %315 = sbr.rel (%p313) target = $region40
      $region39: #{generator_forward.1} parent=5 // pred_region
        // Predicated region
        $region41: #{generator_forward.1} parent=39 // pred_check
          %p316 = pneg %p165
        $region42: #{generator_forward.1} parent=39 // pred_check_branch
          %318 = sbr.rel (%p316) target = $region44
        $region43: #{generator_forward.1} parent=39 // pred_region
          %s319 = sand.u32 %s19, 1
          %s320 = scalar_lea.sflag [#allocation5], %s319
          %s321 = sand.u32 %s155, 1
          %s322 = smul.addr %s321, 16
          %s323 = scalar_lea.vmem [#allocation14], %s322
          %s324 = smul.u32 16, %s19
          %s326 = ssub.s32 256, 256
          %327 = vsyncadd %s320, %s326
          %s328 = smul.addr %s324, 16
          %s329 = scalar_lea.hbm %s7, %s328
          %s331 = sshll.u32 %s323, 4
          %s332 = int_to_ptr.vmem [resolvable:$true] %s331
          %334 = dma.hbm_to_vmem [thread:$0]  %s329, 256, %s332, %s320
        $region44: #{generator_forward.1} parent=39 // pred_fallthru
          _
        // Predicated region
        $region45: #{generator_forward.1} parent=39 // pred_check
          %p335 = pneg %p191
        $region46: #{generator_forward.1} parent=39 // pred_check_branch
          %337 = sbr.rel (%p335) target = $region48
        $region47: #{generator_forward.1} parent=39 // pred_region
          %s338 = sand.u32 %s19, 1
          %s339 = scalar_lea.sflag [#allocation5], %s338
          %s340 = sand.u32 %s181, 1
          %s341 = smul.addr %s340, 16
          %s342 = scalar_lea.vmem [#allocation15], %s341
          %s343 = smul.u32 16, %s19
          %s345 = ssub.s32 256, 256
          %346 = vsyncadd %s339, %s345
          %s347 = smul.addr %s343, 16
          %s348 = scalar_lea.hbm %s8, %s347
          %s350 = sshll.u32 %s342, 4
          %s351 = int_to_ptr.vmem [resolvable:$true] %s350
          %353 = dma.hbm_to_vmem [thread:$0]  %s348, 256, %s351, %s339
        $region48: #{generator_forward.1} parent=39 // pred_fallthru
          _
      $region40: #{generator_forward.1} parent=5 // pred_fallthru
        _
      %p354 = scmp.le.s32.totalorder 1, %s19
      %p355 = scmp.lt.s32.totalorder %s19, 3
      %p356 = pnand %p354, %p355
      %p357 = pneg %p356
      // Predicated region
      $region49: #{generator_forward.1} parent=5 // pred_check
        _
      $region50: #{generator_forward.1} parent=5 // pred_check_branch
        %359 = sbr.rel (%p356) target = $region52
      $region51: #{generator_forward.1} parent=5 // pred_region
        %s360 = ssub.s32 %s19, 1
        // Predicated region
        $region53: #{generator_forward.1} parent=51 // pred_check
          %p361 = pneg %p40
        $region54: #{generator_forward.1} parent=51 // pred_check_branch
          %363 = sbr.rel (%p361) target = $region56
        $region55: #{generator_forward.1} parent=51 // pred_region
          %364 = dma.done [#allocation5], 1024
        $region56: #{generator_forward.1} parent=51 // pred_fallthru
          _
        // Predicated region
        $region57: #{generator_forward.1} parent=51 // pred_check
          %p365 = pneg %p61
        $region58: #{generator_forward.1} parent=51 // pred_check_branch
          %367 = sbr.rel (%p365) target = $region60
        $region59: #{generator_forward.1} parent=51 // pred_region
          %368 = dma.done [#allocation7], 8192
        $region60: #{generator_forward.1} parent=51 // pred_fallthru
          _
        // Predicated region
        $region61: #{generator_forward.1} parent=51 // pred_check
          %p369 = pneg %p82
        $region62: #{generator_forward.1} parent=51 // pred_check_branch
          %371 = sbr.rel (%p369) target = $region64
        $region63: #{generator_forward.1} parent=51 // pred_region
          %372 = dma.done [#allocation7], 2048
        $region64: #{generator_forward.1} parent=51 // pred_fallthru
          _
        // Predicated region
        $region65: #{generator_forward.1} parent=51 // pred_check
          %p373 = pneg %p103
        $region66: #{generator_forward.1} parent=51 // pred_check_branch
          %375 = sbr.rel (%p373) target = $region68
        $region67: #{generator_forward.1} parent=51 // pred_region
          %376 = dma.done [#allocation10], 8192
        $region68: #{generator_forward.1} parent=51 // pred_fallthru
          _
        // Predicated region
        $region69: #{generator_forward.1} parent=51 // pred_check
          %p377 = pneg %p124
        $region70: #{generator_forward.1} parent=51 // pred_check_branch
          %379 = sbr.rel (%p377) target = $region72
        $region71: #{generator_forward.1} parent=51 // pred_region
          %380 = dma.done [#allocation10], 32768
        $region72: #{generator_forward.1} parent=51 // pred_fallthru
          _
        // Predicated region
        $region73: #{generator_forward.1} parent=51 // pred_check
          %p381 = pneg %p145
        $region74: #{generator_forward.1} parent=51 // pred_check_branch
          %383 = sbr.rel (%p381) target = $region76
        $region75: #{generator_forward.1} parent=51 // pred_region
          %384 = dma.done [#allocation13], 688
        $region76: #{generator_forward.1} parent=51 // pred_fallthru
          _
        %s385 = sand.u32 %s24, 1
        %s386 = scalar_lea.sflag [#allocation5], %s385
        %s387 = sand.u32 %s158, 1
        %s388 = smul.addr %s387, 16
        %s389 = scalar_lea.vmem [#allocation14], %s388
        // Predicated region
        $region77: #{generator_forward.1} parent=51 // pred_check
          %p390 = pneg %p171
        $region78: #{generator_forward.1} parent=51 // pred_check_branch
          %392 = sbr.rel (%p390) target = $region80
        $region79: #{generator_forward.1} parent=51 // pred_region
          %393 = dma.done %s386, 256
        $region80: #{generator_forward.1} parent=51 // pred_fallthru
          _
        %s394 = sand.u32 %s24, 1
        %s395 = scalar_lea.sflag [#allocation5], %s394
        %s396 = sand.u32 %s184, 1
        %s397 = smul.addr %s396, 16
        %s398 = scalar_lea.vmem [#allocation15], %s397
        // Predicated region
        $region81: #{generator_forward.1} parent=51 // pred_check
          %p399 = pneg %p197
        $region82: #{generator_forward.1} parent=51 // pred_check_branch
          %401 = sbr.rel (%p399) target = $region84
        $region83: #{generator_forward.1} parent=51 // pred_region
          %402 = dma.done %s395, 256
        $region84: #{generator_forward.1} parent=51 // pred_fallthru
          _
        %p403 = pneg %p40
        %p404 = pneg %p37
        %p405 = pneg %p61
        %p406 = pneg %p58
        %p407 = pneg %p82
        %p408 = pneg %p79
        %p409 = pneg %p103
        %p410 = pneg %p100
        %p411 = pneg %p124
        %p412 = pneg %p121
        %p413 = pneg %p145
        %p414 = pneg %p142
        %s415 = sand.u32 %s24, 1
        %s416 = scalar_lea.sflag [#allocation5], %s415
        %s417 = sand.u32 %s158, 1
        %s418 = smul.addr %s417, 16
        %s419 = scalar_lea.vmem [#allocation14], %s418
        %p420 = pneg %p171
        %p421 = pneg %p168
        %s422 = sand.u32 %s24, 1
        %s423 = scalar_lea.sflag [#allocation5], %s422
        %s424 = sand.u32 %s184, 1
        %s425 = smul.addr %s424, 16
        %s426 = scalar_lea.vmem [#allocation15], %s425
        %p427 = pneg %p197
        %p428 = pneg %p194
        %p429 = pneg %p223
        %p430 = pneg %p220
        %s431 = smul.u32 16, %s24
        %p432 = scmp.lt.s32.totalorder %s431, 31
        %s433 = scalar_select %p432, %s431, 31
        %s434 = smul.addr %s433, 8
        %s435 = scalar_lea.vmem %s9, %s434
        %s436 = smul.u32 16, %s24
        %s437 = smul.u32 16, %s24
        %s438 = smul.u32 16, %s24
        %p439 = scmp.lt.s32.totalorder %s438, 31
        %s440 = scalar_select %p439, %s438, 31
        %s441 = smul.addr %s440, 8
        %s442 = scalar_lea.vmem %s9, %s441
        %s443 = smul.u32 16, %s24
        %s445 = smul.u32 %s24, 4
        %s446 = smul.u32 %s445, 128
        %s447 = smul.addr %s446, 128
        %s448 = scalar_lea.hbm %s5, %s447
        // Predicated region
        $region85: #{generator_forward.1} parent=51 // pred_check
          _
        $region86: #{generator_forward.1} parent=51 // pred_check_branch
          %450 = sbr.rel target = $region88
        $region87: #{generator_forward.1} parent=51 // pred_region
          %451 = sst [smem:[#allocation18]] [#allocation17]
          %452 = sst [smem:[#allocation19]] [#allocation16]
        $region88: #{generator_forward.1} parent=51 // pred_fallthru
          _
        %454 = shalt.err (0)
        %s456 = sshll.u32 [#allocation2], 4
        %s457 = int_to_ptr.vmem [resolvable:$true] %s456
        %459 = dma.hbm_to_vmem [thread:$0]  %s448, 16384, %s457, [#allocation3]
        %v460 = vld [vmem:[#allocation4] sm:$0xff]
        %v461 = vld [vmem:[#allocation4 + $0x8] sm:$0xff]
        %v462 = vld [vmem:[#allocation4 + $0x10] sm:$0xff]
        %v463 = vld [vmem:[#allocation4 + $0x18] sm:$0xff]
        %v464 = vld [vmem:[#allocation4 + $0x20] sm:$0xff]
        %v465 = vld [vmem:[#allocation4 + $0x28] sm:$0xff]
        %v466 = vld [vmem:[#allocation4 + $0x30] sm:$0xff]
        %v467 = vld [vmem:[#allocation4 + $0x38] sm:$0xff]
        %v468 = vpack.c.bf16 %v460, %v460
        %v469 = vpack.c.bf16 %v461, %v461
        %v470 = vpack.c.bf16 %v462, %v462
        %v471 = vpack.c.bf16 %v463, %v463
        %v472 = vpack.c.bf16 %v464, %v464
        %v473 = vpack.c.bf16 %v465, %v465
        %v474 = vpack.c.bf16 %v466, %v466
        %v475 = vpack.c.bf16 %v467, %v467
        %v476 = vld [vmem:[#allocation6] sm:$0xf]
        %v477 = vld [vmem:[#allocation6 + $0x4] sm:$0xf]
        %v478 = vld [vmem:[#allocation6 + $0x8] sm:$0xf]
        %v479 = vld [vmem:[#allocation6 + $0xc] sm:$0xf]
        %v480 = vld [vmem:[#allocation6 + $0x10] sm:$0xf]
        %v481 = vld [vmem:[#allocation6 + $0x14] sm:$0xf]
        %v482 = vld [vmem:[#allocation6 + $0x18] sm:$0xf]
        %v483 = vld [vmem:[#allocation6 + $0x1c] sm:$0xf]
        %v484 = vld [vmem:[#allocation6 + $0x20] sm:$0xf]
        %v485 = vld [vmem:[#allocation6 + $0x24] sm:$0xf]
        %v486 = vld [vmem:[#allocation6 + $0x28] sm:$0xf]
        %v487 = vld [vmem:[#allocation6 + $0x2c] sm:$0xf]
        %v488 = vld [vmem:[#allocation6 + $0x30] sm:$0xf]
        %v489 = vld [vmem:[#allocation6 + $0x34] sm:$0xf]
        %v490 = vld [vmem:[#allocation6 + $0x38] sm:$0xf]
        %v491 = vld [vmem:[#allocation6 + $0x3c] sm:$0xf]
        %v492 = vld [vmem:[#allocation6 + $0x40] sm:$0xf]
        %v493 = vld [vmem:[#allocation6 + $0x44] sm:$0xf]
        %v494 = vld [vmem:[#allocation6 + $0x48] sm:$0xf]
        %v495 = vld [vmem:[#allocation6 + $0x4c] sm:$0xf]
        %v496 = vld [vmem:[#allocation6 + $0x50] sm:$0xf]
        %v497 = vld [vmem:[#allocation6 + $0x54] sm:$0xf]
        %v498 = vld [vmem:[#allocation6 + $0x58] sm:$0xf]
        %v499 = vld [vmem:[#allocation6 + $0x5c] sm:$0xf]
        %v500 = vld [vmem:[#allocation6 + $0x60] sm:$0xf]
        %v501 = vld [vmem:[#allocation6 + $0x64] sm:$0xf]
        %v502 = vld [vmem:[#allocation6 + $0x68] sm:$0xf]
        %v503 = vld [vmem:[#allocation6 + $0x6c] sm:$0xf]
        %v504 = vld [vmem:[#allocation6 + $0x70] sm:$0xf]
        %v505 = vld [vmem:[#allocation6 + $0x74] sm:$0xf]
        %v506 = vld [vmem:[#allocation6 + $0x78] sm:$0xf]
        %v507 = vld [vmem:[#allocation6 + $0x7c] sm:$0xf]
        %v508 = vld [vmem:[#allocation6 + $0x80] sm:$0xf]
        %v509 = vld [vmem:[#allocation6 + $0x84] sm:$0xf]
        %v510 = vld [vmem:[#allocation6 + $0x88] sm:$0xf]
        %v511 = vld [vmem:[#allocation6 + $0x8c] sm:$0xf]
        %v512 = vld [vmem:[#allocation6 + $0x90] sm:$0xf]
        %v513 = vld [vmem:[#allocation6 + $0x94] sm:$0xf]
        %v514 = vld [vmem:[#allocation6 + $0x98] sm:$0xf]
        %v515 = vld [vmem:[#allocation6 + $0x9c] sm:$0xf]
        %v516 = vld [vmem:[#allocation6 + $0xa0] sm:$0xf]
        %v517 = vld [vmem:[#allocation6 + $0xa4] sm:$0xf]
        %v518 = vld [vmem:[#allocation6 + $0xa8] sm:$0xf]
        %v519 = vld [vmem:[#allocation6 + $0xac] sm:$0xf]
        %v520 = vld [vmem:[#allocation6 + $0xb0] sm:$0xf]
        %v521 = vld [vmem:[#allocation6 + $0xb4] sm:$0xf]
        %v522 = vld [vmem:[#allocation6 + $0xb8] sm:$0xf]
        %v523 = vld [vmem:[#allocation6 + $0xbc] sm:$0xf]
        %v524 = vld [vmem:[#allocation6 + $0xc0] sm:$0xf]
        %v525 = vld [vmem:[#allocation6 + $0xc4] sm:$0xf]
        %v526 = vld [vmem:[#allocation6 + $0xc8] sm:$0xf]
        %v527 = vld [vmem:[#allocation6 + $0xcc] sm:$0xf]
        %v528 = vld [vmem:[#allocation6 + $0xd0] sm:$0xf]
        %v529 = vld [vmem:[#allocation6 + $0xd4] sm:$0xf]
        %v530 = vld [vmem:[#allocation6 + $0xd8] sm:$0xf]
        %v531 = vld [vmem:[#allocation6 + $0xdc] sm:$0xf]
        %v532 = vld [vmem:[#allocation6 + $0xe0] sm:$0xf]
        %v533 = vld [vmem:[#allocation6 + $0xe4] sm:$0xf]
        %v534 = vld [vmem:[#allocation6 + $0xe8] sm:$0xf]
        %v535 = vld [vmem:[#allocation6 + $0xec] sm:$0xf]
        %v536 = vld [vmem:[#allocation6 + $0xf0] sm:$0xf]
        %v537 = vld [vmem:[#allocation6 + $0xf4] sm:$0xf]
        %v538 = vld [vmem:[#allocation6 + $0xf8] sm:$0xf]
        %v539 = vld [vmem:[#allocation6 + $0xfc] sm:$0xf]
        %v540 = vld [vmem:[#allocation6 + $0x100] sm:$0xf]
        %v541 = vld [vmem:[#allocation6 + $0x104] sm:$0xf]
        %v542 = vld [vmem:[#allocation6 + $0x108] sm:$0xf]
        %v543 = vld [vmem:[#allocation6 + $0x10c] sm:$0xf]
        %v544 = vld [vmem:[#allocation6 + $0x110] sm:$0xf]
        %v545 = vld [vmem:[#allocation6 + $0x114] sm:$0xf]
        %v546 = vld [vmem:[#allocation6 + $0x118] sm:$0xf]
        %v547 = vld [vmem:[#allocation6 + $0x11c] sm:$0xf]
        %v548 = vld [vmem:[#allocation6 + $0x120] sm:$0xf]
        %v549 = vld [vmem:[#allocation6 + $0x124] sm:$0xf]
        %v550 = vld [vmem:[#allocation6 + $0x128] sm:$0xf]
        %v551 = vld [vmem:[#allocation6 + $0x12c] sm:$0xf]
        %v552 = vld [vmem:[#allocation6 + $0x130] sm:$0xf]
        %v553 = vld [vmem:[#allocation6 + $0x134] sm:$0xf]
        %v554 = vld [vmem:[#allocation6 + $0x138] sm:$0xf]
        %v555 = vld [vmem:[#allocation6 + $0x13c] sm:$0xf]
        %v556 = vld [vmem:[#allocation6 + $0x140] sm:$0xf]
        %v557 = vld [vmem:[#allocation6 + $0x144] sm:$0xf]
        %v558 = vld [vmem:[#allocation6 + $0x148] sm:$0xf]
        %v559 = vld [vmem:[#allocation6 + $0x14c] sm:$0xf]
        %v560 = vld [vmem:[#allocation6 + $0x150] sm:$0xf]
        %v561 = vld [vmem:[#allocation6 + $0x154] sm:$0xf]
        %v562 = vld [vmem:[#allocation6 + $0x158] sm:$0xf]
        %v563 = vld [vmem:[#allocation6 + $0x15c] sm:$0xf]
        %v564 = vld [vmem:[#allocation6 + $0x160] sm:$0xf]
        %v565 = vld [vmem:[#allocation6 + $0x164] sm:$0xf]
        %v566 = vld [vmem:[#allocation6 + $0x168] sm:$0xf]
        %v567 = vld [vmem:[#allocation6 + $0x16c] sm:$0xf]
        %v568 = vld [vmem:[#allocation6 + $0x170] sm:$0xf]
        %v569 = vld [vmem:[#allocation6 + $0x174] sm:$0xf]
        %v570 = vld [vmem:[#allocation6 + $0x178] sm:$0xf]
        %v571 = vld [vmem:[#allocation6 + $0x17c] sm:$0xf]
        %v572 = vld [vmem:[#allocation6 + $0x180] sm:$0xf]
        %v573 = vld [vmem:[#allocation6 + $0x184] sm:$0xf]
        %v574 = vld [vmem:[#allocation6 + $0x188] sm:$0xf]
        %v575 = vld [vmem:[#allocation6 + $0x18c] sm:$0xf]
        %v576 = vld [vmem:[#allocation6 + $0x190] sm:$0xf]
        %v577 = vld [vmem:[#allocation6 + $0x194] sm:$0xf]
        %v578 = vld [vmem:[#allocation6 + $0x198] sm:$0xf]
        %v579 = vld [vmem:[#allocation6 + $0x19c] sm:$0xf]
        %v580 = vld [vmem:[#allocation6 + $0x1a0] sm:$0xf]
        %v581 = vld [vmem:[#allocation6 + $0x1a4] sm:$0xf]
        %v582 = vld [vmem:[#allocation6 + $0x1a8] sm:$0xf]
        %v583 = vld [vmem:[#allocation6 + $0x1ac] sm:$0xf]
        %v584 = vld [vmem:[#allocation6 + $0x1b0] sm:$0xf]
        %v585 = vld [vmem:[#allocation6 + $0x1b4] sm:$0xf]
        %v586 = vld [vmem:[#allocation6 + $0x1b8] sm:$0xf]
        %v587 = vld [vmem:[#allocation6 + $0x1bc] sm:$0xf]
        %v588 = vld [vmem:[#allocation6 + $0x1c0] sm:$0xf]
        %v589 = vld [vmem:[#allocation6 + $0x1c4] sm:$0xf]
        %v590 = vld [vmem:[#allocation6 + $0x1c8] sm:$0xf]
        %v591 = vld [vmem:[#allocation6 + $0x1cc] sm:$0xf]
        %v592 = vld [vmem:[#allocation6 + $0x1d0] sm:$0xf]
        %v593 = vld [vmem:[#allocation6 + $0x1d4] sm:$0xf]
        %v594 = vld [vmem:[#allocation6 + $0x1d8] sm:$0xf]
        %v595 = vld [vmem:[#allocation6 + $0x1dc] sm:$0xf]
        %v596 = vld [vmem:[#allocation6 + $0x1e0] sm:$0xf]
        %v597 = vld [vmem:[#allocation6 + $0x1e4] sm:$0xf]
        %v598 = vld [vmem:[#allocation6 + $0x1e8] sm:$0xf]
        %v599 = vld [vmem:[#allocation6 + $0x1ec] sm:$0xf]
        %v600 = vld [vmem:[#allocation6 + $0x1f0] sm:$0xf]
        %v601 = vld [vmem:[#allocation6 + $0x1f4] sm:$0xf]
        %v602 = vld [vmem:[#allocation6 + $0x1f8] sm:$0xf]
        %v603 = vld [vmem:[#allocation6 + $0x1fc] sm:$0xf]
        %v604 = vld [vmem:[#allocation12] sm:$0x1]
        %v606 = vlaneseq
        %v607 = vshrl.u32 %v606, 7
        %v608 = vsub.s32 0, %v607
        %v609 = vrot.slane %v604, %v608
        %v739 = vunpack.c.l.b16 %v476
        %v740 = vunpack.c.l.b16 %v477
        %v741 = vunpack.c.l.b16 %v478
        %v742 = vunpack.c.l.b16 %v479
        %v743 = vunpack.c.l.b16 %v480
        %v744 = vunpack.c.l.b16 %v481
        %v745 = vunpack.c.l.b16 %v482
        %v746 = vunpack.c.l.b16 %v483
        %v747 = vunpack.c.l.b16 %v484
        %v748 = vunpack.c.l.b16 %v485
        %v749 = vunpack.c.l.b16 %v486
        %v750 = vunpack.c.l.b16 %v487
        %v751 = vunpack.c.l.b16 %v488
        %v752 = vunpack.c.l.b16 %v489
        %v753 = vunpack.c.l.b16 %v490
        %v754 = vunpack.c.l.b16 %v491
        %v755 = vunpack.c.l.b16 %v492
        %v756 = vunpack.c.l.b16 %v493
        %v757 = vunpack.c.l.b16 %v494
        %v758 = vunpack.c.l.b16 %v495
        %v759 = vunpack.c.l.b16 %v496
        %v760 = vunpack.c.l.b16 %v497
        %v761 = vunpack.c.l.b16 %v498
        %v762 = vunpack.c.l.b16 %v499
        %v763 = vunpack.c.l.b16 %v500
        %v764 = vunpack.c.l.b16 %v501
        %v765 = vunpack.c.l.b16 %v502
        %v766 = vunpack.c.l.b16 %v503
        %v767 = vunpack.c.l.b16 %v504
        %v768 = vunpack.c.l.b16 %v505
        %v769 = vunpack.c.l.b16 %v506
        %v770 = vunpack.c.l.b16 %v507
        %v771 = vunpack.c.l.b16 %v508
        %v772 = vunpack.c.l.b16 %v509
        %v773 = vunpack.c.l.b16 %v510
        %v774 = vunpack.c.l.b16 %v511
        %v775 = vunpack.c.l.b16 %v512
        %v776 = vunpack.c.l.b16 %v513
        %v777 = vunpack.c.l.b16 %v514
        %v778 = vunpack.c.l.b16 %v515
        %v779 = vunpack.c.l.b16 %v516
        %v780 = vunpack.c.l.b16 %v517
        %v781 = vunpack.c.l.b16 %v518
        %v782 = vunpack.c.l.b16 %v519
        %v783 = vunpack.c.l.b16 %v520
        %v784 = vunpack.c.l.b16 %v521
        %v785 = vunpack.c.l.b16 %v522
        %v786 = vunpack.c.l.b16 %v523
        %v787 = vunpack.c.l.b16 %v524
        %v788 = vunpack.c.l.b16 %v525
        %v789 = vunpack.c.l.b16 %v526
        %v790 = vunpack.c.l.b16 %v527
        %v791 = vunpack.c.l.b16 %v528
        %v792 = vunpack.c.l.b16 %v529
        %v793 = vunpack.c.l.b16 %v530
        %v794 = vunpack.c.l.b16 %v531
        %v795 = vunpack.c.l.b16 %v532
        %v796 = vunpack.c.l.b16 %v533
        %v797 = vunpack.c.l.b16 %v534
        %v798 = vunpack.c.l.b16 %v535
        %v799 = vunpack.c.l.b16 %v536
        %v800 = vunpack.c.l.b16 %v537
        %v801 = vunpack.c.l.b16 %v538
        %v802 = vunpack.c.l.b16 %v539
        %v803 = vunpack.c.l.b16 %v540
        %v804 = vunpack.c.l.b16 %v541
        %v805 = vunpack.c.l.b16 %v542
        %v806 = vunpack.c.l.b16 %v543
        %v807 = vunpack.c.l.b16 %v544
        %v808 = vunpack.c.l.b16 %v545
        %v809 = vunpack.c.l.b16 %v546
        %v810 = vunpack.c.l.b16 %v547
        %v811 = vunpack.c.l.b16 %v548
        %v812 = vunpack.c.l.b16 %v549
        %v813 = vunpack.c.l.b16 %v550
        %v814 = vunpack.c.l.b16 %v551
        %v815 = vunpack.c.l.b16 %v552
        %v816 = vunpack.c.l.b16 %v553
        %v817 = vunpack.c.l.b16 %v554
        %v818 = vunpack.c.l.b16 %v555
        %v819 = vunpack.c.l.b16 %v556
        %v820 = vunpack.c.l.b16 %v557
        %v821 = vunpack.c.l.b16 %v558
        %v822 = vunpack.c.l.b16 %v559
        %v823 = vunpack.c.l.b16 %v560
        %v824 = vunpack.c.l.b16 %v561
        %v825 = vunpack.c.l.b16 %v562
        %v826 = vunpack.c.l.b16 %v563
        %v827 = vunpack.c.l.b16 %v564
        %v828 = vunpack.c.l.b16 %v565
        %v829 = vunpack.c.l.b16 %v566
        %v830 = vunpack.c.l.b16 %v567
        %v831 = vunpack.c.l.b16 %v568
        %v832 = vunpack.c.l.b16 %v569
        %v833 = vunpack.c.l.b16 %v570
        %v834 = vunpack.c.l.b16 %v571
        %v835 = vunpack.c.l.b16 %v572
        %v836 = vunpack.c.l.b16 %v573
        %v837 = vunpack.c.l.b16 %v574
        %v838 = vunpack.c.l.b16 %v575
        %v839 = vunpack.c.l.b16 %v576
        %v840 = vunpack.c.l.b16 %v577
        %v841 = vunpack.c.l.b16 %v578
        %v842 = vunpack.c.l.b16 %v579
        %v843 = vunpack.c.l.b16 %v580
        %v844 = vunpack.c.l.b16 %v581
        %v845 = vunpack.c.l.b16 %v582
        %v846 = vunpack.c.l.b16 %v583
        %v847 = vunpack.c.l.b16 %v584
        %v848 = vunpack.c.l.b16 %v585
        %v849 = vunpack.c.l.b16 %v586
        %v850 = vunpack.c.l.b16 %v587
        %v851 = vunpack.c.l.b16 %v588
        %v852 = vunpack.c.l.b16 %v589
        %v853 = vunpack.c.l.b16 %v590
        %v854 = vunpack.c.l.b16 %v591
        %v855 = vunpack.c.l.b16 %v592
        %v856 = vunpack.c.l.b16 %v593
        %v857 = vunpack.c.l.b16 %v594
        %v858 = vunpack.c.l.b16 %v595
        %v859 = vunpack.c.l.b16 %v596
        %v860 = vunpack.c.l.b16 %v597
        %v861 = vunpack.c.l.b16 %v598
        %v862 = vunpack.c.l.b16 %v599
        %v863 = vunpack.c.l.b16 %v600
        %v864 = vunpack.c.l.b16 %v601
        %v865 = vunpack.c.l.b16 %v602
        %v866 = vunpack.c.l.b16 %v603
        %v867 = vpack.c.b16 %v740, %v739
        %v868 = vpack.c.b16 %v742, %v741
        %v869 = vpack.c.b16 %v744, %v743
        %v870 = vpack.c.b16 %v746, %v745
        %v871 = vpack.c.b16 %v748, %v747
        %v872 = vpack.c.b16 %v750, %v749
        %v873 = vpack.c.b16 %v752, %v751
        %v874 = vpack.c.b16 %v754, %v753
        %v875 = vpack.c.b16 %v756, %v755
        %v876 = vpack.c.b16 %v758, %v757
        %v877 = vpack.c.b16 %v760, %v759
        %v878 = vpack.c.b16 %v762, %v761
        %v879 = vpack.c.b16 %v764, %v763
        %v880 = vpack.c.b16 %v766, %v765
        %v881 = vpack.c.b16 %v768, %v767
        %v882 = vpack.c.b16 %v770, %v769
        %v883 = vpack.c.b16 %v772, %v771
        %v884 = vpack.c.b16 %v774, %v773
        %v885 = vpack.c.b16 %v776, %v775
        %v886 = vpack.c.b16 %v778, %v777
        %v887 = vpack.c.b16 %v780, %v779
        %v888 = vpack.c.b16 %v782, %v781
        %v889 = vpack.c.b16 %v784, %v783
        %v890 = vpack.c.b16 %v786, %v785
        %v891 = vpack.c.b16 %v788, %v787
        %v892 = vpack.c.b16 %v790, %v789
        %v893 = vpack.c.b16 %v792, %v791
        %v894 = vpack.c.b16 %v794, %v793
        %v895 = vpack.c.b16 %v796, %v795
        %v896 = vpack.c.b16 %v798, %v797
        %v897 = vpack.c.b16 %v800, %v799
        %v898 = vpack.c.b16 %v802, %v801
        %v899 = vpack.c.b16 %v804, %v803
        %v900 = vpack.c.b16 %v806, %v805
        %v901 = vpack.c.b16 %v808, %v807
        %v902 = vpack.c.b16 %v810, %v809
        %v903 = vpack.c.b16 %v812, %v811
        %v904 = vpack.c.b16 %v814, %v813
        %v905 = vpack.c.b16 %v816, %v815
        %v906 = vpack.c.b16 %v818, %v817
        %v907 = vpack.c.b16 %v820, %v819
        %v908 = vpack.c.b16 %v822, %v821
        %v909 = vpack.c.b16 %v824, %v823
        %v910 = vpack.c.b16 %v826, %v825
        %v911 = vpack.c.b16 %v828, %v827
        %v912 = vpack.c.b16 %v830, %v829
        %v913 = vpack.c.b16 %v832, %v831
        %v914 = vpack.c.b16 %v834, %v833
        %v915 = vpack.c.b16 %v836, %v835
        %v916 = vpack.c.b16 %v838, %v837
        %v917 = vpack.c.b16 %v840, %v839
        %v918 = vpack.c.b16 %v842, %v841
        %v919 = vpack.c.b16 %v844, %v843
        %v920 = vpack.c.b16 %v846, %v845
        %v921 = vpack.c.b16 %v848, %v847
        %v922 = vpack.c.b16 %v850, %v849
        %v923 = vpack.c.b16 %v852, %v851
        %v924 = vpack.c.b16 %v854, %v853
        %v925 = vpack.c.b16 %v856, %v855
        %v926 = vpack.c.b16 %v858, %v857
        %v927 = vpack.c.b16 %v860, %v859
        %v928 = vpack.c.b16 %v862, %v861
        %v929 = vpack.c.b16 %v864, %v863
        %v930 = vpack.c.b16 %v866, %v865
        %995 = vmatprep.subr.bf16.mxu0 0
        %996 = vmatpush1.bf16.msra.mxu0 %v867
        %997 = vmatprep.subr.bf16.mxu0 0
        %998 = vmatpush1.bf16.msra.mxu0 %v868
        %999 = vmatprep.subr.bf16.mxu0 0
        %1000 = vmatpush1.bf16.msra.mxu0 %v869
        %1001 = vmatprep.subr.bf16.mxu0 0
        %1002 = vmatpush1.bf16.msra.mxu0 %v870
        %1003 = vmatprep.subr.bf16.mxu0 0
        %1004 = vmatpush1.bf16.msra.mxu0 %v871
        %1005 = vmatprep.subr.bf16.mxu0 0
        %1006 = vmatpush1.bf16.msra.mxu0 %v872
        %1007 = vmatprep.subr.bf16.mxu0 0
        %1008 = vmatpush1.bf16.msra.mxu0 %v873
        %1009 = vmatprep.subr.bf16.mxu0 0
        %1010 = vmatpush1.bf16.msra.mxu0 %v874
        %1011 = vmatprep.subr.bf16.mxu0 0
        %1012 = vmatpush1.bf16.msra.mxu0 %v875
        %1013 = vmatprep.subr.bf16.mxu0 0
        %1014 = vmatpush1.bf16.msra.mxu0 %v876
        %1015 = vmatprep.subr.bf16.mxu0 0
        %1016 = vmatpush1.bf16.msra.mxu0 %v877
        %1017 = vmatprep.subr.bf16.mxu0 0
        %1018 = vmatpush1.bf16.msra.mxu0 %v878
        %1019 = vmatprep.subr.bf16.mxu0 0
        %1020 = vmatpush1.bf16.msra.mxu0 %v879
        %1021 = vmatprep.subr.bf16.mxu0 0
        %1022 = vmatpush1.bf16.msra.mxu0 %v880
        %1023 = vmatprep.subr.bf16.mxu0 0
        %1024 = vmatpush1.bf16.msra.mxu0 %v881
        %1025 = vmatprep.subr.bf16.mxu0 0
        %1026 = vmatpush1.bf16.msra.mxu0 %v882
        %1027 = vmatprep.mubr.bf16.mxu0 %v469
        %1028 = vmatmul.mubr.bf16.gmra.mrb[0].mxu0 %v468
        %v1029 = vpop.f32.mrb[0].mxu0
        %v1030 = vadd.f32 %v609, %v1029
        %v1031 = vpop.f32.mrb[0].mxu0
        %v1032 = vpop.f32.mrb[0].mxu0
        %v1033 = vpop.f32.mrb[0].mxu0
        %1034 = vdwg.mxu0
        %1035 = vmatprep.subr.bf16.mxu0 0
        %1036 = vmatpush1.bf16.msra.mxu0 %v883
        %1037 = vmatprep.subr.bf16.mxu0 0
        %1038 = vmatpush1.bf16.msra.mxu0 %v884
        %1039 = vmatprep.subr.bf16.mxu0 0
        %1040 = vmatpush1.bf16.msra.mxu0 %v885
        %1041 = vmatprep.subr.bf16.mxu0 0
        %1042 = vmatpush1.bf16.msra.mxu0 %v886
        %1043 = vmatprep.subr.bf16.mxu0 0
        %1044 = vmatpush1.bf16.msra.mxu0 %v887
        %1045 = vmatprep.subr.bf16.mxu0 0
        %1046 = vmatpush1.bf16.msra.mxu0 %v888
        %1047 = vmatprep.subr.bf16.mxu0 0
        %1048 = vmatpush1.bf16.msra.mxu0 %v889
        %1049 = vmatprep.subr.bf16.mxu0 0
        %1050 = vmatpush1.bf16.msra.mxu0 %v890
        %1051 = vmatprep.subr.bf16.mxu0 0
        %1052 = vmatpush1.bf16.msra.mxu0 %v891
        %1053 = vmatprep.subr.bf16.mxu0 0
        %1054 = vmatpush1.bf16.msra.mxu0 %v892
        %1055 = vmatprep.subr.bf16.mxu0 0
        %1056 = vmatpush1.bf16.msra.mxu0 %v893
        %1057 = vmatprep.subr.bf16.mxu0 0
        %1058 = vmatpush1.bf16.msra.mxu0 %v894
        %1059 = vmatprep.subr.bf16.mxu0 0
        %1060 = vmatpush1.bf16.msra.mxu0 %v895
        %1061 = vmatprep.subr.bf16.mxu0 0
        %1062 = vmatpush1.bf16.msra.mxu0 %v896
        %1063 = vmatprep.subr.bf16.mxu0 0
        %1064 = vmatpush1.bf16.msra.mxu0 %v897
        %1065 = vmatprep.subr.bf16.mxu0 0
        %1066 = vmatpush1.bf16.msra.mxu0 %v898
        %1067 = vmatprep.mubr.bf16.mxu0 %v471
        %1068 = vmatmul.mubr.bf16.gmra.mrb[0].mxu0 %v470
        %v1069 = vpop.f32.mrb[0].mxu0
        %v1070 = vadd.f32 %v1030, %v1069
        %v1071 = vpop.f32.mrb[0].mxu0
        %v1072 = vpop.f32.mrb[0].mxu0
        %v1073 = vpop.f32.mrb[0].mxu0
        %1074 = vdwg.mxu0
        %1075 = vmatprep.subr.bf16.mxu0 0
        %1076 = vmatpush1.bf16.msra.mxu0 %v899
        %1077 = vmatprep.subr.bf16.mxu0 0
        %1078 = vmatpush1.bf16.msra.mxu0 %v900
        %1079 = vmatprep.subr.bf16.mxu0 0
        %1080 = vmatpush1.bf16.msra.mxu0 %v901
        %1081 = vmatprep.subr.bf16.mxu0 0
        %1082 = vmatpush1.bf16.msra.mxu0 %v902
        %1083 = vmatprep.subr.bf16.mxu0 0
        %1084 = vmatpush1.bf16.msra.mxu0 %v903
        %1085 = vmatprep.subr.bf16.mxu0 0
        %1086 = vmatpush1.bf16.msra.mxu0 %v904
        %1087 = vmatprep.subr.bf16.mxu0 0
        %1088 = vmatpush1.bf16.msra.mxu0 %v905
        %1089 = vmatprep.subr.bf16.mxu0 0
        %1090 = vmatpush1.bf16.msra.mxu0 %v906
        %1091 = vmatprep.subr.bf16.mxu0 0
        %1092 = vmatpush1.bf16.msra.mxu0 %v907
        %1093 = vmatprep.subr.bf16.mxu0 0
        %1094 = vmatpush1.bf16.msra.mxu0 %v908
        %1095 = vmatprep.subr.bf16.mxu0 0
        %1096 = vmatpush1.bf16.msra.mxu0 %v909
        %1097 = vmatprep.subr.bf16.mxu0 0
        %1098 = vmatpush1.bf16.msra.mxu0 %v910
        %1099 = vmatprep.subr.bf16.mxu0 0
        %1100 = vmatpush1.bf16.msra.mxu0 %v911
        %1101 = vmatprep.subr.bf16.mxu0 0
        %1102 = vmatpush1.bf16.msra.mxu0 %v912
        %1103 = vmatprep.subr.bf16.mxu0 0
        %1104 = vmatpush1.bf16.msra.mxu0 %v913
        %1105 = vmatprep.subr.bf16.mxu0 0
        %1106 = vmatpush1.bf16.msra.mxu0 %v914
        %1107 = vmatprep.mubr.bf16.mxu0 %v473
        %1108 = vmatmul.mubr.bf16.gmra.mrb[0].mxu0 %v472
        %v1109 = vpop.f32.mrb[0].mxu0
        %v1110 = vadd.f32 %v1070, %v1109
        %v1111 = vpop.f32.mrb[0].mxu0
        %v1112 = vpop.f32.mrb[0].mxu0
        %v1113 = vpop.f32.mrb[0].mxu0
        %1114 = vdwg.mxu0
        %1115 = vmatprep.subr.bf16.mxu0 0
        %1116 = vmatpush1.bf16.msra.mxu0 %v915
        %1117 = vmatprep.subr.bf16.mxu0 0
        %1118 = vmatpush1.bf16.msra.mxu0 %v916
        %1119 = vmatprep.subr.bf16.mxu0 0
        %1120 = vmatpush1.bf16.msra.mxu0 %v917
        %1121 = vmatprep.subr.bf16.mxu0 0
        %1122 = vmatpush1.bf16.msra.mxu0 %v918
        %1123 = vmatprep.subr.bf16.mxu0 0
        %1124 = vmatpush1.bf16.msra.mxu0 %v919
        %1125 = vmatprep.subr.bf16.mxu0 0
        %1126 = vmatpush1.bf16.msra.mxu0 %v920
        %1127 = vmatprep.subr.bf16.mxu0 0
        %1128 = vmatpush1.bf16.msra.mxu0 %v921
        %1129 = vmatprep.subr.bf16.mxu0 0
        %1130 = vmatpush1.bf16.msra.mxu0 %v922
        %1131 = vmatprep.subr.bf16.mxu0 0
        %1132 = vmatpush1.bf16.msra.mxu0 %v923
        %1133 = vmatprep.subr.bf16.mxu0 0
        %1134 = vmatpush1.bf16.msra.mxu0 %v924
        %1135 = vmatprep.subr.bf16.mxu0 0
        %1136 = vmatpush1.bf16.msra.mxu0 %v925
        %1137 = vmatprep.subr.bf16.mxu0 0
        %1138 = vmatpush1.bf16.msra.mxu0 %v926
        %1139 = vmatprep.subr.bf16.mxu0 0
        %1140 = vmatpush1.bf16.msra.mxu0 %v927
        %1141 = vmatprep.subr.bf16.mxu0 0
        %1142 = vmatpush1.bf16.msra.mxu0 %v928
        %1143 = vmatprep.subr.bf16.mxu0 0
        %1144 = vmatpush1.bf16.msra.mxu0 %v929
        %1145 = vmatprep.subr.bf16.mxu0 0
        %1146 = vmatpush1.bf16.msra.mxu0 %v930
        %1147 = vmatprep.mubr.bf16.mxu0 %v475
        %1148 = vmatmul.mubr.bf16.gmra.mrb[0].mxu0 %v474
        %v1149 = vpop.f32.mrb[0].mxu0
        %v1150 = vadd.f32 %v1110, %v1149
        %v1151 = vpop.f32.mrb[0].mxu0
        %v1152 = vpop.f32.mrb[0].mxu0
        %v1153 = vpop.f32.mrb[0].mxu0
        %1154 = vdwg.mxu0
        %vm1155 = vcmp.gt.f32.partialorder %v1150, 0.0
        %v1156 = vmul.f32 %v1150, 0.2
        %v1157 = vsel %vm1155, %v1150, %v1156
        %v1158 = vpack.c.bf16 %v1157, %v1157
        %v1159 = vld [vmem:[#allocation8] sm:$0xff]
        %v1160 = vld [vmem:[#allocation8 + $0x8] sm:$0xff]
        %v1161 = vld [vmem:[#allocation8 + $0x10] sm:$0xff]
        %v1162 = vld [vmem:[#allocation8 + $0x18] sm:$0xff]
        %v1163 = vld [vmem:[#allocation8 + $0x20] sm:$0xff]
        %v1164 = vld [vmem:[#allocation8 + $0x28] sm:$0xff]
        %v1165 = vld [vmem:[#allocation8 + $0x30] sm:$0xff]
        %v1166 = vld [vmem:[#allocation8 + $0x38] sm:$0xff]
        %v1167 = vld [vmem:[#allocation8 + $0x40] sm:$0xff]
        %v1168 = vld [vmem:[#allocation8 + $0x48] sm:$0xff]
        %v1169 = vld [vmem:[#allocation8 + $0x50] sm:$0xff]
        %v1170 = vld [vmem:[#allocation8 + $0x58] sm:$0xff]
        %v1171 = vld [vmem:[#allocation8 + $0x60] sm:$0xff]
        %v1172 = vld [vmem:[#allocation8 + $0x68] sm:$0xff]
        %v1173 = vld [vmem:[#allocation8 + $0x70] sm:$0xff]
        %v1174 = vld [vmem:[#allocation8 + $0x78] sm:$0xff]
        %v1175 = vld [vmem:[#allocation12 + $0x1] sm:$0x3]
        %v1177 = vlaneseq
        %v1178 = vshrl.u32 %v1177, 7
        %v1179 = vsub.s32 0, %v1178
        %v1180 = vrot.slane %v1175, %v1179
        %v1181 = vlaneseq
        %v1182 = vshrl.u32 %v1181, 7
        %v1183 = vsub.s32 1, %v1182
        %v1184 = vrot.slane %v1175, %v1183
        %v1203 = vunpack.c.l.b16 %v1159
        %v1204 = vunpack.c.h.b16 %v1159
        %v1205 = vunpack.c.l.b16 %v1160
        %v1206 = vunpack.c.h.b16 %v1160
        %v1207 = vunpack.c.l.b16 %v1161
        %v1208 = vunpack.c.h.b16 %v1161
        %v1209 = vunpack.c.l.b16 %v1162
        %v1210 = vunpack.c.h.b16 %v1162
        %v1211 = vunpack.c.l.b16 %v1163
        %v1212 = vunpack.c.h.b16 %v1163
        %v1213 = vunpack.c.l.b16 %v1164
        %v1214 = vunpack.c.h.b16 %v1164
        %v1215 = vunpack.c.l.b16 %v1165
        %v1216 = vunpack.c.h.b16 %v1165
        %v1217 = vunpack.c.l.b16 %v1166
        %v1218 = vunpack.c.h.b16 %v1166
        %v1219 = vunpack.c.l.b16 %v1167
        %v1220 = vunpack.c.h.b16 %v1167
        %v1221 = vunpack.c.l.b16 %v1168
        %v1222 = vunpack.c.h.b16 %v1168
        %v1223 = vunpack.c.l.b16 %v1169
        %v1224 = vunpack.c.h.b16 %v1169
        %v1225 = vunpack.c.l.b16 %v1170
        %v1226 = vunpack.c.h.b16 %v1170
        %v1227 = vunpack.c.l.b16 %v1171
        %v1228 = vunpack.c.h.b16 %v1171
        %v1229 = vunpack.c.l.b16 %v1172
        %v1230 = vunpack.c.h.b16 %v1172
        %v1231 = vunpack.c.l.b16 %v1173
        %v1232 = vunpack.c.h.b16 %v1173
        %v1233 = vunpack.c.l.b16 %v1174
        %v1234 = vunpack.c.h.b16 %v1174
        %v1235 = vpack.c.b16 %v1205, %v1203
        %v1236 = vpack.c.b16 %v1206, %v1204
        %v1237 = vpack.c.b16 %v1209, %v1207
        %v1238 = vpack.c.b16 %v1210, %v1208
        %v1239 = vpack.c.b16 %v1213, %v1211
        %v1240 = vpack.c.b16 %v1214, %v1212
        %v1241 = vpack.c.b16 %v1217, %v1215
        %v1242 = vpack.c.b16 %v1218, %v1216
        %v1243 = vpack.c.b16 %v1221, %v1219
        %v1244 = vpack.c.b16 %v1222, %v1220
        %v1245 = vpack.c.b16 %v1225, %v1223
        %v1246 = vpack.c.b16 %v1226, %v1224
        %v1247 = vpack.c.b16 %v1229, %v1227
        %v1248 = vpack.c.b16 %v1230, %v1228
        %v1249 = vpack.c.b16 %v1233, %v1231
        %v1250 = vpack.c.b16 %v1234, %v1232
        %1267 = vmatprep.subr.bf16.mxu0 %v1236
        %1268 = vmatpush1.bf16.msra.mxu0 %v1235
        %1269 = vmatprep.subr.bf16.mxu0 %v1238
        %1270 = vmatpush1.bf16.msra.mxu0 %v1237
        %1271 = vmatprep.subr.bf16.mxu0 %v1240
        %1272 = vmatpush1.bf16.msra.mxu0 %v1239
        %1273 = vmatprep.subr.bf16.mxu0 %v1242
        %1274 = vmatpush1.bf16.msra.mxu0 %v1241
        %1275 = vmatprep.subr.bf16.mxu0 %v1244
        %1276 = vmatpush1.bf16.msra.mxu0 %v1243
        %1277 = vmatprep.subr.bf16.mxu0 %v1246
        %1278 = vmatpush1.bf16.msra.mxu0 %v1245
        %1279 = vmatprep.subr.bf16.mxu0 %v1248
        %1280 = vmatpush1.bf16.msra.mxu0 %v1247
        %1281 = vmatprep.subr.bf16.mxu0 %v1250
        %1282 = vmatpush1.bf16.msra.mxu0 %v1249
        %1283 = vmatprep.subr.bf16.mxu0 0
        %1284 = vmatpush1.bf16.msra.mxu0 0
        %1285 = vmatprep.subr.bf16.mxu0 0
        %1286 = vmatpush1.bf16.msra.mxu0 0
        %1287 = vmatprep.subr.bf16.mxu0 0
        %1288 = vmatpush1.bf16.msra.mxu0 0
        %1289 = vmatprep.subr.bf16.mxu0 0
        %1290 = vmatpush1.bf16.msra.mxu0 0
        %1291 = vmatprep.subr.bf16.mxu0 0
        %1292 = vmatpush1.bf16.msra.mxu0 0
        %1293 = vmatprep.subr.bf16.mxu0 0
        %1294 = vmatpush1.bf16.msra.mxu0 0
        %1295 = vmatprep.subr.bf16.mxu0 0
        %1296 = vmatpush1.bf16.msra.mxu0 0
        %1297 = vmatprep.subr.bf16.mxu0 0
        %1298 = vmatpush1.bf16.msra.mxu0 0
        %1299 = vmatprep.mubr.bf16.mxu0 0
        %1300 = vmatmul.mubr.bf16.gmra.mrb[0].mxu0 %v1158
        %v1301 = vpop.f32.mrb[0].mxu0
        %v1302 = vadd.f32 %v1180, %v1301
        %v1303 = vpop.f32.mrb[0].mxu0
        %v1304 = vadd.f32 %v1184, %v1303
        %v1305 = vpop.f32.mrb[0].mxu0
        %v1306 = vpop.f32.mrb[0].mxu0
        %1307 = vdwg.mxu0
        %v1308 = vld [vmem:[#allocation12 + $0x3] sm:$0x3]
        %v1309 = vld [vmem:[#allocation12 + $0x5] sm:$0x3]
        %v1310 = vrot.slane %v1302, 4
        %v1311 = vadd.f32 %v1302, %v1310
        %v1312 = vrot.slane %v1311, 2
        %v1313 = vadd.f32 %v1311, %v1312
        %v1314 = vrot.slane %v1313, 1
        %v1315 = vadd.f32 %v1313, %v1314
        %v1316 = vrot.slane %v1304, 4
        %v1317 = vadd.f32 %v1304, %v1316
        %v1318 = vrot.slane %v1317, 2
        %v1319 = vadd.f32 %v1317, %v1318
        %v1320 = vrot.slane %v1319, 1
        %v1321 = vadd.f32 %v1319, %v1320
        %v1322 = vrcp.pop 8.0
        %v1323 = vmul.f32 %v1315, %v1322
        %v1324 = vmul.f32 %v1321, %v1322
        %v1325 = vsub.f32 %v1302, %v1323
        %v1326 = vsub.f32 %v1304, %v1324
        %v1327 = vmul.f32 %v1325, %v1325
        %v1328 = vmul.f32 %v1326, %v1326
        %v1329 = vrot.slane %v1327, 4
        %v1330 = vadd.f32 %v1327, %v1329
        %v1331 = vrot.slane %v1330, 2
        %v1332 = vadd.f32 %v1330, %v1331
        %v1333 = vrot.slane %v1332, 1
        %v1334 = vadd.f32 %v1332, %v1333
        %v1335 = vrot.slane %v1328, 4
        %v1336 = vadd.f32 %v1328, %v1335
        %v1337 = vrot.slane %v1336, 2
        %v1338 = vadd.f32 %v1336, %v1337
        %v1339 = vrot.slane %v1338, 1
        %v1340 = vadd.f32 %v1338, %v1339
        %v1341 = vmul.f32 %v1334, %v1322
        %v1342 = vmul.f32 %v1340, %v1322
        %v1343 = vadd.f32 %v1341, 0.8
        %v1344 = vadd.f32 %v1342, 0.8
        %v1345 = vrsqrt.pop %v1343
        %v1346 = vrsqrt.pop %v1344
        %v1347 = vmul.f32 %v1325, %v1345
        %v1348 = vmul.f32 %v1326, %v1346
        %v1350 = vlaneseq
        %v1351 = vshrl.u32 %v1350, 7
        %v1352 = vsub.s32 0, %v1351
        %v1353 = vrot.slane %v1308, %v1352
        %v1354 = vlaneseq
        %v1355 = vshrl.u32 %v1354, 7
        %v1356 = vsub.s32 1, %v1355
        %v1357 = vrot.slane %v1308, %v1356
        %v1360 = vmul.f32 %v1347, %v1353
        %v1361 = vmul.f32 %v1348, %v1357
        %v1363 = vlaneseq
        %v1364 = vshrl.u32 %v1363, 7
        %v1365 = vsub.s32 0, %v1364
        %v1366 = vrot.slane %v1309, %v1365
        %v1367 = vlaneseq
        %v1368 = vshrl.u32 %v1367, 7
        %v1369 = vsub.s32 1, %v1368
        %v1370 = vrot.slane %v1309, %v1369
        %v1373 = vadd.f32 %v1360, %v1366
        %v1374 = vadd.f32 %v1361, %v1370
        %vm1375 = vcmp.gt.f32.partialorder %v1373, 0.0
        %vm1376 = vcmp.gt.f32.partialorder %v1374, 0.0
        %v1377 = vmul.f32 %v1373, 0.2
        %v1378 = vmul.f32 %v1374, 0.2
        %v1379 = vsel %vm1375, %v1373, %v1377
        %v1380 = vsel %vm1376, %v1374, %v1378
        %v1381 = vpack.c.bf16 %v1379, %v1379
        %v1382 = vpack.c.bf16 %v1380, %v1380
        %v1383 = vld [vmem:[#allocation9] sm:$0xff]
        %v1384 = vld [vmem:[#allocation9 + $0x8] sm:$0xff]
        %v1385 = vld [vmem:[#allocation9 + $0x10] sm:$0xff]
        %v1386 = vld [vmem:[#allocation9 + $0x18] sm:$0xff]
        %v1387 = vld [vmem:[#allocation9 + $0x20] sm:$0xff]
        %v1388 = vld [vmem:[#allocation9 + $0x28] sm:$0xff]
        %v1389 = vld [vmem:[#allocation9 + $0x30] sm:$0xff]
        %v1390 = vld [vmem:[#allocation9 + $0x38] sm:$0xff]
        %v1391 = vld [vmem:[#allocation9 + $0x40] sm:$0xff]
        %v1392 = vld [vmem:[#allocation9 + $0x48] sm:$0xff]
        %v1393 = vld [vmem:[#allocation9 + $0x50] sm:$0xff]
        %v1394 = vld [vmem:[#allocation9 + $0x58] sm:$0xff]
        %v1395 = vld [vmem:[#allocation9 + $0x60] sm:$0xff]
        %v1396 = vld [vmem:[#allocation9 + $0x68] sm:$0xff]
        %v1397 = vld [vmem:[#allocation9 + $0x70] sm:$0xff]
        %v1398 = vld [vmem:[#allocation9 + $0x78] sm:$0xff]
        %v1399 = vld [vmem:[#allocation9 + $0x80] sm:$0xff]
        %v1400 = vld [vmem:[#allocation9 + $0x88] sm:$0xff]
        %v1401 = vld [vmem:[#allocation9 + $0x90] sm:$0xff]
        %v1402 = vld [vmem:[#allocation9 + $0x98] sm:$0xff]
        %v1403 = vld [vmem:[#allocation9 + $0xa0] sm:$0xff]
        %v1404 = vld [vmem:[#allocation9 + $0xa8] sm:$0xff]
        %v1405 = vld [vmem:[#allocation9 + $0xb0] sm:$0xff]
        %v1406 = vld [vmem:[#allocation9 + $0xb8] sm:$0xff]
        %v1407 = vld [vmem:[#allocation9 + $0xc0] sm:$0xff]
        %v1408 = vld [vmem:[#allocation9 + $0xc8] sm:$0xff]
        %v1409 = vld [vmem:[#allocation9 + $0xd0] sm:$0xff]
        %v1410 = vld [vmem:[#allocation9 + $0xd8] sm:$0xff]
        %v1411 = vld [vmem:[#allocation9 + $0xe0] sm:$0xff]
        %v1412 = vld [vmem:[#allocation9 + $0xe8] sm:$0xff]
        %v1413 = vld [vmem:[#allocation9 + $0xf0] sm:$0xff]
        %v1414 = vld [vmem:[#allocation9 + $0xf8] sm:$0xff]
        %v1415 = vld [vmem:[#allocation9 + $0x100] sm:$0xff]
        %v1416 = vld [vmem:[#allocation9 + $0x108] sm:$0xff]
        %v1417 = vld [vmem:[#allocation9 + $0x110] sm:$0xff]
        %v1418 = vld [vmem:[#allocation9 + $0x118] sm:$0xff]
        %v1419 = vld [vmem:[#allocation9 + $0x120] sm:$0xff]
        %v1420 = vld [vmem:[#allocation9 + $0x128] sm:$0xff]
        %v1421 = vld [vmem:[#allocation9 + $0x130] sm:$0xff]
        %v1422 = vld [vmem:[#allocation9 + $0x138] sm:$0xff]
        %v1423 = vld [vmem:[#allocation9 + $0x140] sm:$0xff]
        %v1424 = vld [vmem:[#allocation9 + $0x148] sm:$0xff]
        %v1425 = vld [vmem:[#allocation9 + $0x150] sm:$0xff]
        %v1426 = vld [vmem:[#allocation9 + $0x158] sm:$0xff]
        %v1427 = vld [vmem:[#allocation9 + $0x160] sm:$0xff]
        %v1428 = vld [vmem:[#allocation9 + $0x168] sm:$0xff]
        %v1429 = vld [vmem:[#allocation9 + $0x170] sm:$0xff]
        %v1430 = vld [vmem:[#allocation9 + $0x178] sm:$0xff]
        %v1431 = vld [vmem:[#allocation9 + $0x180] sm:$0xff]
        %v1432 = vld [vmem:[#allocation9 + $0x188] sm:$0xff]
        %v1433 = vld [vmem:[#allocation9 + $0x190] sm:$0xff]
        %v1434 = vld [vmem:[#allocation9 + $0x198] sm:$0xff]
        %v1435 = vld [vmem:[#allocation9 + $0x1a0] sm:$0xff]
        %v1436 = vld [vmem:[#allocation9 + $0x1a8] sm:$0xff]
        %v1437 = vld [vmem:[#allocation9 + $0x1b0] sm:$0xff]
        %v1438 = vld [vmem:[#allocation9 + $0x1b8] sm:$0xff]
        %v1439 = vld [vmem:[#allocation9 + $0x1c0] sm:$0xff]
        %v1440 = vld [vmem:[#allocation9 + $0x1c8] sm:$0xff]
        %v1441 = vld [vmem:[#allocation9 + $0x1d0] sm:$0xff]
        %v1442 = vld [vmem:[#allocation9 + $0x1d8] sm:$0xff]
        %v1443 = vld [vmem:[#allocation9 + $0x1e0] sm:$0xff]
        %v1444 = vld [vmem:[#allocation9 + $0x1e8] sm:$0xff]
        %v1445 = vld [vmem:[#allocation9 + $0x1f0] sm:$0xff]
        %v1446 = vld [vmem:[#allocation9 + $0x1f8] sm:$0xff]
        %v1447 = vld [vmem:[#allocation12 + $0x7] sm:$0xf]
        %v1449 = vlaneseq
        %v1450 = vshrl.u32 %v1449, 7
        %v1451 = vsub.s32 0, %v1450
        %v1452 = vrot.slane %v1447, %v1451
        %v1453 = vlaneseq
        %v1454 = vshrl.u32 %v1453, 7
        %v1455 = vsub.s32 1, %v1454
        %v1456 = vrot.slane %v1447, %v1455
        %v1457 = vlaneseq
        %v1458 = vshrl.u32 %v1457, 7
        %v1459 = vsub.s32 2, %v1458
        %v1460 = vrot.slane %v1447, %v1459
        %v1461 = vlaneseq
        %v1462 = vshrl.u32 %v1461, 7
        %v1463 = vsub.s32 3, %v1462
        %v1464 = vrot.slane %v1447, %v1463
        %v1533 = vunpack.c.l.b16 %v1383
        %v1534 = vunpack.c.h.b16 %v1383
        %v1535 = vunpack.c.l.b16 %v1384
        %v1536 = vunpack.c.h.b16 %v1384
        %v1537 = vunpack.c.l.b16 %v1385
        %v1538 = vunpack.c.h.b16 %v1385
        %v1539 = vunpack.c.l.b16 %v1386
        %v1540 = vunpack.c.h.b16 %v1386
        %v1541 = vunpack.c.l.b16 %v1387
        %v1542 = vunpack.c.h.b16 %v1387
        %v1543 = vunpack.c.l.b16 %v1388
        %v1544 = vunpack.c.h.b16 %v1388
        %v1545 = vunpack.c.l.b16 %v1389
        %v1546 = vunpack.c.h.b16 %v1389
        %v1547 = vunpack.c.l.b16 %v1390
        %v1548 = vunpack.c.h.b16 %v1390
        %v1549 = vunpack.c.l.b16 %v1391
        %v1550 = vunpack.c.h.b16 %v1391
        %v1551 = vunpack.c.l.b16 %v1392
        %v1552 = vunpack.c.h.b16 %v1392
        %v1553 = vunpack.c.l.b16 %v1393
        %v1554 = vunpack.c.h.b16 %v1393
        %v1555 = vunpack.c.l.b16 %v1394
        %v1556 = vunpack.c.h.b16 %v1394
        %v1557 = vunpack.c.l.b16 %v1395
        %v1558 = vunpack.c.h.b16 %v1395
        %v1559 = vunpack.c.l.b16 %v1396
        %v1560 = vunpack.c.h.b16 %v1396
        %v1561 = vunpack.c.l.b16 %v1397
        %v1562 = vunpack.c.h.b16 %v1397
        %v1563 = vunpack.c.l.b16 %v1398
        %v1564 = vunpack.c.h.b16 %v1398
        %v1565 = vunpack.c.l.b16 %v1399
        %v1566 = vunpack.c.h.b16 %v1399
        %v1567 = vunpack.c.l.b16 %v1400
        %v1568 = vunpack.c.h.b16 %v1400
        %v1569 = vunpack.c.l.b16 %v1401
        %v1570 = vunpack.c.h.b16 %v1401
        %v1571 = vunpack.c.l.b16 %v1402
        %v1572 = vunpack.c.h.b16 %v1402
        %v1573 = vunpack.c.l.b16 %v1403
        %v1574 = vunpack.c.h.b16 %v1403
        %v1575 = vunpack.c.l.b16 %v1404
        %v1576 = vunpack.c.h.b16 %v1404
        %v1577 = vunpack.c.l.b16 %v1405
        %v1578 = vunpack.c.h.b16 %v1405
        %v1579 = vunpack.c.l.b16 %v1406
        %v1580 = vunpack.c.h.b16 %v1406
        %v1581 = vunpack.c.l.b16 %v1407
        %v1582 = vunpack.c.h.b16 %v1407
        %v1583 = vunpack.c.l.b16 %v1408
        %v1584 = vunpack.c.h.b16 %v1408
        %v1585 = vunpack.c.l.b16 %v1409
        %v1586 = vunpack.c.h.b16 %v1409
        %v1587 = vunpack.c.l.b16 %v1410
        %v1588 = vunpack.c.h.b16 %v1410
        %v1589 = vunpack.c.l.b16 %v1411
        %v1590 = vunpack.c.h.b16 %v1411
        %v1591 = vunpack.c.l.b16 %v1412
        %v1592 = vunpack.c.h.b16 %v1412
        %v1593 = vunpack.c.l.b16 %v1413
        %v1594 = vunpack.c.h.b16 %v1413
        %v1595 = vunpack.c.l.b16 %v1414
        %v1596 = vunpack.c.h.b16 %v1414
        %v1597 = vunpack.c.l.b16 %v1415
        %v1598 = vunpack.c.h.b16 %v1415
        %v1599 = vunpack.c.l.b16 %v1416
        %v1600 = vunpack.c.h.b16 %v1416
        %v1601 = vunpack.c.l.b16 %v1417
        %v1602 = vunpack.c.h.b16 %v1417
        %v1603 = vunpack.c.l.b16 %v1418
        %v1604 = vunpack.c.h.b16 %v1418
        %v1605 = vunpack.c.l.b16 %v1419
        %v1606 = vunpack.c.h.b16 %v1419
        %v1607 = vunpack.c.l.b16 %v1420
        %v1608 = vunpack.c.h.b16 %v1420
        %v1609 = vunpack.c.l.b16 %v1421
        %v1610 = vunpack.c.h.b16 %v1421
        %v1611 = vunpack.c.l.b16 %v1422
        %v1612 = vunpack.c.h.b16 %v1422
        %v1613 = vunpack.c.l.b16 %v1423
        %v1614 = vunpack.c.h.b16 %v1423
        %v1615 = vunpack.c.l.b16 %v1424
        %v1616 = vunpack.c.h.b16 %v1424
        %v1617 = vunpack.c.l.b16 %v1425
        %v1618 = vunpack.c.h.b16 %v1425
        %v1619 = vunpack.c.l.b16 %v1426
        %v1620 = vunpack.c.h.b16 %v1426
        %v1621 = vunpack.c.l.b16 %v1427
        %v1622 = vunpack.c.h.b16 %v1427
        %v1623 = vunpack.c.l.b16 %v1428
        %v1624 = vunpack.c.h.b16 %v1428
        %v1625 = vunpack.c.l.b16 %v1429
        %v1626 = vunpack.c.h.b16 %v1429
        %v1627 = vunpack.c.l.b16 %v1430
        %v1628 = vunpack.c.h.b16 %v1430
        %v1629 = vunpack.c.l.b16 %v1431
        %v1630 = vunpack.c.h.b16 %v1431
        %v1631 = vunpack.c.l.b16 %v1432
        %v1632 = vunpack.c.h.b16 %v1432
        %v1633 = vunpack.c.l.b16 %v1433
        %v1634 = vunpack.c.h.b16 %v1433
        %v1635 = vunpack.c.l.b16 %v1434
        %v1636 = vunpack.c.h.b16 %v1434
        %v1637 = vunpack.c.l.b16 %v1435
        %v1638 = vunpack.c.h.b16 %v1435
        %v1639 = vunpack.c.l.b16 %v1436
        %v1640 = vunpack.c.h.b16 %v1436
        %v1641 = vunpack.c.l.b16 %v1437
        %v1642 = vunpack.c.h.b16 %v1437
        %v1643 = vunpack.c.l.b16 %v1438
        %v1644 = vunpack.c.h.b16 %v1438
        %v1645 = vunpack.c.l.b16 %v1439
        %v1646 = vunpack.c.h.b16 %v1439
        %v1647 = vunpack.c.l.b16 %v1440
        %v1648 = vunpack.c.h.b16 %v1440
        %v1649 = vunpack.c.l.b16 %v1441
        %v1650 = vunpack.c.h.b16 %v1441
        %v1651 = vunpack.c.l.b16 %v1442
        %v1652 = vunpack.c.h.b16 %v1442
        %v1653 = vunpack.c.l.b16 %v1443
        %v1654 = vunpack.c.h.b16 %v1443
        %v1655 = vunpack.c.l.b16 %v1444
        %v1656 = vunpack.c.h.b16 %v1444
        %v1657 = vunpack.c.l.b16 %v1445
        %v1658 = vunpack.c.h.b16 %v1445
        %v1659 = vunpack.c.l.b16 %v1446
        %v1660 = vunpack.c.h.b16 %v1446
        %v1661 = vpack.c.b16 %v1537, %v1533
        %v1662 = vpack.c.b16 %v1538, %v1534
        %v1663 = vpack.c.b16 %v1539, %v1535
        %v1664 = vpack.c.b16 %v1540, %v1536
        %v1665 = vpack.c.b16 %v1545, %v1541
        %v1666 = vpack.c.b16 %v1546, %v1542
        %v1667 = vpack.c.b16 %v1547, %v1543
        %v1668 = vpack.c.b16 %v1548, %v1544
        %v1669 = vpack.c.b16 %v1553, %v1549
        %v1670 = vpack.c.b16 %v1554, %v1550
        %v1671 = vpack.c.b16 %v1555, %v1551
        %v1672 = vpack.c.b16 %v1556, %v1552
        %v1673 = vpack.c.b16 %v1561, %v1557
        %v1674 = vpack.c.b16 %v1562, %v1558
        %v1675 = vpack.c.b16 %v1563, %v1559
        %v1676 = vpack.c.b16 %v1564, %v1560
        %v1677 = vpack.c.b16 %v1569, %v1565
        %v1678 = vpack.c.b16 %v1570, %v1566
        %v1679 = vpack.c.b16 %v1571, %v1567
        %v1680 = vpack.c.b16 %v1572, %v1568
        %v1681 = vpack.c.b16 %v1577, %v1573
        %v1682 = vpack.c.b16 %v1578, %v1574
        %v1683 = vpack.c.b16 %v1579, %v1575
        %v1684 = vpack.c.b16 %v1580, %v1576
        %v1685 = vpack.c.b16 %v1585, %v1581
        %v1686 = vpack.c.b16 %v1586, %v1582
        %v1687 = vpack.c.b16 %v1587, %v1583
        %v1688 = vpack.c.b16 %v1588, %v1584
        %v1689 = vpack.c.b16 %v1593, %v1589
        %v1690 = vpack.c.b16 %v1594, %v1590
        %v1691 = vpack.c.b16 %v1595, %v1591
        %v1692 = vpack.c.b16 %v1596, %v1592
        %v1693 = vpack.c.b16 %v1601, %v1597
        %v1694 = vpack.c.b16 %v1602, %v1598
        %v1695 = vpack.c.b16 %v1603, %v1599
        %v1696 = vpack.c.b16 %v1604, %v1600
        %v1697 = vpack.c.b16 %v1609, %v1605
        %v1698 = vpack.c.b16 %v1610, %v1606
        %v1699 = vpack.c.b16 %v1611, %v1607
        %v1700 = vpack.c.b16 %v1612, %v1608
        %v1701 = vpack.c.b16 %v1617, %v1613
        %v1702 = vpack.c.b16 %v1618, %v1614
        %v1703 = vpack.c.b16 %v1619, %v1615
        %v1704 = vpack.c.b16 %v1620, %v1616
        %v1705 = vpack.c.b16 %v1625, %v1621
        %v1706 = vpack.c.b16 %v1626, %v1622
        %v1707 = vpack.c.b16 %v1627, %v1623
        %v1708 = vpack.c.b16 %v1628, %v1624
        %v1709 = vpack.c.b16 %v1633, %v1629
        %v1710 = vpack.c.b16 %v1634, %v1630
        %v1711 = vpack.c.b16 %v1635, %v1631
        %v1712 = vpack.c.b16 %v1636, %v1632
        %v1713 = vpack.c.b16 %v1641, %v1637
        %v1714 = vpack.c.b16 %v1642, %v1638
        %v1715 = vpack.c.b16 %v1643, %v1639
        %v1716 = vpack.c.b16 %v1644, %v1640
        %v1717 = vpack.c.b16 %v1649, %v1645
        %v1718 = vpack.c.b16 %v1650, %v1646
        %v1719 = vpack.c.b16 %v1651, %v1647
        %v1720 = vpack.c.b16 %v1652, %v1648
        %v1721 = vpack.c.b16 %v1657, %v1653
        %v1722 = vpack.c.b16 %v1658, %v1654
        %v1723 = vpack.c.b16 %v1659, %v1655
        %v1724 = vpack.c.b16 %v1660, %v1656
        %1789 = vmatprep.subr.bf16.mxu0 %v1662
        %1790 = vmatpush1.bf16.msra.mxu0 %v1661
        %1791 = vmatprep.subr.bf16.mxu0 %v1666
        %1792 = vmatpush1.bf16.msra.mxu0 %v1665
        %1793 = vmatprep.subr.bf16.mxu0 %v1670
        %1794 = vmatpush1.bf16.msra.mxu0 %v1669
        %1795 = vmatprep.subr.bf16.mxu0 %v1674
        %1796 = vmatpush1.bf16.msra.mxu0 %v1673
        %1797 = vmatprep.subr.bf16.mxu0 %v1678
        %1798 = vmatpush1.bf16.msra.mxu0 %v1677
        %1799 = vmatprep.subr.bf16.mxu0 %v1682
        %1800 = vmatpush1.bf16.msra.mxu0 %v1681
        %1801 = vmatprep.subr.bf16.mxu0 %v1686
        %1802 = vmatpush1.bf16.msra.mxu0 %v1685
        %1803 = vmatprep.subr.bf16.mxu0 %v1690
        %1804 = vmatpush1.bf16.msra.mxu0 %v1689
        %1805 = vmatprep.subr.bf16.mxu0 %v1694
        %1806 = vmatpush1.bf16.msra.mxu0 %v1693
        %1807 = vmatprep.subr.bf16.mxu0 %v1698
        %1808 = vmatpush1.bf16.msra.mxu0 %v1697
        %1809 = vmatprep.subr.bf16.mxu0 %v1702
        %1810 = vmatpush1.bf16.msra.mxu0 %v1701
        %1811 = vmatprep.subr.bf16.mxu0 %v1706
        %1812 = vmatpush1.bf16.msra.mxu0 %v1705
        %1813 = vmatprep.subr.bf16.mxu0 %v1710
        %1814 = vmatpush1.bf16.msra.mxu0 %v1709
        %1815 = vmatprep.subr.bf16.mxu0 %v1714
        %1816 = vmatpush1.bf16.msra.mxu0 %v1713
        %1817 = vmatprep.subr.bf16.mxu0 %v1718
        %1818 = vmatpush1.bf16.msra.mxu0 %v1717
        %1819 = vmatprep.subr.bf16.mxu0 %v1722
        %1820 = vmatpush1.bf16.msra.mxu0 %v1721
        %1821 = vmatprep.mubr.bf16.mxu0 %v1382
        %1822 = vmatmul.mubr.bf16.gmra.mrb[0].mxu0 %v1381
        %v1823 = vpop.f32.mrb[0].mxu0
        %v1824 = vadd.f32 %v1452, %v1823
        %v1825 = vpop.f32.mrb[0].mxu0
        %v1826 = vadd.f32 %v1456, %v1825
        %v1827 = vpop.f32.mrb[0].mxu0
        %v1828 = vpop.f32.mrb[0].mxu0
        %1829 = vdwg.mxu0
        %1830 = vmatprep.subr.bf16.mxu0 %v1664
        %1831 = vmatpush1.bf16.msra.mxu0 %v1663
        %1832 = vmatprep.subr.bf16.mxu0 %v1668
        %1833 = vmatpush1.bf16.msra.mxu0 %v1667
        %1834 = vmatprep.subr.bf16.mxu0 %v1672
        %1835 = vmatpush1.bf16.msra.mxu0 %v1671
        %1836 = vmatprep.subr.bf16.mxu0 %v1676
        %1837 = vmatpush1.bf16.msra.mxu0 %v1675
        %1838 = vmatprep.subr.bf16.mxu0 %v1680
        %1839 = vmatpush1.bf16.msra.mxu0 %v1679
        %1840 = vmatprep.subr.bf16.mxu0 %v1684
        %1841 = vmatpush1.bf16.msra.mxu0 %v1683
        %1842 = vmatprep.subr.bf16.mxu0 %v1688
        %1843 = vmatpush1.bf16.msra.mxu0 %v1687
        %1844 = vmatprep.subr.bf16.mxu0 %v1692
        %1845 = vmatpush1.bf16.msra.mxu0 %v1691
        %1846 = vmatprep.subr.bf16.mxu0 %v1696
        %1847 = vmatpush1.bf16.msra.mxu0 %v1695
        %1848 = vmatprep.subr.bf16.mxu0 %v1700
        %1849 = vmatpush1.bf16.msra.mxu0 %v1699
        %1850 = vmatprep.subr.bf16.mxu0 %v1704
        %1851 = vmatpush1.bf16.msra.mxu0 %v1703
        %1852 = vmatprep.subr.bf16.mxu0 %v1708
        %1853 = vmatpush1.bf16.msra.mxu0 %v1707
        %1854 = vmatprep.subr.bf16.mxu0 %v1712
        %1855 = vmatpush1.bf16.msra.mxu0 %v1711
        %1856 = vmatprep.subr.bf16.mxu0 %v1716
        %1857 = vmatpush1.bf16.msra.mxu0 %v1715
        %1858 = vmatprep.subr.bf16.mxu0 %v1720
        %1859 = vmatpush1.bf16.msra.mxu0 %v1719
        %1860 = vmatprep.subr.bf16.mxu0 %v1724
        %1861 = vmatpush1.bf16.msra.mxu0 %v1723
        %1862 = vmatprep.mubr.bf16.mxu0 %v1382
        %1863 = vmatmul.mubr.bf16.gmra.mrb[0].mxu0 %v1381
        %v1864 = vpop.f32.mrb[0].mxu0
        %v1865 = vadd.f32 %v1460, %v1864
        %v1866 = vpop.f32.mrb[0].mxu0
        %v1867 = vadd.f32 %v1464, %v1866
        %v1868 = vpop.f32.mrb[0].mxu0
        %v1869 = vpop.f32.mrb[0].mxu0
        %1870 = vdwg.mxu0
        %v1871 = vld [vmem:[#allocation12 + $0xb] sm:$0xf]
        %v1872 = vld [vmem:[#allocation12 + $0xf] sm:$0xf]
        %v1873 = vrot.slane %v1824, 4
        %v1874 = vadd.f32 %v1824, %v1873
        %v1875 = vrot.slane %v1874, 2
        %v1876 = vadd.f32 %v1874, %v1875
        %v1877 = vrot.slane %v1876, 1
        %v1878 = vadd.f32 %v1876, %v1877
        %v1879 = vrot.slane %v1826, 4
        %v1880 = vadd.f32 %v1826, %v1879
        %v1881 = vrot.slane %v1880, 2
        %v1882 = vadd.f32 %v1880, %v1881
        %v1883 = vrot.slane %v1882, 1
        %v1884 = vadd.f32 %v1882, %v1883
        %v1885 = vrot.slane %v1865, 4
        %v1886 = vadd.f32 %v1865, %v1885
        %v1887 = vrot.slane %v1886, 2
        %v1888 = vadd.f32 %v1886, %v1887
        %v1889 = vrot.slane %v1888, 1
        %v1890 = vadd.f32 %v1888, %v1889
        %v1891 = vrot.slane %v1867, 4
        %v1892 = vadd.f32 %v1867, %v1891
        %v1893 = vrot.slane %v1892, 2
        %v1894 = vadd.f32 %v1892, %v1893
        %v1895 = vrot.slane %v1894, 1
        %v1896 = vadd.f32 %v1894, %v1895
        %v1897 = vmul.f32 %v1878, %v1322
        %v1898 = vmul.f32 %v1884, %v1322
        %v1899 = vmul.f32 %v1890, %v1322
        %v1900 = vmul.f32 %v1896, %v1322
        %v1901 = vsub.f32 %v1824, %v1897
        %v1902 = vsub.f32 %v1826, %v1898
        %v1903 = vsub.f32 %v1865, %v1899
        %v1904 = vsub.f32 %v1867, %v1900
        %v1905 = vmul.f32 %v1901, %v1901
        %v1906 = vmul.f32 %v1902, %v1902
        %v1907 = vmul.f32 %v1903, %v1903
        %v1908 = vmul.f32 %v1904, %v1904
        %v1909 = vrot.slane %v1905, 4
        %v1910 = vadd.f32 %v1905, %v1909
        %v1911 = vrot.slane %v1910, 2
        %v1912 = vadd.f32 %v1910, %v1911
        %v1913 = vrot.slane %v1912, 1
        %v1914 = vadd.f32 %v1912, %v1913
        %v1915 = vrot.slane %v1906, 4
        %v1916 = vadd.f32 %v1906, %v1915
        %v1917 = vrot.slane %v1916, 2
        %v1918 = vadd.f32 %v1916, %v1917
        %v1919 = vrot.slane %v1918, 1
        %v1920 = vadd.f32 %v1918, %v1919
        %v1921 = vrot.slane %v1907, 4
        %v1922 = vadd.f32 %v1907, %v1921
        %v1923 = vrot.slane %v1922, 2
        %v1924 = vadd.f32 %v1922, %v1923
        %v1925 = vrot.slane %v1924, 1
        %v1926 = vadd.f32 %v1924, %v1925
        %v1927 = vrot.slane %v1908, 4
        %v1928 = vadd.f32 %v1908, %v1927
        %v1929 = vrot.slane %v1928, 2
        %v1930 = vadd.f32 %v1928, %v1929
        %v1931 = vrot.slane %v1930, 1
        %v1932 = vadd.f32 %v1930, %v1931
        %v1933 = vmul.f32 %v1914, %v1322
        %v1934 = vmul.f32 %v1920, %v1322
        %v1935 = vmul.f32 %v1926, %v1322
        %v1936 = vmul.f32 %v1932, %v1322
        %v1937 = vadd.f32 %v1933, 0.8
        %v1938 = vadd.f32 %v1934, 0.8
        %v1939 = vadd.f32 %v1935, 0.8
        %v1940 = vadd.f32 %v1936, 0.8
        %v1941 = vrsqrt.pop %v1937
        %v1942 = vrsqrt.pop %v1938
        %v1943 = vrsqrt.pop %v1939
        %v1944 = vrsqrt.pop %v1940
        %v1945 = vmul.f32 %v1901, %v1941
        %v1946 = vmul.f32 %v1902, %v1942
        %v1947 = vmul.f32 %v1903, %v1943
        %v1948 = vmul.f32 %v1904, %v1944
        %v1950 = vlaneseq
        %v1951 = vshrl.u32 %v1950, 7
        %v1952 = vsub.s32 0, %v1951
        %v1953 = vrot.slane %v1871, %v1952
        %v1954 = vlaneseq
        %v1955 = vshrl.u32 %v1954, 7
        %v1956 = vsub.s32 1, %v1955
        %v1957 = vrot.slane %v1871, %v1956
        %v1958 = vlaneseq
        %v1959 = vshrl.u32 %v1958, 7
        %v1960 = vsub.s32 2, %v1959
        %v1961 = vrot.slane %v1871, %v1960
        %v1962 = vlaneseq
        %v1963 = vshrl.u32 %v1962, 7
        %v1964 = vsub.s32 3, %v1963
        %v1965 = vrot.slane %v1871, %v1964
        %v1970 = vmul.f32 %v1945, %v1953
        %v1971 = vmul.f32 %v1946, %v1957
        %v1972 = vmul.f32 %v1947, %v1961
        %v1973 = vmul.f32 %v1948, %v1965
        %v1975 = vlaneseq
        %v1976 = vshrl.u32 %v1975, 7
        %v1977 = vsub.s32 0, %v1976
        %v1978 = vrot.slane %v1872, %v1977
        %v1979 = vlaneseq
        %v1980 = vshrl.u32 %v1979, 7
        %v1981 = vsub.s32 1, %v1980
        %v1982 = vrot.slane %v1872, %v1981
        %v1983 = vlaneseq
        %v1984 = vshrl.u32 %v1983, 7
        %v1985 = vsub.s32 2, %v1984
        %v1986 = vrot.slane %v1872, %v1985
        %v1987 = vlaneseq
        %v1988 = vshrl.u32 %v1987, 7
        %v1989 = vsub.s32 3, %v1988
        %v1990 = vrot.slane %v1872, %v1989
        %v1995 = vadd.f32 %v1970, %v1978
        %v1996 = vadd.f32 %v1971, %v1982
        %v1997 = vadd.f32 %v1972, %v1986
        %v1998 = vadd.f32 %v1973, %v1990
        %vm1999 = vcmp.gt.f32.partialorder %v1995, 0.0
        %vm2000 = vcmp.gt.f32.partialorder %v1996, 0.0
        %vm2001 = vcmp.gt.f32.partialorder %v1997, 0.0
        %vm2002 = vcmp.gt.f32.partialorder %v1998, 0.0
        %v2003 = vmul.f32 %v1995, 0.2
        %v2004 = vmul.f32 %v1996, 0.2
        %v2005 = vmul.f32 %v1997, 0.2
        %v2006 = vmul.f32 %v1998, 0.2
        %v2007 = vsel %vm1999, %v1995, %v2003
        %v2008 = vsel %vm2000, %v1996, %v2004
        %v2009 = vsel %vm2001, %v1997, %v2005
        %v2010 = vsel %vm2002, %v1998, %v2006
        %v2011 = vpack.c.bf16 %v2007, %v2007
        %v2012 = vpack.c.bf16 %v2008, %v2008
        %v2013 = vpack.c.bf16 %v2009, %v2009
        %v2014 = vpack.c.bf16 %v2010, %v2010
        %v2015 = vld [vmem:[#allocation11] sm:$0xff]
        %v2016 = vld [vmem:[#allocation11 + $0x8] sm:$0xff]
        %v2017 = vld [vmem:[#allocation11 + $0x10] sm:$0xff]
        %v2018 = vld [vmem:[#allocation11 + $0x18] sm:$0xff]
        %v2019 = vld [vmem:[#allocation11 + $0x20] sm:$0xff]
        %v2020 = vld [vmem:[#allocation11 + $0x28] sm:$0xff]
        %v2021 = vld [vmem:[#allocation11 + $0x30] sm:$0xff]
        %v2022 = vld [vmem:[#allocation11 + $0x38] sm:$0xff]
        %v2023 = vld [vmem:[#allocation11 + $0x40] sm:$0xff]
        %v2024 = vld [vmem:[#allocation11 + $0x48] sm:$0xff]
        %v2025 = vld [vmem:[#allocation11 + $0x50] sm:$0xff]
        %v2026 = vld [vmem:[#allocation11 + $0x58] sm:$0xff]
        %v2027 = vld [vmem:[#allocation11 + $0x60] sm:$0xff]
        %v2028 = vld [vmem:[#allocation11 + $0x68] sm:$0xff]
        %v2029 = vld [vmem:[#allocation11 + $0x70] sm:$0xff]
        %v2030 = vld [vmem:[#allocation11 + $0x78] sm:$0xff]
        %v2031 = vld [vmem:[#allocation11 + $0x80] sm:$0xff]
        %v2032 = vld [vmem:[#allocation11 + $0x88] sm:$0xff]
        %v2033 = vld [vmem:[#allocation11 + $0x90] sm:$0xff]
        %v2034 = vld [vmem:[#allocation11 + $0x98] sm:$0xff]
        %v2035 = vld [vmem:[#allocation11 + $0xa0] sm:$0xff]
        %v2036 = vld [vmem:[#allocation11 + $0xa8] sm:$0xff]
        %v2037 = vld [vmem:[#allocation11 + $0xb0] sm:$0xff]
        %v2038 = vld [vmem:[#allocation11 + $0xb8] sm:$0xff]
        %v2039 = vld [vmem:[#allocation11 + $0xc0] sm:$0xff]
        %v2040 = vld [vmem:[#allocation11 + $0xc8] sm:$0xff]
        %v2041 = vld [vmem:[#allocation11 + $0xd0] sm:$0xff]
        %v2042 = vld [vmem:[#allocation11 + $0xd8] sm:$0xff]
        %v2043 = vld [vmem:[#allocation11 + $0xe0] sm:$0xff]
        %v2044 = vld [vmem:[#allocation11 + $0xe8] sm:$0xff]
        %v2045 = vld [vmem:[#allocation11 + $0xf0] sm:$0xff]
        %v2046 = vld [vmem:[#allocation11 + $0xf8] sm:$0xff]
        %v2047 = vld [vmem:[#allocation11 + $0x100] sm:$0xff]
        %v2048 = vld [vmem:[#allocation11 + $0x108] sm:$0xff]
        %v2049 = vld [vmem:[#allocation11 + $0x110] sm:$0xff]
        %v2050 = vld [vmem:[#allocation11 + $0x118] sm:$0xff]
        %v2051 = vld [vmem:[#allocation11 + $0x120] sm:$0xff]
        %v2052 = vld [vmem:[#allocation11 + $0x128] sm:$0xff]
        %v2053 = vld [vmem:[#allocation11 + $0x130] sm:$0xff]
        %v2054 = vld [vmem:[#allocation11 + $0x138] sm:$0xff]
        %v2055 = vld [vmem:[#allocation11 + $0x140] sm:$0xff]
        %v2056 = vld [vmem:[#allocation11 + $0x148] sm:$0xff]
        %v2057 = vld [vmem:[#allocation11 + $0x150] sm:$0xff]
        %v2058 = vld [vmem:[#allocation11 + $0x158] sm:$0xff]
        %v2059 = vld [vmem:[#allocation11 + $0x160] sm:$0xff]
        %v2060 = vld [vmem:[#allocation11 + $0x168] sm:$0xff]
        %v2061 = vld [vmem:[#allocation11 + $0x170] sm:$0xff]
        %v2062 = vld [vmem:[#allocation11 + $0x178] sm:$0xff]
        %v2063 = vld [vmem:[#allocation11 + $0x180] sm:$0xff]
        %v2064 = vld [vmem:[#allocation11 + $0x188] sm:$0xff]
        %v2065 = vld [vmem:[#allocation11 + $0x190] sm:$0xff]
        %v2066 = vld [vmem:[#allocation11 + $0x198] sm:$0xff]
        %v2067 = vld [vmem:[#allocation11 + $0x1a0] sm:$0xff]
        %v2068 = vld [vmem:[#allocation11 + $0x1a8] sm:$0xff]
        %v2069 = vld [vmem:[#allocation11 + $0x1b0] sm:$0xff]
        %v2070 = vld [vmem:[#allocation11 + $0x1b8] sm:$0xff]
        %v2071 = vld [vmem:[#allocation11 + $0x1c0] sm:$0xff]
        %v2072 = vld [vmem:[#allocation11 + $0x1c8] sm:$0xff]
        %v2073 = vld [vmem:[#allocation11 + $0x1d0] sm:$0xff]
        %v2074 = vld [vmem:[#allocation11 + $0x1d8] sm:$0xff]
        %v2075 = vld [vmem:[#allocation11 + $0x1e0] sm:$0xff]
        %v2076 = vld [vmem:[#allocation11 + $0x1e8] sm:$0xff]
        %v2077 = vld [vmem:[#allocation11 + $0x1f0] sm:$0xff]
        %v2078 = vld [vmem:[#allocation11 + $0x1f8] sm:$0xff]
        %v2079 = vld [vmem:[#allocation11 + $0x200] sm:$0xff]
        %v2080 = vld [vmem:[#allocation11 + $0x208] sm:$0xff]
        %v2081 = vld [vmem:[#allocation11 + $0x210] sm:$0xff]
        %v2082 = vld [vmem:[#allocation11 + $0x218] sm:$0xff]
        %v2083 = vld [vmem:[#allocation11 + $0x220] sm:$0xff]
        %v2084 = vld [vmem:[#allocation11 + $0x228] sm:$0xff]
        %v2085 = vld [vmem:[#allocation11 + $0x230] sm:$0xff]
        %v2086 = vld [vmem:[#allocation11 + $0x238] sm:$0xff]
        %v2087 = vld [vmem:[#allocation11 + $0x240] sm:$0xff]
        %v2088 = vld [vmem:[#allocation11 + $0x248] sm:$0xff]
        %v2089 = vld [vmem:[#allocation11 + $0x250] sm:$0xff]
        %v2090 = vld [vmem:[#allocation11 + $0x258] sm:$0xff]
        %v2091 = vld [vmem:[#allocation11 + $0x260] sm:$0xff]
        %v2092 = vld [vmem:[#allocation11 + $0x268] sm:$0xff]
        %v2093 = vld [vmem:[#allocation11 + $0x270] sm:$0xff]
        %v2094 = vld [vmem:[#allocation11 + $0x278] sm:$0xff]
        %v2095 = vld [vmem:[#allocation11 + $0x280] sm:$0xff]
        %v2096 = vld [vmem:[#allocation11 + $0x288] sm:$0xff]
        %v2097 = vld [vmem:[#allocation11 + $0x290] sm:$0xff]
        %v2098 = vld [vmem:[#allocation11 + $0x298] sm:$0xff]
        %v2099 = vld [vmem:[#allocation11 + $0x2a0] sm:$0xff]
        %v2100 = vld [vmem:[#allocation11 + $0x2a8] sm:$0xff]
        %v2101 = vld [vmem:[#allocation11 + $0x2b0] sm:$0xff]
        %v2102 = vld [vmem:[#allocation11 + $0x2b8] sm:$0xff]
        %v2103 = vld [vmem:[#allocation11 + $0x2c0] sm:$0xff]
        %v2104 = vld [vmem:[#allocation11 + $0x2c8] sm:$0xff]
        %v2105 = vld [vmem:[#allocation11 + $0x2d0] sm:$0xff]
        %v2106 = vld [vmem:[#allocation11 + $0x2d8] sm:$0xff]
        %v2107 = vld [vmem:[#allocation11 + $0x2e0] sm:$0xff]
        %v2108 = vld [vmem:[#allocation11 + $0x2e8] sm:$0xff]
        %v2109 = vld [vmem:[#allocation11 + $0x2f0] sm:$0xff]
        %v2110 = vld [vmem:[#allocation11 + $0x2f8] sm:$0xff]
        %v2111 = vld [vmem:[#allocation11 + $0x300] sm:$0xff]
        %v2112 = vld [vmem:[#allocation11 + $0x308] sm:$0xff]
        %v2113 = vld [vmem:[#allocation11 + $0x310] sm:$0xff]
        %v2114 = vld [vmem:[#allocation11 + $0x318] sm:$0xff]
        %v2115 = vld [vmem:[#allocation11 + $0x320] sm:$0xff]
        %v2116 = vld [vmem:[#allocation11 + $0x328] sm:$0xff]
        %v2117 = vld [vmem:[#allocation11 + $0x330] sm:$0xff]
        %v2118 = vld [vmem:[#allocation11 + $0x338] sm:$0xff]
        %v2119 = vld [vmem:[#allocation11 + $0x340] sm:$0xff]
        %v2120 = vld [vmem:[#allocation11 + $0x348] sm:$0xff]
        %v2121 = vld [vmem:[#allocation11 + $0x350] sm:$0xff]
        %v2122 = vld [vmem:[#allocation11 + $0x358] sm:$0xff]
        %v2123 = vld [vmem:[#allocation11 + $0x360] sm:$0xff]
        %v2124 = vld [vmem:[#allocation11 + $0x368] sm:$0xff]
        %v2125 = vld [vmem:[#allocation11 + $0x370] sm:$0xff]
        %v2126 = vld [vmem:[#allocation11 + $0x378] sm:$0xff]
        %v2127 = vld [vmem:[#allocation11 + $0x380] sm:$0xff]
        %v2128 = vld [vmem:[#allocation11 + $0x388] sm:$0xff]
        %v2129 = vld [vmem:[#allocation11 + $0x390] sm:$0xff]
        %v2130 = vld [vmem:[#allocation11 + $0x398] sm:$0xff]
        %v2131 = vld [vmem:[#allocation11 + $0x3a0] sm:$0xff]
        %v2132 = vld [vmem:[#allocation11 + $0x3a8] sm:$0xff]
        %v2133 = vld [vmem:[#allocation11 + $0x3b0] sm:$0xff]
        %v2134 = vld [vmem:[#allocation11 + $0x3b8] sm:$0xff]
        %v2135 = vld [vmem:[#allocation11 + $0x3c0] sm:$0xff]
        %v2136 = vld [vmem:[#allocation11 + $0x3c8] sm:$0xff]
        %v2137 = vld [vmem:[#allocation11 + $0x3d0] sm:$0xff]
        %v2138 = vld [vmem:[#allocation11 + $0x3d8] sm:$0xff]
        %v2139 = vld [vmem:[#allocation11 + $0x3e0] sm:$0xff]
        %v2140 = vld [vmem:[#allocation11 + $0x3e8] sm:$0xff]
        %v2141 = vld [vmem:[#allocation11 + $0x3f0] sm:$0xff]
        %v2142 = vld [vmem:[#allocation11 + $0x3f8] sm:$0xff]
        %v2143 = vld [vmem:[#allocation11 + $0x400] sm:$0xff]
        %v2144 = vld [vmem:[#allocation11 + $0x408] sm:$0xff]
        %v2145 = vld [vmem:[#allocation11 + $0x410] sm:$0xff]
        %v2146 = vld [vmem:[#allocation11 + $0x418] sm:$0xff]
        %v2147 = vld [vmem:[#allocation11 + $0x420] sm:$0xff]
        %v2148 = vld [vmem:[#allocation11 + $0x428] sm:$0xff]
        %v2149 = vld [vmem:[#allocation11 + $0x430] sm:$0xff]
        %v2150 = vld [vmem:[#allocation11 + $0x438] sm:$0xff]
        %v2151 = vld [vmem:[#allocation11 + $0x440] sm:$0xff]
        %v2152 = vld [vmem:[#allocation11 + $0x448] sm:$0xff]
        %v2153 = vld [vmem:[#allocation11 + $0x450] sm:$0xff]
        %v2154 = vld [vmem:[#allocation11 + $0x458] sm:$0xff]
        %v2155 = vld [vmem:[#allocation11 + $0x460] sm:$0xff]
        %v2156 = vld [vmem:[#allocation11 + $0x468] sm:$0xff]
        %v2157 = vld [vmem:[#allocation11 + $0x470] sm:$0xff]
        %v2158 = vld [vmem:[#allocation11 + $0x478] sm:$0xff]
        %v2159 = vld [vmem:[#allocation11 + $0x480] sm:$0xff]
        %v2160 = vld [vmem:[#allocation11 + $0x488] sm:$0xff]
        %v2161 = vld [vmem:[#allocation11 + $0x490] sm:$0xff]
        %v2162 = vld [vmem:[#allocation11 + $0x498] sm:$0xff]
        %v2163 = vld [vmem:[#allocation11 + $0x4a0] sm:$0xff]
        %v2164 = vld [vmem:[#allocation11 + $0x4a8] sm:$0xff]
        %v2165 = vld [vmem:[#allocation11 + $0x4b0] sm:$0xff]
        %v2166 = vld [vmem:[#allocation11 + $0x4b8] sm:$0xff]
        %v2167 = vld [vmem:[#allocation11 + $0x4c0] sm:$0xff]
        %v2168 = vld [vmem:[#allocation11 + $0x4c8] sm:$0xff]
        %v2169 = vld [vmem:[#allocation11 + $0x4d0] sm:$0xff]
        %v2170 = vld [vmem:[#allocation11 + $0x4d8] sm:$0xff]
        %v2171 = vld [vmem:[#allocation11 + $0x4e0] sm:$0xff]
        %v2172 = vld [vmem:[#allocation11 + $0x4e8] sm:$0xff]
        %v2173 = vld [vmem:[#allocation11 + $0x4f0] sm:$0xff]
        %v2174 = vld [vmem:[#allocation11 + $0x4f8] sm:$0xff]
        %v2175 = vld [vmem:[#allocation11 + $0x500] sm:$0xff]
        %v2176 = vld [vmem:[#allocation11 + $0x508] sm:$0xff]
        %v2177 = vld [vmem:[#allocation11 + $0x510] sm:$0xff]
        %v2178 = vld [vmem:[#allocation11 + $0x518] sm:$0xff]
        %v2179 = vld [vmem:[#allocation11 + $0x520] sm:$0xff]
        %v2180 = vld [vmem:[#allocation11 + $0x528] sm:$0xff]
        %v2181 = vld [vmem:[#allocation11 + $0x530] sm:$0xff]
        %v2182 = vld [vmem:[#allocation11 + $0x538] sm:$0xff]
        %v2183 = vld [vmem:[#allocation11 + $0x540] sm:$0xff]
        %v2184 = vld [vmem:[#allocation11 + $0x548] sm:$0xff]
        %v2185 = vld [vmem:[#allocation11 + $0x550] sm:$0xff]
        %v2186 = vld [vmem:[#allocation11 + $0x558] sm:$0xff]
        %v2187 = vld [vmem:[#allocation11 + $0x560] sm:$0xff]
        %v2188 = vld [vmem:[#allocation11 + $0x568] sm:$0xff]
        %v2189 = vld [vmem:[#allocation11 + $0x570] sm:$0xff]
        %v2190 = vld [vmem:[#allocation11 + $0x578] sm:$0xff]
        %v2191 = vld [vmem:[#allocation11 + $0x580] sm:$0xff]
        %v2192 = vld [vmem:[#allocation11 + $0x588] sm:$0xff]
        %v2193 = vld [vmem:[#allocation11 + $0x590] sm:$0xff]
        %v2194 = vld [vmem:[#allocation11 + $0x598] sm:$0xff]
        %v2195 = vld [vmem:[#allocation11 + $0x5a0] sm:$0xff]
        %v2196 = vld [vmem:[#allocation11 + $0x5a8] sm:$0xff]
        %v2197 = vld [vmem:[#allocation11 + $0x5b0] sm:$0xff]
        %v2198 = vld [vmem:[#allocation11 + $0x5b8] sm:$0xff]
        %v2199 = vld [vmem:[#allocation11 + $0x5c0] sm:$0xff]
        %v2200 = vld [vmem:[#allocation11 + $0x5c8] sm:$0xff]
        %v2201 = vld [vmem:[#allocation11 + $0x5d0] sm:$0xff]
        %v2202 = vld [vmem:[#allocation11 + $0x5d8] sm:$0xff]
        %v2203 = vld [vmem:[#allocation11 + $0x5e0] sm:$0xff]
        %v2204 = vld [vmem:[#allocation11 + $0x5e8] sm:$0xff]
        %v2205 = vld [vmem:[#allocation11 + $0x5f0] sm:$0xff]
        %v2206 = vld [vmem:[#allocation11 + $0x5f8] sm:$0xff]
        %v2207 = vld [vmem:[#allocation11 + $0x600] sm:$0xff]
        %v2208 = vld [vmem:[#allocation11 + $0x608] sm:$0xff]
        %v2209 = vld [vmem:[#allocation11 + $0x610] sm:$0xff]
        %v2210 = vld [vmem:[#allocation11 + $0x618] sm:$0xff]
        %v2211 = vld [vmem:[#allocation11 + $0x620] sm:$0xff]
        %v2212 = vld [vmem:[#allocation11 + $0x628] sm:$0xff]
        %v2213 = vld [vmem:[#allocation11 + $0x630] sm:$0xff]
        %v2214 = vld [vmem:[#allocation11 + $0x638] sm:$0xff]
        %v2215 = vld [vmem:[#allocation11 + $0x640] sm:$0xff]
        %v2216 = vld [vmem:[#allocation11 + $0x648] sm:$0xff]
        %v2217 = vld [vmem:[#allocation11 + $0x650] sm:$0xff]
        %v2218 = vld [vmem:[#allocation11 + $0x658] sm:$0xff]
        %v2219 = vld [vmem:[#allocation11 + $0x660] sm:$0xff]
        %v2220 = vld [vmem:[#allocation11 + $0x668] sm:$0xff]
        %v2221 = vld [vmem:[#allocation11 + $0x670] sm:$0xff]
        %v2222 = vld [vmem:[#allocation11 + $0x678] sm:$0xff]
        %v2223 = vld [vmem:[#allocation11 + $0x680] sm:$0xff]
        %v2224 = vld [vmem:[#allocation11 + $0x688] sm:$0xff]
        %v2225 = vld [vmem:[#allocation11 + $0x690] sm:$0xff]
        %v2226 = vld [vmem:[#allocation11 + $0x698] sm:$0xff]
        %v2227 = vld [vmem:[#allocation11 + $0x6a0] sm:$0xff]
        %v2228 = vld [vmem:[#allocation11 + $0x6a8] sm:$0xff]
        %v2229 = vld [vmem:[#allocation11 + $0x6b0] sm:$0xff]
        %v2230 = vld [vmem:[#allocation11 + $0x6b8] sm:$0xff]
        %v2231 = vld [vmem:[#allocation11 + $0x6c0] sm:$0xff]
        %v2232 = vld [vmem:[#allocation11 + $0x6c8] sm:$0xff]
        %v2233 = vld [vmem:[#allocation11 + $0x6d0] sm:$0xff]
        %v2234 = vld [vmem:[#allocation11 + $0x6d8] sm:$0xff]
        %v2235 = vld [vmem:[#allocation11 + $0x6e0] sm:$0xff]
        %v2236 = vld [vmem:[#allocation11 + $0x6e8] sm:$0xff]
        %v2237 = vld [vmem:[#allocation11 + $0x6f0] sm:$0xff]
        %v2238 = vld [vmem:[#allocation11 + $0x6f8] sm:$0xff]
        %v2239 = vld [vmem:[#allocation11 + $0x700] sm:$0xff]
        %v2240 = vld [vmem:[#allocation11 + $0x708] sm:$0xff]
        %v2241 = vld [vmem:[#allocation11 + $0x710] sm:$0xff]
        %v2242 = vld [vmem:[#allocation11 + $0x718] sm:$0xff]
        %v2243 = vld [vmem:[#allocation11 + $0x720] sm:$0xff]
        %v2244 = vld [vmem:[#allocation11 + $0x728] sm:$0xff]
        %v2245 = vld [vmem:[#allocation11 + $0x730] sm:$0xff]
        %v2246 = vld [vmem:[#allocation11 + $0x738] sm:$0xff]
        %v2247 = vld [vmem:[#allocation11 + $0x740] sm:$0xff]
        %v2248 = vld [vmem:[#allocation11 + $0x748] sm:$0xff]
        %v2249 = vld [vmem:[#allocation11 + $0x750] sm:$0xff]
        %v2250 = vld [vmem:[#allocation11 + $0x758] sm:$0xff]
        %v2251 = vld [vmem:[#allocation11 + $0x760] sm:$0xff]
        %v2252 = vld [vmem:[#allocation11 + $0x768] sm:$0xff]
        %v2253 = vld [vmem:[#allocation11 + $0x770] sm:$0xff]
        %v2254 = vld [vmem:[#allocation11 + $0x778] sm:$0xff]
        %v2255 = vld [vmem:[#allocation11 + $0x780] sm:$0xff]
        %v2256 = vld [vmem:[#allocation11 + $0x788] sm:$0xff]
        %v2257 = vld [vmem:[#allocation11 + $0x790] sm:$0xff]
        %v2258 = vld [vmem:[#allocation11 + $0x798] sm:$0xff]
        %v2259 = vld [vmem:[#allocation11 + $0x7a0] sm:$0xff]
        %v2260 = vld [vmem:[#allocation11 + $0x7a8] sm:$0xff]
        %v2261 = vld [vmem:[#allocation11 + $0x7b0] sm:$0xff]
        %v2262 = vld [vmem:[#allocation11 + $0x7b8] sm:$0xff]
        %v2263 = vld [vmem:[#allocation11 + $0x7c0] sm:$0xff]
        %v2264 = vld [vmem:[#allocation11 + $0x7c8] sm:$0xff]
        %v2265 = vld [vmem:[#allocation11 + $0x7d0] sm:$0xff]
        %v2266 = vld [vmem:[#allocation11 + $0x7d8] sm:$0xff]
        %v2267 = vld [vmem:[#allocation11 + $0x7e0] sm:$0xff]
        %v2268 = vld [vmem:[#allocation11 + $0x7e8] sm:$0xff]
        %v2269 = vld [vmem:[#allocation11 + $0x7f0] sm:$0xff]
        %v2270 = vld [vmem:[#allocation11 + $0x7f8] sm:$0xff]
        %v2271 = vld [vmem:[#allocation12 + $0x13] sm:$0xff]
        %v2273 = vlaneseq
        %v2274 = vshrl.u32 %v2273, 7
        %v2275 = vsub.s32 0, %v2274
        %v2276 = vrot.slane %v2271, %v2275
        %v2277 = vlaneseq
        %v2278 = vshrl.u32 %v2277, 7
        %v2279 = vsub.s32 1, %v2278
        %v2280 = vrot.slane %v2271, %v2279
        %v2281 = vlaneseq
        %v2282 = vshrl.u32 %v2281, 7
        %v2283 = vsub.s32 2, %v2282
        %v2284 = vrot.slane %v2271, %v2283
        %v2285 = vlaneseq
        %v2286 = vshrl.u32 %v2285, 7
        %v2287 = vsub.s32 3, %v2286
        %v2288 = vrot.slane %v2271, %v2287
        %v2289 = vlaneseq
        %v2290 = vshrl.u32 %v2289, 7
        %v2291 = vsub.s32 4, %v2290
        %v2292 = vrot.slane %v2271, %v2291
        %v2293 = vlaneseq
        %v2294 = vshrl.u32 %v2293, 7
        %v2295 = vsub.s32 5, %v2294
        %v2296 = vrot.slane %v2271, %v2295
        %v2297 = vlaneseq
        %v2298 = vshrl.u32 %v2297, 7
        %v2299 = vsub.s32 6, %v2298
        %v2300 = vrot.slane %v2271, %v2299
        %v2301 = vlaneseq
        %v2302 = vshrl.u32 %v2301, 7
        %v2303 = vsub.s32 7, %v2302
        %v2304 = vrot.slane %v2271, %v2303
        %v2569 = vunpack.c.l.b16 %v2015
        %v2570 = vunpack.c.h.b16 %v2015
        %v2571 = vunpack.c.l.b16 %v2016
        %v2572 = vunpack.c.h.b16 %v2016
        %v2573 = vunpack.c.l.b16 %v2017
        %v2574 = vunpack.c.h.b16 %v2017
        %v2575 = vunpack.c.l.b16 %v2018
        %v2576 = vunpack.c.h.b16 %v2018
        %v2577 = vunpack.c.l.b16 %v2019
        %v2578 = vunpack.c.h.b16 %v2019
        %v2579 = vunpack.c.l.b16 %v2020
        %v2580 = vunpack.c.h.b16 %v2020
        %v2581 = vunpack.c.l.b16 %v2021
        %v2582 = vunpack.c.h.b16 %v2021
        %v2583 = vunpack.c.l.b16 %v2022
        %v2584 = vunpack.c.h.b16 %v2022
        %v2585 = vunpack.c.l.b16 %v2023
        %v2586 = vunpack.c.h.b16 %v2023
        %v2587 = vunpack.c.l.b16 %v2024
        %v2588 = vunpack.c.h.b16 %v2024
        %v2589 = vunpack.c.l.b16 %v2025
        %v2590 = vunpack.c.h.b16 %v2025
        %v2591 = vunpack.c.l.b16 %v2026
        %v2592 = vunpack.c.h.b16 %v2026
        %v2593 = vunpack.c.l.b16 %v2027
        %v2594 = vunpack.c.h.b16 %v2027
        %v2595 = vunpack.c.l.b16 %v2028
        %v2596 = vunpack.c.h.b16 %v2028
        %v2597 = vunpack.c.l.b16 %v2029
        %v2598 = vunpack.c.h.b16 %v2029
        %v2599 = vunpack.c.l.b16 %v2030
        %v2600 = vunpack.c.h.b16 %v2030
        %v2601 = vunpack.c.l.b16 %v2031
        %v2602 = vunpack.c.h.b16 %v2031
        %v2603 = vunpack.c.l.b16 %v2032
        %v2604 = vunpack.c.h.b16 %v2032
        %v2605 = vunpack.c.l.b16 %v2033
        %v2606 = vunpack.c.h.b16 %v2033
        %v2607 = vunpack.c.l.b16 %v2034
        %v2608 = vunpack.c.h.b16 %v2034
        %v2609 = vunpack.c.l.b16 %v2035
        %v2610 = vunpack.c.h.b16 %v2035
        %v2611 = vunpack.c.l.b16 %v2036
        %v2612 = vunpack.c.h.b16 %v2036
        %v2613 = vunpack.c.l.b16 %v2037
        %v2614 = vunpack.c.h.b16 %v2037
        %v2615 = vunpack.c.l.b16 %v2038
        %v2616 = vunpack.c.h.b16 %v2038
        %v2617 = vunpack.c.l.b16 %v2039
        %v2618 = vunpack.c.h.b16 %v2039
        %v2619 = vunpack.c.l.b16 %v2040
        %v2620 = vunpack.c.h.b16 %v2040
        %v2621 = vunpack.c.l.b16 %v2041
        %v2622 = vunpack.c.h.b16 %v2041
        %v2623 = vunpack.c.l.b16 %v2042
        %v2624 = vunpack.c.h.b16 %v2042
        %v2625 = vunpack.c.l.b16 %v2043
        %v2626 = vunpack.c.h.b16 %v2043
        %v2627 = vunpack.c.l.b16 %v2044
        %v2628 = vunpack.c.h.b16 %v2044
        %v2629 = vunpack.c.l.b16 %v2045
        %v2630 = vunpack.c.h.b16 %v2045
        %v2631 = vunpack.c.l.b16 %v2046
        %v2632 = vunpack.c.h.b16 %v2046
        %v2633 = vunpack.c.l.b16 %v2047
        %v2634 = vunpack.c.h.b16 %v2047
        %v2635 = vunpack.c.l.b16 %v2048
        %v2636 = vunpack.c.h.b16 %v2048
        %v2637 = vunpack.c.l.b16 %v2049
        %v2638 = vunpack.c.h.b16 %v2049
        %v2639 = vunpack.c.l.b16 %v2050
        %v2640 = vunpack.c.h.b16 %v2050
        %v2641 = vunpack.c.l.b16 %v2051
        %v2642 = vunpack.c.h.b16 %v2051
        %v2643 = vunpack.c.l.b16 %v2052
        %v2644 = vunpack.c.h.b16 %v2052
        %v2645 = vunpack.c.l.b16 %v2053
        %v2646 = vunpack.c.h.b16 %v2053
        %v2647 = vunpack.c.l.b16 %v2054
        %v2648 = vunpack.c.h.b16 %v2054
        %v2649 = vunpack.c.l.b16 %v2055
        %v2650 = vunpack.c.h.b16 %v2055
        %v2651 = vunpack.c.l.b16 %v2056
        %v2652 = vunpack.c.h.b16 %v2056
        %v2653 = vunpack.c.l.b16 %v2057
        %v2654 = vunpack.c.h.b16 %v2057
        %v2655 = vunpack.c.l.b16 %v2058
        %v2656 = vunpack.c.h.b16 %v2058
        %v2657 = vunpack.c.l.b16 %v2059
        %v2658 = vunpack.c.h.b16 %v2059
        %v2659 = vunpack.c.l.b16 %v2060
        %v2660 = vunpack.c.h.b16 %v2060
        %v2661 = vunpack.c.l.b16 %v2061
        %v2662 = vunpack.c.h.b16 %v2061
        %v2663 = vunpack.c.l.b16 %v2062
        %v2664 = vunpack.c.h.b16 %v2062
        %v2665 = vunpack.c.l.b16 %v2063
        %v2666 = vunpack.c.h.b16 %v2063
        %v2667 = vunpack.c.l.b16 %v2064
        %v2668 = vunpack.c.h.b16 %v2064
        %v2669 = vunpack.c.l.b16 %v2065
        %v2670 = vunpack.c.h.b16 %v2065
        %v2671 = vunpack.c.l.b16 %v2066
        %v2672 = vunpack.c.h.b16 %v2066
        %v2673 = vunpack.c.l.b16 %v2067
        %v2674 = vunpack.c.h.b16 %v2067
        %v2675 = vunpack.c.l.b16 %v2068
        %v2676 = vunpack.c.h.b16 %v2068
        %v2677 = vunpack.c.l.b16 %v2069
        %v2678 = vunpack.c.h.b16 %v2069
        %v2679 = vunpack.c.l.b16 %v2070
        %v2680 = vunpack.c.h.b16 %v2070
        %v2681 = vunpack.c.l.b16 %v2071
        %v2682 = vunpack.c.h.b16 %v2071
        %v2683 = vunpack.c.l.b16 %v2072
        %v2684 = vunpack.c.h.b16 %v2072
        %v2685 = vunpack.c.l.b16 %v2073
        %v2686 = vunpack.c.h.b16 %v2073
        %v2687 = vunpack.c.l.b16 %v2074
        %v2688 = vunpack.c.h.b16 %v2074
        %v2689 = vunpack.c.l.b16 %v2075
        %v2690 = vunpack.c.h.b16 %v2075
        %v2691 = vunpack.c.l.b16 %v2076
        %v2692 = vunpack.c.h.b16 %v2076
        %v2693 = vunpack.c.l.b16 %v2077
        %v2694 = vunpack.c.h.b16 %v2077
        %v2695 = vunpack.c.l.b16 %v2078
        %v2696 = vunpack.c.h.b16 %v2078
        %v2697 = vunpack.c.l.b16 %v2079
        %v2698 = vunpack.c.h.b16 %v2079
        %v2699 = vunpack.c.l.b16 %v2080
        %v2700 = vunpack.c.h.b16 %v2080
        %v2701 = vunpack.c.l.b16 %v2081
        %v2702 = vunpack.c.h.b16 %v2081
        %v2703 = vunpack.c.l.b16 %v2082
        %v2704 = vunpack.c.h.b16 %v2082
        %v2705 = vunpack.c.l.b16 %v2083
        %v2706 = vunpack.c.h.b16 %v2083
        %v2707 = vunpack.c.l.b16 %v2084
        %v2708 = vunpack.c.h.b16 %v2084
        %v2709 = vunpack.c.l.b16 %v2085
        %v2710 = vunpack.c.h.b16 %v2085
        %v2711 = vunpack.c.l.b16 %v2086
        %v2712 = vunpack.c.h.b16 %v2086
        %v2713 = vunpack.c.l.b16 %v2087
        %v2714 = vunpack.c.h.b16 %v2087
        %v2715 = vunpack.c.l.b16 %v2088
        %v2716 = vunpack.c.h.b16 %v2088
        %v2717 = vunpack.c.l.b16 %v2089
        %v2718 = vunpack.c.h.b16 %v2089
        %v2719 = vunpack.c.l.b16 %v2090
        %v2720 = vunpack.c.h.b16 %v2090
        %v2721 = vunpack.c.l.b16 %v2091
        %v2722 = vunpack.c.h.b16 %v2091
        %v2723 = vunpack.c.l.b16 %v2092
        %v2724 = vunpack.c.h.b16 %v2092
        %v2725 = vunpack.c.l.b16 %v2093
        %v2726 = vunpack.c.h.b16 %v2093
        %v2727 = vunpack.c.l.b16 %v2094
        %v2728 = vunpack.c.h.b16 %v2094
        %v2729 = vunpack.c.l.b16 %v2095
        %v2730 = vunpack.c.h.b16 %v2095
        %v2731 = vunpack.c.l.b16 %v2096
        %v2732 = vunpack.c.h.b16 %v2096
        %v2733 = vunpack.c.l.b16 %v2097
        %v2734 = vunpack.c.h.b16 %v2097
        %v2735 = vunpack.c.l.b16 %v2098
        %v2736 = vunpack.c.h.b16 %v2098
        %v2737 = vunpack.c.l.b16 %v2099
        %v2738 = vunpack.c.h.b16 %v2099
        %v2739 = vunpack.c.l.b16 %v2100
        %v2740 = vunpack.c.h.b16 %v2100
        %v2741 = vunpack.c.l.b16 %v2101
        %v2742 = vunpack.c.h.b16 %v2101
        %v2743 = vunpack.c.l.b16 %v2102
        %v2744 = vunpack.c.h.b16 %v2102
        %v2745 = vunpack.c.l.b16 %v2103
        %v2746 = vunpack.c.h.b16 %v2103
        %v2747 = vunpack.c.l.b16 %v2104
        %v2748 = vunpack.c.h.b16 %v2104
        %v2749 = vunpack.c.l.b16 %v2105
        %v2750 = vunpack.c.h.b16 %v2105
        %v2751 = vunpack.c.l.b16 %v2106
        %v2752 = vunpack.c.h.b16 %v2106
        %v2753 = vunpack.c.l.b16 %v2107
        %v2754 = vunpack.c.h.b16 %v2107
        %v2755 = vunpack.c.l.b16 %v2108
        %v2756 = vunpack.c.h.b16 %v2108
        %v2757 = vunpack.c.l.b16 %v2109
        %v2758 = vunpack.c.h.b16 %v2109
        %v2759 = vunpack.c.l.b16 %v2110
        %v2760 = vunpack.c.h.b16 %v2110
        %v2761 = vunpack.c.l.b16 %v2111
        %v2762 = vunpack.c.h.b16 %v2111
        %v2763 = vunpack.c.l.b16 %v2112
        %v2764 = vunpack.c.h.b16 %v2112
        %v2765 = vunpack.c.l.b16 %v2113
        %v2766 = vunpack.c.h.b16 %v2113
        %v2767 = vunpack.c.l.b16 %v2114
        %v2768 = vunpack.c.h.b16 %v2114
        %v2769 = vunpack.c.l.b16 %v2115
        %v2770 = vunpack.c.h.b16 %v2115
        %v2771 = vunpack.c.l.b16 %v2116
        %v2772 = vunpack.c.h.b16 %v2116
        %v2773 = vunpack.c.l.b16 %v2117
        %v2774 = vunpack.c.h.b16 %v2117
        %v2775 = vunpack.c.l.b16 %v2118
        %v2776 = vunpack.c.h.b16 %v2118
        %v2777 = vunpack.c.l.b16 %v2119
        %v2778 = vunpack.c.h.b16 %v2119
        %v2779 = vunpack.c.l.b16 %v2120
        %v2780 = vunpack.c.h.b16 %v2120
        %v2781 = vunpack.c.l.b16 %v2121
        %v2782 = vunpack.c.h.b16 %v2121
        %v2783 = vunpack.c.l.b16 %v2122
        %v2784 = vunpack.c.h.b16 %v2122
        %v2785 = vunpack.c.l.b16 %v2123
        %v2786 = vunpack.c.h.b16 %v2123
        %v2787 = vunpack.c.l.b16 %v2124
        %v2788 = vunpack.c.h.b16 %v2124
        %v2789 = vunpack.c.l.b16 %v2125
        %v2790 = vunpack.c.h.b16 %v2125
        %v2791 = vunpack.c.l.b16 %v2126
        %v2792 = vunpack.c.h.b16 %v2126
        %v2793 = vunpack.c.l.b16 %v2127
        %v2794 = vunpack.c.h.b16 %v2127
        %v2795 = vunpack.c.l.b16 %v2128
        %v2796 = vunpack.c.h.b16 %v2128
        %v2797 = vunpack.c.l.b16 %v2129
        %v2798 = vunpack.c.h.b16 %v2129
        %v2799 = vunpack.c.l.b16 %v2130
        %v2800 = vunpack.c.h.b16 %v2130
        %v2801 = vunpack.c.l.b16 %v2131
        %v2802 = vunpack.c.h.b16 %v2131
        %v2803 = vunpack.c.l.b16 %v2132
        %v2804 = vunpack.c.h.b16 %v2132
        %v2805 = vunpack.c.l.b16 %v2133
        %v2806 = vunpack.c.h.b16 %v2133
        %v2807 = vunpack.c.l.b16 %v2134
        %v2808 = vunpack.c.h.b16 %v2134
        %v2809 = vunpack.c.l.b16 %v2135
        %v2810 = vunpack.c.h.b16 %v2135
        %v2811 = vunpack.c.l.b16 %v2136
        %v2812 = vunpack.c.h.b16 %v2136
        %v2813 = vunpack.c.l.b16 %v2137
        %v2814 = vunpack.c.h.b16 %v2137
        %v2815 = vunpack.c.l.b16 %v2138
        %v2816 = vunpack.c.h.b16 %v2138
        %v2817 = vunpack.c.l.b16 %v2139
        %v2818 = vunpack.c.h.b16 %v2139
        %v2819 = vunpack.c.l.b16 %v2140
        %v2820 = vunpack.c.h.b16 %v2140
        %v2821 = vunpack.c.l.b16 %v2141
        %v2822 = vunpack.c.h.b16 %v2141
        %v2823 = vunpack.c.l.b16 %v2142
        %v2824 = vunpack.c.h.b16 %v2142
        %v2825 = vunpack.c.l.b16 %v2143
        %v2826 = vunpack.c.h.b16 %v2143
        %v2827 = vunpack.c.l.b16 %v2144
        %v2828 = vunpack.c.h.b16 %v2144
        %v2829 = vunpack.c.l.b16 %v2145
        %v2830 = vunpack.c.h.b16 %v2145
        %v2831 = vunpack.c.l.b16 %v2146
        %v2832 = vunpack.c.h.b16 %v2146
        %v2833 = vunpack.c.l.b16 %v2147
        %v2834 = vunpack.c.h.b16 %v2147
        %v2835 = vunpack.c.l.b16 %v2148
        %v2836 = vunpack.c.h.b16 %v2148
        %v2837 = vunpack.c.l.b16 %v2149
        %v2838 = vunpack.c.h.b16 %v2149
        %v2839 = vunpack.c.l.b16 %v2150
        %v2840 = vunpack.c.h.b16 %v2150
        %v2841 = vunpack.c.l.b16 %v2151
        %v2842 = vunpack.c.h.b16 %v2151
        %v2843 = vunpack.c.l.b16 %v2152
        %v2844 = vunpack.c.h.b16 %v2152
        %v2845 = vunpack.c.l.b16 %v2153
        %v2846 = vunpack.c.h.b16 %v2153
        %v2847 = vunpack.c.l.b16 %v2154
        %v2848 = vunpack.c.h.b16 %v2154
        %v2849 = vunpack.c.l.b16 %v2155
        %v2850 = vunpack.c.h.b16 %v2155
        %v2851 = vunpack.c.l.b16 %v2156
        %v2852 = vunpack.c.h.b16 %v2156
        %v2853 = vunpack.c.l.b16 %v2157
        %v2854 = vunpack.c.h.b16 %v2157
        %v2855 = vunpack.c.l.b16 %v2158
        %v2856 = vunpack.c.h.b16 %v2158
        %v2857 = vunpack.c.l.b16 %v2159
        %v2858 = vunpack.c.h.b16 %v2159
        %v2859 = vunpack.c.l.b16 %v2160
        %v2860 = vunpack.c.h.b16 %v2160
        %v2861 = vunpack.c.l.b16 %v2161
        %v2862 = vunpack.c.h.b16 %v2161
        %v2863 = vunpack.c.l.b16 %v2162
        %v2864 = vunpack.c.h.b16 %v2162
        %v2865 = vunpack.c.l.b16 %v2163
        %v2866 = vunpack.c.h.b16 %v2163
        %v2867 = vunpack.c.l.b16 %v2164
        %v2868 = vunpack.c.h.b16 %v2164
        %v2869 = vunpack.c.l.b16 %v2165
        %v2870 = vunpack.c.h.b16 %v2165
        %v2871 = vunpack.c.l.b16 %v2166
        %v2872 = vunpack.c.h.b16 %v2166
        %v2873 = vunpack.c.l.b16 %v2167
        %v2874 = vunpack.c.h.b16 %v2167
        %v2875 = vunpack.c.l.b16 %v2168
        %v2876 = vunpack.c.h.b16 %v2168
        %v2877 = vunpack.c.l.b16 %v2169
        %v2878 = vunpack.c.h.b16 %v2169
        %v2879 = vunpack.c.l.b16 %v2170
        %v2880 = vunpack.c.h.b16 %v2170
        %v2881 = vunpack.c.l.b16 %v2171
        %v2882 = vunpack.c.h.b16 %v2171
        %v2883 = vunpack.c.l.b16 %v2172
        %v2884 = vunpack.c.h.b16 %v2172
        %v2885 = vunpack.c.l.b16 %v2173
        %v2886 = vunpack.c.h.b16 %v2173
        %v2887 = vunpack.c.l.b16 %v2174
        %v2888 = vunpack.c.h.b16 %v2174
        %v2889 = vunpack.c.l.b16 %v2175
        %v2890 = vunpack.c.h.b16 %v2175
        %v2891 = vunpack.c.l.b16 %v2176
        %v2892 = vunpack.c.h.b16 %v2176
        %v2893 = vunpack.c.l.b16 %v2177
        %v2894 = vunpack.c.h.b16 %v2177
        %v2895 = vunpack.c.l.b16 %v2178
        %v2896 = vunpack.c.h.b16 %v2178
        %v2897 = vunpack.c.l.b16 %v2179
        %v2898 = vunpack.c.h.b16 %v2179
        %v2899 = vunpack.c.l.b16 %v2180
        %v2900 = vunpack.c.h.b16 %v2180
        %v2901 = vunpack.c.l.b16 %v2181
        %v2902 = vunpack.c.h.b16 %v2181
        %v2903 = vunpack.c.l.b16 %v2182
        %v2904 = vunpack.c.h.b16 %v2182
        %v2905 = vunpack.c.l.b16 %v2183
        %v2906 = vunpack.c.h.b16 %v2183
        %v2907 = vunpack.c.l.b16 %v2184
        %v2908 = vunpack.c.h.b16 %v2184
        %v2909 = vunpack.c.l.b16 %v2185
        %v2910 = vunpack.c.h.b16 %v2185
        %v2911 = vunpack.c.l.b16 %v2186
        %v2912 = vunpack.c.h.b16 %v2186
        %v2913 = vunpack.c.l.b16 %v2187
        %v2914 = vunpack.c.h.b16 %v2187
        %v2915 = vunpack.c.l.b16 %v2188
        %v2916 = vunpack.c.h.b16 %v2188
        %v2917 = vunpack.c.l.b16 %v2189
        %v2918 = vunpack.c.h.b16 %v2189
        %v2919 = vunpack.c.l.b16 %v2190
        %v2920 = vunpack.c.h.b16 %v2190
        %v2921 = vunpack.c.l.b16 %v2191
        %v2922 = vunpack.c.h.b16 %v2191
        %v2923 = vunpack.c.l.b16 %v2192
        %v2924 = vunpack.c.h.b16 %v2192
        %v2925 = vunpack.c.l.b16 %v2193
        %v2926 = vunpack.c.h.b16 %v2193
        %v2927 = vunpack.c.l.b16 %v2194
        %v2928 = vunpack.c.h.b16 %v2194
        %v2929 = vunpack.c.l.b16 %v2195
        %v2930 = vunpack.c.h.b16 %v2195
        %v2931 = vunpack.c.l.b16 %v2196
        %v2932 = vunpack.c.h.b16 %v2196
        %v2933 = vunpack.c.l.b16 %v2197
        %v2934 = vunpack.c.h.b16 %v2197
        %v2935 = vunpack.c.l.b16 %v2198
        %v2936 = vunpack.c.h.b16 %v2198
        %v2937 = vunpack.c.l.b16 %v2199
        %v2938 = vunpack.c.h.b16 %v2199
        %v2939 = vunpack.c.l.b16 %v2200
        %v2940 = vunpack.c.h.b16 %v2200
        %v2941 = vunpack.c.l.b16 %v2201
        %v2942 = vunpack.c.h.b16 %v2201
        %v2943 = vunpack.c.l.b16 %v2202
        %v2944 = vunpack.c.h.b16 %v2202
        %v2945 = vunpack.c.l.b16 %v2203
        %v2946 = vunpack.c.h.b16 %v2203
        %v2947 = vunpack.c.l.b16 %v2204
        %v2948 = vunpack.c.h.b16 %v2204
        %v2949 = vunpack.c.l.b16 %v2205
        %v2950 = vunpack.c.h.b16 %v2205
        %v2951 = vunpack.c.l.b16 %v2206
        %v2952 = vunpack.c.h.b16 %v2206
        %v2953 = vunpack.c.l.b16 %v2207
        %v2954 = vunpack.c.h.b16 %v2207
        %v2955 = vunpack.c.l.b16 %v2208
        %v2956 = vunpack.c.h.b16 %v2208
        %v2957 = vunpack.c.l.b16 %v2209
        %v2958 = vunpack.c.h.b16 %v2209
        %v2959 = vunpack.c.l.b16 %v2210
        %v2960 = vunpack.c.h.b16 %v2210
        %v2961 = vunpack.c.l.b16 %v2211
        %v2962 = vunpack.c.h.b16 %v2211
        %v2963 = vunpack.c.l.b16 %v2212
        %v2964 = vunpack.c.h.b16 %v2212
        %v2965 = vunpack.c.l.b16 %v2213
        %v2966 = vunpack.c.h.b16 %v2213
        %v2967 = vunpack.c.l.b16 %v2214
        %v2968 = vunpack.c.h.b16 %v2214
        %v2969 = vunpack.c.l.b16 %v2215
        %v2970 = vunpack.c.h.b16 %v2215
        %v2971 = vunpack.c.l.b16 %v2216
        %v2972 = vunpack.c.h.b16 %v2216
        %v2973 = vunpack.c.l.b16 %v2217
        %v2974 = vunpack.c.h.b16 %v2217
        %v2975 = vunpack.c.l.b16 %v2218
        %v2976 = vunpack.c.h.b16 %v2218
        %v2977 = vunpack.c.l.b16 %v2219
        %v2978 = vunpack.c.h.b16 %v2219
        %v2979 = vunpack.c.l.b16 %v2220
        %v2980 = vunpack.c.h.b16 %v2220
        %v2981 = vunpack.c.l.b16 %v2221
        %v2982 = vunpack.c.h.b16 %v2221
        %v2983 = vunpack.c.l.b16 %v2222
        %v2984 = vunpack.c.h.b16 %v2222
        %v2985 = vunpack.c.l.b16 %v2223
        %v2986 = vunpack.c.h.b16 %v2223
        %v2987 = vunpack.c.l.b16 %v2224
        %v2988 = vunpack.c.h.b16 %v2224
        %v2989 = vunpack.c.l.b16 %v2225
        %v2990 = vunpack.c.h.b16 %v2225
        %v2991 = vunpack.c.l.b16 %v2226
        %v2992 = vunpack.c.h.b16 %v2226
        %v2993 = vunpack.c.l.b16 %v2227
        %v2994 = vunpack.c.h.b16 %v2227
        %v2995 = vunpack.c.l.b16 %v2228
        %v2996 = vunpack.c.h.b16 %v2228
        %v2997 = vunpack.c.l.b16 %v2229
        %v2998 = vunpack.c.h.b16 %v2229
        %v2999 = vunpack.c.l.b16 %v2230
        %v3000 = vunpack.c.h.b16 %v2230
        %v3001 = vunpack.c.l.b16 %v2231
        %v3002 = vunpack.c.h.b16 %v2231
        %v3003 = vunpack.c.l.b16 %v2232
        %v3004 = vunpack.c.h.b16 %v2232
        %v3005 = vunpack.c.l.b16 %v2233
        %v3006 = vunpack.c.h.b16 %v2233
        %v3007 = vunpack.c.l.b16 %v2234
        %v3008 = vunpack.c.h.b16 %v2234
        %v3009 = vunpack.c.l.b16 %v2235
        %v3010 = vunpack.c.h.b16 %v2235
        %v3011 = vunpack.c.l.b16 %v2236
        %v3012 = vunpack.c.h.b16 %v2236
        %v3013 = vunpack.c.l.b16 %v2237
        %v3014 = vunpack.c.h.b16 %v2237
        %v3015 = vunpack.c.l.b16 %v2238
        %v3016 = vunpack.c.h.b16 %v2238
        %v3017 = vunpack.c.l.b16 %v2239
        %v3018 = vunpack.c.h.b16 %v2239
        %v3019 = vunpack.c.l.b16 %v2240
        %v3020 = vunpack.c.h.b16 %v2240
        %v3021 = vunpack.c.l.b16 %v2241
        %v3022 = vunpack.c.h.b16 %v2241
        %v3023 = vunpack.c.l.b16 %v2242
        %v3024 = vunpack.c.h.b16 %v2242
        %v3025 = vunpack.c.l.b16 %v2243
        %v3026 = vunpack.c.h.b16 %v2243
        %v3027 = vunpack.c.l.b16 %v2244
        %v3028 = vunpack.c.h.b16 %v2244
        %v3029 = vunpack.c.l.b16 %v2245
        %v3030 = vunpack.c.h.b16 %v2245
        %v3031 = vunpack.c.l.b16 %v2246
        %v3032 = vunpack.c.h.b16 %v2246
        %v3033 = vunpack.c.l.b16 %v2247
        %v3034 = vunpack.c.h.b16 %v2247
        %v3035 = vunpack.c.l.b16 %v2248
        %v3036 = vunpack.c.h.b16 %v2248
        %v3037 = vunpack.c.l.b16 %v2249
        %v3038 = vunpack.c.h.b16 %v2249
        %v3039 = vunpack.c.l.b16 %v2250
        %v3040 = vunpack.c.h.b16 %v2250
        %v3041 = vunpack.c.l.b16 %v2251
        %v3042 = vunpack.c.h.b16 %v2251
        %v3043 = vunpack.c.l.b16 %v2252
        %v3044 = vunpack.c.h.b16 %v2252
        %v3045 = vunpack.c.l.b16 %v2253
        %v3046 = vunpack.c.h.b16 %v2253
        %v3047 = vunpack.c.l.b16 %v2254
        %v3048 = vunpack.c.h.b16 %v2254
        %v3049 = vunpack.c.l.b16 %v2255
        %v3050 = vunpack.c.h.b16 %v2255
        %v3051 = vunpack.c.l.b16 %v2256
        %v3052 = vunpack.c.h.b16 %v2256
        %v3053 = vunpack.c.l.b16 %v2257
        %v3054 = vunpack.c.h.b16 %v2257
        %v3055 = vunpack.c.l.b16 %v2258
        %v3056 = vunpack.c.h.b16 %v2258
        %v3057 = vunpack.c.l.b16 %v2259
        %v3058 = vunpack.c.h.b16 %v2259
        %v3059 = vunpack.c.l.b16 %v2260
        %v3060 = vunpack.c.h.b16 %v2260
        %v3061 = vunpack.c.l.b16 %v2261
        %v3062 = vunpack.c.h.b16 %v2261
        %v3063 = vunpack.c.l.b16 %v2262
        %v3064 = vunpack.c.h.b16 %v2262
        %v3065 = vunpack.c.l.b16 %v2263
        %v3066 = vunpack.c.h.b16 %v2263
        %v3067 = vunpack.c.l.b16 %v2264
        %v3068 = vunpack.c.h.b16 %v2264
        %v3069 = vunpack.c.l.b16 %v2265
        %v3070 = vunpack.c.h.b16 %v2265
        %v3071 = vunpack.c.l.b16 %v2266
        %v3072 = vunpack.c.h.b16 %v2266
        %v3073 = vunpack.c.l.b16 %v2267
        %v3074 = vunpack.c.h.b16 %v2267
        %v3075 = vunpack.c.l.b16 %v2268
        %v3076 = vunpack.c.h.b16 %v2268
        %v3077 = vunpack.c.l.b16 %v2269
        %v3078 = vunpack.c.h.b16 %v2269
        %v3079 = vunpack.c.l.b16 %v2270
        %v3080 = vunpack.c.h.b16 %v2270
        %v3081 = vpack.c.b16 %v2577, %v2569
        %v3082 = vpack.c.b16 %v2578, %v2570
        %v3083 = vpack.c.b16 %v2579, %v2571
        %v3084 = vpack.c.b16 %v2580, %v2572
        %v3085 = vpack.c.b16 %v2581, %v2573
        %v3086 = vpack.c.b16 %v2582, %v2574
        %v3087 = vpack.c.b16 %v2583, %v2575
        %v3088 = vpack.c.b16 %v2584, %v2576
        %v3089 = vpack.c.b16 %v2593, %v2585
        %v3090 = vpack.c.b16 %v2594, %v2586
        %v3091 = vpack.c.b16 %v2595, %v2587
        %v3092 = vpack.c.b16 %v2596, %v2588
        %v3093 = vpack.c.b16 %v2597, %v2589
        %v3094 = vpack.c.b16 %v2598, %v2590
        %v3095 = vpack.c.b16 %v2599, %v2591
        %v3096 = vpack.c.b16 %v2600, %v2592
        %v3097 = vpack.c.b16 %v2609, %v2601
        %v3098 = vpack.c.b16 %v2610, %v2602
        %v3099 = vpack.c.b16 %v2611, %v2603
        %v3100 = vpack.c.b16 %v2612, %v2604
        %v3101 = vpack.c.b16 %v2613, %v2605
        %v3102 = vpack.c.b16 %v2614, %v2606
        %v3103 = vpack.c.b16 %v2615, %v2607
        %v3104 = vpack.c.b16 %v2616, %v2608
        %v3105 = vpack.c.b16 %v2625, %v2617
        %v3106 = vpack.c.b16 %v2626, %v2618
        %v3107 = vpack.c.b16 %v2627, %v2619
        %v3108 = vpack.c.b16 %v2628, %v2620
        %v3109 = vpack.c.b16 %v2629, %v2621
        %v3110 = vpack.c.b16 %v2630, %v2622
        %v3111 = vpack.c.b16 %v2631, %v2623
        %v3112 = vpack.c.b16 %v2632, %v2624
        %v3113 = vpack.c.b16 %v2641, %v2633
        %v3114 = vpack.c.b16 %v2642, %v2634
        %v3115 = vpack.c.b16 %v2643, %v2635
        %v3116 = vpack.c.b16 %v2644, %v2636
        %v3117 = vpack.c.b16 %v2645, %v2637
        %v3118 = vpack.c.b16 %v2646, %v2638
        %v3119 = vpack.c.b16 %v2647, %v2639
        %v3120 = vpack.c.b16 %v2648, %v2640
        %v3121 = vpack.c.b16 %v2657, %v2649
        %v3122 = vpack.c.b16 %v2658, %v2650
        %v3123 = vpack.c.b16 %v2659, %v2651
        %v3124 = vpack.c.b16 %v2660, %v2652
        %v3125 = vpack.c.b16 %v2661, %v2653
        %v3126 = vpack.c.b16 %v2662, %v2654
        %v3127 = vpack.c.b16 %v2663, %v2655
        %v3128 = vpack.c.b16 %v2664, %v2656
        %v3129 = vpack.c.b16 %v2673, %v2665
        %v3130 = vpack.c.b16 %v2674, %v2666
        %v3131 = vpack.c.b16 %v2675, %v2667
        %v3132 = vpack.c.b16 %v2676, %v2668
        %v3133 = vpack.c.b16 %v2677, %v2669
        %v3134 = vpack.c.b16 %v2678, %v2670
        %v3135 = vpack.c.b16 %v2679, %v2671
        %v3136 = vpack.c.b16 %v2680, %v2672
        %v3137 = vpack.c.b16 %v2689, %v2681
        %v3138 = vpack.c.b16 %v2690, %v2682
        %v3139 = vpack.c.b16 %v2691, %v2683
        %v3140 = vpack.c.b16 %v2692, %v2684
        %v3141 = vpack.c.b16 %v2693, %v2685
        %v3142 = vpack.c.b16 %v2694, %v2686
        %v3143 = vpack.c.b16 %v2695, %v2687
        %v3144 = vpack.c.b16 %v2696, %v2688
        %v3145 = vpack.c.b16 %v2705, %v2697
        %v3146 = vpack.c.b16 %v2706, %v2698
        %v3147 = vpack.c.b16 %v2707, %v2699
        %v3148 = vpack.c.b16 %v2708, %v2700
        %v3149 = vpack.c.b16 %v2709, %v2701
        %v3150 = vpack.c.b16 %v2710, %v2702
        %v3151 = vpack.c.b16 %v2711, %v2703
        %v3152 = vpack.c.b16 %v2712, %v2704
        %v3153 = vpack.c.b16 %v2721, %v2713
        %v3154 = vpack.c.b16 %v2722, %v2714
        %v3155 = vpack.c.b16 %v2723, %v2715
        %v3156 = vpack.c.b16 %v2724, %v2716
        %v3157 = vpack.c.b16 %v2725, %v2717
        %v3158 = vpack.c.b16 %v2726, %v2718
        %v3159 = vpack.c.b16 %v2727, %v2719
        %v3160 = vpack.c.b16 %v2728, %v2720
        %v3161 = vpack.c.b16 %v2737, %v2729
        %v3162 = vpack.c.b16 %v2738, %v2730
        %v3163 = vpack.c.b16 %v2739, %v2731
        %v3164 = vpack.c.b16 %v2740, %v2732
        %v3165 = vpack.c.b16 %v2741, %v2733
        %v3166 = vpack.c.b16 %v2742, %v2734
        %v3167 = vpack.c.b16 %v2743, %v2735
        %v3168 = vpack.c.b16 %v2744, %v2736
        %v3169 = vpack.c.b16 %v2753, %v2745
        %v3170 = vpack.c.b16 %v2754, %v2746
        %v3171 = vpack.c.b16 %v2755, %v2747
        %v3172 = vpack.c.b16 %v2756, %v2748
        %v3173 = vpack.c.b16 %v2757, %v2749
        %v3174 = vpack.c.b16 %v2758, %v2750
        %v3175 = vpack.c.b16 %v2759, %v2751
        %v3176 = vpack.c.b16 %v2760, %v2752
        %v3177 = vpack.c.b16 %v2769, %v2761
        %v3178 = vpack.c.b16 %v2770, %v2762
        %v3179 = vpack.c.b16 %v2771, %v2763
        %v3180 = vpack.c.b16 %v2772, %v2764
        %v3181 = vpack.c.b16 %v2773, %v2765
        %v3182 = vpack.c.b16 %v2774, %v2766
        %v3183 = vpack.c.b16 %v2775, %v2767
        %v3184 = vpack.c.b16 %v2776, %v2768
        %v3185 = vpack.c.b16 %v2785, %v2777
        %v3186 = vpack.c.b16 %v2786, %v2778
        %v3187 = vpack.c.b16 %v2787, %v2779
        %v3188 = vpack.c.b16 %v2788, %v2780
        %v3189 = vpack.c.b16 %v2789, %v2781
        %v3190 = vpack.c.b16 %v2790, %v2782
        %v3191 = vpack.c.b16 %v2791, %v2783
        %v3192 = vpack.c.b16 %v2792, %v2784
        %v3193 = vpack.c.b16 %v2801, %v2793
        %v3194 = vpack.c.b16 %v2802, %v2794
        %v3195 = vpack.c.b16 %v2803, %v2795
        %v3196 = vpack.c.b16 %v2804, %v2796
        %v3197 = vpack.c.b16 %v2805, %v2797
        %v3198 = vpack.c.b16 %v2806, %v2798
        %v3199 = vpack.c.b16 %v2807, %v2799
        %v3200 = vpack.c.b16 %v2808, %v2800
        %v3201 = vpack.c.b16 %v2817, %v2809
        %v3202 = vpack.c.b16 %v2818, %v2810
        %v3203 = vpack.c.b16 %v2819, %v2811
        %v3204 = vpack.c.b16 %v2820, %v2812
        %v3205 = vpack.c.b16 %v2821, %v2813
        %v3206 = vpack.c.b16 %v2822, %v2814
        %v3207 = vpack.c.b16 %v2823, %v2815
        %v3208 = vpack.c.b16 %v2824, %v2816
        %v3209 = vpack.c.b16 %v2833, %v2825
        %v3210 = vpack.c.b16 %v2834, %v2826
        %v3211 = vpack.c.b16 %v2835, %v2827
        %v3212 = vpack.c.b16 %v2836, %v2828
        %v3213 = vpack.c.b16 %v2837, %v2829
        %v3214 = vpack.c.b16 %v2838, %v2830
        %v3215 = vpack.c.b16 %v2839, %v2831
        %v3216 = vpack.c.b16 %v2840, %v2832
        %v3217 = vpack.c.b16 %v2849, %v2841
        %v3218 = vpack.c.b16 %v2850, %v2842
        %v3219 = vpack.c.b16 %v2851, %v2843
        %v3220 = vpack.c.b16 %v2852, %v2844
        %v3221 = vpack.c.b16 %v2853, %v2845
        %v3222 = vpack.c.b16 %v2854, %v2846
        %v3223 = vpack.c.b16 %v2855, %v2847
        %v3224 = vpack.c.b16 %v2856, %v2848
        %v3225 = vpack.c.b16 %v2865, %v2857
        %v3226 = vpack.c.b16 %v2866, %v2858
        %v3227 = vpack.c.b16 %v2867, %v2859
        %v3228 = vpack.c.b16 %v2868, %v2860
        %v3229 = vpack.c.b16 %v2869, %v2861
        %v3230 = vpack.c.b16 %v2870, %v2862
        %v3231 = vpack.c.b16 %v2871, %v2863
        %v3232 = vpack.c.b16 %v2872, %v2864
        %v3233 = vpack.c.b16 %v2881, %v2873
        %v3234 = vpack.c.b16 %v2882, %v2874
        %v3235 = vpack.c.b16 %v2883, %v2875
        %v3236 = vpack.c.b16 %v2884, %v2876
        %v3237 = vpack.c.b16 %v2885, %v2877
        %v3238 = vpack.c.b16 %v2886, %v2878
        %v3239 = vpack.c.b16 %v2887, %v2879
        %v3240 = vpack.c.b16 %v2888, %v2880
        %v3241 = vpack.c.b16 %v2897, %v2889
        %v3242 = vpack.c.b16 %v2898, %v2890
        %v3243 = vpack.c.b16 %v2899, %v2891
        %v3244 = vpack.c.b16 %v2900, %v2892
        %v3245 = vpack.c.b16 %v2901, %v2893
        %v3246 = vpack.c.b16 %v2902, %v2894
        %v3247 = vpack.c.b16 %v2903, %v2895
        %v3248 = vpack.c.b16 %v2904, %v2896
        %v3249 = vpack.c.b16 %v2913, %v2905
        %v3250 = vpack.c.b16 %v2914, %v2906
        %v3251 = vpack.c.b16 %v2915, %v2907
        %v3252 = vpack.c.b16 %v2916, %v2908
        %v3253 = vpack.c.b16 %v2917, %v2909
        %v3254 = vpack.c.b16 %v2918, %v2910
        %v3255 = vpack.c.b16 %v2919, %v2911
        %v3256 = vpack.c.b16 %v2920, %v2912
        %v3257 = vpack.c.b16 %v2929, %v2921
        %v3258 = vpack.c.b16 %v2930, %v2922
        %v3259 = vpack.c.b16 %v2931, %v2923
        %v3260 = vpack.c.b16 %v2932, %v2924
        %v3261 = vpack.c.b16 %v2933, %v2925
        %v3262 = vpack.c.b16 %v2934, %v2926
        %v3263 = vpack.c.b16 %v2935, %v2927
        %v3264 = vpack.c.b16 %v2936, %v2928
        %v3265 = vpack.c.b16 %v2945, %v2937
        %v3266 = vpack.c.b16 %v2946, %v2938
        %v3267 = vpack.c.b16 %v2947, %v2939
        %v3268 = vpack.c.b16 %v2948, %v2940
        %v3269 = vpack.c.b16 %v2949, %v2941
        %v3270 = vpack.c.b16 %v2950, %v2942
        %v3271 = vpack.c.b16 %v2951, %v2943
        %v3272 = vpack.c.b16 %v2952, %v2944
        %v3273 = vpack.c.b16 %v2961, %v2953
        %v3274 = vpack.c.b16 %v2962, %v2954
        %v3275 = vpack.c.b16 %v2963, %v2955
        %v3276 = vpack.c.b16 %v2964, %v2956
        %v3277 = vpack.c.b16 %v2965, %v2957
        %v3278 = vpack.c.b16 %v2966, %v2958
        %v3279 = vpack.c.b16 %v2967, %v2959
        %v3280 = vpack.c.b16 %v2968, %v2960
        %v3281 = vpack.c.b16 %v2977, %v2969
        %v3282 = vpack.c.b16 %v2978, %v2970
        %v3283 = vpack.c.b16 %v2979, %v2971
        %v3284 = vpack.c.b16 %v2980, %v2972
        %v3285 = vpack.c.b16 %v2981, %v2973
        %v3286 = vpack.c.b16 %v2982, %v2974
        %v3287 = vpack.c.b16 %v2983, %v2975
        %v3288 = vpack.c.b16 %v2984, %v2976
        %v3289 = vpack.c.b16 %v2993, %v2985
        %v3290 = vpack.c.b16 %v2994, %v2986
        %v3291 = vpack.c.b16 %v2995, %v2987
        %v3292 = vpack.c.b16 %v2996, %v2988
        %v3293 = vpack.c.b16 %v2997, %v2989
        %v3294 = vpack.c.b16 %v2998, %v2990
        %v3295 = vpack.c.b16 %v2999, %v2991
        %v3296 = vpack.c.b16 %v3000, %v2992
        %v3297 = vpack.c.b16 %v3009, %v3001
        %v3298 = vpack.c.b16 %v3010, %v3002
        %v3299 = vpack.c.b16 %v3011, %v3003
        %v3300 = vpack.c.b16 %v3012, %v3004
        %v3301 = vpack.c.b16 %v3013, %v3005
        %v3302 = vpack.c.b16 %v3014, %v3006
        %v3303 = vpack.c.b16 %v3015, %v3007
        %v3304 = vpack.c.b16 %v3016, %v3008
        %v3305 = vpack.c.b16 %v3025, %v3017
        %v3306 = vpack.c.b16 %v3026, %v3018
        %v3307 = vpack.c.b16 %v3027, %v3019
        %v3308 = vpack.c.b16 %v3028, %v3020
        %v3309 = vpack.c.b16 %v3029, %v3021
        %v3310 = vpack.c.b16 %v3030, %v3022
        %v3311 = vpack.c.b16 %v3031, %v3023
        %v3312 = vpack.c.b16 %v3032, %v3024
        %v3313 = vpack.c.b16 %v3041, %v3033
        %v3314 = vpack.c.b16 %v3042, %v3034
        %v3315 = vpack.c.b16 %v3043, %v3035
        %v3316 = vpack.c.b16 %v3044, %v3036
        %v3317 = vpack.c.b16 %v3045, %v3037
        %v3318 = vpack.c.b16 %v3046, %v3038
        %v3319 = vpack.c.b16 %v3047, %v3039
        %v3320 = vpack.c.b16 %v3048, %v3040
        %v3321 = vpack.c.b16 %v3057, %v3049
        %v3322 = vpack.c.b16 %v3058, %v3050
        %v3323 = vpack.c.b16 %v3059, %v3051
        %v3324 = vpack.c.b16 %v3060, %v3052
        %v3325 = vpack.c.b16 %v3061, %v3053
        %v3326 = vpack.c.b16 %v3062, %v3054
        %v3327 = vpack.c.b16 %v3063, %v3055
        %v3328 = vpack.c.b16 %v3064, %v3056
        %v3329 = vpack.c.b16 %v3073, %v3065
        %v3330 = vpack.c.b16 %v3074, %v3066
        %v3331 = vpack.c.b16 %v3075, %v3067
        %v3332 = vpack.c.b16 %v3076, %v3068
        %v3333 = vpack.c.b16 %v3077, %v3069
        %v3334 = vpack.c.b16 %v3078, %v3070
        %v3335 = vpack.c.b16 %v3079, %v3071
        %v3336 = vpack.c.b16 %v3080, %v3072
        %3593 = vmatprep.subr.bf16.mxu0 %v3082
        %3594 = vmatpush1.bf16.msra.mxu0 %v3081
        %3595 = vmatprep.subr.bf16.mxu0 %v3090
        %3596 = vmatpush1.bf16.msra.mxu0 %v3089
        %3597 = vmatprep.subr.bf16.mxu0 %v3098
        %3598 = vmatpush1.bf16.msra.mxu0 %v3097
        %3599 = vmatprep.subr.bf16.mxu0 %v3106
        %3600 = vmatpush1.bf16.msra.mxu0 %v3105
        %3601 = vmatprep.subr.bf16.mxu0 %v3114
        %3602 = vmatpush1.bf16.msra.mxu0 %v3113
        %3603 = vmatprep.subr.bf16.mxu0 %v3122
        %3604 = vmatpush1.bf16.msra.mxu0 %v3121
        %3605 = vmatprep.subr.bf16.mxu0 %v3130
        %3606 = vmatpush1.bf16.msra.mxu0 %v3129
        %3607 = vmatprep.subr.bf16.mxu0 %v3138
        %3608 = vmatpush1.bf16.msra.mxu0 %v3137
        %3609 = vmatprep.subr.bf16.mxu0 %v3146
        %3610 = vmatpush1.bf16.msra.mxu0 %v3145
        %3611 = vmatprep.subr.bf16.mxu0 %v3154
        %3612 = vmatpush1.bf16.msra.mxu0 %v3153
        %3613 = vmatprep.subr.bf16.mxu0 %v3162
        %3614 = vmatpush1.bf16.msra.mxu0 %v3161
        %3615 = vmatprep.subr.bf16.mxu0 %v3170
        %3616 = vmatpush1.bf16.msra.mxu0 %v3169
        %3617 = vmatprep.subr.bf16.mxu0 %v3178
        %3618 = vmatpush1.bf16.msra.mxu0 %v3177
        %3619 = vmatprep.subr.bf16.mxu0 %v3186
        %3620 = vmatpush1.bf16.msra.mxu0 %v3185
        %3621 = vmatprep.subr.bf16.mxu0 %v3194
        %3622 = vmatpush1.bf16.msra.mxu0 %v3193
        %3623 = vmatprep.subr.bf16.mxu0 %v3202
        %3624 = vmatpush1.bf16.msra.mxu0 %v3201
        %3625 = vmatprep.mubr.bf16.mxu0 %v2012
        %3626 = vmatmul.mubr.bf16.gmra.mrb[0].mxu0 %v2011
        %v3627 = vpop.f32.mrb[0].mxu0
        %v3628 = vadd.f32 %v2276, %v3627
        %v3629 = vpop.f32.mrb[0].mxu0
        %v3630 = vadd.f32 %v2280, %v3629
        %v3631 = vpop.f32.mrb[0].mxu0
        %v3632 = vpop.f32.mrb[0].mxu0
        %3633 = vdwg.mxu0
        %3634 = vmatprep.subr.bf16.mxu0 %v3210
        %3635 = vmatpush1.bf16.msra.mxu0 %v3209
        %3636 = vmatprep.subr.bf16.mxu0 %v3218
        %3637 = vmatpush1.bf16.msra.mxu0 %v3217
        %3638 = vmatprep.subr.bf16.mxu0 %v3226
        %3639 = vmatpush1.bf16.msra.mxu0 %v3225
        %3640 = vmatprep.subr.bf16.mxu0 %v3234
        %3641 = vmatpush1.bf16.msra.mxu0 %v3233
        %3642 = vmatprep.subr.bf16.mxu0 %v3242
        %3643 = vmatpush1.bf16.msra.mxu0 %v3241
        %3644 = vmatprep.subr.bf16.mxu0 %v3250
        %3645 = vmatpush1.bf16.msra.mxu0 %v3249
        %3646 = vmatprep.subr.bf16.mxu0 %v3258
        %3647 = vmatpush1.bf16.msra.mxu0 %v3257
        %3648 = vmatprep.subr.bf16.mxu0 %v3266
        %3649 = vmatpush1.bf16.msra.mxu0 %v3265
        %3650 = vmatprep.subr.bf16.mxu0 %v3274
        %3651 = vmatpush1.bf16.msra.mxu0 %v3273
        %3652 = vmatprep.subr.bf16.mxu0 %v3282
        %3653 = vmatpush1.bf16.msra.mxu0 %v3281
        %3654 = vmatprep.subr.bf16.mxu0 %v3290
        %3655 = vmatpush1.bf16.msra.mxu0 %v3289
        %3656 = vmatprep.subr.bf16.mxu0 %v3298
        %3657 = vmatpush1.bf16.msra.mxu0 %v3297
        %3658 = vmatprep.subr.bf16.mxu0 %v3306
        %3659 = vmatpush1.bf16.msra.mxu0 %v3305
        %3660 = vmatprep.subr.bf16.mxu0 %v3314
        %3661 = vmatpush1.bf16.msra.mxu0 %v3313
        %3662 = vmatprep.subr.bf16.mxu0 %v3322
        %3663 = vmatpush1.bf16.msra.mxu0 %v3321
        %3664 = vmatprep.subr.bf16.mxu0 %v3330
        %3665 = vmatpush1.bf16.msra.mxu0 %v3329
        %3666 = vmatprep.mubr.bf16.mxu0 %v2014
        %3667 = vmatmul.mubr.bf16.gmra.mrb[0].mxu0 %v2013
        %v3668 = vpop.f32.mrb[0].mxu0
        %v3669 = vadd.f32 %v3628, %v3668
        %v3670 = vpop.f32.mrb[0].mxu0
        %v3671 = vadd.f32 %v3630, %v3670
        %v3672 = vpop.f32.mrb[0].mxu0
        %v3673 = vpop.f32.mrb[0].mxu0
        %3674 = vdwg.mxu0
        %3675 = vmatprep.subr.bf16.mxu0 %v3084
        %3676 = vmatpush1.bf16.msra.mxu0 %v3083
        %3677 = vmatprep.subr.bf16.mxu0 %v3092
        %3678 = vmatpush1.bf16.msra.mxu0 %v3091
        %3679 = vmatprep.subr.bf16.mxu0 %v3100
        %3680 = vmatpush1.bf16.msra.mxu0 %v3099
        %3681 = vmatprep.subr.bf16.mxu0 %v3108
        %3682 = vmatpush1.bf16.msra.mxu0 %v3107
        %3683 = vmatprep.subr.bf16.mxu0 %v3116
        %3684 = vmatpush1.bf16.msra.mxu0 %v3115
        %3685 = vmatprep.subr.bf16.mxu0 %v3124
        %3686 = vmatpush1.bf16.msra.mxu0 %v3123
        %3687 = vmatprep.subr.bf16.mxu0 %v3132
        %3688 = vmatpush1.bf16.msra.mxu0 %v3131
        %3689 = vmatprep.subr.bf16.mxu0 %v3140
        %3690 = vmatpush1.bf16.msra.mxu0 %v3139
        %3691 = vmatprep.subr.bf16.mxu0 %v3148
        %3692 = vmatpush1.bf16.msra.mxu0 %v3147
        %3693 = vmatprep.subr.bf16.mxu0 %v3156
        %3694 = vmatpush1.bf16.msra.mxu0 %v3155
        %3695 = vmatprep.subr.bf16.mxu0 %v3164
        %3696 = vmatpush1.bf16.msra.mxu0 %v3163
        %3697 = vmatprep.subr.bf16.mxu0 %v3172
        %3698 = vmatpush1.bf16.msra.mxu0 %v3171
        %3699 = vmatprep.subr.bf16.mxu0 %v3180
        %3700 = vmatpush1.bf16.msra.mxu0 %v3179
        %3701 = vmatprep.subr.bf16.mxu0 %v3188
        %3702 = vmatpush1.bf16.msra.mxu0 %v3187
        %3703 = vmatprep.subr.bf16.mxu0 %v3196
        %3704 = vmatpush1.bf16.msra.mxu0 %v3195
        %3705 = vmatprep.subr.bf16.mxu0 %v3204
        %3706 = vmatpush1.bf16.msra.mxu0 %v3203
        %3707 = vmatprep.mubr.bf16.mxu0 %v2012
        %3708 = vmatmul.mubr.bf16.gmra.mrb[0].mxu0 %v2011
        %v3709 = vpop.f32.mrb[0].mxu0
        %v3710 = vadd.f32 %v2284, %v3709
        %v3711 = vpop.f32.mrb[0].mxu0
        %v3712 = vadd.f32 %v2288, %v3711
        %v3713 = vpop.f32.mrb[0].mxu0
        %v3714 = vpop.f32.mrb[0].mxu0
        %3715 = vdwg.mxu0
        %3716 = vmatprep.subr.bf16.mxu0 %v3212
        %3717 = vmatpush1.bf16.msra.mxu0 %v3211
        %3718 = vmatprep.subr.bf16.mxu0 %v3220
        %3719 = vmatpush1.bf16.msra.mxu0 %v3219
        %3720 = vmatprep.subr.bf16.mxu0 %v3228
        %3721 = vmatpush1.bf16.msra.mxu0 %v3227
        %3722 = vmatprep.subr.bf16.mxu0 %v3236
        %3723 = vmatpush1.bf16.msra.mxu0 %v3235
        %3724 = vmatprep.subr.bf16.mxu0 %v3244
        %3725 = vmatpush1.bf16.msra.mxu0 %v3243
        %3726 = vmatprep.subr.bf16.mxu0 %v3252
        %3727 = vmatpush1.bf16.msra.mxu0 %v3251
        %3728 = vmatprep.subr.bf16.mxu0 %v3260
        %3729 = vmatpush1.bf16.msra.mxu0 %v3259
        %3730 = vmatprep.subr.bf16.mxu0 %v3268
        %3731 = vmatpush1.bf16.msra.mxu0 %v3267
        %3732 = vmatprep.subr.bf16.mxu0 %v3276
        %3733 = vmatpush1.bf16.msra.mxu0 %v3275
        %3734 = vmatprep.subr.bf16.mxu0 %v3284
        %3735 = vmatpush1.bf16.msra.mxu0 %v3283
        %3736 = vmatprep.subr.bf16.mxu0 %v3292
        %3737 = vmatpush1.bf16.msra.mxu0 %v3291
        %3738 = vmatprep.subr.bf16.mxu0 %v3300
        %3739 = vmatpush1.bf16.msra.mxu0 %v3299
        %3740 = vmatprep.subr.bf16.mxu0 %v3308
        %3741 = vmatpush1.bf16.msra.mxu0 %v3307
        %3742 = vmatprep.subr.bf16.mxu0 %v3316
        %3743 = vmatpush1.bf16.msra.mxu0 %v3315
        %3744 = vmatprep.subr.bf16.mxu0 %v3324
        %3745 = vmatpush1.bf16.msra.mxu0 %v3323
        %3746 = vmatprep.subr.bf16.mxu0 %v3332
        %3747 = vmatpush1.bf16.msra.mxu0 %v3331
        %3748 = vmatprep.mubr.bf16.mxu0 %v2014
        %3749 = vmatmul.mubr.bf16.gmra.mrb[0].mxu0 %v2013
        %v3750 = vpop.f32.mrb[0].mxu0
        %v3751 = vadd.f32 %v3710, %v3750
        %v3752 = vpop.f32.mrb[0].mxu0
        %v3753 = vadd.f32 %v3712, %v3752
        %v3754 = vpop.f32.mrb[0].mxu0
        %v3755 = vpop.f32.mrb[0].mxu0
        %3756 = vdwg.mxu0
        %3757 = vmatprep.subr.bf16.mxu0 %v3086
        %3758 = vmatpush1.bf16.msra.mxu0 %v3085
        %3759 = vmatprep.subr.bf16.mxu0 %v3094
        %3760 = vmatpush1.bf16.msra.mxu0 %v3093
        %3761 = vmatprep.subr.bf16.mxu0 %v3102
        %3762 = vmatpush1.bf16.msra.mxu0 %v3101
        %3763 = vmatprep.subr.bf16.mxu0 %v3110
        %3764 = vmatpush1.bf16.msra.mxu0 %v3109
        %3765 = vmatprep.subr.bf16.mxu0 %v3118
        %3766 = vmatpush1.bf16.msra.mxu0 %v3117
        %3767 = vmatprep.subr.bf16.mxu0 %v3126
        %3768 = vmatpush1.bf16.msra.mxu0 %v3125
        %3769 = vmatprep.subr.bf16.mxu0 %v3134
        %3770 = vmatpush1.bf16.msra.mxu0 %v3133
        %3771 = vmatprep.subr.bf16.mxu0 %v3142
        %3772 = vmatpush1.bf16.msra.mxu0 %v3141
        %3773 = vmatprep.subr.bf16.mxu0 %v3150
        %3774 = vmatpush1.bf16.msra.mxu0 %v3149
        %3775 = vmatprep.subr.bf16.mxu0 %v3158
        %3776 = vmatpush1.bf16.msra.mxu0 %v3157
        %3777 = vmatprep.subr.bf16.mxu0 %v3166
        %3778 = vmatpush1.bf16.msra.mxu0 %v3165
        %3779 = vmatprep.subr.bf16.mxu0 %v3174
        %3780 = vmatpush1.bf16.msra.mxu0 %v3173
        %3781 = vmatprep.subr.bf16.mxu0 %v3182
        %3782 = vmatpush1.bf16.msra.mxu0 %v3181
        %3783 = vmatprep.subr.bf16.mxu0 %v3190
        %3784 = vmatpush1.bf16.msra.mxu0 %v3189
        %3785 = vmatprep.subr.bf16.mxu0 %v3198
        %3786 = vmatpush1.bf16.msra.mxu0 %v3197
        %3787 = vmatprep.subr.bf16.mxu0 %v3206
        %3788 = vmatpush1.bf16.msra.mxu0 %v3205
        %3789 = vmatprep.mubr.bf16.mxu0 %v2012
        %3790 = vmatmul.mubr.bf16.gmra.mrb[0].mxu0 %v2011
        %v3791 = vpop.f32.mrb[0].mxu0
        %v3792 = vadd.f32 %v2292, %v3791
        %v3793 = vpop.f32.mrb[0].mxu0
        %v3794 = vadd.f32 %v2296, %v3793
        %v3795 = vpop.f32.mrb[0].mxu0
        %v3796 = vpop.f32.mrb[0].mxu0
        %3797 = vdwg.mxu0
        %3798 = vmatprep.subr.bf16.mxu0 %v3214
        %3799 = vmatpush1.bf16.msra.mxu0 %v3213
        %3800 = vmatprep.subr.bf16.mxu0 %v3222
        %3801 = vmatpush1.bf16.msra.mxu0 %v3221
        %3802 = vmatprep.subr.bf16.mxu0 %v3230
        %3803 = vmatpush1.bf16.msra.mxu0 %v3229
        %3804 = vmatprep.subr.bf16.mxu0 %v3238
        %3805 = vmatpush1.bf16.msra.mxu0 %v3237
        %3806 = vmatprep.subr.bf16.mxu0 %v3246
        %3807 = vmatpush1.bf16.msra.mxu0 %v3245
        %3808 = vmatprep.subr.bf16.mxu0 %v3254
        %3809 = vmatpush1.bf16.msra.mxu0 %v3253
        %3810 = vmatprep.subr.bf16.mxu0 %v3262
        %3811 = vmatpush1.bf16.msra.mxu0 %v3261
        %3812 = vmatprep.subr.bf16.mxu0 %v3270
        %3813 = vmatpush1.bf16.msra.mxu0 %v3269
        %3814 = vmatprep.subr.bf16.mxu0 %v3278
        %3815 = vmatpush1.bf16.msra.mxu0 %v3277
        %3816 = vmatprep.subr.bf16.mxu0 %v3286
        %3817 = vmatpush1.bf16.msra.mxu0 %v3285
        %3818 = vmatprep.subr.bf16.mxu0 %v3294
        %3819 = vmatpush1.bf16.msra.mxu0 %v3293
        %3820 = vmatprep.subr.bf16.mxu0 %v3302
        %3821 = vmatpush1.bf16.msra.mxu0 %v3301
        %3822 = vmatprep.subr.bf16.mxu0 %v3310
        %3823 = vmatpush1.bf16.msra.mxu0 %v3309
        %3824 = vmatprep.subr.bf16.mxu0 %v3318
        %3825 = vmatpush1.bf16.msra.mxu0 %v3317
        %3826 = vmatprep.subr.bf16.mxu0 %v3326
        %3827 = vmatpush1.bf16.msra.mxu0 %v3325
        %3828 = vmatprep.subr.bf16.mxu0 %v3334
        %3829 = vmatpush1.bf16.msra.mxu0 %v3333
        %3830 = vmatprep.mubr.bf16.mxu0 %v2014
        %3831 = vmatmul.mubr.bf16.gmra.mrb[0].mxu0 %v2013
        %v3832 = vpop.f32.mrb[0].mxu0
        %v3833 = vadd.f32 %v3792, %v3832
        %v3834 = vpop.f32.mrb[0].mxu0
        %v3835 = vadd.f32 %v3794, %v3834
        %v3836 = vpop.f32.mrb[0].mxu0
        %v3837 = vpop.f32.mrb[0].mxu0
        %3838 = vdwg.mxu0
        %3839 = vmatprep.subr.bf16.mxu0 %v3088
        %3840 = vmatpush1.bf16.msra.mxu0 %v3087
        %3841 = vmatprep.subr.bf16.mxu0 %v3096
        %3842 = vmatpush1.bf16.msra.mxu0 %v3095
        %3843 = vmatprep.subr.bf16.mxu0 %v3104
        %3844 = vmatpush1.bf16.msra.mxu0 %v3103
        %3845 = vmatprep.subr.bf16.mxu0 %v3112
        %3846 = vmatpush1.bf16.msra.mxu0 %v3111
        %3847 = vmatprep.subr.bf16.mxu0 %v3120
        %3848 = vmatpush1.bf16.msra.mxu0 %v3119
        %3849 = vmatprep.subr.bf16.mxu0 %v3128
        %3850 = vmatpush1.bf16.msra.mxu0 %v3127
        %3851 = vmatprep.subr.bf16.mxu0 %v3136
        %3852 = vmatpush1.bf16.msra.mxu0 %v3135
        %3853 = vmatprep.subr.bf16.mxu0 %v3144
        %3854 = vmatpush1.bf16.msra.mxu0 %v3143
        %3855 = vmatprep.subr.bf16.mxu0 %v3152
        %3856 = vmatpush1.bf16.msra.mxu0 %v3151
        %3857 = vmatprep.subr.bf16.mxu0 %v3160
        %3858 = vmatpush1.bf16.msra.mxu0 %v3159
        %3859 = vmatprep.subr.bf16.mxu0 %v3168
        %3860 = vmatpush1.bf16.msra.mxu0 %v3167
        %3861 = vmatprep.subr.bf16.mxu0 %v3176
        %3862 = vmatpush1.bf16.msra.mxu0 %v3175
        %3863 = vmatprep.subr.bf16.mxu0 %v3184
        %3864 = vmatpush1.bf16.msra.mxu0 %v3183
        %3865 = vmatprep.subr.bf16.mxu0 %v3192
        %3866 = vmatpush1.bf16.msra.mxu0 %v3191
        %3867 = vmatprep.subr.bf16.mxu0 %v3200
        %3868 = vmatpush1.bf16.msra.mxu0 %v3199
        %3869 = vmatprep.subr.bf16.mxu0 %v3208
        %3870 = vmatpush1.bf16.msra.mxu0 %v3207
        %3871 = vmatprep.mubr.bf16.mxu0 %v2012
        %3872 = vmatmul.mubr.bf16.gmra.mrb[0].mxu0 %v2011
        %v3873 = vpop.f32.mrb[0].mxu0
        %v3874 = vadd.f32 %v2300, %v3873
        %v3875 = vpop.f32.mrb[0].mxu0
        %v3876 = vadd.f32 %v2304, %v3875
        %v3877 = vpop.f32.mrb[0].mxu0
        %v3878 = vpop.f32.mrb[0].mxu0
        %3879 = vdwg.mxu0
        %3880 = vmatprep.subr.bf16.mxu0 %v3216
        %3881 = vmatpush1.bf16.msra.mxu0 %v3215
        %3882 = vmatprep.subr.bf16.mxu0 %v3224
        %3883 = vmatpush1.bf16.msra.mxu0 %v3223
        %3884 = vmatprep.subr.bf16.mxu0 %v3232
        %3885 = vmatpush1.bf16.msra.mxu0 %v3231
        %3886 = vmatprep.subr.bf16.mxu0 %v3240
        %3887 = vmatpush1.bf16.msra.mxu0 %v3239
        %3888 = vmatprep.subr.bf16.mxu0 %v3248
        %3889 = vmatpush1.bf16.msra.mxu0 %v3247
        %3890 = vmatprep.subr.bf16.mxu0 %v3256
        %3891 = vmatpush1.bf16.msra.mxu0 %v3255
        %3892 = vmatprep.subr.bf16.mxu0 %v3264
        %3893 = vmatpush1.bf16.msra.mxu0 %v3263
        %3894 = vmatprep.subr.bf16.mxu0 %v3272
        %3895 = vmatpush1.bf16.msra.mxu0 %v3271
        %3896 = vmatprep.subr.bf16.mxu0 %v3280
        %3897 = vmatpush1.bf16.msra.mxu0 %v3279
        %3898 = vmatprep.subr.bf16.mxu0 %v3288
        %3899 = vmatpush1.bf16.msra.mxu0 %v3287
        %3900 = vmatprep.subr.bf16.mxu0 %v3296
        %3901 = vmatpush1.bf16.msra.mxu0 %v3295
        %3902 = vmatprep.subr.bf16.mxu0 %v3304
        %3903 = vmatpush1.bf16.msra.mxu0 %v3303
        %3904 = vmatprep.subr.bf16.mxu0 %v3312
        %3905 = vmatpush1.bf16.msra.mxu0 %v3311
        %3906 = vmatprep.subr.bf16.mxu0 %v3320
        %3907 = vmatpush1.bf16.msra.mxu0 %v3319
        %3908 = vmatprep.subr.bf16.mxu0 %v3328
        %3909 = vmatpush1.bf16.msra.mxu0 %v3327
        %3910 = vmatprep.subr.bf16.mxu0 %v3336
        %3911 = vmatpush1.bf16.msra.mxu0 %v3335
        %3912 = vmatprep.mubr.bf16.mxu0 %v2014
        %3913 = vmatmul.mubr.bf16.gmra.mrb[0].mxu0 %v2013
        %v3914 = vpop.f32.mrb[0].mxu0
        %v3915 = vadd.f32 %v3874, %v3914
        %v3916 = vpop.f32.mrb[0].mxu0
        %v3917 = vadd.f32 %v3876, %v3916
        %v3918 = vpop.f32.mrb[0].mxu0
        %v3919 = vpop.f32.mrb[0].mxu0
        %3920 = vdwg.mxu0
        %v3921 = vld [vmem:[#allocation12 + $0x1b] sm:$0xff]
        %v3922 = vld [vmem:[#allocation12 + $0x23] sm:$0xff]
        %v3923 = vrot.slane %v3669, 4
        %v3924 = vadd.f32 %v3669, %v3923
        %v3925 = vrot.slane %v3924, 2
        %v3926 = vadd.f32 %v3924, %v3925
        %v3927 = vrot.slane %v3926, 1
        %v3928 = vadd.f32 %v3926, %v3927
        %v3929 = vrot.slane %v3671, 4
        %v3930 = vadd.f32 %v3671, %v3929
        %v3931 = vrot.slane %v3930, 2
        %v3932 = vadd.f32 %v3930, %v3931
        %v3933 = vrot.slane %v3932, 1
        %v3934 = vadd.f32 %v3932, %v3933
        %v3935 = vrot.slane %v3751, 4
        %v3936 = vadd.f32 %v3751, %v3935
        %v3937 = vrot.slane %v3936, 2
        %v3938 = vadd.f32 %v3936, %v3937
        %v3939 = vrot.slane %v3938, 1
        %v3940 = vadd.f32 %v3938, %v3939
        %v3941 = vrot.slane %v3753, 4
        %v3942 = vadd.f32 %v3753, %v3941
        %v3943 = vrot.slane %v3942, 2
        %v3944 = vadd.f32 %v3942, %v3943
        %v3945 = vrot.slane %v3944, 1
        %v3946 = vadd.f32 %v3944, %v3945
        %v3947 = vrot.slane %v3833, 4
        %v3948 = vadd.f32 %v3833, %v3947
        %v3949 = vrot.slane %v3948, 2
        %v3950 = vadd.f32 %v3948, %v3949
        %v3951 = vrot.slane %v3950, 1
        %v3952 = vadd.f32 %v3950, %v3951
        %v3953 = vrot.slane %v3835, 4
        %v3954 = vadd.f32 %v3835, %v3953
        %v3955 = vrot.slane %v3954, 2
        %v3956 = vadd.f32 %v3954, %v3955
        %v3957 = vrot.slane %v3956, 1
        %v3958 = vadd.f32 %v3956, %v3957
        %v3959 = vrot.slane %v3915, 4
        %v3960 = vadd.f32 %v3915, %v3959
        %v3961 = vrot.slane %v3960, 2
        %v3962 = vadd.f32 %v3960, %v3961
        %v3963 = vrot.slane %v3962, 1
        %v3964 = vadd.f32 %v3962, %v3963
        %v3965 = vrot.slane %v3917, 4
        %v3966 = vadd.f32 %v3917, %v3965
        %v3967 = vrot.slane %v3966, 2
        %v3968 = vadd.f32 %v3966, %v3967
        %v3969 = vrot.slane %v3968, 1
        %v3970 = vadd.f32 %v3968, %v3969
        %v3971 = vmul.f32 %v3928, %v1322
        %v3972 = vmul.f32 %v3934, %v1322
        %v3973 = vmul.f32 %v3940, %v1322
        %v3974 = vmul.f32 %v3946, %v1322
        %v3975 = vmul.f32 %v3952, %v1322
        %v3976 = vmul.f32 %v3958, %v1322
        %v3977 = vmul.f32 %v3964, %v1322
        %v3978 = vmul.f32 %v3970, %v1322
        %v3979 = vsub.f32 %v3669, %v3971
        %v3980 = vsub.f32 %v3671, %v3972
        %v3981 = vsub.f32 %v3751, %v3973
        %v3982 = vsub.f32 %v3753, %v3974
        %v3983 = vsub.f32 %v3833, %v3975
        %v3984 = vsub.f32 %v3835, %v3976
        %v3985 = vsub.f32 %v3915, %v3977
        %v3986 = vsub.f32 %v3917, %v3978
        %v3987 = vmul.f32 %v3979, %v3979
        %v3988 = vmul.f32 %v3980, %v3980
        %v3989 = vmul.f32 %v3981, %v3981
        %v3990 = vmul.f32 %v3982, %v3982
        %v3991 = vmul.f32 %v3983, %v3983
        %v3992 = vmul.f32 %v3984, %v3984
        %v3993 = vmul.f32 %v3985, %v3985
        %v3994 = vmul.f32 %v3986, %v3986
        %v3995 = vrot.slane %v3987, 4
        %v3996 = vadd.f32 %v3987, %v3995
        %v3997 = vrot.slane %v3996, 2
        %v3998 = vadd.f32 %v3996, %v3997
        %v3999 = vrot.slane %v3998, 1
        %v4000 = vadd.f32 %v3998, %v3999
        %v4001 = vrot.slane %v3988, 4
        %v4002 = vadd.f32 %v3988, %v4001
        %v4003 = vrot.slane %v4002, 2
        %v4004 = vadd.f32 %v4002, %v4003
        %v4005 = vrot.slane %v4004, 1
        %v4006 = vadd.f32 %v4004, %v4005
        %v4007 = vrot.slane %v3989, 4
        %v4008 = vadd.f32 %v3989, %v4007
        %v4009 = vrot.slane %v4008, 2
        %v4010 = vadd.f32 %v4008, %v4009
        %v4011 = vrot.slane %v4010, 1
        %v4012 = vadd.f32 %v4010, %v4011
        %v4013 = vrot.slane %v3990, 4
        %v4014 = vadd.f32 %v3990, %v4013
        %v4015 = vrot.slane %v4014, 2
        %v4016 = vadd.f32 %v4014, %v4015
        %v4017 = vrot.slane %v4016, 1
        %v4018 = vadd.f32 %v4016, %v4017
        %v4019 = vrot.slane %v3991, 4
        %v4020 = vadd.f32 %v3991, %v4019
        %v4021 = vrot.slane %v4020, 2
        %v4022 = vadd.f32 %v4020, %v4021
        %v4023 = vrot.slane %v4022, 1
        %v4024 = vadd.f32 %v4022, %v4023
        %v4025 = vrot.slane %v3992, 4
        %v4026 = vadd.f32 %v3992, %v4025
        %v4027 = vrot.slane %v4026, 2
        %v4028 = vadd.f32 %v4026, %v4027
        %v4029 = vrot.slane %v4028, 1
        %v4030 = vadd.f32 %v4028, %v4029
        %v4031 = vrot.slane %v3993, 4
        %v4032 = vadd.f32 %v3993, %v4031
        %v4033 = vrot.slane %v4032, 2
        %v4034 = vadd.f32 %v4032, %v4033
        %v4035 = vrot.slane %v4034, 1
        %v4036 = vadd.f32 %v4034, %v4035
        %v4037 = vrot.slane %v3994, 4
        %v4038 = vadd.f32 %v3994, %v4037
        %v4039 = vrot.slane %v4038, 2
        %v4040 = vadd.f32 %v4038, %v4039
        %v4041 = vrot.slane %v4040, 1
        %v4042 = vadd.f32 %v4040, %v4041
        %v4043 = vmul.f32 %v4000, %v1322
        %v4044 = vmul.f32 %v4006, %v1322
        %v4045 = vmul.f32 %v4012, %v1322
        %v4046 = vmul.f32 %v4018, %v1322
        %v4047 = vmul.f32 %v4024, %v1322
        %v4048 = vmul.f32 %v4030, %v1322
        %v4049 = vmul.f32 %v4036, %v1322
        %v4050 = vmul.f32 %v4042, %v1322
        %v4051 = vadd.f32 %v4043, 0.8
        %v4052 = vadd.f32 %v4044, 0.8
        %v4053 = vadd.f32 %v4045, 0.8
        %v4054 = vadd.f32 %v4046, 0.8
        %v4055 = vadd.f32 %v4047, 0.8
        %v4056 = vadd.f32 %v4048, 0.8
        %v4057 = vadd.f32 %v4049, 0.8
        %v4058 = vadd.f32 %v4050, 0.8
        %v4059 = vrsqrt.pop %v4051
        %v4060 = vrsqrt.pop %v4052
        %v4061 = vrsqrt.pop %v4053
        %v4062 = vrsqrt.pop %v4054
        %v4063 = vrsqrt.pop %v4055
        %v4064 = vrsqrt.pop %v4056
        %v4065 = vrsqrt.pop %v4057
        %v4066 = vrsqrt.pop %v4058
        %v4067 = vmul.f32 %v3979, %v4059
        %v4068 = vmul.f32 %v3980, %v4060
        %v4069 = vmul.f32 %v3981, %v4061
        %v4070 = vmul.f32 %v3982, %v4062
        %v4071 = vmul.f32 %v3983, %v4063
        %v4072 = vmul.f32 %v3984, %v4064
        %v4073 = vmul.f32 %v3985, %v4065
        %v4074 = vmul.f32 %v3986, %v4066
        %v4076 = vlaneseq
        %v4077 = vshrl.u32 %v4076, 7
        %v4078 = vsub.s32 0, %v4077
        %v4079 = vrot.slane %v3921, %v4078
        %v4080 = vlaneseq
        %v4081 = vshrl.u32 %v4080, 7
        %v4082 = vsub.s32 1, %v4081
        %v4083 = vrot.slane %v3921, %v4082
        %v4084 = vlaneseq
        %v4085 = vshrl.u32 %v4084, 7
        %v4086 = vsub.s32 2, %v4085
        %v4087 = vrot.slane %v3921, %v4086
        %v4088 = vlaneseq
        %v4089 = vshrl.u32 %v4088, 7
        %v4090 = vsub.s32 3, %v4089
        %v4091 = vrot.slane %v3921, %v4090
        %v4092 = vlaneseq
        %v4093 = vshrl.u32 %v4092, 7
        %v4094 = vsub.s32 4, %v4093
        %v4095 = vrot.slane %v3921, %v4094
        %v4096 = vlaneseq
        %v4097 = vshrl.u32 %v4096, 7
        %v4098 = vsub.s32 5, %v4097
        %v4099 = vrot.slane %v3921, %v4098
        %v4100 = vlaneseq
        %v4101 = vshrl.u32 %v4100, 7
        %v4102 = vsub.s32 6, %v4101
        %v4103 = vrot.slane %v3921, %v4102
        %v4104 = vlaneseq
        %v4105 = vshrl.u32 %v4104, 7
        %v4106 = vsub.s32 7, %v4105
        %v4107 = vrot.slane %v3921, %v4106
        %v4116 = vmul.f32 %v4067, %v4079
        %v4117 = vmul.f32 %v4068, %v4083
        %v4118 = vmul.f32 %v4069, %v4087
        %v4119 = vmul.f32 %v4070, %v4091
        %v4120 = vmul.f32 %v4071, %v4095
        %v4121 = vmul.f32 %v4072, %v4099
        %v4122 = vmul.f32 %v4073, %v4103
        %v4123 = vmul.f32 %v4074, %v4107
        %v4125 = vlaneseq
        %v4126 = vshrl.u32 %v4125, 7
        %v4127 = vsub.s32 0, %v4126
        %v4128 = vrot.slane %v3922, %v4127
        %v4129 = vlaneseq
        %v4130 = vshrl.u32 %v4129, 7
        %v4131 = vsub.s32 1, %v4130
        %v4132 = vrot.slane %v3922, %v4131
        %v4133 = vlaneseq
        %v4134 = vshrl.u32 %v4133, 7
        %v4135 = vsub.s32 2, %v4134
        %v4136 = vrot.slane %v3922, %v4135
        %v4137 = vlaneseq
        %v4138 = vshrl.u32 %v4137, 7
        %v4139 = vsub.s32 3, %v4138
        %v4140 = vrot.slane %v3922, %v4139
        %v4141 = vlaneseq
        %v4142 = vshrl.u32 %v4141, 7
        %v4143 = vsub.s32 4, %v4142
        %v4144 = vrot.slane %v3922, %v4143
        %v4145 = vlaneseq
        %v4146 = vshrl.u32 %v4145, 7
        %v4147 = vsub.s32 5, %v4146
        %v4148 = vrot.slane %v3922, %v4147
        %v4149 = vlaneseq
        %v4150 = vshrl.u32 %v4149, 7
        %v4151 = vsub.s32 6, %v4150
        %v4152 = vrot.slane %v3922, %v4151
        %v4153 = vlaneseq
        %v4154 = vshrl.u32 %v4153, 7
        %v4155 = vsub.s32 7, %v4154
        %v4156 = vrot.slane %v3922, %v4155
        %v4165 = vadd.f32 %v4116, %v4128
        %v4166 = vadd.f32 %v4117, %v4132
        %v4167 = vadd.f32 %v4118, %v4136
        %v4168 = vadd.f32 %v4119, %v4140
        %v4169 = vadd.f32 %v4120, %v4144
        %v4170 = vadd.f32 %v4121, %v4148
        %v4171 = vadd.f32 %v4122, %v4152
        %v4172 = vadd.f32 %v4123, %v4156
        %vm4173 = vcmp.gt.f32.partialorder %v4165, 0.0
        %vm4174 = vcmp.gt.f32.partialorder %v4166, 0.0
        %vm4175 = vcmp.gt.f32.partialorder %v4167, 0.0
        %vm4176 = vcmp.gt.f32.partialorder %v4168, 0.0
        %vm4177 = vcmp.gt.f32.partialorder %v4169, 0.0
        %vm4178 = vcmp.gt.f32.partialorder %v4170, 0.0
        %vm4179 = vcmp.gt.f32.partialorder %v4171, 0.0
        %vm4180 = vcmp.gt.f32.partialorder %v4172, 0.0
        %v4181 = vmul.f32 %v4165, 0.2
        %v4182 = vmul.f32 %v4166, 0.2
        %v4183 = vmul.f32 %v4167, 0.2
        %v4184 = vmul.f32 %v4168, 0.2
        %v4185 = vmul.f32 %v4169, 0.2
        %v4186 = vmul.f32 %v4170, 0.2
        %v4187 = vmul.f32 %v4171, 0.2
        %v4188 = vmul.f32 %v4172, 0.2
        %v4189 = vsel %vm4173, %v4165, %v4181
        %v4190 = vsel %vm4174, %v4166, %v4182
        %v4191 = vsel %vm4175, %v4167, %v4183
        %v4192 = vsel %vm4176, %v4168, %v4184
        %v4193 = vsel %vm4177, %v4169, %v4185
        %v4194 = vsel %vm4178, %v4170, %v4186
        %v4195 = vsel %vm4179, %v4171, %v4187
        %v4196 = vsel %vm4180, %v4172, %v4188
        %v4197 = vpack.c.bf16 %v4189, %v4189
        %v4198 = vpack.c.bf16 %v4190, %v4190
        %v4199 = vpack.c.bf16 %v4191, %v4191
        %v4200 = vpack.c.bf16 %v4192, %v4192
        %v4201 = vpack.c.bf16 %v4193, %v4193
        %v4202 = vpack.c.bf16 %v4194, %v4194
        %v4203 = vpack.c.bf16 %v4195, %v4195
        %v4204 = vpack.c.bf16 %v4196, %v4196
        %s4205 = sadd.s32 %s445, 1
        %s4206 = smul.u32 %s4205, 128
        %s4207 = smul.addr %s4206, 128
        %s4208 = scalar_lea.hbm %s5, %s4207
        %s4209 = scalar_lea.vmem [#allocation2], 1024
        %s4210 = scalar_lea.sflag [#allocation3], 1
        // Predicated region
        $region89: #{generator_forward.1} parent=51 // pred_check
          _
        $region90: #{generator_forward.1} parent=51 // pred_check_branch
          %4212 = sbr.rel target = $region92
        $region91: #{generator_forward.1} parent=51 // pred_region
          %4213 = sst [smem:[#allocation18]] [#allocation21]
          %4214 = sst [smem:[#allocation19]] [#allocation20]
        $region92: #{generator_forward.1} parent=51 // pred_fallthru
          _
        %4216 = shalt.err (0)
        %s4218 = sshll.u32 %s4209, 4
        %s4219 = int_to_ptr.vmem [resolvable:$true] %s4218
        %4221 = dma.hbm_to_vmem [thread:$0]  %s4208, 16384, %s4219, %s4210
        %s4222 = smul.u32 2, 128
        %s4223 = smul.u32 %s4222, 4
        %s4224 = sshll.u32 %s4223, 4
        %4225 = dma.done [#allocation3], %s4224
        %v4226 = vld [vmem:[#allocation2] sm:$0xff]
        %v4227 = vld [vmem:[#allocation2 + $0x8] sm:$0xff]
        %v4228 = vld [vmem:[#allocation2 + $0x10] sm:$0xff]
        %v4229 = vld [vmem:[#allocation2 + $0x18] sm:$0xff]
        %v4230 = vld [vmem:[#allocation2 + $0x20] sm:$0xff]
        %v4231 = vld [vmem:[#allocation2 + $0x28] sm:$0xff]
        %v4232 = vld [vmem:[#allocation2 + $0x30] sm:$0xff]
        %v4233 = vld [vmem:[#allocation2 + $0x38] sm:$0xff]
        %v4234 = vld [vmem:[#allocation2 + $0x40] sm:$0xff]
        %v4235 = vld [vmem:[#allocation2 + $0x48] sm:$0xff]
        %v4236 = vld [vmem:[#allocation2 + $0x50] sm:$0xff]
        %v4237 = vld [vmem:[#allocation2 + $0x58] sm:$0xff]
        %v4238 = vld [vmem:[#allocation2 + $0x60] sm:$0xff]
        %v4239 = vld [vmem:[#allocation2 + $0x68] sm:$0xff]
        %v4240 = vld [vmem:[#allocation2 + $0x70] sm:$0xff]
        %v4241 = vld [vmem:[#allocation2 + $0x78] sm:$0xff]
        %v4242 = vld [vmem:[#allocation2 + $0x80] sm:$0xff]
        %v4243 = vld [vmem:[#allocation2 + $0x88] sm:$0xff]
        %v4244 = vld [vmem:[#allocation2 + $0x90] sm:$0xff]
        %v4245 = vld [vmem:[#allocation2 + $0x98] sm:$0xff]
        %v4246 = vld [vmem:[#allocation2 + $0xa0] sm:$0xff]
        %v4247 = vld [vmem:[#allocation2 + $0xa8] sm:$0xff]
        %v4248 = vld [vmem:[#allocation2 + $0xb0] sm:$0xff]
        %v4249 = vld [vmem:[#allocation2 + $0xb8] sm:$0xff]
        %v4250 = vld [vmem:[#allocation2 + $0xc0] sm:$0xff]
        %v4251 = vld [vmem:[#allocation2 + $0xc8] sm:$0xff]
        %v4252 = vld [vmem:[#allocation2 + $0xd0] sm:$0xff]
        %v4253 = vld [vmem:[#allocation2 + $0xd8] sm:$0xff]
        %v4254 = vld [vmem:[#allocation2 + $0xe0] sm:$0xff]
        %v4255 = vld [vmem:[#allocation2 + $0xe8] sm:$0xff]
        %v4256 = vld [vmem:[#allocation2 + $0xf0] sm:$0xff]
        %v4257 = vld [vmem:[#allocation2 + $0xf8] sm:$0xff]
        %v4258 = vld [vmem:[#allocation2 + $0x100] sm:$0xff]
        %v4259 = vld [vmem:[#allocation2 + $0x108] sm:$0xff]
        %v4260 = vld [vmem:[#allocation2 + $0x110] sm:$0xff]
        %v4261 = vld [vmem:[#allocation2 + $0x118] sm:$0xff]
        %v4262 = vld [vmem:[#allocation2 + $0x120] sm:$0xff]
        %v4263 = vld [vmem:[#allocation2 + $0x128] sm:$0xff]
        %v4264 = vld [vmem:[#allocation2 + $0x130] sm:$0xff]
        %v4265 = vld [vmem:[#allocation2 + $0x138] sm:$0xff]
        %v4266 = vld [vmem:[#allocation2 + $0x140] sm:$0xff]
        %v4267 = vld [vmem:[#allocation2 + $0x148] sm:$0xff]
        %v4268 = vld [vmem:[#allocation2 + $0x150] sm:$0xff]
        %v4269 = vld [vmem:[#allocation2 + $0x158] sm:$0xff]
        %v4270 = vld [vmem:[#allocation2 + $0x160] sm:$0xff]
        %v4271 = vld [vmem:[#allocation2 + $0x168] sm:$0xff]
        %v4272 = vld [vmem:[#allocation2 + $0x170] sm:$0xff]
        %v4273 = vld [vmem:[#allocation2 + $0x178] sm:$0xff]
        %v4274 = vld [vmem:[#allocation2 + $0x180] sm:$0xff]
        %v4275 = vld [vmem:[#allocation2 + $0x188] sm:$0xff]
        %v4276 = vld [vmem:[#allocation2 + $0x190] sm:$0xff]
        %v4277 = vld [vmem:[#allocation2 + $0x198] sm:$0xff]
        %v4278 = vld [vmem:[#allocation2 + $0x1a0] sm:$0xff]
        %v4279 = vld [vmem:[#allocation2 + $0x1a8] sm:$0xff]
        %v4280 = vld [vmem:[#allocation2 + $0x1b0] sm:$0xff]
        %v4281 = vld [vmem:[#allocation2 + $0x1b8] sm:$0xff]
        %v4282 = vld [vmem:[#allocation2 + $0x1c0] sm:$0xff]
        %v4283 = vld [vmem:[#allocation2 + $0x1c8] sm:$0xff]
        %v4284 = vld [vmem:[#allocation2 + $0x1d0] sm:$0xff]
        %v4285 = vld [vmem:[#allocation2 + $0x1d8] sm:$0xff]
        %v4286 = vld [vmem:[#allocation2 + $0x1e0] sm:$0xff]
        %v4287 = vld [vmem:[#allocation2 + $0x1e8] sm:$0xff]
        %v4288 = vld [vmem:[#allocation2 + $0x1f0] sm:$0xff]
        %v4289 = vld [vmem:[#allocation2 + $0x1f8] sm:$0xff]
        %v4290 = vld [vmem:[#allocation2 + $0x200] sm:$0xff]
        %v4291 = vld [vmem:[#allocation2 + $0x208] sm:$0xff]
        %v4292 = vld [vmem:[#allocation2 + $0x210] sm:$0xff]
        %v4293 = vld [vmem:[#allocation2 + $0x218] sm:$0xff]
        %v4294 = vld [vmem:[#allocation2 + $0x220] sm:$0xff]
        %v4295 = vld [vmem:[#allocation2 + $0x228] sm:$0xff]
        %v4296 = vld [vmem:[#allocation2 + $0x230] sm:$0xff]
        %v4297 = vld [vmem:[#allocation2 + $0x238] sm:$0xff]
        %v4298 = vld [vmem:[#allocation2 + $0x240] sm:$0xff]
        %v4299 = vld [vmem:[#allocation2 + $0x248] sm:$0xff]
        %v4300 = vld [vmem:[#allocation2 + $0x250] sm:$0xff]
        %v4301 = vld [vmem:[#allocation2 + $0x258] sm:$0xff]
        %v4302 = vld [vmem:[#allocation2 + $0x260] sm:$0xff]
        %v4303 = vld [vmem:[#allocation2 + $0x268] sm:$0xff]
        %v4304 = vld [vmem:[#allocation2 + $0x270] sm:$0xff]
        %v4305 = vld [vmem:[#allocation2 + $0x278] sm:$0xff]
        %v4306 = vld [vmem:[#allocation2 + $0x280] sm:$0xff]
        %v4307 = vld [vmem:[#allocation2 + $0x288] sm:$0xff]
        %v4308 = vld [vmem:[#allocation2 + $0x290] sm:$0xff]
        %v4309 = vld [vmem:[#allocation2 + $0x298] sm:$0xff]
        %v4310 = vld [vmem:[#allocation2 + $0x2a0] sm:$0xff]
        %v4311 = vld [vmem:[#allocation2 + $0x2a8] sm:$0xff]
        %v4312 = vld [vmem:[#allocation2 + $0x2b0] sm:$0xff]
        %v4313 = vld [vmem:[#allocation2 + $0x2b8] sm:$0xff]
        %v4314 = vld [vmem:[#allocation2 + $0x2c0] sm:$0xff]
        %v4315 = vld [vmem:[#allocation2 + $0x2c8] sm:$0xff]
        %v4316 = vld [vmem:[#allocation2 + $0x2d0] sm:$0xff]
        %v4317 = vld [vmem:[#allocation2 + $0x2d8] sm:$0xff]
        %v4318 = vld [vmem:[#allocation2 + $0x2e0] sm:$0xff]
        %v4319 = vld [vmem:[#allocation2 + $0x2e8] sm:$0xff]
        %v4320 = vld [vmem:[#allocation2 + $0x2f0] sm:$0xff]
        %v4321 = vld [vmem:[#allocation2 + $0x2f8] sm:$0xff]
        %v4322 = vld [vmem:[#allocation2 + $0x300] sm:$0xff]
        %v4323 = vld [vmem:[#allocation2 + $0x308] sm:$0xff]
        %v4324 = vld [vmem:[#allocation2 + $0x310] sm:$0xff]
        %v4325 = vld [vmem:[#allocation2 + $0x318] sm:$0xff]
        %v4326 = vld [vmem:[#allocation2 + $0x320] sm:$0xff]
        %v4327 = vld [vmem:[#allocation2 + $0x328] sm:$0xff]
        %v4328 = vld [vmem:[#allocation2 + $0x330] sm:$0xff]
        %v4329 = vld [vmem:[#allocation2 + $0x338] sm:$0xff]
        %v4330 = vld [vmem:[#allocation2 + $0x340] sm:$0xff]
        %v4331 = vld [vmem:[#allocation2 + $0x348] sm:$0xff]
        %v4332 = vld [vmem:[#allocation2 + $0x350] sm:$0xff]
        %v4333 = vld [vmem:[#allocation2 + $0x358] sm:$0xff]
        %v4334 = vld [vmem:[#allocation2 + $0x360] sm:$0xff]
        %v4335 = vld [vmem:[#allocation2 + $0x368] sm:$0xff]
        %v4336 = vld [vmem:[#allocation2 + $0x370] sm:$0xff]
        %v4337 = vld [vmem:[#allocation2 + $0x378] sm:$0xff]
        %v4338 = vld [vmem:[#allocation2 + $0x380] sm:$0xff]
        %v4339 = vld [vmem:[#allocation2 + $0x388] sm:$0xff]
        %v4340 = vld [vmem:[#allocation2 + $0x390] sm:$0xff]
        %v4341 = vld [vmem:[#allocation2 + $0x398] sm:$0xff]
        %v4342 = vld [vmem:[#allocation2 + $0x3a0] sm:$0xff]
        %v4343 = vld [vmem:[#allocation2 + $0x3a8] sm:$0xff]
        %v4344 = vld [vmem:[#allocation2 + $0x3b0] sm:$0xff]
        %v4345 = vld [vmem:[#allocation2 + $0x3b8] sm:$0xff]
        %v4346 = vld [vmem:[#allocation2 + $0x3c0] sm:$0xff]
        %v4347 = vld [vmem:[#allocation2 + $0x3c8] sm:$0xff]
        %v4348 = vld [vmem:[#allocation2 + $0x3d0] sm:$0xff]
        %v4349 = vld [vmem:[#allocation2 + $0x3d8] sm:$0xff]
        %v4350 = vld [vmem:[#allocation2 + $0x3e0] sm:$0xff]
        %v4351 = vld [vmem:[#allocation2 + $0x3e8] sm:$0xff]
        %v4352 = vld [vmem:[#allocation2 + $0x3f0] sm:$0xff]
        %v4353 = vld [vmem:[#allocation2 + $0x3f8] sm:$0xff]
        %v4354 = vunpack.c.l.s8.bf16 %v4226
        %v4355 = vunpack.c.l.s8.bf16 %v4227
        %v4356 = vunpack.c.l.s8.bf16 %v4228
        %v4357 = vunpack.c.l.s8.bf16 %v4229
        %v4358 = vunpack.c.h.s8.bf16 %v4226
        %v4359 = vunpack.c.h.s8.bf16 %v4227
        %v4360 = vunpack.c.h.s8.bf16 %v4228
        %v4361 = vunpack.c.h.s8.bf16 %v4229
        %v4362 = vunpack.c.l.s8.bf16 %v4230
        %v4363 = vunpack.c.l.s8.bf16 %v4231
        %v4364 = vunpack.c.l.s8.bf16 %v4232
        %v4365 = vunpack.c.l.s8.bf16 %v4233
        %v4366 = vunpack.c.h.s8.bf16 %v4230
        %v4367 = vunpack.c.h.s8.bf16 %v4231
        %v4368 = vunpack.c.h.s8.bf16 %v4232
        %v4369 = vunpack.c.h.s8.bf16 %v4233
        %v4370 = vunpack.c.l.s8.bf16 %v4234
        %v4371 = vunpack.c.l.s8.bf16 %v4235
        %v4372 = vunpack.c.l.s8.bf16 %v4236
        %v4373 = vunpack.c.l.s8.bf16 %v4237
        %v4374 = vunpack.c.h.s8.bf16 %v4234
        %v4375 = vunpack.c.h.s8.bf16 %v4235
        %v4376 = vunpack.c.h.s8.bf16 %v4236
        %v4377 = vunpack.c.h.s8.bf16 %v4237
        %v4378 = vunpack.c.l.s8.bf16 %v4238
        %v4379 = vunpack.c.l.s8.bf16 %v4239
        %v4380 = vunpack.c.l.s8.bf16 %v4240
        %v4381 = vunpack.c.l.s8.bf16 %v4241
        %v4382 = vunpack.c.h.s8.bf16 %v4238
        %v4383 = vunpack.c.h.s8.bf16 %v4239
        %v4384 = vunpack.c.h.s8.bf16 %v4240
        %v4385 = vunpack.c.h.s8.bf16 %v4241
        %v4386 = vunpack.c.l.s8.bf16 %v4242
        %v4387 = vunpack.c.l.s8.bf16 %v4243
        %v4388 = vunpack.c.l.s8.bf16 %v4244
        %v4389 = vunpack.c.l.s8.bf16 %v4245
        %v4390 = vunpack.c.h.s8.bf16 %v4242
        %v4391 = vunpack.c.h.s8.bf16 %v4243
        %v4392 = vunpack.c.h.s8.bf16 %v4244
        %v4393 = vunpack.c.h.s8.bf16 %v4245
        %v4394 = vunpack.c.l.s8.bf16 %v4246
        %v4395 = vunpack.c.l.s8.bf16 %v4247
        %v4396 = vunpack.c.l.s8.bf16 %v4248
        %v4397 = vunpack.c.l.s8.bf16 %v4249
        %v4398 = vunpack.c.h.s8.bf16 %v4246
        %v4399 = vunpack.c.h.s8.bf16 %v4247
        %v4400 = vunpack.c.h.s8.bf16 %v4248
        %v4401 = vunpack.c.h.s8.bf16 %v4249
        %v4402 = vunpack.c.l.s8.bf16 %v4250
        %v4403 = vunpack.c.l.s8.bf16 %v4251
        %v4404 = vunpack.c.l.s8.bf16 %v4252
        %v4405 = vunpack.c.l.s8.bf16 %v4253
        %v4406 = vunpack.c.h.s8.bf16 %v4250
        %v4407 = vunpack.c.h.s8.bf16 %v4251
        %v4408 = vunpack.c.h.s8.bf16 %v4252
        %v4409 = vunpack.c.h.s8.bf16 %v4253
        %v4410 = vunpack.c.l.s8.bf16 %v4254
        %v4411 = vunpack.c.l.s8.bf16 %v4255
        %v4412 = vunpack.c.l.s8.bf16 %v4256
        %v4413 = vunpack.c.l.s8.bf16 %v4257
        %v4414 = vunpack.c.h.s8.bf16 %v4254
        %v4415 = vunpack.c.h.s8.bf16 %v4255
        %v4416 = vunpack.c.h.s8.bf16 %v4256
        %v4417 = vunpack.c.h.s8.bf16 %v4257
        %v4418 = vunpack.c.l.s8.bf16 %v4258
        %v4419 = vunpack.c.l.s8.bf16 %v4259
        %v4420 = vunpack.c.l.s8.bf16 %v4260
        %v4421 = vunpack.c.l.s8.bf16 %v4261
        %v4422 = vunpack.c.h.s8.bf16 %v4258
        %v4423 = vunpack.c.h.s8.bf16 %v4259
        %v4424 = vunpack.c.h.s8.bf16 %v4260
        %v4425 = vunpack.c.h.s8.bf16 %v4261
        %v4426 = vunpack.c.l.s8.bf16 %v4262
        %v4427 = vunpack.c.l.s8.bf16 %v4263
        %v4428 = vunpack.c.l.s8.bf16 %v4264
        %v4429 = vunpack.c.l.s8.bf16 %v4265
        %v4430 = vunpack.c.h.s8.bf16 %v4262
        %v4431 = vunpack.c.h.s8.bf16 %v4263
        %v4432 = vunpack.c.h.s8.bf16 %v4264
        %v4433 = vunpack.c.h.s8.bf16 %v4265
        %v4434 = vunpack.c.l.s8.bf16 %v4266
        %v4435 = vunpack.c.l.s8.bf16 %v4267
        %v4436 = vunpack.c.l.s8.bf16 %v4268
        %v4437 = vunpack.c.l.s8.bf16 %v4269
        %v4438 = vunpack.c.h.s8.bf16 %v4266
        %v4439 = vunpack.c.h.s8.bf16 %v4267
        %v4440 = vunpack.c.h.s8.bf16 %v4268
        %v4441 = vunpack.c.h.s8.bf16 %v4269
        %v4442 = vunpack.c.l.s8.bf16 %v4270
        %v4443 = vunpack.c.l.s8.bf16 %v4271
        %v4444 = vunpack.c.l.s8.bf16 %v4272
        %v4445 = vunpack.c.l.s8.bf16 %v4273
        %v4446 = vunpack.c.h.s8.bf16 %v4270
        %v4447 = vunpack.c.h.s8.bf16 %v4271
        %v4448 = vunpack.c.h.s8.bf16 %v4272
        %v4449 = vunpack.c.h.s8.bf16 %v4273
        %v4450 = vunpack.c.l.s8.bf16 %v4274
        %v4451 = vunpack.c.l.s8.bf16 %v4275
        %v4452 = vunpack.c.l.s8.bf16 %v4276
        %v4453 = vunpack.c.l.s8.bf16 %v4277
        %v4454 = vunpack.c.h.s8.bf16 %v4274
        %v4455 = vunpack.c.h.s8.bf16 %v4275
        %v4456 = vunpack.c.h.s8.bf16 %v4276
        %v4457 = vunpack.c.h.s8.bf16 %v4277
        %v4458 = vunpack.c.l.s8.bf16 %v4278
        %v4459 = vunpack.c.l.s8.bf16 %v4279
        %v4460 = vunpack.c.l.s8.bf16 %v4280
        %v4461 = vunpack.c.l.s8.bf16 %v4281
        %v4462 = vunpack.c.h.s8.bf16 %v4278
        %v4463 = vunpack.c.h.s8.bf16 %v4279
        %v4464 = vunpack.c.h.s8.bf16 %v4280
        %v4465 = vunpack.c.h.s8.bf16 %v4281
        %v4466 = vunpack.c.l.s8.bf16 %v4282
        %v4467 = vunpack.c.l.s8.bf16 %v4283
        %v4468 = vunpack.c.l.s8.bf16 %v4284
        %v4469 = vunpack.c.l.s8.bf16 %v4285
        %v4470 = vunpack.c.h.s8.bf16 %v4282
        %v4471 = vunpack.c.h.s8.bf16 %v4283
        %v4472 = vunpack.c.h.s8.bf16 %v4284
        %v4473 = vunpack.c.h.s8.bf16 %v4285
        %v4474 = vunpack.c.l.s8.bf16 %v4286
        %v4475 = vunpack.c.l.s8.bf16 %v4287
        %v4476 = vunpack.c.l.s8.bf16 %v4288
        %v4477 = vunpack.c.l.s8.bf16 %v4289
        %v4478 = vunpack.c.h.s8.bf16 %v4286
        %v4479 = vunpack.c.h.s8.bf16 %v4287
        %v4480 = vunpack.c.h.s8.bf16 %v4288
        %v4481 = vunpack.c.h.s8.bf16 %v4289
        %v4482 = vunpack.c.l.s8.bf16 %v4290
        %v4483 = vunpack.c.l.s8.bf16 %v4291
        %v4484 = vunpack.c.l.s8.bf16 %v4292
        %v4485 = vunpack.c.l.s8.bf16 %v4293
        %v4486 = vunpack.c.h.s8.bf16 %v4290
        %v4487 = vunpack.c.h.s8.bf16 %v4291
        %v4488 = vunpack.c.h.s8.bf16 %v4292
        %v4489 = vunpack.c.h.s8.bf16 %v4293
        %v4490 = vunpack.c.l.s8.bf16 %v4294
        %v4491 = vunpack.c.l.s8.bf16 %v4295
        %v4492 = vunpack.c.l.s8.bf16 %v4296
        %v4493 = vunpack.c.l.s8.bf16 %v4297
        %v4494 = vunpack.c.h.s8.bf16 %v4294
        %v4495 = vunpack.c.h.s8.bf16 %v4295
        %v4496 = vunpack.c.h.s8.bf16 %v4296
        %v4497 = vunpack.c.h.s8.bf16 %v4297
        %v4498 = vunpack.c.l.s8.bf16 %v4298
        %v4499 = vunpack.c.l.s8.bf16 %v4299
        %v4500 = vunpack.c.l.s8.bf16 %v4300
        %v4501 = vunpack.c.l.s8.bf16 %v4301
        %v4502 = vunpack.c.h.s8.bf16 %v4298
        %v4503 = vunpack.c.h.s8.bf16 %v4299
        %v4504 = vunpack.c.h.s8.bf16 %v4300
        %v4505 = vunpack.c.h.s8.bf16 %v4301
        %v4506 = vunpack.c.l.s8.bf16 %v4302
        %v4507 = vunpack.c.l.s8.bf16 %v4303
        %v4508 = vunpack.c.l.s8.bf16 %v4304
        %v4509 = vunpack.c.l.s8.bf16 %v4305
        %v4510 = vunpack.c.h.s8.bf16 %v4302
        %v4511 = vunpack.c.h.s8.bf16 %v4303
        %v4512 = vunpack.c.h.s8.bf16 %v4304
        %v4513 = vunpack.c.h.s8.bf16 %v4305
        %v4514 = vunpack.c.l.s8.bf16 %v4306
        %v4515 = vunpack.c.l.s8.bf16 %v4307
        %v4516 = vunpack.c.l.s8.bf16 %v4308
        %v4517 = vunpack.c.l.s8.bf16 %v4309
        %v4518 = vunpack.c.h.s8.bf16 %v4306
        %v4519 = vunpack.c.h.s8.bf16 %v4307
        %v4520 = vunpack.c.h.s8.bf16 %v4308
        %v4521 = vunpack.c.h.s8.bf16 %v4309
        %v4522 = vunpack.c.l.s8.bf16 %v4310
        %v4523 = vunpack.c.l.s8.bf16 %v4311
        %v4524 = vunpack.c.l.s8.bf16 %v4312
        %v4525 = vunpack.c.l.s8.bf16 %v4313
        %v4526 = vunpack.c.h.s8.bf16 %v4310
        %v4527 = vunpack.c.h.s8.bf16 %v4311
        %v4528 = vunpack.c.h.s8.bf16 %v4312
        %v4529 = vunpack.c.h.s8.bf16 %v4313
        %v4530 = vunpack.c.l.s8.bf16 %v4314
        %v4531 = vunpack.c.l.s8.bf16 %v4315
        %v4532 = vunpack.c.l.s8.bf16 %v4316
        %v4533 = vunpack.c.l.s8.bf16 %v4317
        %v4534 = vunpack.c.h.s8.bf16 %v4314
        %v4535 = vunpack.c.h.s8.bf16 %v4315
        %v4536 = vunpack.c.h.s8.bf16 %v4316
        %v4537 = vunpack.c.h.s8.bf16 %v4317
        %v4538 = vunpack.c.l.s8.bf16 %v4318
        %v4539 = vunpack.c.l.s8.bf16 %v4319
        %v4540 = vunpack.c.l.s8.bf16 %v4320
        %v4541 = vunpack.c.l.s8.bf16 %v4321
        %v4542 = vunpack.c.h.s8.bf16 %v4318
        %v4543 = vunpack.c.h.s8.bf16 %v4319
        %v4544 = vunpack.c.h.s8.bf16 %v4320
        %v4545 = vunpack.c.h.s8.bf16 %v4321
        %v4546 = vunpack.c.l.s8.bf16 %v4322
        %v4547 = vunpack.c.l.s8.bf16 %v4323
        %v4548 = vunpack.c.l.s8.bf16 %v4324
        %v4549 = vunpack.c.l.s8.bf16 %v4325
        %v4550 = vunpack.c.h.s8.bf16 %v4322
        %v4551 = vunpack.c.h.s8.bf16 %v4323
        %v4552 = vunpack.c.h.s8.bf16 %v4324
        %v4553 = vunpack.c.h.s8.bf16 %v4325
        %v4554 = vunpack.c.l.s8.bf16 %v4326
        %v4555 = vunpack.c.l.s8.bf16 %v4327
        %v4556 = vunpack.c.l.s8.bf16 %v4328
        %v4557 = vunpack.c.l.s8.bf16 %v4329
        %v4558 = vunpack.c.h.s8.bf16 %v4326
        %v4559 = vunpack.c.h.s8.bf16 %v4327
        %v4560 = vunpack.c.h.s8.bf16 %v4328
        %v4561 = vunpack.c.h.s8.bf16 %v4329
        %v4562 = vunpack.c.l.s8.bf16 %v4330
        %v4563 = vunpack.c.l.s8.bf16 %v4331
        %v4564 = vunpack.c.l.s8.bf16 %v4332
        %v4565 = vunpack.c.l.s8.bf16 %v4333
        %v4566 = vunpack.c.h.s8.bf16 %v4330
        %v4567 = vunpack.c.h.s8.bf16 %v4331
        %v4568 = vunpack.c.h.s8.bf16 %v4332
        %v4569 = vunpack.c.h.s8.bf16 %v4333
        %v4570 = vunpack.c.l.s8.bf16 %v4334
        %v4571 = vunpack.c.l.s8.bf16 %v4335
        %v4572 = vunpack.c.l.s8.bf16 %v4336
        %v4573 = vunpack.c.l.s8.bf16 %v4337
        %v4574 = vunpack.c.h.s8.bf16 %v4334
        %v4575 = vunpack.c.h.s8.bf16 %v4335
        %v4576 = vunpack.c.h.s8.bf16 %v4336
        %v4577 = vunpack.c.h.s8.bf16 %v4337
        %v4578 = vunpack.c.l.s8.bf16 %v4338
        %v4579 = vunpack.c.l.s8.bf16 %v4339
        %v4580 = vunpack.c.l.s8.bf16 %v4340
        %v4581 = vunpack.c.l.s8.bf16 %v4341
        %v4582 = vunpack.c.h.s8.bf16 %v4338
        %v4583 = vunpack.c.h.s8.bf16 %v4339
        %v4584 = vunpack.c.h.s8.bf16 %v4340
        %v4585 = vunpack.c.h.s8.bf16 %v4341
        %v4586 = vunpack.c.l.s8.bf16 %v4342
        %v4587 = vunpack.c.l.s8.bf16 %v4343
        %v4588 = vunpack.c.l.s8.bf16 %v4344
        %v4589 = vunpack.c.l.s8.bf16 %v4345
        %v4590 = vunpack.c.h.s8.bf16 %v4342
        %v4591 = vunpack.c.h.s8.bf16 %v4343
        %v4592 = vunpack.c.h.s8.bf16 %v4344
        %v4593 = vunpack.c.h.s8.bf16 %v4345
        %v4594 = vunpack.c.l.s8.bf16 %v4346
        %v4595 = vunpack.c.l.s8.bf16 %v4347
        %v4596 = vunpack.c.l.s8.bf16 %v4348
        %v4597 = vunpack.c.l.s8.bf16 %v4349
        %v4598 = vunpack.c.h.s8.bf16 %v4346
        %v4599 = vunpack.c.h.s8.bf16 %v4347
        %v4600 = vunpack.c.h.s8.bf16 %v4348
        %v4601 = vunpack.c.h.s8.bf16 %v4349
        %v4602 = vunpack.c.l.s8.bf16 %v4350
        %v4603 = vunpack.c.l.s8.bf16 %v4351
        %v4604 = vunpack.c.l.s8.bf16 %v4352
        %v4605 = vunpack.c.l.s8.bf16 %v4353
        %v4606 = vunpack.c.h.s8.bf16 %v4350
        %v4607 = vunpack.c.h.s8.bf16 %v4351
        %v4608 = vunpack.c.h.s8.bf16 %v4352
        %v4609 = vunpack.c.h.s8.bf16 %v4353
        %4610 = vmatprep.subr.bf16.mxu0 %v4355
        %4611 = vmatpush1.bf16.msra.mxu0 %v4354
        %4612 = vmatprep.subr.bf16.mxu0 %v4359
        %4613 = vmatpush1.bf16.msra.mxu0 %v4358
        %4614 = vmatprep.subr.bf16.mxu0 %v4363
        %4615 = vmatpush1.bf16.msra.mxu0 %v4362
        %4616 = vmatprep.subr.bf16.mxu0 %v4367
        %4617 = vmatpush1.bf16.msra.mxu0 %v4366
        %4618 = vmatprep.subr.bf16.mxu0 %v4371
        %4619 = vmatpush1.bf16.msra.mxu0 %v4370
        %4620 = vmatprep.subr.bf16.mxu0 %v4375
        %4621 = vmatpush1.bf16.msra.mxu0 %v4374
        %4622 = vmatprep.subr.bf16.mxu0 %v4379
        %4623 = vmatpush1.bf16.msra.mxu0 %v4378
        %4624 = vmatprep.subr.bf16.mxu0 %v4383
        %4625 = vmatpush1.bf16.msra.mxu0 %v4382
        %4626 = vmatprep.subr.bf16.mxu0 %v4387
        %4627 = vmatpush1.bf16.msra.mxu0 %v4386
        %4628 = vmatprep.subr.bf16.mxu0 %v4391
        %4629 = vmatpush1.bf16.msra.mxu0 %v4390
        %4630 = vmatprep.subr.bf16.mxu0 %v4395
        %4631 = vmatpush1.bf16.msra.mxu0 %v4394
        %4632 = vmatprep.subr.bf16.mxu0 %v4399
        %4633 = vmatpush1.bf16.msra.mxu0 %v4398
        %4634 = vmatprep.subr.bf16.mxu0 %v4403
        %4635 = vmatpush1.bf16.msra.mxu0 %v4402
        %4636 = vmatprep.subr.bf16.mxu0 %v4407
        %4637 = vmatpush1.bf16.msra.mxu0 %v4406
        %4638 = vmatprep.subr.bf16.mxu0 %v4411
        %4639 = vmatpush1.bf16.msra.mxu0 %v4410
        %4640 = vmatprep.subr.bf16.mxu0 %v4415
        %4641 = vmatpush1.bf16.msra.mxu0 %v4414
        %4642 = vmatprep.mubr.bf16.mxu0 %v4198
        %4643 = vmatmul.mubr.bf16.gmra.mrb[0].mxu0 %v4197
        %v4644 = vpop.f32.mrb[0].mxu0
        %v4645 = vadd.f32 0.0, %v4644
        %v4646 = vpop.f32.mrb[0].mxu0
        %v4647 = vadd.f32 0.0, %v4646
        %v4648 = vpop.f32.mrb[0].mxu0
        %v4649 = vpop.f32.mrb[0].mxu0
        %4650 = vdwg.mxu0
        %4651 = vmatprep.subr.bf16.mxu0 %v4419
        %4652 = vmatpush1.bf16.msra.mxu0 %v4418
        %4653 = vmatprep.subr.bf16.mxu0 %v4423
        %4654 = vmatpush1.bf16.msra.mxu0 %v4422
        %4655 = vmatprep.subr.bf16.mxu0 %v4427
        %4656 = vmatpush1.bf16.msra.mxu0 %v4426
        %4657 = vmatprep.subr.bf16.mxu0 %v4431
        %4658 = vmatpush1.bf16.msra.mxu0 %v4430
        %4659 = vmatprep.subr.bf16.mxu0 %v4435
        %4660 = vmatpush1.bf16.msra.mxu0 %v4434
        %4661 = vmatprep.subr.bf16.mxu0 %v4439
        %4662 = vmatpush1.bf16.msra.mxu0 %v4438
        %4663 = vmatprep.subr.bf16.mxu0 %v4443
        %4664 = vmatpush1.bf16.msra.mxu0 %v4442
        %4665 = vmatprep.subr.bf16.mxu0 %v4447
        %4666 = vmatpush1.bf16.msra.mxu0 %v4446
        %4667 = vmatprep.subr.bf16.mxu0 %v4451
        %4668 = vmatpush1.bf16.msra.mxu0 %v4450
        %4669 = vmatprep.subr.bf16.mxu0 %v4455
        %4670 = vmatpush1.bf16.msra.mxu0 %v4454
        %4671 = vmatprep.subr.bf16.mxu0 %v4459
        %4672 = vmatpush1.bf16.msra.mxu0 %v4458
        %4673 = vmatprep.subr.bf16.mxu0 %v4463
        %4674 = vmatpush1.bf16.msra.mxu0 %v4462
        %4675 = vmatprep.subr.bf16.mxu0 %v4467
        %4676 = vmatpush1.bf16.msra.mxu0 %v4466
        %4677 = vmatprep.subr.bf16.mxu0 %v4471
        %4678 = vmatpush1.bf16.msra.mxu0 %v4470
        %4679 = vmatprep.subr.bf16.mxu0 %v4475
        %4680 = vmatpush1.bf16.msra.mxu0 %v4474
        %4681 = vmatprep.subr.bf16.mxu0 %v4479
        %4682 = vmatpush1.bf16.msra.mxu0 %v4478
        %4683 = vmatprep.mubr.bf16.mxu0 %v4200
        %4684 = vmatmul.mubr.bf16.gmra.mrb[0].mxu0 %v4199
        %v4685 = vpop.f32.mrb[0].mxu0
        %v4686 = vadd.f32 %v4645, %v4685
        %v4687 = vpop.f32.mrb[0].mxu0
        %v4688 = vadd.f32 %v4647, %v4687
        %v4689 = vpop.f32.mrb[0].mxu0
        %v4690 = vpop.f32.mrb[0].mxu0
        %4691 = vdwg.mxu0
        %4692 = vmatprep.subr.bf16.mxu0 %v4483
        %4693 = vmatpush1.bf16.msra.mxu0 %v4482
        %4694 = vmatprep.subr.bf16.mxu0 %v4487
        %4695 = vmatpush1.bf16.msra.mxu0 %v4486
        %4696 = vmatprep.subr.bf16.mxu0 %v4491
        %4697 = vmatpush1.bf16.msra.mxu0 %v4490
        %4698 = vmatprep.subr.bf16.mxu0 %v4495
        %4699 = vmatpush1.bf16.msra.mxu0 %v4494
        %4700 = vmatprep.subr.bf16.mxu0 %v4499
        %4701 = vmatpush1.bf16.msra.mxu0 %v4498
        %4702 = vmatprep.subr.bf16.mxu0 %v4503
        %4703 = vmatpush1.bf16.msra.mxu0 %v4502
        %4704 = vmatprep.subr.bf16.mxu0 %v4507
        %4705 = vmatpush1.bf16.msra.mxu0 %v4506
        %4706 = vmatprep.subr.bf16.mxu0 %v4511
        %4707 = vmatpush1.bf16.msra.mxu0 %v4510
        %4708 = vmatprep.subr.bf16.mxu0 %v4515
        %4709 = vmatpush1.bf16.msra.mxu0 %v4514
        %4710 = vmatprep.subr.bf16.mxu0 %v4519
        %4711 = vmatpush1.bf16.msra.mxu0 %v4518
        %4712 = vmatprep.subr.bf16.mxu0 %v4523
        %4713 = vmatpush1.bf16.msra.mxu0 %v4522
        %4714 = vmatprep.subr.bf16.mxu0 %v4527
        %4715 = vmatpush1.bf16.msra.mxu0 %v4526
        %4716 = vmatprep.subr.bf16.mxu0 %v4531
        %4717 = vmatpush1.bf16.msra.mxu0 %v4530
        %4718 = vmatprep.subr.bf16.mxu0 %v4535
        %4719 = vmatpush1.bf16.msra.mxu0 %v4534
        %4720 = vmatprep.subr.bf16.mxu0 %v4539
        %4721 = vmatpush1.bf16.msra.mxu0 %v4538
        %4722 = vmatprep.subr.bf16.mxu0 %v4543
        %4723 = vmatpush1.bf16.msra.mxu0 %v4542
        %4724 = vmatprep.mubr.bf16.mxu0 %v4202
        %4725 = vmatmul.mubr.bf16.gmra.mrb[0].mxu0 %v4201
        %v4726 = vpop.f32.mrb[0].mxu0
        %v4727 = vadd.f32 %v4686, %v4726
        %v4728 = vpop.f32.mrb[0].mxu0
        %v4729 = vadd.f32 %v4688, %v4728
        %v4730 = vpop.f32.mrb[0].mxu0
        %v4731 = vpop.f32.mrb[0].mxu0
        %4732 = vdwg.mxu0
        %4733 = vmatprep.subr.bf16.mxu0 %v4547
        %4734 = vmatpush1.bf16.msra.mxu0 %v4546
        %4735 = vmatprep.subr.bf16.mxu0 %v4551
        %4736 = vmatpush1.bf16.msra.mxu0 %v4550
        %4737 = vmatprep.subr.bf16.mxu0 %v4555
        %4738 = vmatpush1.bf16.msra.mxu0 %v4554
        %4739 = vmatprep.subr.bf16.mxu0 %v4559
        %4740 = vmatpush1.bf16.msra.mxu0 %v4558
        %4741 = vmatprep.subr.bf16.mxu0 %v4563
        %4742 = vmatpush1.bf16.msra.mxu0 %v4562
        %4743 = vmatprep.subr.bf16.mxu0 %v4567
        %4744 = vmatpush1.bf16.msra.mxu0 %v4566
        %4745 = vmatprep.subr.bf16.mxu0 %v4571
        %4746 = vmatpush1.bf16.msra.mxu0 %v4570
        %4747 = vmatprep.subr.bf16.mxu0 %v4575
        %4748 = vmatpush1.bf16.msra.mxu0 %v4574
        %4749 = vmatprep.subr.bf16.mxu0 %v4579
        %4750 = vmatpush1.bf16.msra.mxu0 %v4578
        %4751 = vmatprep.subr.bf16.mxu0 %v4583
        %4752 = vmatpush1.bf16.msra.mxu0 %v4582
        %4753 = vmatprep.subr.bf16.mxu0 %v4587
        %4754 = vmatpush1.bf16.msra.mxu0 %v4586
        %4755 = vmatprep.subr.bf16.mxu0 %v4591
        %4756 = vmatpush1.bf16.msra.mxu0 %v4590
        %4757 = vmatprep.subr.bf16.mxu0 %v4595
        %4758 = vmatpush1.bf16.msra.mxu0 %v4594
        %4759 = vmatprep.subr.bf16.mxu0 %v4599
        %4760 = vmatpush1.bf16.msra.mxu0 %v4598
        %4761 = vmatprep.subr.bf16.mxu0 %v4603
        %4762 = vmatpush1.bf16.msra.mxu0 %v4602
        %4763 = vmatprep.subr.bf16.mxu0 %v4607
        %4764 = vmatpush1.bf16.msra.mxu0 %v4606
        %4765 = vmatprep.mubr.bf16.mxu0 %v4204
        %4766 = vmatmul.mubr.bf16.gmra.mrb[0].mxu0 %v4203
        %v4767 = vpop.f32.mrb[0].mxu0
        %v4768 = vadd.f32 %v4727, %v4767
        %v4769 = vpop.f32.mrb[0].mxu0
        %v4770 = vadd.f32 %v4729, %v4769
        %v4771 = vpop.f32.mrb[0].mxu0
        %v4772 = vpop.f32.mrb[0].mxu0
        %4773 = vdwg.mxu0
        %4774 = vmatprep.subr.bf16.mxu0 %v4357
        %4775 = vmatpush1.bf16.msra.mxu0 %v4356
        %4776 = vmatprep.subr.bf16.mxu0 %v4361
        %4777 = vmatpush1.bf16.msra.mxu0 %v4360
        %4778 = vmatprep.subr.bf16.mxu0 %v4365
        %4779 = vmatpush1.bf16.msra.mxu0 %v4364
        %4780 = vmatprep.subr.bf16.mxu0 %v4369
        %4781 = vmatpush1.bf16.msra.mxu0 %v4368
        %4782 = vmatprep.subr.bf16.mxu0 %v4373
        %4783 = vmatpush1.bf16.msra.mxu0 %v4372
        %4784 = vmatprep.subr.bf16.mxu0 %v4377
        %4785 = vmatpush1.bf16.msra.mxu0 %v4376
        %4786 = vmatprep.subr.bf16.mxu0 %v4381
        %4787 = vmatpush1.bf16.msra.mxu0 %v4380
        %4788 = vmatprep.subr.bf16.mxu0 %v4385
        %4789 = vmatpush1.bf16.msra.mxu0 %v4384
        %4790 = vmatprep.subr.bf16.mxu0 %v4389
        %4791 = vmatpush1.bf16.msra.mxu0 %v4388
        %4792 = vmatprep.subr.bf16.mxu0 %v4393
        %4793 = vmatpush1.bf16.msra.mxu0 %v4392
        %4794 = vmatprep.subr.bf16.mxu0 %v4397
        %4795 = vmatpush1.bf16.msra.mxu0 %v4396
        %4796 = vmatprep.subr.bf16.mxu0 %v4401
        %4797 = vmatpush1.bf16.msra.mxu0 %v4400
        %4798 = vmatprep.subr.bf16.mxu0 %v4405
        %4799 = vmatpush1.bf16.msra.mxu0 %v4404
        %4800 = vmatprep.subr.bf16.mxu0 %v4409
        %4801 = vmatpush1.bf16.msra.mxu0 %v4408
        %4802 = vmatprep.subr.bf16.mxu0 %v4413
        %4803 = vmatpush1.bf16.msra.mxu0 %v4412
        %4804 = vmatprep.subr.bf16.mxu0 %v4417
        %4805 = vmatpush1.bf16.msra.mxu0 %v4416
        %4806 = vmatprep.mubr.bf16.mxu0 %v4198
        %4807 = vmatmul.mubr.bf16.gmra.mrb[0].mxu0 %v4197
        %v4808 = vpop.f32.mrb[0].mxu0
        %v4809 = vadd.f32 0.0, %v4808
        %v4810 = vpop.f32.mrb[0].mxu0
        %v4811 = vadd.f32 0.0, %v4810
        %v4812 = vpop.f32.mrb[0].mxu0
        %v4813 = vpop.f32.mrb[0].mxu0
        %4814 = vdwg.mxu0
        %4815 = vmatprep.subr.bf16.mxu0 %v4421
        %4816 = vmatpush1.bf16.msra.mxu0 %v4420
        %4817 = vmatprep.subr.bf16.mxu0 %v4425
        %4818 = vmatpush1.bf16.msra.mxu0 %v4424
        %4819 = vmatprep.subr.bf16.mxu0 %v4429
        %4820 = vmatpush1.bf16.msra.mxu0 %v4428
        %4821 = vmatprep.subr.bf16.mxu0 %v4433
        %4822 = vmatpush1.bf16.msra.mxu0 %v4432
        %4823 = vmatprep.subr.bf16.mxu0 %v4437
        %4824 = vmatpush1.bf16.msra.mxu0 %v4436
        %4825 = vmatprep.subr.bf16.mxu0 %v4441
        %4826 = vmatpush1.bf16.msra.mxu0 %v4440
        %4827 = vmatprep.subr.bf16.mxu0 %v4445
        %4828 = vmatpush1.bf16.msra.mxu0 %v4444
        %4829 = vmatprep.subr.bf16.mxu0 %v4449
        %4830 = vmatpush1.bf16.msra.mxu0 %v4448
        %4831 = vmatprep.subr.bf16.mxu0 %v4453
        %4832 = vmatpush1.bf16.msra.mxu0 %v4452
        %4833 = vmatprep.subr.bf16.mxu0 %v4457
        %4834 = vmatpush1.bf16.msra.mxu0 %v4456
        %4835 = vmatprep.subr.bf16.mxu0 %v4461
        %4836 = vmatpush1.bf16.msra.mxu0 %v4460
        %4837 = vmatprep.subr.bf16.mxu0 %v4465
        %4838 = vmatpush1.bf16.msra.mxu0 %v4464
        %4839 = vmatprep.subr.bf16.mxu0 %v4469
        %4840 = vmatpush1.bf16.msra.mxu0 %v4468
        %4841 = vmatprep.subr.bf16.mxu0 %v4473
        %4842 = vmatpush1.bf16.msra.mxu0 %v4472
        %4843 = vmatprep.subr.bf16.mxu0 %v4477
        %4844 = vmatpush1.bf16.msra.mxu0 %v4476
        %4845 = vmatprep.subr.bf16.mxu0 %v4481
        %4846 = vmatpush1.bf16.msra.mxu0 %v4480
        %4847 = vmatprep.mubr.bf16.mxu0 %v4200
        %4848 = vmatmul.mubr.bf16.gmra.mrb[0].mxu0 %v4199
        %v4849 = vpop.f32.mrb[0].mxu0
        %v4850 = vadd.f32 %v4809, %v4849
        %v4851 = vpop.f32.mrb[0].mxu0
        %v4852 = vadd.f32 %v4811, %v4851
        %v4853 = vpop.f32.mrb[0].mxu0
        %v4854 = vpop.f32.mrb[0].mxu0
        %4855 = vdwg.mxu0
        %4856 = vmatprep.subr.bf16.mxu0 %v4485
        %4857 = vmatpush1.bf16.msra.mxu0 %v4484
        %4858 = vmatprep.subr.bf16.mxu0 %v4489
        %4859 = vmatpush1.bf16.msra.mxu0 %v4488
        %4860 = vmatprep.subr.bf16.mxu0 %v4493
        %4861 = vmatpush1.bf16.msra.mxu0 %v4492
        %4862 = vmatprep.subr.bf16.mxu0 %v4497
        %4863 = vmatpush1.bf16.msra.mxu0 %v4496
        %4864 = vmatprep.subr.bf16.mxu0 %v4501
        %4865 = vmatpush1.bf16.msra.mxu0 %v4500
        %4866 = vmatprep.subr.bf16.mxu0 %v4505
        %4867 = vmatpush1.bf16.msra.mxu0 %v4504
        %4868 = vmatprep.subr.bf16.mxu0 %v4509
        %4869 = vmatpush1.bf16.msra.mxu0 %v4508
        %4870 = vmatprep.subr.bf16.mxu0 %v4513
        %4871 = vmatpush1.bf16.msra.mxu0 %v4512
        %4872 = vmatprep.subr.bf16.mxu0 %v4517
        %4873 = vmatpush1.bf16.msra.mxu0 %v4516
        %4874 = vmatprep.subr.bf16.mxu0 %v4521
        %4875 = vmatpush1.bf16.msra.mxu0 %v4520
        %4876 = vmatprep.subr.bf16.mxu0 %v4525
        %4877 = vmatpush1.bf16.msra.mxu0 %v4524
        %4878 = vmatprep.subr.bf16.mxu0 %v4529
        %4879 = vmatpush1.bf16.msra.mxu0 %v4528
        %4880 = vmatprep.subr.bf16.mxu0 %v4533
        %4881 = vmatpush1.bf16.msra.mxu0 %v4532
        %4882 = vmatprep.subr.bf16.mxu0 %v4537
        %4883 = vmatpush1.bf16.msra.mxu0 %v4536
        %4884 = vmatprep.subr.bf16.mxu0 %v4541
        %4885 = vmatpush1.bf16.msra.mxu0 %v4540
        %4886 = vmatprep.subr.bf16.mxu0 %v4545
        %4887 = vmatpush1.bf16.msra.mxu0 %v4544
        %4888 = vmatprep.mubr.bf16.mxu0 %v4202
        %4889 = vmatmul.mubr.bf16.gmra.mrb[0].mxu0 %v4201
        %v4890 = vpop.f32.mrb[0].mxu0
        %v4891 = vadd.f32 %v4850, %v4890
        %v4892 = vpop.f32.mrb[0].mxu0
        %v4893 = vadd.f32 %v4852, %v4892
        %v4894 = vpop.f32.mrb[0].mxu0
        %v4895 = vpop.f32.mrb[0].mxu0
        %4896 = vdwg.mxu0
        %4897 = vmatprep.subr.bf16.mxu0 %v4549
        %4898 = vmatpush1.bf16.msra.mxu0 %v4548
        %4899 = vmatprep.subr.bf16.mxu0 %v4553
        %4900 = vmatpush1.bf16.msra.mxu0 %v4552
        %4901 = vmatprep.subr.bf16.mxu0 %v4557
        %4902 = vmatpush1.bf16.msra.mxu0 %v4556
        %4903 = vmatprep.subr.bf16.mxu0 %v4561
        %4904 = vmatpush1.bf16.msra.mxu0 %v4560
        %4905 = vmatprep.subr.bf16.mxu0 %v4565
        %4906 = vmatpush1.bf16.msra.mxu0 %v4564
        %4907 = vmatprep.subr.bf16.mxu0 %v4569
        %4908 = vmatpush1.bf16.msra.mxu0 %v4568
        %4909 = vmatprep.subr.bf16.mxu0 %v4573
        %4910 = vmatpush1.bf16.msra.mxu0 %v4572
        %4911 = vmatprep.subr.bf16.mxu0 %v4577
        %4912 = vmatpush1.bf16.msra.mxu0 %v4576
        %4913 = vmatprep.subr.bf16.mxu0 %v4581
        %4914 = vmatpush1.bf16.msra.mxu0 %v4580
        %4915 = vmatprep.subr.bf16.mxu0 %v4585
        %4916 = vmatpush1.bf16.msra.mxu0 %v4584
        %4917 = vmatprep.subr.bf16.mxu0 %v4589
        %4918 = vmatpush1.bf16.msra.mxu0 %v4588
        %4919 = vmatprep.subr.bf16.mxu0 %v4593
        %4920 = vmatpush1.bf16.msra.mxu0 %v4592
        %4921 = vmatprep.subr.bf16.mxu0 %v4597
        %4922 = vmatpush1.bf16.msra.mxu0 %v4596
        %4923 = vmatprep.subr.bf16.mxu0 %v4601
        %4924 = vmatpush1.bf16.msra.mxu0 %v4600
        %4925 = vmatprep.subr.bf16.mxu0 %v4605
        %4926 = vmatpush1.bf16.msra.mxu0 %v4604
        %4927 = vmatprep.subr.bf16.mxu0 %v4609
        %4928 = vmatpush1.bf16.msra.mxu0 %v4608
        %4929 = vmatprep.mubr.bf16.mxu0 %v4204
        %4930 = vmatmul.mubr.bf16.gmra.mrb[0].mxu0 %v4203
        %v4931 = vpop.f32.mrb[0].mxu0
        %v4932 = vadd.f32 %v4891, %v4931
        %v4933 = vpop.f32.mrb[0].mxu0
        %v4934 = vadd.f32 %v4893, %v4933
        %v4935 = vpop.f32.mrb[0].mxu0
        %v4936 = vpop.f32.mrb[0].mxu0
        %4937 = vdwg.mxu0
        %v4938 = vld [vmem:[%s398] sm:$0xf]
        %v4940 = vlaneseq
        %v4941 = vshrl.u32 %v4940, 7
        %v4942 = vsub.s32 0, %v4941
        %v4943 = vrot.slane %v4938, %v4942
        %v4944 = vlaneseq
        %v4945 = vshrl.u32 %v4944, 7
        %v4946 = vsub.s32 1, %v4945
        %v4947 = vrot.slane %v4938, %v4946
        %v4948 = vlaneseq
        %v4949 = vshrl.u32 %v4948, 7
        %v4950 = vsub.s32 2, %v4949
        %v4951 = vrot.slane %v4938, %v4950
        %v4952 = vlaneseq
        %v4953 = vshrl.u32 %v4952, 7
        %v4954 = vsub.s32 3, %v4953
        %v4955 = vrot.slane %v4938, %v4954
        %v4960 = vmul.f32 %v4768, %v4943
        %v4961 = vmul.f32 %v4770, %v4947
        %v4962 = vmul.f32 %v4932, %v4951
        %v4963 = vmul.f32 %v4934, %v4955
        %v4964 = vld [vmem:[%s389] sm:$0xf]
        %v4966 = vlaneseq
        %v4967 = vshrl.u32 %v4966, 7
        %v4968 = vsub.s32 0, %v4967
        %v4969 = vrot.slane %v4964, %v4968
        %v4970 = vlaneseq
        %v4971 = vshrl.u32 %v4970, 7
        %v4972 = vsub.s32 1, %v4971
        %v4973 = vrot.slane %v4964, %v4972
        %v4974 = vlaneseq
        %v4975 = vshrl.u32 %v4974, 7
        %v4976 = vsub.s32 2, %v4975
        %v4977 = vrot.slane %v4964, %v4976
        %v4978 = vlaneseq
        %v4979 = vshrl.u32 %v4978, 7
        %v4980 = vsub.s32 3, %v4979
        %v4981 = vrot.slane %v4964, %v4980
        %v4986 = vadd.f32 %v4960, %v4969
        %v4987 = vadd.f32 %v4961, %v4973
        %v4988 = vadd.f32 %v4962, %v4977
        %v4989 = vadd.f32 %v4963, %v4981
        %v4990 = vtanh.pop %v4986
        %v4991 = vtanh.pop %v4987
        %v4992 = vtanh.pop %v4988
        %v4993 = vtanh.pop %v4989
        %4994 = vst [vmem:[%s442] sm:$0xff] %v4990
        %4995 = vst [vmem:[%s442 + $0x8] sm:$0xff] %v4991
        %4996 = vst [vmem:[%s442 + $0x10] sm:$0xff] %v4992
        %4997 = vst [vmem:[%s442 + $0x18] sm:$0xff] %v4993
        %s4998 = sadd.s32 %s445, 2
        %s4999 = smul.u32 %s4998, 128
        %s5000 = smul.addr %s4999, 128
        %s5001 = scalar_lea.hbm %s5, %s5000
        // Predicated region
        $region93: #{generator_forward.1} parent=51 // pred_check
          _
        $region94: #{generator_forward.1} parent=51 // pred_check_branch
          %5003 = sbr.rel target = $region96
        $region95: #{generator_forward.1} parent=51 // pred_region
          %5004 = sst [smem:[#allocation18]] [#allocation23]
          %5005 = sst [smem:[#allocation19]] [#allocation22]
        $region96: #{generator_forward.1} parent=51 // pred_fallthru
          _
        %5007 = shalt.err (0)
        %s5009 = sshll.u32 [#allocation2], 4
        %s5010 = int_to_ptr.vmem [resolvable:$true] %s5009
        %5012 = dma.hbm_to_vmem [thread:$0]  %s5001, 16384, %s5010, [#allocation3]
        %s5013 = sshll.u32 %s4223, 4
        %5014 = dma.done %s4210, %s5013
        %v5015 = vld [vmem:[%s4209] sm:$0xff]
        %v5016 = vld [vmem:[%s4209 + $0x8] sm:$0xff]
        %v5017 = vld [vmem:[%s4209 + $0x10] sm:$0xff]
        %v5018 = vld [vmem:[%s4209 + $0x18] sm:$0xff]
        %v5019 = vld [vmem:[%s4209 + $0x20] sm:$0xff]
        %v5020 = vld [vmem:[%s4209 + $0x28] sm:$0xff]
        %v5021 = vld [vmem:[%s4209 + $0x30] sm:$0xff]
        %v5022 = vld [vmem:[%s4209 + $0x38] sm:$0xff]
        %v5023 = vld [vmem:[%s4209 + $0x40] sm:$0xff]
        %v5024 = vld [vmem:[%s4209 + $0x48] sm:$0xff]
        %v5025 = vld [vmem:[%s4209 + $0x50] sm:$0xff]
        %v5026 = vld [vmem:[%s4209 + $0x58] sm:$0xff]
        %v5027 = vld [vmem:[%s4209 + $0x60] sm:$0xff]
        %v5028 = vld [vmem:[%s4209 + $0x68] sm:$0xff]
        %v5029 = vld [vmem:[%s4209 + $0x70] sm:$0xff]
        %v5030 = vld [vmem:[%s4209 + $0x78] sm:$0xff]
        %v5031 = vld [vmem:[%s4209 + $0x80] sm:$0xff]
        %v5032 = vld [vmem:[%s4209 + $0x88] sm:$0xff]
        %v5033 = vld [vmem:[%s4209 + $0x90] sm:$0xff]
        %v5034 = vld [vmem:[%s4209 + $0x98] sm:$0xff]
        %v5035 = vld [vmem:[%s4209 + $0xa0] sm:$0xff]
        %v5036 = vld [vmem:[%s4209 + $0xa8] sm:$0xff]
        %v5037 = vld [vmem:[%s4209 + $0xb0] sm:$0xff]
        %v5038 = vld [vmem:[%s4209 + $0xb8] sm:$0xff]
        %v5039 = vld [vmem:[%s4209 + $0xc0] sm:$0xff]
        %v5040 = vld [vmem:[%s4209 + $0xc8] sm:$0xff]
        %v5041 = vld [vmem:[%s4209 + $0xd0] sm:$0xff]
        %v5042 = vld [vmem:[%s4209 + $0xd8] sm:$0xff]
        %v5043 = vld [vmem:[%s4209 + $0xe0] sm:$0xff]
        %v5044 = vld [vmem:[%s4209 + $0xe8] sm:$0xff]
        %v5045 = vld [vmem:[%s4209 + $0xf0] sm:$0xff]
        %v5046 = vld [vmem:[%s4209 + $0xf8] sm:$0xff]
        %v5047 = vld [vmem:[%s4209 + $0x100] sm:$0xff]
        %v5048 = vld [vmem:[%s4209 + $0x108] sm:$0xff]
        %v5049 = vld [vmem:[%s4209 + $0x110] sm:$0xff]
        %v5050 = vld [vmem:[%s4209 + $0x118] sm:$0xff]
        %v5051 = vld [vmem:[%s4209 + $0x120] sm:$0xff]
        %v5052 = vld [vmem:[%s4209 + $0x128] sm:$0xff]
        %v5053 = vld [vmem:[%s4209 + $0x130] sm:$0xff]
        %v5054 = vld [vmem:[%s4209 + $0x138] sm:$0xff]
        %v5055 = vld [vmem:[%s4209 + $0x140] sm:$0xff]
        %v5056 = vld [vmem:[%s4209 + $0x148] sm:$0xff]
        %v5057 = vld [vmem:[%s4209 + $0x150] sm:$0xff]
        %v5058 = vld [vmem:[%s4209 + $0x158] sm:$0xff]
        %v5059 = vld [vmem:[%s4209 + $0x160] sm:$0xff]
        %v5060 = vld [vmem:[%s4209 + $0x168] sm:$0xff]
        %v5061 = vld [vmem:[%s4209 + $0x170] sm:$0xff]
        %v5062 = vld [vmem:[%s4209 + $0x178] sm:$0xff]
        %v5063 = vld [vmem:[%s4209 + $0x180] sm:$0xff]
        %v5064 = vld [vmem:[%s4209 + $0x188] sm:$0xff]
        %v5065 = vld [vmem:[%s4209 + $0x190] sm:$0xff]
        %v5066 = vld [vmem:[%s4209 + $0x198] sm:$0xff]
        %v5067 = vld [vmem:[%s4209 + $0x1a0] sm:$0xff]
        %v5068 = vld [vmem:[%s4209 + $0x1a8] sm:$0xff]
        %v5069 = vld [vmem:[%s4209 + $0x1b0] sm:$0xff]
        %v5070 = vld [vmem:[%s4209 + $0x1b8] sm:$0xff]
        %v5071 = vld [vmem:[%s4209 + $0x1c0] sm:$0xff]
        %v5072 = vld [vmem:[%s4209 + $0x1c8] sm:$0xff]
        %v5073 = vld [vmem:[%s4209 + $0x1d0] sm:$0xff]
        %v5074 = vld [vmem:[%s4209 + $0x1d8] sm:$0xff]
        %v5075 = vld [vmem:[%s4209 + $0x1e0] sm:$0xff]
        %v5076 = vld [vmem:[%s4209 + $0x1e8] sm:$0xff]
        %v5077 = vld [vmem:[%s4209 + $0x1f0] sm:$0xff]
        %v5078 = vld [vmem:[%s4209 + $0x1f8] sm:$0xff]
        %v5079 = vld [vmem:[%s4209 + $0x200] sm:$0xff]
        %v5080 = vld [vmem:[%s4209 + $0x208] sm:$0xff]
        %v5081 = vld [vmem:[%s4209 + $0x210] sm:$0xff]
        %v5082 = vld [vmem:[%s4209 + $0x218] sm:$0xff]
        %v5083 = vld [vmem:[%s4209 + $0x220] sm:$0xff]
        %v5084 = vld [vmem:[%s4209 + $0x228] sm:$0xff]
        %v5085 = vld [vmem:[%s4209 + $0x230] sm:$0xff]
        %v5086 = vld [vmem:[%s4209 + $0x238] sm:$0xff]
        %v5087 = vld [vmem:[%s4209 + $0x240] sm:$0xff]
        %v5088 = vld [vmem:[%s4209 + $0x248] sm:$0xff]
        %v5089 = vld [vmem:[%s4209 + $0x250] sm:$0xff]
        %v5090 = vld [vmem:[%s4209 + $0x258] sm:$0xff]
        %v5091 = vld [vmem:[%s4209 + $0x260] sm:$0xff]
        %v5092 = vld [vmem:[%s4209 + $0x268] sm:$0xff]
        %v5093 = vld [vmem:[%s4209 + $0x270] sm:$0xff]
        %v5094 = vld [vmem:[%s4209 + $0x278] sm:$0xff]
        %v5095 = vld [vmem:[%s4209 + $0x280] sm:$0xff]
        %v5096 = vld [vmem:[%s4209 + $0x288] sm:$0xff]
        %v5097 = vld [vmem:[%s4209 + $0x290] sm:$0xff]
        %v5098 = vld [vmem:[%s4209 + $0x298] sm:$0xff]
        %v5099 = vld [vmem:[%s4209 + $0x2a0] sm:$0xff]
        %v5100 = vld [vmem:[%s4209 + $0x2a8] sm:$0xff]
        %v5101 = vld [vmem:[%s4209 + $0x2b0] sm:$0xff]
        %v5102 = vld [vmem:[%s4209 + $0x2b8] sm:$0xff]
        %v5103 = vld [vmem:[%s4209 + $0x2c0] sm:$0xff]
        %v5104 = vld [vmem:[%s4209 + $0x2c8] sm:$0xff]
        %v5105 = vld [vmem:[%s4209 + $0x2d0] sm:$0xff]
        %v5106 = vld [vmem:[%s4209 + $0x2d8] sm:$0xff]
        %v5107 = vld [vmem:[%s4209 + $0x2e0] sm:$0xff]
        %v5108 = vld [vmem:[%s4209 + $0x2e8] sm:$0xff]
        %v5109 = vld [vmem:[%s4209 + $0x2f0] sm:$0xff]
        %v5110 = vld [vmem:[%s4209 + $0x2f8] sm:$0xff]
        %v5111 = vld [vmem:[%s4209 + $0x300] sm:$0xff]
        %v5112 = vld [vmem:[%s4209 + $0x308] sm:$0xff]
        %v5113 = vld [vmem:[%s4209 + $0x310] sm:$0xff]
        %v5114 = vld [vmem:[%s4209 + $0x318] sm:$0xff]
        %v5115 = vld [vmem:[%s4209 + $0x320] sm:$0xff]
        %v5116 = vld [vmem:[%s4209 + $0x328] sm:$0xff]
        %v5117 = vld [vmem:[%s4209 + $0x330] sm:$0xff]
        %v5118 = vld [vmem:[%s4209 + $0x338] sm:$0xff]
        %v5119 = vld [vmem:[%s4209 + $0x340] sm:$0xff]
        %v5120 = vld [vmem:[%s4209 + $0x348] sm:$0xff]
        %v5121 = vld [vmem:[%s4209 + $0x350] sm:$0xff]
        %v5122 = vld [vmem:[%s4209 + $0x358] sm:$0xff]
        %v5123 = vld [vmem:[%s4209 + $0x360] sm:$0xff]
        %v5124 = vld [vmem:[%s4209 + $0x368] sm:$0xff]
        %v5125 = vld [vmem:[%s4209 + $0x370] sm:$0xff]
        %v5126 = vld [vmem:[%s4209 + $0x378] sm:$0xff]
        %v5127 = vld [vmem:[%s4209 + $0x380] sm:$0xff]
        %v5128 = vld [vmem:[%s4209 + $0x388] sm:$0xff]
        %v5129 = vld [vmem:[%s4209 + $0x390] sm:$0xff]
        %v5130 = vld [vmem:[%s4209 + $0x398] sm:$0xff]
        %v5131 = vld [vmem:[%s4209 + $0x3a0] sm:$0xff]
        %v5132 = vld [vmem:[%s4209 + $0x3a8] sm:$0xff]
        %v5133 = vld [vmem:[%s4209 + $0x3b0] sm:$0xff]
        %v5134 = vld [vmem:[%s4209 + $0x3b8] sm:$0xff]
        %v5135 = vld [vmem:[%s4209 + $0x3c0] sm:$0xff]
        %v5136 = vld [vmem:[%s4209 + $0x3c8] sm:$0xff]
        %v5137 = vld [vmem:[%s4209 + $0x3d0] sm:$0xff]
        %v5138 = vld [vmem:[%s4209 + $0x3d8] sm:$0xff]
        %v5139 = vld [vmem:[%s4209 + $0x3e0] sm:$0xff]
        %v5140 = vld [vmem:[%s4209 + $0x3e8] sm:$0xff]
        %v5141 = vld [vmem:[%s4209 + $0x3f0] sm:$0xff]
        %v5142 = vld [vmem:[%s4209 + $0x3f8] sm:$0xff]
        %v5143 = vunpack.c.l.s8.bf16 %v5015
        %v5144 = vunpack.c.l.s8.bf16 %v5016
        %v5145 = vunpack.c.l.s8.bf16 %v5017
        %v5146 = vunpack.c.l.s8.bf16 %v5018
        %v5147 = vunpack.c.h.s8.bf16 %v5015
        %v5148 = vunpack.c.h.s8.bf16 %v5016
        %v5149 = vunpack.c.h.s8.bf16 %v5017
        %v5150 = vunpack.c.h.s8.bf16 %v5018
        %v5151 = vunpack.c.l.s8.bf16 %v5019
        %v5152 = vunpack.c.l.s8.bf16 %v5020
        %v5153 = vunpack.c.l.s8.bf16 %v5021
        %v5154 = vunpack.c.l.s8.bf16 %v5022
        %v5155 = vunpack.c.h.s8.bf16 %v5019
        %v5156 = vunpack.c.h.s8.bf16 %v5020
        %v5157 = vunpack.c.h.s8.bf16 %v5021
        %v5158 = vunpack.c.h.s8.bf16 %v5022
        %v5159 = vunpack.c.l.s8.bf16 %v5023
        %v5160 = vunpack.c.l.s8.bf16 %v5024
        %v5161 = vunpack.c.l.s8.bf16 %v5025
        %v5162 = vunpack.c.l.s8.bf16 %v5026
        %v5163 = vunpack.c.h.s8.bf16 %v5023
        %v5164 = vunpack.c.h.s8.bf16 %v5024
        %v5165 = vunpack.c.h.s8.bf16 %v5025
        %v5166 = vunpack.c.h.s8.bf16 %v5026
        %v5167 = vunpack.c.l.s8.bf16 %v5027
        %v5168 = vunpack.c.l.s8.bf16 %v5028
        %v5169 = vunpack.c.l.s8.bf16 %v5029
        %v5170 = vunpack.c.l.s8.bf16 %v5030
        %v5171 = vunpack.c.h.s8.bf16 %v5027
        %v5172 = vunpack.c.h.s8.bf16 %v5028
        %v5173 = vunpack.c.h.s8.bf16 %v5029
        %v5174 = vunpack.c.h.s8.bf16 %v5030
        %v5175 = vunpack.c.l.s8.bf16 %v5031
        %v5176 = vunpack.c.l.s8.bf16 %v5032
        %v5177 = vunpack.c.l.s8.bf16 %v5033
        %v5178 = vunpack.c.l.s8.bf16 %v5034
        %v5179 = vunpack.c.h.s8.bf16 %v5031
        %v5180 = vunpack.c.h.s8.bf16 %v5032
        %v5181 = vunpack.c.h.s8.bf16 %v5033
        %v5182 = vunpack.c.h.s8.bf16 %v5034
        %v5183 = vunpack.c.l.s8.bf16 %v5035
        %v5184 = vunpack.c.l.s8.bf16 %v5036
        %v5185 = vunpack.c.l.s8.bf16 %v5037
        %v5186 = vunpack.c.l.s8.bf16 %v5038
        %v5187 = vunpack.c.h.s8.bf16 %v5035
        %v5188 = vunpack.c.h.s8.bf16 %v5036
        %v5189 = vunpack.c.h.s8.bf16 %v5037
        %v5190 = vunpack.c.h.s8.bf16 %v5038
        %v5191 = vunpack.c.l.s8.bf16 %v5039
        %v5192 = vunpack.c.l.s8.bf16 %v5040
        %v5193 = vunpack.c.l.s8.bf16 %v5041
        %v5194 = vunpack.c.l.s8.bf16 %v5042
        %v5195 = vunpack.c.h.s8.bf16 %v5039
        %v5196 = vunpack.c.h.s8.bf16 %v5040
        %v5197 = vunpack.c.h.s8.bf16 %v5041
        %v5198 = vunpack.c.h.s8.bf16 %v5042
        %v5199 = vunpack.c.l.s8.bf16 %v5043
        %v5200 = vunpack.c.l.s8.bf16 %v5044
        %v5201 = vunpack.c.l.s8.bf16 %v5045
        %v5202 = vunpack.c.l.s8.bf16 %v5046
        %v5203 = vunpack.c.h.s8.bf16 %v5043
        %v5204 = vunpack.c.h.s8.bf16 %v5044
        %v5205 = vunpack.c.h.s8.bf16 %v5045
        %v5206 = vunpack.c.h.s8.bf16 %v5046
        %v5207 = vunpack.c.l.s8.bf16 %v5047
        %v5208 = vunpack.c.l.s8.bf16 %v5048
        %v5209 = vunpack.c.l.s8.bf16 %v5049
        %v5210 = vunpack.c.l.s8.bf16 %v5050
        %v5211 = vunpack.c.h.s8.bf16 %v5047
        %v5212 = vunpack.c.h.s8.bf16 %v5048
        %v5213 = vunpack.c.h.s8.bf16 %v5049
        %v5214 = vunpack.c.h.s8.bf16 %v5050
        %v5215 = vunpack.c.l.s8.bf16 %v5051
        %v5216 = vunpack.c.l.s8.bf16 %v5052
        %v5217 = vunpack.c.l.s8.bf16 %v5053
        %v5218 = vunpack.c.l.s8.bf16 %v5054
        %v5219 = vunpack.c.h.s8.bf16 %v5051
        %v5220 = vunpack.c.h.s8.bf16 %v5052
        %v5221 = vunpack.c.h.s8.bf16 %v5053
        %v5222 = vunpack.c.h.s8.bf16 %v5054
        %v5223 = vunpack.c.l.s8.bf16 %v5055
        %v5224 = vunpack.c.l.s8.bf16 %v5056
        %v5225 = vunpack.c.l.s8.bf16 %v5057
        %v5226 = vunpack.c.l.s8.bf16 %v5058
        %v5227 = vunpack.c.h.s8.bf16 %v5055
        %v5228 = vunpack.c.h.s8.bf16 %v5056
        %v5229 = vunpack.c.h.s8.bf16 %v5057
        %v5230 = vunpack.c.h.s8.bf16 %v5058
        %v5231 = vunpack.c.l.s8.bf16 %v5059
        %v5232 = vunpack.c.l.s8.bf16 %v5060
        %v5233 = vunpack.c.l.s8.bf16 %v5061
        %v5234 = vunpack.c.l.s8.bf16 %v5062
        %v5235 = vunpack.c.h.s8.bf16 %v5059
        %v5236 = vunpack.c.h.s8.bf16 %v5060
        %v5237 = vunpack.c.h.s8.bf16 %v5061
        %v5238 = vunpack.c.h.s8.bf16 %v5062
        %v5239 = vunpack.c.l.s8.bf16 %v5063
        %v5240 = vunpack.c.l.s8.bf16 %v5064
        %v5241 = vunpack.c.l.s8.bf16 %v5065
        %v5242 = vunpack.c.l.s8.bf16 %v5066
        %v5243 = vunpack.c.h.s8.bf16 %v5063
        %v5244 = vunpack.c.h.s8.bf16 %v5064
        %v5245 = vunpack.c.h.s8.bf16 %v5065
        %v5246 = vunpack.c.h.s8.bf16 %v5066
        %v5247 = vunpack.c.l.s8.bf16 %v5067
        %v5248 = vunpack.c.l.s8.bf16 %v5068
        %v5249 = vunpack.c.l.s8.bf16 %v5069
        %v5250 = vunpack.c.l.s8.bf16 %v5070
        %v5251 = vunpack.c.h.s8.bf16 %v5067
        %v5252 = vunpack.c.h.s8.bf16 %v5068
        %v5253 = vunpack.c.h.s8.bf16 %v5069
        %v5254 = vunpack.c.h.s8.bf16 %v5070
        %v5255 = vunpack.c.l.s8.bf16 %v5071
        %v5256 = vunpack.c.l.s8.bf16 %v5072
        %v5257 = vunpack.c.l.s8.bf16 %v5073
        %v5258 = vunpack.c.l.s8.bf16 %v5074
        %v5259 = vunpack.c.h.s8.bf16 %v5071
        %v5260 = vunpack.c.h.s8.bf16 %v5072
        %v5261 = vunpack.c.h.s8.bf16 %v5073
        %v5262 = vunpack.c.h.s8.bf16 %v5074
        %v5263 = vunpack.c.l.s8.bf16 %v5075
        %v5264 = vunpack.c.l.s8.bf16 %v5076
        %v5265 = vunpack.c.l.s8.bf16 %v5077
        %v5266 = vunpack.c.l.s8.bf16 %v5078
        %v5267 = vunpack.c.h.s8.bf16 %v5075
        %v5268 = vunpack.c.h.s8.bf16 %v5076
        %v5269 = vunpack.c.h.s8.bf16 %v5077
        %v5270 = vunpack.c.h.s8.bf16 %v5078
        %v5271 = vunpack.c.l.s8.bf16 %v5079
        %v5272 = vunpack.c.l.s8.bf16 %v5080
        %v5273 = vunpack.c.l.s8.bf16 %v5081
        %v5274 = vunpack.c.l.s8.bf16 %v5082
        %v5275 = vunpack.c.h.s8.bf16 %v5079
        %v5276 = vunpack.c.h.s8.bf16 %v5080
        %v5277 = vunpack.c.h.s8.bf16 %v5081
        %v5278 = vunpack.c.h.s8.bf16 %v5082
        %v5279 = vunpack.c.l.s8.bf16 %v5083
        %v5280 = vunpack.c.l.s8.bf16 %v5084
        %v5281 = vunpack.c.l.s8.bf16 %v5085
        %v5282 = vunpack.c.l.s8.bf16 %v5086
        %v5283 = vunpack.c.h.s8.bf16 %v5083
        %v5284 = vunpack.c.h.s8.bf16 %v5084
        %v5285 = vunpack.c.h.s8.bf16 %v5085
        %v5286 = vunpack.c.h.s8.bf16 %v5086
        %v5287 = vunpack.c.l.s8.bf16 %v5087
        %v5288 = vunpack.c.l.s8.bf16 %v5088
        %v5289 = vunpack.c.l.s8.bf16 %v5089
        %v5290 = vunpack.c.l.s8.bf16 %v5090
        %v5291 = vunpack.c.h.s8.bf16 %v5087
        %v5292 = vunpack.c.h.s8.bf16 %v5088
        %v5293 = vunpack.c.h.s8.bf16 %v5089
        %v5294 = vunpack.c.h.s8.bf16 %v5090
        %v5295 = vunpack.c.l.s8.bf16 %v5091
        %v5296 = vunpack.c.l.s8.bf16 %v5092
        %v5297 = vunpack.c.l.s8.bf16 %v5093
        %v5298 = vunpack.c.l.s8.bf16 %v5094
        %v5299 = vunpack.c.h.s8.bf16 %v5091
        %v5300 = vunpack.c.h.s8.bf16 %v5092
        %v5301 = vunpack.c.h.s8.bf16 %v5093
        %v5302 = vunpack.c.h.s8.bf16 %v5094
        %v5303 = vunpack.c.l.s8.bf16 %v5095
        %v5304 = vunpack.c.l.s8.bf16 %v5096
        %v5305 = vunpack.c.l.s8.bf16 %v5097
        %v5306 = vunpack.c.l.s8.bf16 %v5098
        %v5307 = vunpack.c.h.s8.bf16 %v5095
        %v5308 = vunpack.c.h.s8.bf16 %v5096
        %v5309 = vunpack.c.h.s8.bf16 %v5097
        %v5310 = vunpack.c.h.s8.bf16 %v5098
        %v5311 = vunpack.c.l.s8.bf16 %v5099
        %v5312 = vunpack.c.l.s8.bf16 %v5100
        %v5313 = vunpack.c.l.s8.bf16 %v5101
        %v5314 = vunpack.c.l.s8.bf16 %v5102
        %v5315 = vunpack.c.h.s8.bf16 %v5099
        %v5316 = vunpack.c.h.s8.bf16 %v5100
        %v5317 = vunpack.c.h.s8.bf16 %v5101
        %v5318 = vunpack.c.h.s8.bf16 %v5102
        %v5319 = vunpack.c.l.s8.bf16 %v5103
        %v5320 = vunpack.c.l.s8.bf16 %v5104
        %v5321 = vunpack.c.l.s8.bf16 %v5105
        %v5322 = vunpack.c.l.s8.bf16 %v5106
        %v5323 = vunpack.c.h.s8.bf16 %v5103
        %v5324 = vunpack.c.h.s8.bf16 %v5104
        %v5325 = vunpack.c.h.s8.bf16 %v5105
        %v5326 = vunpack.c.h.s8.bf16 %v5106
        %v5327 = vunpack.c.l.s8.bf16 %v5107
        %v5328 = vunpack.c.l.s8.bf16 %v5108
        %v5329 = vunpack.c.l.s8.bf16 %v5109
        %v5330 = vunpack.c.l.s8.bf16 %v5110
        %v5331 = vunpack.c.h.s8.bf16 %v5107
        %v5332 = vunpack.c.h.s8.bf16 %v5108
        %v5333 = vunpack.c.h.s8.bf16 %v5109
        %v5334 = vunpack.c.h.s8.bf16 %v5110
        %v5335 = vunpack.c.l.s8.bf16 %v5111
        %v5336 = vunpack.c.l.s8.bf16 %v5112
        %v5337 = vunpack.c.l.s8.bf16 %v5113
        %v5338 = vunpack.c.l.s8.bf16 %v5114
        %v5339 = vunpack.c.h.s8.bf16 %v5111
        %v5340 = vunpack.c.h.s8.bf16 %v5112
        %v5341 = vunpack.c.h.s8.bf16 %v5113
        %v5342 = vunpack.c.h.s8.bf16 %v5114
        %v5343 = vunpack.c.l.s8.bf16 %v5115
        %v5344 = vunpack.c.l.s8.bf16 %v5116
        %v5345 = vunpack.c.l.s8.bf16 %v5117
        %v5346 = vunpack.c.l.s8.bf16 %v5118
        %v5347 = vunpack.c.h.s8.bf16 %v5115
        %v5348 = vunpack.c.h.s8.bf16 %v5116
        %v5349 = vunpack.c.h.s8.bf16 %v5117
        %v5350 = vunpack.c.h.s8.bf16 %v5118
        %v5351 = vunpack.c.l.s8.bf16 %v5119
        %v5352 = vunpack.c.l.s8.bf16 %v5120
        %v5353 = vunpack.c.l.s8.bf16 %v5121
        %v5354 = vunpack.c.l.s8.bf16 %v5122
        %v5355 = vunpack.c.h.s8.bf16 %v5119
        %v5356 = vunpack.c.h.s8.bf16 %v5120
        %v5357 = vunpack.c.h.s8.bf16 %v5121
        %v5358 = vunpack.c.h.s8.bf16 %v5122
        %v5359 = vunpack.c.l.s8.bf16 %v5123
        %v5360 = vunpack.c.l.s8.bf16 %v5124
        %v5361 = vunpack.c.l.s8.bf16 %v5125
        %v5362 = vunpack.c.l.s8.bf16 %v5126
        %v5363 = vunpack.c.h.s8.bf16 %v5123
        %v5364 = vunpack.c.h.s8.bf16 %v5124
        %v5365 = vunpack.c.h.s8.bf16 %v5125
        %v5366 = vunpack.c.h.s8.bf16 %v5126
        %v5367 = vunpack.c.l.s8.bf16 %v5127
        %v5368 = vunpack.c.l.s8.bf16 %v5128
        %v5369 = vunpack.c.l.s8.bf16 %v5129
        %v5370 = vunpack.c.l.s8.bf16 %v5130
        %v5371 = vunpack.c.h.s8.bf16 %v5127
        %v5372 = vunpack.c.h.s8.bf16 %v5128
        %v5373 = vunpack.c.h.s8.bf16 %v5129
        %v5374 = vunpack.c.h.s8.bf16 %v5130
        %v5375 = vunpack.c.l.s8.bf16 %v5131
        %v5376 = vunpack.c.l.s8.bf16 %v5132
        %v5377 = vunpack.c.l.s8.bf16 %v5133
        %v5378 = vunpack.c.l.s8.bf16 %v5134
        %v5379 = vunpack.c.h.s8.bf16 %v5131
        %v5380 = vunpack.c.h.s8.bf16 %v5132
        %v5381 = vunpack.c.h.s8.bf16 %v5133
        %v5382 = vunpack.c.h.s8.bf16 %v5134
        %v5383 = vunpack.c.l.s8.bf16 %v5135
        %v5384 = vunpack.c.l.s8.bf16 %v5136
        %v5385 = vunpack.c.l.s8.bf16 %v5137
        %v5386 = vunpack.c.l.s8.bf16 %v5138
        %v5387 = vunpack.c.h.s8.bf16 %v5135
        %v5388 = vunpack.c.h.s8.bf16 %v5136
        %v5389 = vunpack.c.h.s8.bf16 %v5137
        %v5390 = vunpack.c.h.s8.bf16 %v5138
        %v5391 = vunpack.c.l.s8.bf16 %v5139
        %v5392 = vunpack.c.l.s8.bf16 %v5140
        %v5393 = vunpack.c.l.s8.bf16 %v5141
        %v5394 = vunpack.c.l.s8.bf16 %v5142
        %v5395 = vunpack.c.h.s8.bf16 %v5139
        %v5396 = vunpack.c.h.s8.bf16 %v5140
        %v5397 = vunpack.c.h.s8.bf16 %v5141
        %v5398 = vunpack.c.h.s8.bf16 %v5142
        %5399 = vmatprep.subr.bf16.mxu0 %v5144
        %5400 = vmatpush1.bf16.msra.mxu0 %v5143
        %5401 = vmatprep.subr.bf16.mxu0 %v5148
        %5402 = vmatpush1.bf16.msra.mxu0 %v5147
        %5403 = vmatprep.subr.bf16.mxu0 %v5152
        %5404 = vmatpush1.bf16.msra.mxu0 %v5151
        %5405 = vmatprep.subr.bf16.mxu0 %v5156
        %5406 = vmatpush1.bf16.msra.mxu0 %v5155
        %5407 = vmatprep.subr.bf16.mxu0 %v5160
        %5408 = vmatpush1.bf16.msra.mxu0 %v5159
        %5409 = vmatprep.subr.bf16.mxu0 %v5164
        %5410 = vmatpush1.bf16.msra.mxu0 %v5163
        %5411 = vmatprep.subr.bf16.mxu0 %v5168
        %5412 = vmatpush1.bf16.msra.mxu0 %v5167
        %5413 = vmatprep.subr.bf16.mxu0 %v5172
        %5414 = vmatpush1.bf16.msra.mxu0 %v5171
        %5415 = vmatprep.subr.bf16.mxu0 %v5176
        %5416 = vmatpush1.bf16.msra.mxu0 %v5175
        %5417 = vmatprep.subr.bf16.mxu0 %v5180
        %5418 = vmatpush1.bf16.msra.mxu0 %v5179
        %5419 = vmatprep.subr.bf16.mxu0 %v5184
        %5420 = vmatpush1.bf16.msra.mxu0 %v5183
        %5421 = vmatprep.subr.bf16.mxu0 %v5188
        %5422 = vmatpush1.bf16.msra.mxu0 %v5187
        %5423 = vmatprep.subr.bf16.mxu0 %v5192
        %5424 = vmatpush1.bf16.msra.mxu0 %v5191
        %5425 = vmatprep.subr.bf16.mxu0 %v5196
        %5426 = vmatpush1.bf16.msra.mxu0 %v5195
        %5427 = vmatprep.subr.bf16.mxu0 %v5200
        %5428 = vmatpush1.bf16.msra.mxu0 %v5199
        %5429 = vmatprep.subr.bf16.mxu0 %v5204
        %5430 = vmatpush1.bf16.msra.mxu0 %v5203
        %5431 = vmatprep.mubr.bf16.mxu0 %v4198
        %5432 = vmatmul.mubr.bf16.gmra.mrb[0].mxu0 %v4197
        %v5433 = vpop.f32.mrb[0].mxu0
        %v5434 = vadd.f32 0.0, %v5433
        %v5435 = vpop.f32.mrb[0].mxu0
        %v5436 = vadd.f32 0.0, %v5435
        %v5437 = vpop.f32.mrb[0].mxu0
        %v5438 = vpop.f32.mrb[0].mxu0
        %5439 = vdwg.mxu0
        %5440 = vmatprep.subr.bf16.mxu0 %v5208
        %5441 = vmatpush1.bf16.msra.mxu0 %v5207
        %5442 = vmatprep.subr.bf16.mxu0 %v5212
        %5443 = vmatpush1.bf16.msra.mxu0 %v5211
        %5444 = vmatprep.subr.bf16.mxu0 %v5216
        %5445 = vmatpush1.bf16.msra.mxu0 %v5215
        %5446 = vmatprep.subr.bf16.mxu0 %v5220
        %5447 = vmatpush1.bf16.msra.mxu0 %v5219
        %5448 = vmatprep.subr.bf16.mxu0 %v5224
        %5449 = vmatpush1.bf16.msra.mxu0 %v5223
        %5450 = vmatprep.subr.bf16.mxu0 %v5228
        %5451 = vmatpush1.bf16.msra.mxu0 %v5227
        %5452 = vmatprep.subr.bf16.mxu0 %v5232
        %5453 = vmatpush1.bf16.msra.mxu0 %v5231
        %5454 = vmatprep.subr.bf16.mxu0 %v5236
        %5455 = vmatpush1.bf16.msra.mxu0 %v5235
        %5456 = vmatprep.subr.bf16.mxu0 %v5240
        %5457 = vmatpush1.bf16.msra.mxu0 %v5239
        %5458 = vmatprep.subr.bf16.mxu0 %v5244
        %5459 = vmatpush1.bf16.msra.mxu0 %v5243
        %5460 = vmatprep.subr.bf16.mxu0 %v5248
        %5461 = vmatpush1.bf16.msra.mxu0 %v5247
        %5462 = vmatprep.subr.bf16.mxu0 %v5252
        %5463 = vmatpush1.bf16.msra.mxu0 %v5251
        %5464 = vmatprep.subr.bf16.mxu0 %v5256
        %5465 = vmatpush1.bf16.msra.mxu0 %v5255
        %5466 = vmatprep.subr.bf16.mxu0 %v5260
        %5467 = vmatpush1.bf16.msra.mxu0 %v5259
        %5468 = vmatprep.subr.bf16.mxu0 %v5264
        %5469 = vmatpush1.bf16.msra.mxu0 %v5263
        %5470 = vmatprep.subr.bf16.mxu0 %v5268
        %5471 = vmatpush1.bf16.msra.mxu0 %v5267
        %5472 = vmatprep.mubr.bf16.mxu0 %v4200
        %5473 = vmatmul.mubr.bf16.gmra.mrb[0].mxu0 %v4199
        %v5474 = vpop.f32.mrb[0].mxu0
        %v5475 = vadd.f32 %v5434, %v5474
        %v5476 = vpop.f32.mrb[0].mxu0
        %v5477 = vadd.f32 %v5436, %v5476
        %v5478 = vpop.f32.mrb[0].mxu0
        %v5479 = vpop.f32.mrb[0].mxu0
        %5480 = vdwg.mxu0
        %5481 = vmatprep.subr.bf16.mxu0 %v5272
        %5482 = vmatpush1.bf16.msra.mxu0 %v5271
        %5483 = vmatprep.subr.bf16.mxu0 %v5276
        %5484 = vmatpush1.bf16.msra.mxu0 %v5275
        %5485 = vmatprep.subr.bf16.mxu0 %v5280
        %5486 = vmatpush1.bf16.msra.mxu0 %v5279
        %5487 = vmatprep.subr.bf16.mxu0 %v5284
        %5488 = vmatpush1.bf16.msra.mxu0 %v5283
        %5489 = vmatprep.subr.bf16.mxu0 %v5288
        %5490 = vmatpush1.bf16.msra.mxu0 %v5287
        %5491 = vmatprep.subr.bf16.mxu0 %v5292
        %5492 = vmatpush1.bf16.msra.mxu0 %v5291
        %5493 = vmatprep.subr.bf16.mxu0 %v5296
        %5494 = vmatpush1.bf16.msra.mxu0 %v5295
        %5495 = vmatprep.subr.bf16.mxu0 %v5300
        %5496 = vmatpush1.bf16.msra.mxu0 %v5299
        %5497 = vmatprep.subr.bf16.mxu0 %v5304
        %5498 = vmatpush1.bf16.msra.mxu0 %v5303
        %5499 = vmatprep.subr.bf16.mxu0 %v5308
        %5500 = vmatpush1.bf16.msra.mxu0 %v5307
        %5501 = vmatprep.subr.bf16.mxu0 %v5312
        %5502 = vmatpush1.bf16.msra.mxu0 %v5311
        %5503 = vmatprep.subr.bf16.mxu0 %v5316
        %5504 = vmatpush1.bf16.msra.mxu0 %v5315
        %5505 = vmatprep.subr.bf16.mxu0 %v5320
        %5506 = vmatpush1.bf16.msra.mxu0 %v5319
        %5507 = vmatprep.subr.bf16.mxu0 %v5324
        %5508 = vmatpush1.bf16.msra.mxu0 %v5323
        %5509 = vmatprep.subr.bf16.mxu0 %v5328
        %5510 = vmatpush1.bf16.msra.mxu0 %v5327
        %5511 = vmatprep.subr.bf16.mxu0 %v5332
        %5512 = vmatpush1.bf16.msra.mxu0 %v5331
        %5513 = vmatprep.mubr.bf16.mxu0 %v4202
        %5514 = vmatmul.mubr.bf16.gmra.mrb[0].mxu0 %v4201
        %v5515 = vpop.f32.mrb[0].mxu0
        %v5516 = vadd.f32 %v5475, %v5515
        %v5517 = vpop.f32.mrb[0].mxu0
        %v5518 = vadd.f32 %v5477, %v5517
        %v5519 = vpop.f32.mrb[0].mxu0
        %v5520 = vpop.f32.mrb[0].mxu0
        %5521 = vdwg.mxu0
        %5522 = vmatprep.subr.bf16.mxu0 %v5336
        %5523 = vmatpush1.bf16.msra.mxu0 %v5335
        %5524 = vmatprep.subr.bf16.mxu0 %v5340
        %5525 = vmatpush1.bf16.msra.mxu0 %v5339
        %5526 = vmatprep.subr.bf16.mxu0 %v5344
        %5527 = vmatpush1.bf16.msra.mxu0 %v5343
        %5528 = vmatprep.subr.bf16.mxu0 %v5348
        %5529 = vmatpush1.bf16.msra.mxu0 %v5347
        %5530 = vmatprep.subr.bf16.mxu0 %v5352
        %5531 = vmatpush1.bf16.msra.mxu0 %v5351
        %5532 = vmatprep.subr.bf16.mxu0 %v5356
        %5533 = vmatpush1.bf16.msra.mxu0 %v5355
        %5534 = vmatprep.subr.bf16.mxu0 %v5360
        %5535 = vmatpush1.bf16.msra.mxu0 %v5359
        %5536 = vmatprep.subr.bf16.mxu0 %v5364
        %5537 = vmatpush1.bf16.msra.mxu0 %v5363
        %5538 = vmatprep.subr.bf16.mxu0 %v5368
        %5539 = vmatpush1.bf16.msra.mxu0 %v5367
        %5540 = vmatprep.subr.bf16.mxu0 %v5372
        %5541 = vmatpush1.bf16.msra.mxu0 %v5371
        %5542 = vmatprep.subr.bf16.mxu0 %v5376
        %5543 = vmatpush1.bf16.msra.mxu0 %v5375
        %5544 = vmatprep.subr.bf16.mxu0 %v5380
        %5545 = vmatpush1.bf16.msra.mxu0 %v5379
        %5546 = vmatprep.subr.bf16.mxu0 %v5384
        %5547 = vmatpush1.bf16.msra.mxu0 %v5383
        %5548 = vmatprep.subr.bf16.mxu0 %v5388
        %5549 = vmatpush1.bf16.msra.mxu0 %v5387
        %5550 = vmatprep.subr.bf16.mxu0 %v5392
        %5551 = vmatpush1.bf16.msra.mxu0 %v5391
        %5552 = vmatprep.subr.bf16.mxu0 %v5396
        %5553 = vmatpush1.bf16.msra.mxu0 %v5395
        %5554 = vmatprep.mubr.bf16.mxu0 %v4204
        %5555 = vmatmul.mubr.bf16.gmra.mrb[0].mxu0 %v4203
        %v5556 = vpop.f32.mrb[0].mxu0
        %v5557 = vadd.f32 %v5516, %v5556
        %v5558 = vpop.f32.mrb[0].mxu0
        %v5559 = vadd.f32 %v5518, %v5558
        %v5560 = vpop.f32.mrb[0].mxu0
        %v5561 = vpop.f32.mrb[0].mxu0
        %5562 = vdwg.mxu0
        %5563 = vmatprep.subr.bf16.mxu0 %v5146
        %5564 = vmatpush1.bf16.msra.mxu0 %v5145
        %5565 = vmatprep.subr.bf16.mxu0 %v5150
        %5566 = vmatpush1.bf16.msra.mxu0 %v5149
        %5567 = vmatprep.subr.bf16.mxu0 %v5154
        %5568 = vmatpush1.bf16.msra.mxu0 %v5153
        %5569 = vmatprep.subr.bf16.mxu0 %v5158
        %5570 = vmatpush1.bf16.msra.mxu0 %v5157
        %5571 = vmatprep.subr.bf16.mxu0 %v5162
        %5572 = vmatpush1.bf16.msra.mxu0 %v5161
        %5573 = vmatprep.subr.bf16.mxu0 %v5166
        %5574 = vmatpush1.bf16.msra.mxu0 %v5165
        %5575 = vmatprep.subr.bf16.mxu0 %v5170
        %5576 = vmatpush1.bf16.msra.mxu0 %v5169
        %5577 = vmatprep.subr.bf16.mxu0 %v5174
        %5578 = vmatpush1.bf16.msra.mxu0 %v5173
        %5579 = vmatprep.subr.bf16.mxu0 %v5178
        %5580 = vmatpush1.bf16.msra.mxu0 %v5177
        %5581 = vmatprep.subr.bf16.mxu0 %v5182
        %5582 = vmatpush1.bf16.msra.mxu0 %v5181
        %5583 = vmatprep.subr.bf16.mxu0 %v5186
        %5584 = vmatpush1.bf16.msra.mxu0 %v5185
        %5585 = vmatprep.subr.bf16.mxu0 %v5190
        %5586 = vmatpush1.bf16.msra.mxu0 %v5189
        %5587 = vmatprep.subr.bf16.mxu0 %v5194
        %5588 = vmatpush1.bf16.msra.mxu0 %v5193
        %5589 = vmatprep.subr.bf16.mxu0 %v5198
        %5590 = vmatpush1.bf16.msra.mxu0 %v5197
        %5591 = vmatprep.subr.bf16.mxu0 %v5202
        %5592 = vmatpush1.bf16.msra.mxu0 %v5201
        %5593 = vmatprep.subr.bf16.mxu0 %v5206
        %5594 = vmatpush1.bf16.msra.mxu0 %v5205
        %5595 = vmatprep.mubr.bf16.mxu0 %v4198
        %5596 = vmatmul.mubr.bf16.gmra.mrb[0].mxu0 %v4197
        %v5597 = vpop.f32.mrb[0].mxu0
        %v5598 = vadd.f32 0.0, %v5597
        %v5599 = vpop.f32.mrb[0].mxu0
        %v5600 = vadd.f32 0.0, %v5599
        %v5601 = vpop.f32.mrb[0].mxu0
        %v5602 = vpop.f32.mrb[0].mxu0
        %5603 = vdwg.mxu0
        %5604 = vmatprep.subr.bf16.mxu0 %v5210
        %5605 = vmatpush1.bf16.msra.mxu0 %v5209
        %5606 = vmatprep.subr.bf16.mxu0 %v5214
        %5607 = vmatpush1.bf16.msra.mxu0 %v5213
        %5608 = vmatprep.subr.bf16.mxu0 %v5218
        %5609 = vmatpush1.bf16.msra.mxu0 %v5217
        %5610 = vmatprep.subr.bf16.mxu0 %v5222
        %5611 = vmatpush1.bf16.msra.mxu0 %v5221
        %5612 = vmatprep.subr.bf16.mxu0 %v5226
        %5613 = vmatpush1.bf16.msra.mxu0 %v5225
        %5614 = vmatprep.subr.bf16.mxu0 %v5230
        %5615 = vmatpush1.bf16.msra.mxu0 %v5229
        %5616 = vmatprep.subr.bf16.mxu0 %v5234
        %5617 = vmatpush1.bf16.msra.mxu0 %v5233
        %5618 = vmatprep.subr.bf16.mxu0 %v5238
        %5619 = vmatpush1.bf16.msra.mxu0 %v5237
        %5620 = vmatprep.subr.bf16.mxu0 %v5242
        %5621 = vmatpush1.bf16.msra.mxu0 %v5241
        %5622 = vmatprep.subr.bf16.mxu0 %v5246
        %5623 = vmatpush1.bf16.msra.mxu0 %v5245
        %5624 = vmatprep.subr.bf16.mxu0 %v5250
        %5625 = vmatpush1.bf16.msra.mxu0 %v5249
        %5626 = vmatprep.subr.bf16.mxu0 %v5254
        %5627 = vmatpush1.bf16.msra.mxu0 %v5253
        %5628 = vmatprep.subr.bf16.mxu0 %v5258
        %5629 = vmatpush1.bf16.msra.mxu0 %v5257
        %5630 = vmatprep.subr.bf16.mxu0 %v5262
        %5631 = vmatpush1.bf16.msra.mxu0 %v5261
        %5632 = vmatprep.subr.bf16.mxu0 %v5266
        %5633 = vmatpush1.bf16.msra.mxu0 %v5265
        %5634 = vmatprep.subr.bf16.mxu0 %v5270
        %5635 = vmatpush1.bf16.msra.mxu0 %v5269
        %5636 = vmatprep.mubr.bf16.mxu0 %v4200
        %5637 = vmatmul.mubr.bf16.gmra.mrb[0].mxu0 %v4199
        %v5638 = vpop.f32.mrb[0].mxu0
        %v5639 = vadd.f32 %v5598, %v5638
        %v5640 = vpop.f32.mrb[0].mxu0
        %v5641 = vadd.f32 %v5600, %v5640
        %v5642 = vpop.f32.mrb[0].mxu0
        %v5643 = vpop.f32.mrb[0].mxu0
        %5644 = vdwg.mxu0
        %5645 = vmatprep.subr.bf16.mxu0 %v5274
        %5646 = vmatpush1.bf16.msra.mxu0 %v5273
        %5647 = vmatprep.subr.bf16.mxu0 %v5278
        %5648 = vmatpush1.bf16.msra.mxu0 %v5277
        %5649 = vmatprep.subr.bf16.mxu0 %v5282
        %5650 = vmatpush1.bf16.msra.mxu0 %v5281
        %5651 = vmatprep.subr.bf16.mxu0 %v5286
        %5652 = vmatpush1.bf16.msra.mxu0 %v5285
        %5653 = vmatprep.subr.bf16.mxu0 %v5290
        %5654 = vmatpush1.bf16.msra.mxu0 %v5289
        %5655 = vmatprep.subr.bf16.mxu0 %v5294
        %5656 = vmatpush1.bf16.msra.mxu0 %v5293
        %5657 = vmatprep.subr.bf16.mxu0 %v5298
        %5658 = vmatpush1.bf16.msra.mxu0 %v5297
        %5659 = vmatprep.subr.bf16.mxu0 %v5302
        %5660 = vmatpush1.bf16.msra.mxu0 %v5301
        %5661 = vmatprep.subr.bf16.mxu0 %v5306
        %5662 = vmatpush1.bf16.msra.mxu0 %v5305
        %5663 = vmatprep.subr.bf16.mxu0 %v5310
        %5664 = vmatpush1.bf16.msra.mxu0 %v5309
        %5665 = vmatprep.subr.bf16.mxu0 %v5314
        %5666 = vmatpush1.bf16.msra.mxu0 %v5313
        %5667 = vmatprep.subr.bf16.mxu0 %v5318
        %5668 = vmatpush1.bf16.msra.mxu0 %v5317
        %5669 = vmatprep.subr.bf16.mxu0 %v5322
        %5670 = vmatpush1.bf16.msra.mxu0 %v5321
        %5671 = vmatprep.subr.bf16.mxu0 %v5326
        %5672 = vmatpush1.bf16.msra.mxu0 %v5325
        %5673 = vmatprep.subr.bf16.mxu0 %v5330
        %5674 = vmatpush1.bf16.msra.mxu0 %v5329
        %5675 = vmatprep.subr.bf16.mxu0 %v5334
        %5676 = vmatpush1.bf16.msra.mxu0 %v5333
        %5677 = vmatprep.mubr.bf16.mxu0 %v4202
        %5678 = vmatmul.mubr.bf16.gmra.mrb[0].mxu0 %v4201
        %v5679 = vpop.f32.mrb[0].mxu0
        %v5680 = vadd.f32 %v5639, %v5679
        %v5681 = vpop.f32.mrb[0].mxu0
        %v5682 = vadd.f32 %v5641, %v5681
        %v5683 = vpop.f32.mrb[0].mxu0
        %v5684 = vpop.f32.mrb[0].mxu0
        %5685 = vdwg.mxu0
        %5686 = vmatprep.subr.bf16.mxu0 %v5338
        %5687 = vmatpush1.bf16.msra.mxu0 %v5337
        %5688 = vmatprep.subr.bf16.mxu0 %v5342
        %5689 = vmatpush1.bf16.msra.mxu0 %v5341
        %5690 = vmatprep.subr.bf16.mxu0 %v5346
        %5691 = vmatpush1.bf16.msra.mxu0 %v5345
        %5692 = vmatprep.subr.bf16.mxu0 %v5350
        %5693 = vmatpush1.bf16.msra.mxu0 %v5349
        %5694 = vmatprep.subr.bf16.mxu0 %v5354
        %5695 = vmatpush1.bf16.msra.mxu0 %v5353
        %5696 = vmatprep.subr.bf16.mxu0 %v5358
        %5697 = vmatpush1.bf16.msra.mxu0 %v5357
        %5698 = vmatprep.subr.bf16.mxu0 %v5362
        %5699 = vmatpush1.bf16.msra.mxu0 %v5361
        %5700 = vmatprep.subr.bf16.mxu0 %v5366
        %5701 = vmatpush1.bf16.msra.mxu0 %v5365
        %5702 = vmatprep.subr.bf16.mxu0 %v5370
        %5703 = vmatpush1.bf16.msra.mxu0 %v5369
        %5704 = vmatprep.subr.bf16.mxu0 %v5374
        %5705 = vmatpush1.bf16.msra.mxu0 %v5373
        %5706 = vmatprep.subr.bf16.mxu0 %v5378
        %5707 = vmatpush1.bf16.msra.mxu0 %v5377
        %5708 = vmatprep.subr.bf16.mxu0 %v5382
        %5709 = vmatpush1.bf16.msra.mxu0 %v5381
        %5710 = vmatprep.subr.bf16.mxu0 %v5386
        %5711 = vmatpush1.bf16.msra.mxu0 %v5385
        %5712 = vmatprep.subr.bf16.mxu0 %v5390
        %5713 = vmatpush1.bf16.msra.mxu0 %v5389
        %5714 = vmatprep.subr.bf16.mxu0 %v5394
        %5715 = vmatpush1.bf16.msra.mxu0 %v5393
        %5716 = vmatprep.subr.bf16.mxu0 %v5398
        %5717 = vmatpush1.bf16.msra.mxu0 %v5397
        %5718 = vmatprep.mubr.bf16.mxu0 %v4204
        %5719 = vmatmul.mubr.bf16.gmra.mrb[0].mxu0 %v4203
        %v5720 = vpop.f32.mrb[0].mxu0
        %v5721 = vadd.f32 %v5680, %v5720
        %v5722 = vpop.f32.mrb[0].mxu0
        %v5723 = vadd.f32 %v5682, %v5722
        %v5724 = vpop.f32.mrb[0].mxu0
        %v5725 = vpop.f32.mrb[0].mxu0
        %5726 = vdwg.mxu0
        %v5727 = vld [vmem:[%s398 + $0x4] sm:$0xf]
        %v5729 = vlaneseq
        %v5730 = vshrl.u32 %v5729, 7
        %v5731 = vsub.s32 0, %v5730
        %v5732 = vrot.slane %v5727, %v5731
        %v5733 = vlaneseq
        %v5734 = vshrl.u32 %v5733, 7
        %v5735 = vsub.s32 1, %v5734
        %v5736 = vrot.slane %v5727, %v5735
        %v5737 = vlaneseq
        %v5738 = vshrl.u32 %v5737, 7
        %v5739 = vsub.s32 2, %v5738
        %v5740 = vrot.slane %v5727, %v5739
        %v5741 = vlaneseq
        %v5742 = vshrl.u32 %v5741, 7
        %v5743 = vsub.s32 3, %v5742
        %v5744 = vrot.slane %v5727, %v5743
        %v5749 = vmul.f32 %v5557, %v5732
        %v5750 = vmul.f32 %v5559, %v5736
        %v5751 = vmul.f32 %v5721, %v5740
        %v5752 = vmul.f32 %v5723, %v5744
        %v5753 = vld [vmem:[%s389 + $0x4] sm:$0xf]
        %v5755 = vlaneseq
        %v5756 = vshrl.u32 %v5755, 7
        %v5757 = vsub.s32 0, %v5756
        %v5758 = vrot.slane %v5753, %v5757
        %v5759 = vlaneseq
        %v5760 = vshrl.u32 %v5759, 7
        %v5761 = vsub.s32 1, %v5760
        %v5762 = vrot.slane %v5753, %v5761
        %v5763 = vlaneseq
        %v5764 = vshrl.u32 %v5763, 7
        %v5765 = vsub.s32 2, %v5764
        %v5766 = vrot.slane %v5753, %v5765
        %v5767 = vlaneseq
        %v5768 = vshrl.u32 %v5767, 7
        %v5769 = vsub.s32 3, %v5768
        %v5770 = vrot.slane %v5753, %v5769
        %v5775 = vadd.f32 %v5749, %v5758
        %v5776 = vadd.f32 %v5750, %v5762
        %v5777 = vadd.f32 %v5751, %v5766
        %v5778 = vadd.f32 %v5752, %v5770
        %v5779 = vtanh.pop %v5775
        %v5780 = vtanh.pop %v5776
        %v5781 = vtanh.pop %v5777
        %v5782 = vtanh.pop %v5778
        %5783 = vst [vmem:[%s442 + $0x20] sm:$0xff] %v5779
        %5784 = vst [vmem:[%s442 + $0x28] sm:$0xff] %v5780
        %5785 = vst [vmem:[%s442 + $0x30] sm:$0xff] %v5781
        %5786 = vst [vmem:[%s442 + $0x38] sm:$0xff] %v5782
        %s5787 = sadd.s32 %s445, 3
        %s5788 = smul.u32 %s5787, 128
        %s5789 = smul.addr %s5788, 128
        %s5790 = scalar_lea.hbm %s5, %s5789
        // Predicated region
        $region97: #{generator_forward.1} parent=51 // pred_check
          _
        $region98: #{generator_forward.1} parent=51 // pred_check_branch
          %5792 = sbr.rel target = $region100
        $region99: #{generator_forward.1} parent=51 // pred_region
          %5793 = sst [smem:[#allocation18]] [#allocation25]
          %5794 = sst [smem:[#allocation19]] [#allocation24]
        $region100: #{generator_forward.1} parent=51 // pred_fallthru
          _
        %5796 = shalt.err (0)
        %s5798 = sshll.u32 %s4209, 4
        %s5799 = int_to_ptr.vmem [resolvable:$true] %s5798
        %5801 = dma.hbm_to_vmem [thread:$0]  %s5790, 16384, %s5799, %s4210
        %s5802 = sshll.u32 %s4223, 4
        %5803 = dma.done [#allocation3], %s5802
        %v5804 = vld [vmem:[#allocation2] sm:$0xff]
        %v5805 = vld [vmem:[#allocation2 + $0x8] sm:$0xff]
        %v5806 = vld [vmem:[#allocation2 + $0x10] sm:$0xff]
        %v5807 = vld [vmem:[#allocation2 + $0x18] sm:$0xff]
        %v5808 = vld [vmem:[#allocation2 + $0x20] sm:$0xff]
        %v5809 = vld [vmem:[#allocation2 + $0x28] sm:$0xff]
        %v5810 = vld [vmem:[#allocation2 + $0x30] sm:$0xff]
        %v5811 = vld [vmem:[#allocation2 + $0x38] sm:$0xff]
        %v5812 = vld [vmem:[#allocation2 + $0x40] sm:$0xff]
        %v5813 = vld [vmem:[#allocation2 + $0x48] sm:$0xff]
        %v5814 = vld [vmem:[#allocation2 + $0x50] sm:$0xff]
        %v5815 = vld [vmem:[#allocation2 + $0x58] sm:$0xff]
        %v5816 = vld [vmem:[#allocation2 + $0x60] sm:$0xff]
        %v5817 = vld [vmem:[#allocation2 + $0x68] sm:$0xff]
        %v5818 = vld [vmem:[#allocation2 + $0x70] sm:$0xff]
        %v5819 = vld [vmem:[#allocation2 + $0x78] sm:$0xff]
        %v5820 = vld [vmem:[#allocation2 + $0x80] sm:$0xff]
        %v5821 = vld [vmem:[#allocation2 + $0x88] sm:$0xff]
        %v5822 = vld [vmem:[#allocation2 + $0x90] sm:$0xff]
        %v5823 = vld [vmem:[#allocation2 + $0x98] sm:$0xff]
        %v5824 = vld [vmem:[#allocation2 + $0xa0] sm:$0xff]
        %v5825 = vld [vmem:[#allocation2 + $0xa8] sm:$0xff]
        %v5826 = vld [vmem:[#allocation2 + $0xb0] sm:$0xff]
        %v5827 = vld [vmem:[#allocation2 + $0xb8] sm:$0xff]
        %v5828 = vld [vmem:[#allocation2 + $0xc0] sm:$0xff]
        %v5829 = vld [vmem:[#allocation2 + $0xc8] sm:$0xff]
        %v5830 = vld [vmem:[#allocation2 + $0xd0] sm:$0xff]
        %v5831 = vld [vmem:[#allocation2 + $0xd8] sm:$0xff]
        %v5832 = vld [vmem:[#allocation2 + $0xe0] sm:$0xff]
        %v5833 = vld [vmem:[#allocation2 + $0xe8] sm:$0xff]
        %v5834 = vld [vmem:[#allocation2 + $0xf0] sm:$0xff]
        %v5835 = vld [vmem:[#allocation2 + $0xf8] sm:$0xff]
        %v5836 = vld [vmem:[#allocation2 + $0x100] sm:$0xff]
        %v5837 = vld [vmem:[#allocation2 + $0x108] sm:$0xff]
        %v5838 = vld [vmem:[#allocation2 + $0x110] sm:$0xff]
        %v5839 = vld [vmem:[#allocation2 + $0x118] sm:$0xff]
        %v5840 = vld [vmem:[#allocation2 + $0x120] sm:$0xff]
        %v5841 = vld [vmem:[#allocation2 + $0x128] sm:$0xff]
        %v5842 = vld [vmem:[#allocation2 + $0x130] sm:$0xff]
        %v5843 = vld [vmem:[#allocation2 + $0x138] sm:$0xff]
        %v5844 = vld [vmem:[#allocation2 + $0x140] sm:$0xff]
        %v5845 = vld [vmem:[#allocation2 + $0x148] sm:$0xff]
        %v5846 = vld [vmem:[#allocation2 + $0x150] sm:$0xff]
        %v5847 = vld [vmem:[#allocation2 + $0x158] sm:$0xff]
        %v5848 = vld [vmem:[#allocation2 + $0x160] sm:$0xff]
        %v5849 = vld [vmem:[#allocation2 + $0x168] sm:$0xff]
        %v5850 = vld [vmem:[#allocation2 + $0x170] sm:$0xff]
        %v5851 = vld [vmem:[#allocation2 + $0x178] sm:$0xff]
        %v5852 = vld [vmem:[#allocation2 + $0x180] sm:$0xff]
        %v5853 = vld [vmem:[#allocation2 + $0x188] sm:$0xff]
        %v5854 = vld [vmem:[#allocation2 + $0x190] sm:$0xff]
        %v5855 = vld [vmem:[#allocation2 + $0x198] sm:$0xff]
        %v5856 = vld [vmem:[#allocation2 + $0x1a0] sm:$0xff]
        %v5857 = vld [vmem:[#allocation2 + $0x1a8] sm:$0xff]
        %v5858 = vld [vmem:[#allocation2 + $0x1b0] sm:$0xff]
        %v5859 = vld [vmem:[#allocation2 + $0x1b8] sm:$0xff]
        %v5860 = vld [vmem:[#allocation2 + $0x1c0] sm:$0xff]
        %v5861 = vld [vmem:[#allocation2 + $0x1c8] sm:$0xff]
        %v5862 = vld [vmem:[#allocation2 + $0x1d0] sm:$0xff]
        %v5863 = vld [vmem:[#allocation2 + $0x1d8] sm:$0xff]
        %v5864 = vld [vmem:[#allocation2 + $0x1e0] sm:$0xff]
        %v5865 = vld [vmem:[#allocation2 + $0x1e8] sm:$0xff]
        %v5866 = vld [vmem:[#allocation2 + $0x1f0] sm:$0xff]
        %v5867 = vld [vmem:[#allocation2 + $0x1f8] sm:$0xff]
        %v5868 = vld [vmem:[#allocation2 + $0x200] sm:$0xff]
        %v5869 = vld [vmem:[#allocation2 + $0x208] sm:$0xff]
        %v5870 = vld [vmem:[#allocation2 + $0x210] sm:$0xff]
        %v5871 = vld [vmem:[#allocation2 + $0x218] sm:$0xff]
        %v5872 = vld [vmem:[#allocation2 + $0x220] sm:$0xff]
        %v5873 = vld [vmem:[#allocation2 + $0x228] sm:$0xff]
        %v5874 = vld [vmem:[#allocation2 + $0x230] sm:$0xff]
        %v5875 = vld [vmem:[#allocation2 + $0x238] sm:$0xff]
        %v5876 = vld [vmem:[#allocation2 + $0x240] sm:$0xff]
        %v5877 = vld [vmem:[#allocation2 + $0x248] sm:$0xff]
        %v5878 = vld [vmem:[#allocation2 + $0x250] sm:$0xff]
        %v5879 = vld [vmem:[#allocation2 + $0x258] sm:$0xff]
        %v5880 = vld [vmem:[#allocation2 + $0x260] sm:$0xff]
        %v5881 = vld [vmem:[#allocation2 + $0x268] sm:$0xff]
        %v5882 = vld [vmem:[#allocation2 + $0x270] sm:$0xff]
        %v5883 = vld [vmem:[#allocation2 + $0x278] sm:$0xff]
        %v5884 = vld [vmem:[#allocation2 + $0x280] sm:$0xff]
        %v5885 = vld [vmem:[#allocation2 + $0x288] sm:$0xff]
        %v5886 = vld [vmem:[#allocation2 + $0x290] sm:$0xff]
        %v5887 = vld [vmem:[#allocation2 + $0x298] sm:$0xff]
        %v5888 = vld [vmem:[#allocation2 + $0x2a0] sm:$0xff]
        %v5889 = vld [vmem:[#allocation2 + $0x2a8] sm:$0xff]
        %v5890 = vld [vmem:[#allocation2 + $0x2b0] sm:$0xff]
        %v5891 = vld [vmem:[#allocation2 + $0x2b8] sm:$0xff]
        %v5892 = vld [vmem:[#allocation2 + $0x2c0] sm:$0xff]
        %v5893 = vld [vmem:[#allocation2 + $0x2c8] sm:$0xff]
        %v5894 = vld [vmem:[#allocation2 + $0x2d0] sm:$0xff]
        %v5895 = vld [vmem:[#allocation2 + $0x2d8] sm:$0xff]
        %v5896 = vld [vmem:[#allocation2 + $0x2e0] sm:$0xff]
        %v5897 = vld [vmem:[#allocation2 + $0x2e8] sm:$0xff]
        %v5898 = vld [vmem:[#allocation2 + $0x2f0] sm:$0xff]
        %v5899 = vld [vmem:[#allocation2 + $0x2f8] sm:$0xff]
        %v5900 = vld [vmem:[#allocation2 + $0x300] sm:$0xff]
        %v5901 = vld [vmem:[#allocation2 + $0x308] sm:$0xff]
        %v5902 = vld [vmem:[#allocation2 + $0x310] sm:$0xff]
        %v5903 = vld [vmem:[#allocation2 + $0x318] sm:$0xff]
        %v5904 = vld [vmem:[#allocation2 + $0x320] sm:$0xff]
        %v5905 = vld [vmem:[#allocation2 + $0x328] sm:$0xff]
        %v5906 = vld [vmem:[#allocation2 + $0x330] sm:$0xff]
        %v5907 = vld [vmem:[#allocation2 + $0x338] sm:$0xff]
        %v5908 = vld [vmem:[#allocation2 + $0x340] sm:$0xff]
        %v5909 = vld [vmem:[#allocation2 + $0x348] sm:$0xff]
        %v5910 = vld [vmem:[#allocation2 + $0x350] sm:$0xff]
        %v5911 = vld [vmem:[#allocation2 + $0x358] sm:$0xff]
        %v5912 = vld [vmem:[#allocation2 + $0x360] sm:$0xff]
        %v5913 = vld [vmem:[#allocation2 + $0x368] sm:$0xff]
        %v5914 = vld [vmem:[#allocation2 + $0x370] sm:$0xff]
        %v5915 = vld [vmem:[#allocation2 + $0x378] sm:$0xff]
        %v5916 = vld [vmem:[#allocation2 + $0x380] sm:$0xff]
        %v5917 = vld [vmem:[#allocation2 + $0x388] sm:$0xff]
        %v5918 = vld [vmem:[#allocation2 + $0x390] sm:$0xff]
        %v5919 = vld [vmem:[#allocation2 + $0x398] sm:$0xff]
        %v5920 = vld [vmem:[#allocation2 + $0x3a0] sm:$0xff]
        %v5921 = vld [vmem:[#allocation2 + $0x3a8] sm:$0xff]
        %v5922 = vld [vmem:[#allocation2 + $0x3b0] sm:$0xff]
        %v5923 = vld [vmem:[#allocation2 + $0x3b8] sm:$0xff]
        %v5924 = vld [vmem:[#allocation2 + $0x3c0] sm:$0xff]
        %v5925 = vld [vmem:[#allocation2 + $0x3c8] sm:$0xff]
        %v5926 = vld [vmem:[#allocation2 + $0x3d0] sm:$0xff]
        %v5927 = vld [vmem:[#allocation2 + $0x3d8] sm:$0xff]
        %v5928 = vld [vmem:[#allocation2 + $0x3e0] sm:$0xff]
        %v5929 = vld [vmem:[#allocation2 + $0x3e8] sm:$0xff]
        %v5930 = vld [vmem:[#allocation2 + $0x3f0] sm:$0xff]
        %v5931 = vld [vmem:[#allocation2 + $0x3f8] sm:$0xff]
        %v5932 = vunpack.c.l.s8.bf16 %v5804
        %v5933 = vunpack.c.l.s8.bf16 %v5805
        %v5934 = vunpack.c.l.s8.bf16 %v5806
        %v5935 = vunpack.c.l.s8.bf16 %v5807
        %v5936 = vunpack.c.h.s8.bf16 %v5804
        %v5937 = vunpack.c.h.s8.bf16 %v5805
        %v5938 = vunpack.c.h.s8.bf16 %v5806
        %v5939 = vunpack.c.h.s8.bf16 %v5807
        %v5940 = vunpack.c.l.s8.bf16 %v5808
        %v5941 = vunpack.c.l.s8.bf16 %v5809
        %v5942 = vunpack.c.l.s8.bf16 %v5810
        %v5943 = vunpack.c.l.s8.bf16 %v5811
        %v5944 = vunpack.c.h.s8.bf16 %v5808
        %v5945 = vunpack.c.h.s8.bf16 %v5809
        %v5946 = vunpack.c.h.s8.bf16 %v5810
        %v5947 = vunpack.c.h.s8.bf16 %v5811
        %v5948 = vunpack.c.l.s8.bf16 %v5812
        %v5949 = vunpack.c.l.s8.bf16 %v5813
        %v5950 = vunpack.c.l.s8.bf16 %v5814
        %v5951 = vunpack.c.l.s8.bf16 %v5815
        %v5952 = vunpack.c.h.s8.bf16 %v5812
        %v5953 = vunpack.c.h.s8.bf16 %v5813
        %v5954 = vunpack.c.h.s8.bf16 %v5814
        %v5955 = vunpack.c.h.s8.bf16 %v5815
        %v5956 = vunpack.c.l.s8.bf16 %v5816
        %v5957 = vunpack.c.l.s8.bf16 %v5817
        %v5958 = vunpack.c.l.s8.bf16 %v5818
        %v5959 = vunpack.c.l.s8.bf16 %v5819
        %v5960 = vunpack.c.h.s8.bf16 %v5816
        %v5961 = vunpack.c.h.s8.bf16 %v5817
        %v5962 = vunpack.c.h.s8.bf16 %v5818
        %v5963 = vunpack.c.h.s8.bf16 %v5819
        %v5964 = vunpack.c.l.s8.bf16 %v5820
        %v5965 = vunpack.c.l.s8.bf16 %v5821
        %v5966 = vunpack.c.l.s8.bf16 %v5822
        %v5967 = vunpack.c.l.s8.bf16 %v5823
        %v5968 = vunpack.c.h.s8.bf16 %v5820
        %v5969 = vunpack.c.h.s8.bf16 %v5821
        %v5970 = vunpack.c.h.s8.bf16 %v5822
        %v5971 = vunpack.c.h.s8.bf16 %v5823
        %v5972 = vunpack.c.l.s8.bf16 %v5824
        %v5973 = vunpack.c.l.s8.bf16 %v5825
        %v5974 = vunpack.c.l.s8.bf16 %v5826
        %v5975 = vunpack.c.l.s8.bf16 %v5827
        %v5976 = vunpack.c.h.s8.bf16 %v5824
        %v5977 = vunpack.c.h.s8.bf16 %v5825
        %v5978 = vunpack.c.h.s8.bf16 %v5826
        %v5979 = vunpack.c.h.s8.bf16 %v5827
        %v5980 = vunpack.c.l.s8.bf16 %v5828
        %v5981 = vunpack.c.l.s8.bf16 %v5829
        %v5982 = vunpack.c.l.s8.bf16 %v5830
        %v5983 = vunpack.c.l.s8.bf16 %v5831
        %v5984 = vunpack.c.h.s8.bf16 %v5828
        %v5985 = vunpack.c.h.s8.bf16 %v5829
        %v5986 = vunpack.c.h.s8.bf16 %v5830
        %v5987 = vunpack.c.h.s8.bf16 %v5831
        %v5988 = vunpack.c.l.s8.bf16 %v5832
        %v5989 = vunpack.c.l.s8.bf16 %v5833
        %v5990 = vunpack.c.l.s8.bf16 %v5834
        %v5991 = vunpack.c.l.s8.bf16 %v5835
        %v5992 = vunpack.c.h.s8.bf16 %v5832
        %v5993 = vunpack.c.h.s8.bf16 %v5833
        %v5994 = vunpack.c.h.s8.bf16 %v5834
        %v5995 = vunpack.c.h.s8.bf16 %v5835
        %v5996 = vunpack.c.l.s8.bf16 %v5836
        %v5997 = vunpack.c.l.s8.bf16 %v5837
        %v5998 = vunpack.c.l.s8.bf16 %v5838
        %v5999 = vunpack.c.l.s8.bf16 %v5839
        %v6000 = vunpack.c.h.s8.bf16 %v5836
        %v6001 = vunpack.c.h.s8.bf16 %v5837
        %v6002 = vunpack.c.h.s8.bf16 %v5838
        %v6003 = vunpack.c.h.s8.bf16 %v5839
        %v6004 = vunpack.c.l.s8.bf16 %v5840
        %v6005 = vunpack.c.l.s8.bf16 %v5841
        %v6006 = vunpack.c.l.s8.bf16 %v5842
        %v6007 = vunpack.c.l.s8.bf16 %v5843
        %v6008 = vunpack.c.h.s8.bf16 %v5840
        %v6009 = vunpack.c.h.s8.bf16 %v5841
        %v6010 = vunpack.c.h.s8.bf16 %v5842
        %v6011 = vunpack.c.h.s8.bf16 %v5843
        %v6012 = vunpack.c.l.s8.bf16 %v5844
        %v6013 = vunpack.c.l.s8.bf16 %v5845
        %v6014 = vunpack.c.l.s8.bf16 %v5846
        %v6015 = vunpack.c.l.s8.bf16 %v5847
        %v6016 = vunpack.c.h.s8.bf16 %v5844
        %v6017 = vunpack.c.h.s8.bf16 %v5845
        %v6018 = vunpack.c.h.s8.bf16 %v5846
        %v6019 = vunpack.c.h.s8.bf16 %v5847
        %v6020 = vunpack.c.l.s8.bf16 %v5848
        %v6021 = vunpack.c.l.s8.bf16 %v5849
        %v6022 = vunpack.c.l.s8.bf16 %v5850
        %v6023 = vunpack.c.l.s8.bf16 %v5851
        %v6024 = vunpack.c.h.s8.bf16 %v5848
        %v6025 = vunpack.c.h.s8.bf16 %v5849
        %v6026 = vunpack.c.h.s8.bf16 %v5850
        %v6027 = vunpack.c.h.s8.bf16 %v5851
        %v6028 = vunpack.c.l.s8.bf16 %v5852
        %v6029 = vunpack.c.l.s8.bf16 %v5853
        %v6030 = vunpack.c.l.s8.bf16 %v5854
        %v6031 = vunpack.c.l.s8.bf16 %v5855
        %v6032 = vunpack.c.h.s8.bf16 %v5852
        %v6033 = vunpack.c.h.s8.bf16 %v5853
        %v6034 = vunpack.c.h.s8.bf16 %v5854
        %v6035 = vunpack.c.h.s8.bf16 %v5855
        %v6036 = vunpack.c.l.s8.bf16 %v5856
        %v6037 = vunpack.c.l.s8.bf16 %v5857
        %v6038 = vunpack.c.l.s8.bf16 %v5858
        %v6039 = vunpack.c.l.s8.bf16 %v5859
        %v6040 = vunpack.c.h.s8.bf16 %v5856
        %v6041 = vunpack.c.h.s8.bf16 %v5857
        %v6042 = vunpack.c.h.s8.bf16 %v5858
        %v6043 = vunpack.c.h.s8.bf16 %v5859
        %v6044 = vunpack.c.l.s8.bf16 %v5860
        %v6045 = vunpack.c.l.s8.bf16 %v5861
        %v6046 = vunpack.c.l.s8.bf16 %v5862
        %v6047 = vunpack.c.l.s8.bf16 %v5863
        %v6048 = vunpack.c.h.s8.bf16 %v5860
        %v6049 = vunpack.c.h.s8.bf16 %v5861
        %v6050 = vunpack.c.h.s8.bf16 %v5862
        %v6051 = vunpack.c.h.s8.bf16 %v5863
        %v6052 = vunpack.c.l.s8.bf16 %v5864
        %v6053 = vunpack.c.l.s8.bf16 %v5865
        %v6054 = vunpack.c.l.s8.bf16 %v5866
        %v6055 = vunpack.c.l.s8.bf16 %v5867
        %v6056 = vunpack.c.h.s8.bf16 %v5864
        %v6057 = vunpack.c.h.s8.bf16 %v5865
        %v6058 = vunpack.c.h.s8.bf16 %v5866
        %v6059 = vunpack.c.h.s8.bf16 %v5867
        %v6060 = vunpack.c.l.s8.bf16 %v5868
        %v6061 = vunpack.c.l.s8.bf16 %v5869
        %v6062 = vunpack.c.l.s8.bf16 %v5870
        %v6063 = vunpack.c.l.s8.bf16 %v5871
        %v6064 = vunpack.c.h.s8.bf16 %v5868
        %v6065 = vunpack.c.h.s8.bf16 %v5869
        %v6066 = vunpack.c.h.s8.bf16 %v5870
        %v6067 = vunpack.c.h.s8.bf16 %v5871
        %v6068 = vunpack.c.l.s8.bf16 %v5872
        %v6069 = vunpack.c.l.s8.bf16 %v5873
        %v6070 = vunpack.c.l.s8.bf16 %v5874
        %v6071 = vunpack.c.l.s8.bf16 %v5875
        %v6072 = vunpack.c.h.s8.bf16 %v5872
        %v6073 = vunpack.c.h.s8.bf16 %v5873
        %v6074 = vunpack.c.h.s8.bf16 %v5874
        %v6075 = vunpack.c.h.s8.bf16 %v5875
        %v6076 = vunpack.c.l.s8.bf16 %v5876
        %v6077 = vunpack.c.l.s8.bf16 %v5877
        %v6078 = vunpack.c.l.s8.bf16 %v5878
        %v6079 = vunpack.c.l.s8.bf16 %v5879
        %v6080 = vunpack.c.h.s8.bf16 %v5876
        %v6081 = vunpack.c.h.s8.bf16 %v5877
        %v6082 = vunpack.c.h.s8.bf16 %v5878
        %v6083 = vunpack.c.h.s8.bf16 %v5879
        %v6084 = vunpack.c.l.s8.bf16 %v5880
        %v6085 = vunpack.c.l.s8.bf16 %v5881
        %v6086 = vunpack.c.l.s8.bf16 %v5882
        %v6087 = vunpack.c.l.s8.bf16 %v5883
        %v6088 = vunpack.c.h.s8.bf16 %v5880
        %v6089 = vunpack.c.h.s8.bf16 %v5881
        %v6090 = vunpack.c.h.s8.bf16 %v5882
        %v6091 = vunpack.c.h.s8.bf16 %v5883
        %v6092 = vunpack.c.l.s8.bf16 %v5884
        %v6093 = vunpack.c.l.s8.bf16 %v5885
        %v6094 = vunpack.c.l.s8.bf16 %v5886
        %v6095 = vunpack.c.l.s8.bf16 %v5887
        %v6096 = vunpack.c.h.s8.bf16 %v5884
        %v6097 = vunpack.c.h.s8.bf16 %v5885
        %v6098 = vunpack.c.h.s8.bf16 %v5886
        %v6099 = vunpack.c.h.s8.bf16 %v5887
        %v6100 = vunpack.c.l.s8.bf16 %v5888
        %v6101 = vunpack.c.l.s8.bf16 %v5889
        %v6102 = vunpack.c.l.s8.bf16 %v5890
        %v6103 = vunpack.c.l.s8.bf16 %v5891
        %v6104 = vunpack.c.h.s8.bf16 %v5888
        %v6105 = vunpack.c.h.s8.bf16 %v5889
        %v6106 = vunpack.c.h.s8.bf16 %v5890
        %v6107 = vunpack.c.h.s8.bf16 %v5891
        %v6108 = vunpack.c.l.s8.bf16 %v5892
        %v6109 = vunpack.c.l.s8.bf16 %v5893
        %v6110 = vunpack.c.l.s8.bf16 %v5894
        %v6111 = vunpack.c.l.s8.bf16 %v5895
        %v6112 = vunpack.c.h.s8.bf16 %v5892
        %v6113 = vunpack.c.h.s8.bf16 %v5893
        %v6114 = vunpack.c.h.s8.bf16 %v5894
        %v6115 = vunpack.c.h.s8.bf16 %v5895
        %v6116 = vunpack.c.l.s8.bf16 %v5896
        %v6117 = vunpack.c.l.s8.bf16 %v5897
        %v6118 = vunpack.c.l.s8.bf16 %v5898
        %v6119 = vunpack.c.l.s8.bf16 %v5899
        %v6120 = vunpack.c.h.s8.bf16 %v5896
        %v6121 = vunpack.c.h.s8.bf16 %v5897
        %v6122 = vunpack.c.h.s8.bf16 %v5898
        %v6123 = vunpack.c.h.s8.bf16 %v5899
        %v6124 = vunpack.c.l.s8.bf16 %v5900
        %v6125 = vunpack.c.l.s8.bf16 %v5901
        %v6126 = vunpack.c.l.s8.bf16 %v5902
        %v6127 = vunpack.c.l.s8.bf16 %v5903
        %v6128 = vunpack.c.h.s8.bf16 %v5900
        %v6129 = vunpack.c.h.s8.bf16 %v5901
        %v6130 = vunpack.c.h.s8.bf16 %v5902
        %v6131 = vunpack.c.h.s8.bf16 %v5903
        %v6132 = vunpack.c.l.s8.bf16 %v5904
        %v6133 = vunpack.c.l.s8.bf16 %v5905
        %v6134 = vunpack.c.l.s8.bf16 %v5906
        %v6135 = vunpack.c.l.s8.bf16 %v5907
        %v6136 = vunpack.c.h.s8.bf16 %v5904
        %v6137 = vunpack.c.h.s8.bf16 %v5905
        %v6138 = vunpack.c.h.s8.bf16 %v5906
        %v6139 = vunpack.c.h.s8.bf16 %v5907
        %v6140 = vunpack.c.l.s8.bf16 %v5908
        %v6141 = vunpack.c.l.s8.bf16 %v5909
        %v6142 = vunpack.c.l.s8.bf16 %v5910
        %v6143 = vunpack.c.l.s8.bf16 %v5911
        %v6144 = vunpack.c.h.s8.bf16 %v5908
        %v6145 = vunpack.c.h.s8.bf16 %v5909
        %v6146 = vunpack.c.h.s8.bf16 %v5910
        %v6147 = vunpack.c.h.s8.bf16 %v5911
        %v6148 = vunpack.c.l.s8.bf16 %v5912
        %v6149 = vunpack.c.l.s8.bf16 %v5913
        %v6150 = vunpack.c.l.s8.bf16 %v5914
        %v6151 = vunpack.c.l.s8.bf16 %v5915
        %v6152 = vunpack.c.h.s8.bf16 %v5912
        %v6153 = vunpack.c.h.s8.bf16 %v5913
        %v6154 = vunpack.c.h.s8.bf16 %v5914
        %v6155 = vunpack.c.h.s8.bf16 %v5915
        %v6156 = vunpack.c.l.s8.bf16 %v5916
        %v6157 = vunpack.c.l.s8.bf16 %v5917
        %v6158 = vunpack.c.l.s8.bf16 %v5918
        %v6159 = vunpack.c.l.s8.bf16 %v5919
        %v6160 = vunpack.c.h.s8.bf16 %v5916
        %v6161 = vunpack.c.h.s8.bf16 %v5917
        %v6162 = vunpack.c.h.s8.bf16 %v5918
        %v6163 = vunpack.c.h.s8.bf16 %v5919
        %v6164 = vunpack.c.l.s8.bf16 %v5920
        %v6165 = vunpack.c.l.s8.bf16 %v5921
        %v6166 = vunpack.c.l.s8.bf16 %v5922
        %v6167 = vunpack.c.l.s8.bf16 %v5923
        %v6168 = vunpack.c.h.s8.bf16 %v5920
        %v6169 = vunpack.c.h.s8.bf16 %v5921
        %v6170 = vunpack.c.h.s8.bf16 %v5922
        %v6171 = vunpack.c.h.s8.bf16 %v5923
        %v6172 = vunpack.c.l.s8.bf16 %v5924
        %v6173 = vunpack.c.l.s8.bf16 %v5925
        %v6174 = vunpack.c.l.s8.bf16 %v5926
        %v6175 = vunpack.c.l.s8.bf16 %v5927
        %v6176 = vunpack.c.h.s8.bf16 %v5924
        %v6177 = vunpack.c.h.s8.bf16 %v5925
        %v6178 = vunpack.c.h.s8.bf16 %v5926
        %v6179 = vunpack.c.h.s8.bf16 %v5927
        %v6180 = vunpack.c.l.s8.bf16 %v5928
        %v6181 = vunpack.c.l.s8.bf16 %v5929
        %v6182 = vunpack.c.l.s8.bf16 %v5930
        %v6183 = vunpack.c.l.s8.bf16 %v5931
        %v6184 = vunpack.c.h.s8.bf16 %v5928
        %v6185 = vunpack.c.h.s8.bf16 %v5929
        %v6186 = vunpack.c.h.s8.bf16 %v5930
        %v6187 = vunpack.c.h.s8.bf16 %v5931
        %6188 = vmatprep.subr.bf16.mxu0 %v5933
        %6189 = vmatpush1.bf16.msra.mxu0 %v5932
        %6190 = vmatprep.subr.bf16.mxu0 %v5937
        %6191 = vmatpush1.bf16.msra.mxu0 %v5936
        %6192 = vmatprep.subr.bf16.mxu0 %v5941
        %6193 = vmatpush1.bf16.msra.mxu0 %v5940
        %6194 = vmatprep.subr.bf16.mxu0 %v5945
        %6195 = vmatpush1.bf16.msra.mxu0 %v5944
        %6196 = vmatprep.subr.bf16.mxu0 %v5949
        %6197 = vmatpush1.bf16.msra.mxu0 %v5948
        %6198 = vmatprep.subr.bf16.mxu0 %v5953
        %6199 = vmatpush1.bf16.msra.mxu0 %v5952
        %6200 = vmatprep.subr.bf16.mxu0 %v5957
        %6201 = vmatpush1.bf16.msra.mxu0 %v5956
        %6202 = vmatprep.subr.bf16.mxu0 %v5961
        %6203 = vmatpush1.bf16.msra.mxu0 %v5960
        %6204 = vmatprep.subr.bf16.mxu0 %v5965
        %6205 = vmatpush1.bf16.msra.mxu0 %v5964
        %6206 = vmatprep.subr.bf16.mxu0 %v5969
        %6207 = vmatpush1.bf16.msra.mxu0 %v5968
        %6208 = vmatprep.subr.bf16.mxu0 %v5973
        %6209 = vmatpush1.bf16.msra.mxu0 %v5972
        %6210 = vmatprep.subr.bf16.mxu0 %v5977
        %6211 = vmatpush1.bf16.msra.mxu0 %v5976
        %6212 = vmatprep.subr.bf16.mxu0 %v5981
        %6213 = vmatpush1.bf16.msra.mxu0 %v5980
        %6214 = vmatprep.subr.bf16.mxu0 %v5985
        %6215 = vmatpush1.bf16.msra.mxu0 %v5984
        %6216 = vmatprep.subr.bf16.mxu0 %v5989
        %6217 = vmatpush1.bf16.msra.mxu0 %v5988
        %6218 = vmatprep.subr.bf16.mxu0 %v5993
        %6219 = vmatpush1.bf16.msra.mxu0 %v5992
        %6220 = vmatprep.mubr.bf16.mxu0 %v4198
        %6221 = vmatmul.mubr.bf16.gmra.mrb[0].mxu0 %v4197
        %v6222 = vpop.f32.mrb[0].mxu0
        %v6223 = vadd.f32 0.0, %v6222
        %v6224 = vpop.f32.mrb[0].mxu0
        %v6225 = vadd.f32 0.0, %v6224
        %v6226 = vpop.f32.mrb[0].mxu0
        %v6227 = vpop.f32.mrb[0].mxu0
        %6228 = vdwg.mxu0
        %6229 = vmatprep.subr.bf16.mxu0 %v5997
        %6230 = vmatpush1.bf16.msra.mxu0 %v5996
        %6231 = vmatprep.subr.bf16.mxu0 %v6001
        %6232 = vmatpush1.bf16.msra.mxu0 %v6000
        %6233 = vmatprep.subr.bf16.mxu0 %v6005
        %6234 = vmatpush1.bf16.msra.mxu0 %v6004
        %6235 = vmatprep.subr.bf16.mxu0 %v6009
        %6236 = vmatpush1.bf16.msra.mxu0 %v6008
        %6237 = vmatprep.subr.bf16.mxu0 %v6013
        %6238 = vmatpush1.bf16.msra.mxu0 %v6012
        %6239 = vmatprep.subr.bf16.mxu0 %v6017
        %6240 = vmatpush1.bf16.msra.mxu0 %v6016
        %6241 = vmatprep.subr.bf16.mxu0 %v6021
        %6242 = vmatpush1.bf16.msra.mxu0 %v6020
        %6243 = vmatprep.subr.bf16.mxu0 %v6025
        %6244 = vmatpush1.bf16.msra.mxu0 %v6024
        %6245 = vmatprep.subr.bf16.mxu0 %v6029
        %6246 = vmatpush1.bf16.msra.mxu0 %v6028
        %6247 = vmatprep.subr.bf16.mxu0 %v6033
        %6248 = vmatpush1.bf16.msra.mxu0 %v6032
        %6249 = vmatprep.subr.bf16.mxu0 %v6037
        %6250 = vmatpush1.bf16.msra.mxu0 %v6036
        %6251 = vmatprep.subr.bf16.mxu0 %v6041
        %6252 = vmatpush1.bf16.msra.mxu0 %v6040
        %6253 = vmatprep.subr.bf16.mxu0 %v6045
        %6254 = vmatpush1.bf16.msra.mxu0 %v6044
        %6255 = vmatprep.subr.bf16.mxu0 %v6049
        %6256 = vmatpush1.bf16.msra.mxu0 %v6048
        %6257 = vmatprep.subr.bf16.mxu0 %v6053
        %6258 = vmatpush1.bf16.msra.mxu0 %v6052
        %6259 = vmatprep.subr.bf16.mxu0 %v6057
        %6260 = vmatpush1.bf16.msra.mxu0 %v6056
        %6261 = vmatprep.mubr.bf16.mxu0 %v4200
        %6262 = vmatmul.mubr.bf16.gmra.mrb[0].mxu0 %v4199
        %v6263 = vpop.f32.mrb[0].mxu0
        %v6264 = vadd.f32 %v6223, %v6263
        %v6265 = vpop.f32.mrb[0].mxu0
        %v6266 = vadd.f32 %v6225, %v6265
        %v6267 = vpop.f32.mrb[0].mxu0
        %v6268 = vpop.f32.mrb[0].mxu0
        %6269 = vdwg.mxu0
        %6270 = vmatprep.subr.bf16.mxu0 %v6061
        %6271 = vmatpush1.bf16.msra.mxu0 %v6060
        %6272 = vmatprep.subr.bf16.mxu0 %v6065
        %6273 = vmatpush1.bf16.msra.mxu0 %v6064
        %6274 = vmatprep.subr.bf16.mxu0 %v6069
        %6275 = vmatpush1.bf16.msra.mxu0 %v6068
        %6276 = vmatprep.subr.bf16.mxu0 %v6073
        %6277 = vmatpush1.bf16.msra.mxu0 %v6072
        %6278 = vmatprep.subr.bf16.mxu0 %v6077
        %6279 = vmatpush1.bf16.msra.mxu0 %v6076
        %6280 = vmatprep.subr.bf16.mxu0 %v6081
        %6281 = vmatpush1.bf16.msra.mxu0 %v6080
        %6282 = vmatprep.subr.bf16.mxu0 %v6085
        %6283 = vmatpush1.bf16.msra.mxu0 %v6084
        %6284 = vmatprep.subr.bf16.mxu0 %v6089
        %6285 = vmatpush1.bf16.msra.mxu0 %v6088
        %6286 = vmatprep.subr.bf16.mxu0 %v6093
        %6287 = vmatpush1.bf16.msra.mxu0 %v6092
        %6288 = vmatprep.subr.bf16.mxu0 %v6097
        %6289 = vmatpush1.bf16.msra.mxu0 %v6096
        %6290 = vmatprep.subr.bf16.mxu0 %v6101
        %6291 = vmatpush1.bf16.msra.mxu0 %v6100
        %6292 = vmatprep.subr.bf16.mxu0 %v6105
        %6293 = vmatpush1.bf16.msra.mxu0 %v6104
        %6294 = vmatprep.subr.bf16.mxu0 %v6109
        %6295 = vmatpush1.bf16.msra.mxu0 %v6108
        %6296 = vmatprep.subr.bf16.mxu0 %v6113
        %6297 = vmatpush1.bf16.msra.mxu0 %v6112
        %6298 = vmatprep.subr.bf16.mxu0 %v6117
        %6299 = vmatpush1.bf16.msra.mxu0 %v6116
        %6300 = vmatprep.subr.bf16.mxu0 %v6121
        %6301 = vmatpush1.bf16.msra.mxu0 %v6120
        %6302 = vmatprep.mubr.bf16.mxu0 %v4202
        %6303 = vmatmul.mubr.bf16.gmra.mrb[0].mxu0 %v4201
        %v6304 = vpop.f32.mrb[0].mxu0
        %v6305 = vadd.f32 %v6264, %v6304
        %v6306 = vpop.f32.mrb[0].mxu0
        %v6307 = vadd.f32 %v6266, %v6306
        %v6308 = vpop.f32.mrb[0].mxu0
        %v6309 = vpop.f32.mrb[0].mxu0
        %6310 = vdwg.mxu0
        %6311 = vmatprep.subr.bf16.mxu0 %v6125
        %6312 = vmatpush1.bf16.msra.mxu0 %v6124
        %6313 = vmatprep.subr.bf16.mxu0 %v6129
        %6314 = vmatpush1.bf16.msra.mxu0 %v6128
        %6315 = vmatprep.subr.bf16.mxu0 %v6133
        %6316 = vmatpush1.bf16.msra.mxu0 %v6132
        %6317 = vmatprep.subr.bf16.mxu0 %v6137
        %6318 = vmatpush1.bf16.msra.mxu0 %v6136
        %6319 = vmatprep.subr.bf16.mxu0 %v6141
        %6320 = vmatpush1.bf16.msra.mxu0 %v6140
        %6321 = vmatprep.subr.bf16.mxu0 %v6145
        %6322 = vmatpush1.bf16.msra.mxu0 %v6144
        %6323 = vmatprep.subr.bf16.mxu0 %v6149
        %6324 = vmatpush1.bf16.msra.mxu0 %v6148
        %6325 = vmatprep.subr.bf16.mxu0 %v6153
        %6326 = vmatpush1.bf16.msra.mxu0 %v6152
        %6327 = vmatprep.subr.bf16.mxu0 %v6157
        %6328 = vmatpush1.bf16.msra.mxu0 %v6156
        %6329 = vmatprep.subr.bf16.mxu0 %v6161
        %6330 = vmatpush1.bf16.msra.mxu0 %v6160
        %6331 = vmatprep.subr.bf16.mxu0 %v6165
        %6332 = vmatpush1.bf16.msra.mxu0 %v6164
        %6333 = vmatprep.subr.bf16.mxu0 %v6169
        %6334 = vmatpush1.bf16.msra.mxu0 %v6168
        %6335 = vmatprep.subr.bf16.mxu0 %v6173
        %6336 = vmatpush1.bf16.msra.mxu0 %v6172
        %6337 = vmatprep.subr.bf16.mxu0 %v6177
        %6338 = vmatpush1.bf16.msra.mxu0 %v6176
        %6339 = vmatprep.subr.bf16.mxu0 %v6181
        %6340 = vmatpush1.bf16.msra.mxu0 %v6180
        %6341 = vmatprep.subr.bf16.mxu0 %v6185
        %6342 = vmatpush1.bf16.msra.mxu0 %v6184
        %6343 = vmatprep.mubr.bf16.mxu0 %v4204
        %6344 = vmatmul.mubr.bf16.gmra.mrb[0].mxu0 %v4203
        %v6345 = vpop.f32.mrb[0].mxu0
        %v6346 = vadd.f32 %v6305, %v6345
        %v6347 = vpop.f32.mrb[0].mxu0
        %v6348 = vadd.f32 %v6307, %v6347
        %v6349 = vpop.f32.mrb[0].mxu0
        %v6350 = vpop.f32.mrb[0].mxu0
        %6351 = vdwg.mxu0
        %6352 = vmatprep.subr.bf16.mxu0 %v5935
        %6353 = vmatpush1.bf16.msra.mxu0 %v5934
        %6354 = vmatprep.subr.bf16.mxu0 %v5939
        %6355 = vmatpush1.bf16.msra.mxu0 %v5938
        %6356 = vmatprep.subr.bf16.mxu0 %v5943
        %6357 = vmatpush1.bf16.msra.mxu0 %v5942
        %6358 = vmatprep.subr.bf16.mxu0 %v5947
        %6359 = vmatpush1.bf16.msra.mxu0 %v5946
        %6360 = vmatprep.subr.bf16.mxu0 %v5951
        %6361 = vmatpush1.bf16.msra.mxu0 %v5950
        %6362 = vmatprep.subr.bf16.mxu0 %v5955
        %6363 = vmatpush1.bf16.msra.mxu0 %v5954
        %6364 = vmatprep.subr.bf16.mxu0 %v5959
        %6365 = vmatpush1.bf16.msra.mxu0 %v5958
        %6366 = vmatprep.subr.bf16.mxu0 %v5963
        %6367 = vmatpush1.bf16.msra.mxu0 %v5962
        %6368 = vmatprep.subr.bf16.mxu0 %v5967
        %6369 = vmatpush1.bf16.msra.mxu0 %v5966
        %6370 = vmatprep.subr.bf16.mxu0 %v5971
        %6371 = vmatpush1.bf16.msra.mxu0 %v5970
        %6372 = vmatprep.subr.bf16.mxu0 %v5975
        %6373 = vmatpush1.bf16.msra.mxu0 %v5974
        %6374 = vmatprep.subr.bf16.mxu0 %v5979
        %6375 = vmatpush1.bf16.msra.mxu0 %v5978
        %6376 = vmatprep.subr.bf16.mxu0 %v5983
        %6377 = vmatpush1.bf16.msra.mxu0 %v5982
        %6378 = vmatprep.subr.bf16.mxu0 %v5987
        %6379 = vmatpush1.bf16.msra.mxu0 %v5986
        %6380 = vmatprep.subr.bf16.mxu0 %v5991
        %6381 = vmatpush1.bf16.msra.mxu0 %v5990
        %6382 = vmatprep.subr.bf16.mxu0 %v5995
        %6383 = vmatpush1.bf16.msra.mxu0 %v5994
        %6384 = vmatprep.mubr.bf16.mxu0 %v4198
        %6385 = vmatmul.mubr.bf16.gmra.mrb[0].mxu0 %v4197
        %v6386 = vpop.f32.mrb[0].mxu0
        %v6387 = vadd.f32 0.0, %v6386
        %v6388 = vpop.f32.mrb[0].mxu0
        %v6389 = vadd.f32 0.0, %v6388
        %v6390 = vpop.f32.mrb[0].mxu0
        %v6391 = vpop.f32.mrb[0].mxu0
        %6392 = vdwg.mxu0
        %6393 = vmatprep.subr.bf16.mxu0 %v5999
        %6394 = vmatpush1.bf16.msra.mxu0 %v5998
        %6395 = vmatprep.subr.bf16.mxu0 %v6003
        %6396 = vmatpush1.bf16.msra.mxu0 %v6002
        %6397 = vmatprep.subr.bf16.mxu0 %v6007
        %6398 = vmatpush1.bf16.msra.mxu0 %v6006
        %6399 = vmatprep.subr.bf16.mxu0 %v6011
        %6400 = vmatpush1.bf16.msra.mxu0 %v6010
        %6401 = vmatprep.subr.bf16.mxu0 %v6015
        %6402 = vmatpush1.bf16.msra.mxu0 %v6014
        %6403 = vmatprep.subr.bf16.mxu0 %v6019
        %6404 = vmatpush1.bf16.msra.mxu0 %v6018
        %6405 = vmatprep.subr.bf16.mxu0 %v6023
        %6406 = vmatpush1.bf16.msra.mxu0 %v6022
        %6407 = vmatprep.subr.bf16.mxu0 %v6027
        %6408 = vmatpush1.bf16.msra.mxu0 %v6026
        %6409 = vmatprep.subr.bf16.mxu0 %v6031
        %6410 = vmatpush1.bf16.msra.mxu0 %v6030
        %6411 = vmatprep.subr.bf16.mxu0 %v6035
        %6412 = vmatpush1.bf16.msra.mxu0 %v6034
        %6413 = vmatprep.subr.bf16.mxu0 %v6039
        %6414 = vmatpush1.bf16.msra.mxu0 %v6038
        %6415 = vmatprep.subr.bf16.mxu0 %v6043
        %6416 = vmatpush1.bf16.msra.mxu0 %v6042
        %6417 = vmatprep.subr.bf16.mxu0 %v6047
        %6418 = vmatpush1.bf16.msra.mxu0 %v6046
        %6419 = vmatprep.subr.bf16.mxu0 %v6051
        %6420 = vmatpush1.bf16.msra.mxu0 %v6050
        %6421 = vmatprep.subr.bf16.mxu0 %v6055
        %6422 = vmatpush1.bf16.msra.mxu0 %v6054
        %6423 = vmatprep.subr.bf16.mxu0 %v6059
        %6424 = vmatpush1.bf16.msra.mxu0 %v6058
        %6425 = vmatprep.mubr.bf16.mxu0 %v4200
        %6426 = vmatmul.mubr.bf16.gmra.mrb[0].mxu0 %v4199
        %v6427 = vpop.f32.mrb[0].mxu0
        %v6428 = vadd.f32 %v6387, %v6427
        %v6429 = vpop.f32.mrb[0].mxu0
        %v6430 = vadd.f32 %v6389, %v6429
        %v6431 = vpop.f32.mrb[0].mxu0
        %v6432 = vpop.f32.mrb[0].mxu0
        %6433 = vdwg.mxu0
        %6434 = vmatprep.subr.bf16.mxu0 %v6063
        %6435 = vmatpush1.bf16.msra.mxu0 %v6062
        %6436 = vmatprep.subr.bf16.mxu0 %v6067
        %6437 = vmatpush1.bf16.msra.mxu0 %v6066
        %6438 = vmatprep.subr.bf16.mxu0 %v6071
        %6439 = vmatpush1.bf16.msra.mxu0 %v6070
        %6440 = vmatprep.subr.bf16.mxu0 %v6075
        %6441 = vmatpush1.bf16.msra.mxu0 %v6074
        %6442 = vmatprep.subr.bf16.mxu0 %v6079
        %6443 = vmatpush1.bf16.msra.mxu0 %v6078
        %6444 = vmatprep.subr.bf16.mxu0 %v6083
        %6445 = vmatpush1.bf16.msra.mxu0 %v6082
        %6446 = vmatprep.subr.bf16.mxu0 %v6087
        %6447 = vmatpush1.bf16.msra.mxu0 %v6086
        %6448 = vmatprep.subr.bf16.mxu0 %v6091
        %6449 = vmatpush1.bf16.msra.mxu0 %v6090
        %6450 = vmatprep.subr.bf16.mxu0 %v6095
        %6451 = vmatpush1.bf16.msra.mxu0 %v6094
        %6452 = vmatprep.subr.bf16.mxu0 %v6099
        %6453 = vmatpush1.bf16.msra.mxu0 %v6098
        %6454 = vmatprep.subr.bf16.mxu0 %v6103
        %6455 = vmatpush1.bf16.msra.mxu0 %v6102
        %6456 = vmatprep.subr.bf16.mxu0 %v6107
        %6457 = vmatpush1.bf16.msra.mxu0 %v6106
        %6458 = vmatprep.subr.bf16.mxu0 %v6111
        %6459 = vmatpush1.bf16.msra.mxu0 %v6110
        %6460 = vmatprep.subr.bf16.mxu0 %v6115
        %6461 = vmatpush1.bf16.msra.mxu0 %v6114
        %6462 = vmatprep.subr.bf16.mxu0 %v6119
        %6463 = vmatpush1.bf16.msra.mxu0 %v6118
        %6464 = vmatprep.subr.bf16.mxu0 %v6123
        %6465 = vmatpush1.bf16.msra.mxu0 %v6122
        %6466 = vmatprep.mubr.bf16.mxu0 %v4202
        %6467 = vmatmul.mubr.bf16.gmra.mrb[0].mxu0 %v4201
        %v6468 = vpop.f32.mrb[0].mxu0
        %v6469 = vadd.f32 %v6428, %v6468
        %v6470 = vpop.f32.mrb[0].mxu0
        %v6471 = vadd.f32 %v6430, %v6470
        %v6472 = vpop.f32.mrb[0].mxu0
        %v6473 = vpop.f32.mrb[0].mxu0
        %6474 = vdwg.mxu0
        %6475 = vmatprep.subr.bf16.mxu0 %v6127
        %6476 = vmatpush1.bf16.msra.mxu0 %v6126
        %6477 = vmatprep.subr.bf16.mxu0 %v6131
        %6478 = vmatpush1.bf16.msra.mxu0 %v6130
        %6479 = vmatprep.subr.bf16.mxu0 %v6135
        %6480 = vmatpush1.bf16.msra.mxu0 %v6134
        %6481 = vmatprep.subr.bf16.mxu0 %v6139
        %6482 = vmatpush1.bf16.msra.mxu0 %v6138
        %6483 = vmatprep.subr.bf16.mxu0 %v6143
        %6484 = vmatpush1.bf16.msra.mxu0 %v6142
        %6485 = vmatprep.subr.bf16.mxu0 %v6147
        %6486 = vmatpush1.bf16.msra.mxu0 %v6146
        %6487 = vmatprep.subr.bf16.mxu0 %v6151
        %6488 = vmatpush1.bf16.msra.mxu0 %v6150
        %6489 = vmatprep.subr.bf16.mxu0 %v6155
        %6490 = vmatpush1.bf16.msra.mxu0 %v6154
        %6491 = vmatprep.subr.bf16.mxu0 %v6159
        %6492 = vmatpush1.bf16.msra.mxu0 %v6158
        %6493 = vmatprep.subr.bf16.mxu0 %v6163
        %6494 = vmatpush1.bf16.msra.mxu0 %v6162
        %6495 = vmatprep.subr.bf16.mxu0 %v6167
        %6496 = vmatpush1.bf16.msra.mxu0 %v6166
        %6497 = vmatprep.subr.bf16.mxu0 %v6171
        %6498 = vmatpush1.bf16.msra.mxu0 %v6170
        %6499 = vmatprep.subr.bf16.mxu0 %v6175
        %6500 = vmatpush1.bf16.msra.mxu0 %v6174
        %6501 = vmatprep.subr.bf16.mxu0 %v6179
        %6502 = vmatpush1.bf16.msra.mxu0 %v6178
        %6503 = vmatprep.subr.bf16.mxu0 %v6183
        %6504 = vmatpush1.bf16.msra.mxu0 %v6182
        %6505 = vmatprep.subr.bf16.mxu0 %v6187
        %6506 = vmatpush1.bf16.msra.mxu0 %v6186
        %6507 = vmatprep.mubr.bf16.mxu0 %v4204
        %6508 = vmatmul.mubr.bf16.gmra.mrb[0].mxu0 %v4203
        %v6509 = vpop.f32.mrb[0].mxu0
        %v6510 = vadd.f32 %v6469, %v6509
        %v6511 = vpop.f32.mrb[0].mxu0
        %v6512 = vadd.f32 %v6471, %v6511
        %v6513 = vpop.f32.mrb[0].mxu0
        %v6514 = vpop.f32.mrb[0].mxu0
        %6515 = vdwg.mxu0
        %v6516 = vld [vmem:[%s398 + $0x8] sm:$0xf]
        %v6518 = vlaneseq
        %v6519 = vshrl.u32 %v6518, 7
        %v6520 = vsub.s32 0, %v6519
        %v6521 = vrot.slane %v6516, %v6520
        %v6522 = vlaneseq
        %v6523 = vshrl.u32 %v6522, 7
        %v6524 = vsub.s32 1, %v6523
        %v6525 = vrot.slane %v6516, %v6524
        %v6526 = vlaneseq
        %v6527 = vshrl.u32 %v6526, 7
        %v6528 = vsub.s32 2, %v6527
        %v6529 = vrot.slane %v6516, %v6528
        %v6530 = vlaneseq
        %v6531 = vshrl.u32 %v6530, 7
        %v6532 = vsub.s32 3, %v6531
        %v6533 = vrot.slane %v6516, %v6532
        %v6538 = vmul.f32 %v6346, %v6521
        %v6539 = vmul.f32 %v6348, %v6525
        %v6540 = vmul.f32 %v6510, %v6529
        %v6541 = vmul.f32 %v6512, %v6533
        %v6542 = vld [vmem:[%s389 + $0x8] sm:$0xf]
        %v6544 = vlaneseq
        %v6545 = vshrl.u32 %v6544, 7
        %v6546 = vsub.s32 0, %v6545
        %v6547 = vrot.slane %v6542, %v6546
        %v6548 = vlaneseq
        %v6549 = vshrl.u32 %v6548, 7
        %v6550 = vsub.s32 1, %v6549
        %v6551 = vrot.slane %v6542, %v6550
        %v6552 = vlaneseq
        %v6553 = vshrl.u32 %v6552, 7
        %v6554 = vsub.s32 2, %v6553
        %v6555 = vrot.slane %v6542, %v6554
        %v6556 = vlaneseq
        %v6557 = vshrl.u32 %v6556, 7
        %v6558 = vsub.s32 3, %v6557
        %v6559 = vrot.slane %v6542, %v6558
        %v6564 = vadd.f32 %v6538, %v6547
        %v6565 = vadd.f32 %v6539, %v6551
        %v6566 = vadd.f32 %v6540, %v6555
        %v6567 = vadd.f32 %v6541, %v6559
        %v6568 = vtanh.pop %v6564
        %v6569 = vtanh.pop %v6565
        %v6570 = vtanh.pop %v6566
        %v6571 = vtanh.pop %v6567
        %6572 = vst [vmem:[%s442 + $0x40] sm:$0xff] %v6568
        %6573 = vst [vmem:[%s442 + $0x48] sm:$0xff] %v6569
        %6574 = vst [vmem:[%s442 + $0x50] sm:$0xff] %v6570
        %6575 = vst [vmem:[%s442 + $0x58] sm:$0xff] %v6571
        %s6576 = sshll.u32 %s4223, 4
        %6577 = dma.done %s4210, %s6576
        %v6578 = vld [vmem:[%s4209] sm:$0xff]
        %v6579 = vld [vmem:[%s4209 + $0x8] sm:$0xff]
        %v6580 = vld [vmem:[%s4209 + $0x10] sm:$0xff]
        %v6581 = vld [vmem:[%s4209 + $0x18] sm:$0xff]
        %v6582 = vld [vmem:[%s4209 + $0x20] sm:$0xff]
        %v6583 = vld [vmem:[%s4209 + $0x28] sm:$0xff]
        %v6584 = vld [vmem:[%s4209 + $0x30] sm:$0xff]
        %v6585 = vld [vmem:[%s4209 + $0x38] sm:$0xff]
        %v6586 = vld [vmem:[%s4209 + $0x40] sm:$0xff]
        %v6587 = vld [vmem:[%s4209 + $0x48] sm:$0xff]
        %v6588 = vld [vmem:[%s4209 + $0x50] sm:$0xff]
        %v6589 = vld [vmem:[%s4209 + $0x58] sm:$0xff]
        %v6590 = vld [vmem:[%s4209 + $0x60] sm:$0xff]
        %v6591 = vld [vmem:[%s4209 + $0x68] sm:$0xff]
        %v6592 = vld [vmem:[%s4209 + $0x70] sm:$0xff]
        %v6593 = vld [vmem:[%s4209 + $0x78] sm:$0xff]
        %v6594 = vld [vmem:[%s4209 + $0x80] sm:$0xff]
        %v6595 = vld [vmem:[%s4209 + $0x88] sm:$0xff]
        %v6596 = vld [vmem:[%s4209 + $0x90] sm:$0xff]
        %v6597 = vld [vmem:[%s4209 + $0x98] sm:$0xff]
        %v6598 = vld [vmem:[%s4209 + $0xa0] sm:$0xff]
        %v6599 = vld [vmem:[%s4209 + $0xa8] sm:$0xff]
        %v6600 = vld [vmem:[%s4209 + $0xb0] sm:$0xff]
        %v6601 = vld [vmem:[%s4209 + $0xb8] sm:$0xff]
        %v6602 = vld [vmem:[%s4209 + $0xc0] sm:$0xff]
        %v6603 = vld [vmem:[%s4209 + $0xc8] sm:$0xff]
        %v6604 = vld [vmem:[%s4209 + $0xd0] sm:$0xff]
        %v6605 = vld [vmem:[%s4209 + $0xd8] sm:$0xff]
        %v6606 = vld [vmem:[%s4209 + $0xe0] sm:$0xff]
        %v6607 = vld [vmem:[%s4209 + $0xe8] sm:$0xff]
        %v6608 = vld [vmem:[%s4209 + $0xf0] sm:$0xff]
        %v6609 = vld [vmem:[%s4209 + $0xf8] sm:$0xff]
        %v6610 = vld [vmem:[%s4209 + $0x100] sm:$0xff]
        %v6611 = vld [vmem:[%s4209 + $0x108] sm:$0xff]
        %v6612 = vld [vmem:[%s4209 + $0x110] sm:$0xff]
        %v6613 = vld [vmem:[%s4209 + $0x118] sm:$0xff]
        %v6614 = vld [vmem:[%s4209 + $0x120] sm:$0xff]
        %v6615 = vld [vmem:[%s4209 + $0x128] sm:$0xff]
        %v6616 = vld [vmem:[%s4209 + $0x130] sm:$0xff]
        %v6617 = vld [vmem:[%s4209 + $0x138] sm:$0xff]
        %v6618 = vld [vmem:[%s4209 + $0x140] sm:$0xff]
        %v6619 = vld [vmem:[%s4209 + $0x148] sm:$0xff]
        %v6620 = vld [vmem:[%s4209 + $0x150] sm:$0xff]
        %v6621 = vld [vmem:[%s4209 + $0x158] sm:$0xff]
        %v6622 = vld [vmem:[%s4209 + $0x160] sm:$0xff]
        %v6623 = vld [vmem:[%s4209 + $0x168] sm:$0xff]
        %v6624 = vld [vmem:[%s4209 + $0x170] sm:$0xff]
        %v6625 = vld [vmem:[%s4209 + $0x178] sm:$0xff]
        %v6626 = vld [vmem:[%s4209 + $0x180] sm:$0xff]
        %v6627 = vld [vmem:[%s4209 + $0x188] sm:$0xff]
        %v6628 = vld [vmem:[%s4209 + $0x190] sm:$0xff]
        %v6629 = vld [vmem:[%s4209 + $0x198] sm:$0xff]
        %v6630 = vld [vmem:[%s4209 + $0x1a0] sm:$0xff]
        %v6631 = vld [vmem:[%s4209 + $0x1a8] sm:$0xff]
        %v6632 = vld [vmem:[%s4209 + $0x1b0] sm:$0xff]
        %v6633 = vld [vmem:[%s4209 + $0x1b8] sm:$0xff]
        %v6634 = vld [vmem:[%s4209 + $0x1c0] sm:$0xff]
        %v6635 = vld [vmem:[%s4209 + $0x1c8] sm:$0xff]
        %v6636 = vld [vmem:[%s4209 + $0x1d0] sm:$0xff]
        %v6637 = vld [vmem:[%s4209 + $0x1d8] sm:$0xff]
        %v6638 = vld [vmem:[%s4209 + $0x1e0] sm:$0xff]
        %v6639 = vld [vmem:[%s4209 + $0x1e8] sm:$0xff]
        %v6640 = vld [vmem:[%s4209 + $0x1f0] sm:$0xff]
        %v6641 = vld [vmem:[%s4209 + $0x1f8] sm:$0xff]
        %v6642 = vld [vmem:[%s4209 + $0x200] sm:$0xff]
        %v6643 = vld [vmem:[%s4209 + $0x208] sm:$0xff]
        %v6644 = vld [vmem:[%s4209 + $0x210] sm:$0xff]
        %v6645 = vld [vmem:[%s4209 + $0x218] sm:$0xff]
        %v6646 = vld [vmem:[%s4209 + $0x220] sm:$0xff]
        %v6647 = vld [vmem:[%s4209 + $0x228] sm:$0xff]
        %v6648 = vld [vmem:[%s4209 + $0x230] sm:$0xff]
        %v6649 = vld [vmem:[%s4209 + $0x238] sm:$0xff]
        %v6650 = vld [vmem:[%s4209 + $0x240] sm:$0xff]
        %v6651 = vld [vmem:[%s4209 + $0x248] sm:$0xff]
        %v6652 = vld [vmem:[%s4209 + $0x250] sm:$0xff]
        %v6653 = vld [vmem:[%s4209 + $0x258] sm:$0xff]
        %v6654 = vld [vmem:[%s4209 + $0x260] sm:$0xff]
        %v6655 = vld [vmem:[%s4209 + $0x268] sm:$0xff]
        %v6656 = vld [vmem:[%s4209 + $0x270] sm:$0xff]
        %v6657 = vld [vmem:[%s4209 + $0x278] sm:$0xff]
        %v6658 = vld [vmem:[%s4209 + $0x280] sm:$0xff]
        %v6659 = vld [vmem:[%s4209 + $0x288] sm:$0xff]
        %v6660 = vld [vmem:[%s4209 + $0x290] sm:$0xff]
        %v6661 = vld [vmem:[%s4209 + $0x298] sm:$0xff]
        %v6662 = vld [vmem:[%s4209 + $0x2a0] sm:$0xff]
        %v6663 = vld [vmem:[%s4209 + $0x2a8] sm:$0xff]
        %v6664 = vld [vmem:[%s4209 + $0x2b0] sm:$0xff]
        %v6665 = vld [vmem:[%s4209 + $0x2b8] sm:$0xff]
        %v6666 = vld [vmem:[%s4209 + $0x2c0] sm:$0xff]
        %v6667 = vld [vmem:[%s4209 + $0x2c8] sm:$0xff]
        %v6668 = vld [vmem:[%s4209 + $0x2d0] sm:$0xff]
        %v6669 = vld [vmem:[%s4209 + $0x2d8] sm:$0xff]
        %v6670 = vld [vmem:[%s4209 + $0x2e0] sm:$0xff]
        %v6671 = vld [vmem:[%s4209 + $0x2e8] sm:$0xff]
        %v6672 = vld [vmem:[%s4209 + $0x2f0] sm:$0xff]
        %v6673 = vld [vmem:[%s4209 + $0x2f8] sm:$0xff]
        %v6674 = vld [vmem:[%s4209 + $0x300] sm:$0xff]
        %v6675 = vld [vmem:[%s4209 + $0x308] sm:$0xff]
        %v6676 = vld [vmem:[%s4209 + $0x310] sm:$0xff]
        %v6677 = vld [vmem:[%s4209 + $0x318] sm:$0xff]
        %v6678 = vld [vmem:[%s4209 + $0x320] sm:$0xff]
        %v6679 = vld [vmem:[%s4209 + $0x328] sm:$0xff]
        %v6680 = vld [vmem:[%s4209 + $0x330] sm:$0xff]
        %v6681 = vld [vmem:[%s4209 + $0x338] sm:$0xff]
        %v6682 = vld [vmem:[%s4209 + $0x340] sm:$0xff]
        %v6683 = vld [vmem:[%s4209 + $0x348] sm:$0xff]
        %v6684 = vld [vmem:[%s4209 + $0x350] sm:$0xff]
        %v6685 = vld [vmem:[%s4209 + $0x358] sm:$0xff]
        %v6686 = vld [vmem:[%s4209 + $0x360] sm:$0xff]
        %v6687 = vld [vmem:[%s4209 + $0x368] sm:$0xff]
        %v6688 = vld [vmem:[%s4209 + $0x370] sm:$0xff]
        %v6689 = vld [vmem:[%s4209 + $0x378] sm:$0xff]
        %v6690 = vld [vmem:[%s4209 + $0x380] sm:$0xff]
        %v6691 = vld [vmem:[%s4209 + $0x388] sm:$0xff]
        %v6692 = vld [vmem:[%s4209 + $0x390] sm:$0xff]
        %v6693 = vld [vmem:[%s4209 + $0x398] sm:$0xff]
        %v6694 = vld [vmem:[%s4209 + $0x3a0] sm:$0xff]
        %v6695 = vld [vmem:[%s4209 + $0x3a8] sm:$0xff]
        %v6696 = vld [vmem:[%s4209 + $0x3b0] sm:$0xff]
        %v6697 = vld [vmem:[%s4209 + $0x3b8] sm:$0xff]
        %v6698 = vld [vmem:[%s4209 + $0x3c0] sm:$0xff]
        %v6699 = vld [vmem:[%s4209 + $0x3c8] sm:$0xff]
        %v6700 = vld [vmem:[%s4209 + $0x3d0] sm:$0xff]
        %v6701 = vld [vmem:[%s4209 + $0x3d8] sm:$0xff]
        %v6702 = vld [vmem:[%s4209 + $0x3e0] sm:$0xff]
        %v6703 = vld [vmem:[%s4209 + $0x3e8] sm:$0xff]
        %v6704 = vld [vmem:[%s4209 + $0x3f0] sm:$0xff]
        %v6705 = vld [vmem:[%s4209 + $0x3f8] sm:$0xff]
        %v6706 = vunpack.c.l.s8.bf16 %v6578
        %v6707 = vunpack.c.l.s8.bf16 %v6579
        %v6708 = vunpack.c.l.s8.bf16 %v6580
        %v6709 = vunpack.c.l.s8.bf16 %v6581
        %v6710 = vunpack.c.h.s8.bf16 %v6578
        %v6711 = vunpack.c.h.s8.bf16 %v6579
        %v6712 = vunpack.c.h.s8.bf16 %v6580
        %v6713 = vunpack.c.h.s8.bf16 %v6581
        %v6714 = vunpack.c.l.s8.bf16 %v6582
        %v6715 = vunpack.c.l.s8.bf16 %v6583
        %v6716 = vunpack.c.l.s8.bf16 %v6584
        %v6717 = vunpack.c.l.s8.bf16 %v6585
        %v6718 = vunpack.c.h.s8.bf16 %v6582
        %v6719 = vunpack.c.h.s8.bf16 %v6583
        %v6720 = vunpack.c.h.s8.bf16 %v6584
        %v6721 = vunpack.c.h.s8.bf16 %v6585
        %v6722 = vunpack.c.l.s8.bf16 %v6586
        %v6723 = vunpack.c.l.s8.bf16 %v6587
        %v6724 = vunpack.c.l.s8.bf16 %v6588
        %v6725 = vunpack.c.l.s8.bf16 %v6589
        %v6726 = vunpack.c.h.s8.bf16 %v6586
        %v6727 = vunpack.c.h.s8.bf16 %v6587
        %v6728 = vunpack.c.h.s8.bf16 %v6588
        %v6729 = vunpack.c.h.s8.bf16 %v6589
        %v6730 = vunpack.c.l.s8.bf16 %v6590
        %v6731 = vunpack.c.l.s8.bf16 %v6591
        %v6732 = vunpack.c.l.s8.bf16 %v6592
        %v6733 = vunpack.c.l.s8.bf16 %v6593
        %v6734 = vunpack.c.h.s8.bf16 %v6590
        %v6735 = vunpack.c.h.s8.bf16 %v6591
        %v6736 = vunpack.c.h.s8.bf16 %v6592
        %v6737 = vunpack.c.h.s8.bf16 %v6593
        %v6738 = vunpack.c.l.s8.bf16 %v6594
        %v6739 = vunpack.c.l.s8.bf16 %v6595
        %v6740 = vunpack.c.l.s8.bf16 %v6596
        %v6741 = vunpack.c.l.s8.bf16 %v6597
        %v6742 = vunpack.c.h.s8.bf16 %v6594
        %v6743 = vunpack.c.h.s8.bf16 %v6595
        %v6744 = vunpack.c.h.s8.bf16 %v6596
        %v6745 = vunpack.c.h.s8.bf16 %v6597
        %v6746 = vunpack.c.l.s8.bf16 %v6598
        %v6747 = vunpack.c.l.s8.bf16 %v6599
        %v6748 = vunpack.c.l.s8.bf16 %v6600
        %v6749 = vunpack.c.l.s8.bf16 %v6601
        %v6750 = vunpack.c.h.s8.bf16 %v6598
        %v6751 = vunpack.c.h.s8.bf16 %v6599
        %v6752 = vunpack.c.h.s8.bf16 %v6600
        %v6753 = vunpack.c.h.s8.bf16 %v6601
        %v6754 = vunpack.c.l.s8.bf16 %v6602
        %v6755 = vunpack.c.l.s8.bf16 %v6603
        %v6756 = vunpack.c.l.s8.bf16 %v6604
        %v6757 = vunpack.c.l.s8.bf16 %v6605
        %v6758 = vunpack.c.h.s8.bf16 %v6602
        %v6759 = vunpack.c.h.s8.bf16 %v6603
        %v6760 = vunpack.c.h.s8.bf16 %v6604
        %v6761 = vunpack.c.h.s8.bf16 %v6605
        %v6762 = vunpack.c.l.s8.bf16 %v6606
        %v6763 = vunpack.c.l.s8.bf16 %v6607
        %v6764 = vunpack.c.l.s8.bf16 %v6608
        %v6765 = vunpack.c.l.s8.bf16 %v6609
        %v6766 = vunpack.c.h.s8.bf16 %v6606
        %v6767 = vunpack.c.h.s8.bf16 %v6607
        %v6768 = vunpack.c.h.s8.bf16 %v6608
        %v6769 = vunpack.c.h.s8.bf16 %v6609
        %v6770 = vunpack.c.l.s8.bf16 %v6610
        %v6771 = vunpack.c.l.s8.bf16 %v6611
        %v6772 = vunpack.c.l.s8.bf16 %v6612
        %v6773 = vunpack.c.l.s8.bf16 %v6613
        %v6774 = vunpack.c.h.s8.bf16 %v6610
        %v6775 = vunpack.c.h.s8.bf16 %v6611
        %v6776 = vunpack.c.h.s8.bf16 %v6612
        %v6777 = vunpack.c.h.s8.bf16 %v6613
        %v6778 = vunpack.c.l.s8.bf16 %v6614
        %v6779 = vunpack.c.l.s8.bf16 %v6615
        %v6780 = vunpack.c.l.s8.bf16 %v6616
        %v6781 = vunpack.c.l.s8.bf16 %v6617
        %v6782 = vunpack.c.h.s8.bf16 %v6614
        %v6783 = vunpack.c.h.s8.bf16 %v6615
        %v6784 = vunpack.c.h.s8.bf16 %v6616
        %v6785 = vunpack.c.h.s8.bf16 %v6617
        %v6786 = vunpack.c.l.s8.bf16 %v6618
        %v6787 = vunpack.c.l.s8.bf16 %v6619
        %v6788 = vunpack.c.l.s8.bf16 %v6620
        %v6789 = vunpack.c.l.s8.bf16 %v6621
        %v6790 = vunpack.c.h.s8.bf16 %v6618
        %v6791 = vunpack.c.h.s8.bf16 %v6619
        %v6792 = vunpack.c.h.s8.bf16 %v6620
        %v6793 = vunpack.c.h.s8.bf16 %v6621
        %v6794 = vunpack.c.l.s8.bf16 %v6622
        %v6795 = vunpack.c.l.s8.bf16 %v6623
        %v6796 = vunpack.c.l.s8.bf16 %v6624
        %v6797 = vunpack.c.l.s8.bf16 %v6625
        %v6798 = vunpack.c.h.s8.bf16 %v6622
        %v6799 = vunpack.c.h.s8.bf16 %v6623
        %v6800 = vunpack.c.h.s8.bf16 %v6624
        %v6801 = vunpack.c.h.s8.bf16 %v6625
        %v6802 = vunpack.c.l.s8.bf16 %v6626
        %v6803 = vunpack.c.l.s8.bf16 %v6627
        %v6804 = vunpack.c.l.s8.bf16 %v6628
        %v6805 = vunpack.c.l.s8.bf16 %v6629
        %v6806 = vunpack.c.h.s8.bf16 %v6626
        %v6807 = vunpack.c.h.s8.bf16 %v6627
        %v6808 = vunpack.c.h.s8.bf16 %v6628
        %v6809 = vunpack.c.h.s8.bf16 %v6629
        %v6810 = vunpack.c.l.s8.bf16 %v6630
        %v6811 = vunpack.c.l.s8.bf16 %v6631
        %v6812 = vunpack.c.l.s8.bf16 %v6632
        %v6813 = vunpack.c.l.s8.bf16 %v6633
        %v6814 = vunpack.c.h.s8.bf16 %v6630
        %v6815 = vunpack.c.h.s8.bf16 %v6631
        %v6816 = vunpack.c.h.s8.bf16 %v6632
        %v6817 = vunpack.c.h.s8.bf16 %v6633
        %v6818 = vunpack.c.l.s8.bf16 %v6634
        %v6819 = vunpack.c.l.s8.bf16 %v6635
        %v6820 = vunpack.c.l.s8.bf16 %v6636
        %v6821 = vunpack.c.l.s8.bf16 %v6637
        %v6822 = vunpack.c.h.s8.bf16 %v6634
        %v6823 = vunpack.c.h.s8.bf16 %v6635
        %v6824 = vunpack.c.h.s8.bf16 %v6636
        %v6825 = vunpack.c.h.s8.bf16 %v6637
        %v6826 = vunpack.c.l.s8.bf16 %v6638
        %v6827 = vunpack.c.l.s8.bf16 %v6639
        %v6828 = vunpack.c.l.s8.bf16 %v6640
        %v6829 = vunpack.c.l.s8.bf16 %v6641
        %v6830 = vunpack.c.h.s8.bf16 %v6638
        %v6831 = vunpack.c.h.s8.bf16 %v6639
        %v6832 = vunpack.c.h.s8.bf16 %v6640
        %v6833 = vunpack.c.h.s8.bf16 %v6641
        %v6834 = vunpack.c.l.s8.bf16 %v6642
        %v6835 = vunpack.c.l.s8.bf16 %v6643
        %v6836 = vunpack.c.l.s8.bf16 %v6644
        %v6837 = vunpack.c.l.s8.bf16 %v6645
        %v6838 = vunpack.c.h.s8.bf16 %v6642
        %v6839 = vunpack.c.h.s8.bf16 %v6643
        %v6840 = vunpack.c.h.s8.bf16 %v6644
        %v6841 = vunpack.c.h.s8.bf16 %v6645
        %v6842 = vunpack.c.l.s8.bf16 %v6646
        %v6843 = vunpack.c.l.s8.bf16 %v6647
        %v6844 = vunpack.c.l.s8.bf16 %v6648
        %v6845 = vunpack.c.l.s8.bf16 %v6649
        %v6846 = vunpack.c.h.s8.bf16 %v6646
        %v6847 = vunpack.c.h.s8.bf16 %v6647
        %v6848 = vunpack.c.h.s8.bf16 %v6648
        %v6849 = vunpack.c.h.s8.bf16 %v6649
        %v6850 = vunpack.c.l.s8.bf16 %v6650
        %v6851 = vunpack.c.l.s8.bf16 %v6651
        %v6852 = vunpack.c.l.s8.bf16 %v6652
        %v6853 = vunpack.c.l.s8.bf16 %v6653
        %v6854 = vunpack.c.h.s8.bf16 %v6650
        %v6855 = vunpack.c.h.s8.bf16 %v6651
        %v6856 = vunpack.c.h.s8.bf16 %v6652
        %v6857 = vunpack.c.h.s8.bf16 %v6653
        %v6858 = vunpack.c.l.s8.bf16 %v6654
        %v6859 = vunpack.c.l.s8.bf16 %v6655
        %v6860 = vunpack.c.l.s8.bf16 %v6656
        %v6861 = vunpack.c.l.s8.bf16 %v6657
        %v6862 = vunpack.c.h.s8.bf16 %v6654
        %v6863 = vunpack.c.h.s8.bf16 %v6655
        %v6864 = vunpack.c.h.s8.bf16 %v6656
        %v6865 = vunpack.c.h.s8.bf16 %v6657
        %v6866 = vunpack.c.l.s8.bf16 %v6658
        %v6867 = vunpack.c.l.s8.bf16 %v6659
        %v6868 = vunpack.c.l.s8.bf16 %v6660
        %v6869 = vunpack.c.l.s8.bf16 %v6661
        %v6870 = vunpack.c.h.s8.bf16 %v6658
        %v6871 = vunpack.c.h.s8.bf16 %v6659
        %v6872 = vunpack.c.h.s8.bf16 %v6660
        %v6873 = vunpack.c.h.s8.bf16 %v6661
        %v6874 = vunpack.c.l.s8.bf16 %v6662
        %v6875 = vunpack.c.l.s8.bf16 %v6663
        %v6876 = vunpack.c.l.s8.bf16 %v6664
        %v6877 = vunpack.c.l.s8.bf16 %v6665
        %v6878 = vunpack.c.h.s8.bf16 %v6662
        %v6879 = vunpack.c.h.s8.bf16 %v6663
        %v6880 = vunpack.c.h.s8.bf16 %v6664
        %v6881 = vunpack.c.h.s8.bf16 %v6665
        %v6882 = vunpack.c.l.s8.bf16 %v6666
        %v6883 = vunpack.c.l.s8.bf16 %v6667
        %v6884 = vunpack.c.l.s8.bf16 %v6668
        %v6885 = vunpack.c.l.s8.bf16 %v6669
        %v6886 = vunpack.c.h.s8.bf16 %v6666
        %v6887 = vunpack.c.h.s8.bf16 %v6667
        %v6888 = vunpack.c.h.s8.bf16 %v6668
        %v6889 = vunpack.c.h.s8.bf16 %v6669
        %v6890 = vunpack.c.l.s8.bf16 %v6670
        %v6891 = vunpack.c.l.s8.bf16 %v6671
        %v6892 = vunpack.c.l.s8.bf16 %v6672
        %v6893 = vunpack.c.l.s8.bf16 %v6673
        %v6894 = vunpack.c.h.s8.bf16 %v6670
        %v6895 = vunpack.c.h.s8.bf16 %v6671
        %v6896 = vunpack.c.h.s8.bf16 %v6672
        %v6897 = vunpack.c.h.s8.bf16 %v6673
        %v6898 = vunpack.c.l.s8.bf16 %v6674
        %v6899 = vunpack.c.l.s8.bf16 %v6675
        %v6900 = vunpack.c.l.s8.bf16 %v6676
        %v6901 = vunpack.c.l.s8.bf16 %v6677
        %v6902 = vunpack.c.h.s8.bf16 %v6674
        %v6903 = vunpack.c.h.s8.bf16 %v6675
        %v6904 = vunpack.c.h.s8.bf16 %v6676
        %v6905 = vunpack.c.h.s8.bf16 %v6677
        %v6906 = vunpack.c.l.s8.bf16 %v6678
        %v6907 = vunpack.c.l.s8.bf16 %v6679
        %v6908 = vunpack.c.l.s8.bf16 %v6680
        %v6909 = vunpack.c.l.s8.bf16 %v6681
        %v6910 = vunpack.c.h.s8.bf16 %v6678
        %v6911 = vunpack.c.h.s8.bf16 %v6679
        %v6912 = vunpack.c.h.s8.bf16 %v6680
        %v6913 = vunpack.c.h.s8.bf16 %v6681
        %v6914 = vunpack.c.l.s8.bf16 %v6682
        %v6915 = vunpack.c.l.s8.bf16 %v6683
        %v6916 = vunpack.c.l.s8.bf16 %v6684
        %v6917 = vunpack.c.l.s8.bf16 %v6685
        %v6918 = vunpack.c.h.s8.bf16 %v6682
        %v6919 = vunpack.c.h.s8.bf16 %v6683
        %v6920 = vunpack.c.h.s8.bf16 %v6684
        %v6921 = vunpack.c.h.s8.bf16 %v6685
        %v6922 = vunpack.c.l.s8.bf16 %v6686
        %v6923 = vunpack.c.l.s8.bf16 %v6687
        %v6924 = vunpack.c.l.s8.bf16 %v6688
        %v6925 = vunpack.c.l.s8.bf16 %v6689
        %v6926 = vunpack.c.h.s8.bf16 %v6686
        %v6927 = vunpack.c.h.s8.bf16 %v6687
        %v6928 = vunpack.c.h.s8.bf16 %v6688
        %v6929 = vunpack.c.h.s8.bf16 %v6689
        %v6930 = vunpack.c.l.s8.bf16 %v6690
        %v6931 = vunpack.c.l.s8.bf16 %v6691
        %v6932 = vunpack.c.l.s8.bf16 %v6692
        %v6933 = vunpack.c.l.s8.bf16 %v6693
        %v6934 = vunpack.c.h.s8.bf16 %v6690
        %v6935 = vunpack.c.h.s8.bf16 %v6691
        %v6936 = vunpack.c.h.s8.bf16 %v6692
        %v6937 = vunpack.c.h.s8.bf16 %v6693
        %v6938 = vunpack.c.l.s8.bf16 %v6694
        %v6939 = vunpack.c.l.s8.bf16 %v6695
        %v6940 = vunpack.c.l.s8.bf16 %v6696
        %v6941 = vunpack.c.l.s8.bf16 %v6697
        %v6942 = vunpack.c.h.s8.bf16 %v6694
        %v6943 = vunpack.c.h.s8.bf16 %v6695
        %v6944 = vunpack.c.h.s8.bf16 %v6696
        %v6945 = vunpack.c.h.s8.bf16 %v6697
        %v6946 = vunpack.c.l.s8.bf16 %v6698
        %v6947 = vunpack.c.l.s8.bf16 %v6699
        %v6948 = vunpack.c.l.s8.bf16 %v6700
        %v6949 = vunpack.c.l.s8.bf16 %v6701
        %v6950 = vunpack.c.h.s8.bf16 %v6698
        %v6951 = vunpack.c.h.s8.bf16 %v6699
        %v6952 = vunpack.c.h.s8.bf16 %v6700
        %v6953 = vunpack.c.h.s8.bf16 %v6701
        %v6954 = vunpack.c.l.s8.bf16 %v6702
        %v6955 = vunpack.c.l.s8.bf16 %v6703
        %v6956 = vunpack.c.l.s8.bf16 %v6704
        %v6957 = vunpack.c.l.s8.bf16 %v6705
        %v6958 = vunpack.c.h.s8.bf16 %v6702
        %v6959 = vunpack.c.h.s8.bf16 %v6703
        %v6960 = vunpack.c.h.s8.bf16 %v6704
        %v6961 = vunpack.c.h.s8.bf16 %v6705
        %6962 = vmatprep.subr.bf16.mxu0 %v6707
        %6963 = vmatpush1.bf16.msra.mxu0 %v6706
        %6964 = vmatprep.subr.bf16.mxu0 %v6711
        %6965 = vmatpush1.bf16.msra.mxu0 %v6710
        %6966 = vmatprep.subr.bf16.mxu0 %v6715
        %6967 = vmatpush1.bf16.msra.mxu0 %v6714
        %6968 = vmatprep.subr.bf16.mxu0 %v6719
        %6969 = vmatpush1.bf16.msra.mxu0 %v6718
        %6970 = vmatprep.subr.bf16.mxu0 %v6723
        %6971 = vmatpush1.bf16.msra.mxu0 %v6722
        %6972 = vmatprep.subr.bf16.mxu0 %v6727
        %6973 = vmatpush1.bf16.msra.mxu0 %v6726
        %6974 = vmatprep.subr.bf16.mxu0 %v6731
        %6975 = vmatpush1.bf16.msra.mxu0 %v6730
        %6976 = vmatprep.subr.bf16.mxu0 %v6735
        %6977 = vmatpush1.bf16.msra.mxu0 %v6734
        %6978 = vmatprep.subr.bf16.mxu0 %v6739
        %6979 = vmatpush1.bf16.msra.mxu0 %v6738
        %6980 = vmatprep.subr.bf16.mxu0 %v6743
        %6981 = vmatpush1.bf16.msra.mxu0 %v6742
        %6982 = vmatprep.subr.bf16.mxu0 %v6747
        %6983 = vmatpush1.bf16.msra.mxu0 %v6746
        %6984 = vmatprep.subr.bf16.mxu0 %v6751
        %6985 = vmatpush1.bf16.msra.mxu0 %v6750
        %6986 = vmatprep.subr.bf16.mxu0 %v6755
        %6987 = vmatpush1.bf16.msra.mxu0 %v6754
        %6988 = vmatprep.subr.bf16.mxu0 %v6759
        %6989 = vmatpush1.bf16.msra.mxu0 %v6758
        %6990 = vmatprep.subr.bf16.mxu0 %v6763
        %6991 = vmatpush1.bf16.msra.mxu0 %v6762
        %6992 = vmatprep.subr.bf16.mxu0 %v6767
        %6993 = vmatpush1.bf16.msra.mxu0 %v6766
        %6994 = vmatprep.mubr.bf16.mxu0 %v4198
        %6995 = vmatmul.mubr.bf16.gmra.mrb[0].mxu0 %v4197
        %v6996 = vpop.f32.mrb[0].mxu0
        %v6997 = vadd.f32 0.0, %v6996
        %v6998 = vpop.f32.mrb[0].mxu0
        %v6999 = vadd.f32 0.0, %v6998
        %v7000 = vpop.f32.mrb[0].mxu0
        %v7001 = vpop.f32.mrb[0].mxu0
        %7002 = vdwg.mxu0
        %7003 = vmatprep.subr.bf16.mxu0 %v6771
        %7004 = vmatpush1.bf16.msra.mxu0 %v6770
        %7005 = vmatprep.subr.bf16.mxu0 %v6775
        %7006 = vmatpush1.bf16.msra.mxu0 %v6774
        %7007 = vmatprep.subr.bf16.mxu0 %v6779
        %7008 = vmatpush1.bf16.msra.mxu0 %v6778
        %7009 = vmatprep.subr.bf16.mxu0 %v6783
        %7010 = vmatpush1.bf16.msra.mxu0 %v6782
        %7011 = vmatprep.subr.bf16.mxu0 %v6787
        %7012 = vmatpush1.bf16.msra.mxu0 %v6786
        %7013 = vmatprep.subr.bf16.mxu0 %v6791
        %7014 = vmatpush1.bf16.msra.mxu0 %v6790
        %7015 = vmatprep.subr.bf16.mxu0 %v6795
        %7016 = vmatpush1.bf16.msra.mxu0 %v6794
        %7017 = vmatprep.subr.bf16.mxu0 %v6799
        %7018 = vmatpush1.bf16.msra.mxu0 %v6798
        %7019 = vmatprep.subr.bf16.mxu0 %v6803
        %7020 = vmatpush1.bf16.msra.mxu0 %v6802
        %7021 = vmatprep.subr.bf16.mxu0 %v6807
        %7022 = vmatpush1.bf16.msra.mxu0 %v6806
        %7023 = vmatprep.subr.bf16.mxu0 %v6811
        %7024 = vmatpush1.bf16.msra.mxu0 %v6810
        %7025 = vmatprep.subr.bf16.mxu0 %v6815
        %7026 = vmatpush1.bf16.msra.mxu0 %v6814
        %7027 = vmatprep.subr.bf16.mxu0 %v6819
        %7028 = vmatpush1.bf16.msra.mxu0 %v6818
        %7029 = vmatprep.subr.bf16.mxu0 %v6823
        %7030 = vmatpush1.bf16.msra.mxu0 %v6822
        %7031 = vmatprep.subr.bf16.mxu0 %v6827
        %7032 = vmatpush1.bf16.msra.mxu0 %v6826
        %7033 = vmatprep.subr.bf16.mxu0 %v6831
        %7034 = vmatpush1.bf16.msra.mxu0 %v6830
        %7035 = vmatprep.mubr.bf16.mxu0 %v4200
        %7036 = vmatmul.mubr.bf16.gmra.mrb[0].mxu0 %v4199
        %v7037 = vpop.f32.mrb[0].mxu0
        %v7038 = vadd.f32 %v6997, %v7037
        %v7039 = vpop.f32.mrb[0].mxu0
        %v7040 = vadd.f32 %v6999, %v7039
        %v7041 = vpop.f32.mrb[0].mxu0
        %v7042 = vpop.f32.mrb[0].mxu0
        %7043 = vdwg.mxu0
        %7044 = vmatprep.subr.bf16.mxu0 %v6835
        %7045 = vmatpush1.bf16.msra.mxu0 %v6834
        %7046 = vmatprep.subr.bf16.mxu0 %v6839
        %7047 = vmatpush1.bf16.msra.mxu0 %v6838
        %7048 = vmatprep.subr.bf16.mxu0 %v6843
        %7049 = vmatpush1.bf16.msra.mxu0 %v6842
        %7050 = vmatprep.subr.bf16.mxu0 %v6847
        %7051 = vmatpush1.bf16.msra.mxu0 %v6846
        %7052 = vmatprep.subr.bf16.mxu0 %v6851
        %7053 = vmatpush1.bf16.msra.mxu0 %v6850
        %7054 = vmatprep.subr.bf16.mxu0 %v6855
        %7055 = vmatpush1.bf16.msra.mxu0 %v6854
        %7056 = vmatprep.subr.bf16.mxu0 %v6859
        %7057 = vmatpush1.bf16.msra.mxu0 %v6858
        %7058 = vmatprep.subr.bf16.mxu0 %v6863
        %7059 = vmatpush1.bf16.msra.mxu0 %v6862
        %7060 = vmatprep.subr.bf16.mxu0 %v6867
        %7061 = vmatpush1.bf16.msra.mxu0 %v6866
        %7062 = vmatprep.subr.bf16.mxu0 %v6871
        %7063 = vmatpush1.bf16.msra.mxu0 %v6870
        %7064 = vmatprep.subr.bf16.mxu0 %v6875
        %7065 = vmatpush1.bf16.msra.mxu0 %v6874
        %7066 = vmatprep.subr.bf16.mxu0 %v6879
        %7067 = vmatpush1.bf16.msra.mxu0 %v6878
        %7068 = vmatprep.subr.bf16.mxu0 %v6883
        %7069 = vmatpush1.bf16.msra.mxu0 %v6882
        %7070 = vmatprep.subr.bf16.mxu0 %v6887
        %7071 = vmatpush1.bf16.msra.mxu0 %v6886
        %7072 = vmatprep.subr.bf16.mxu0 %v6891
        %7073 = vmatpush1.bf16.msra.mxu0 %v6890
        %7074 = vmatprep.subr.bf16.mxu0 %v6895
        %7075 = vmatpush1.bf16.msra.mxu0 %v6894
        %7076 = vmatprep.mubr.bf16.mxu0 %v4202
        %7077 = vmatmul.mubr.bf16.gmra.mrb[0].mxu0 %v4201
        %v7078 = vpop.f32.mrb[0].mxu0
        %v7079 = vadd.f32 %v7038, %v7078
        %v7080 = vpop.f32.mrb[0].mxu0
        %v7081 = vadd.f32 %v7040, %v7080
        %v7082 = vpop.f32.mrb[0].mxu0
        %v7083 = vpop.f32.mrb[0].mxu0
        %7084 = vdwg.mxu0
        %7085 = vmatprep.subr.bf16.mxu0 %v6899
        %7086 = vmatpush1.bf16.msra.mxu0 %v6898
        %7087 = vmatprep.subr.bf16.mxu0 %v6903
        %7088 = vmatpush1.bf16.msra.mxu0 %v6902
        %7089 = vmatprep.subr.bf16.mxu0 %v6907
        %7090 = vmatpush1.bf16.msra.mxu0 %v6906
        %7091 = vmatprep.subr.bf16.mxu0 %v6911
        %7092 = vmatpush1.bf16.msra.mxu0 %v6910
        %7093 = vmatprep.subr.bf16.mxu0 %v6915
        %7094 = vmatpush1.bf16.msra.mxu0 %v6914
        %7095 = vmatprep.subr.bf16.mxu0 %v6919
        %7096 = vmatpush1.bf16.msra.mxu0 %v6918
        %7097 = vmatprep.subr.bf16.mxu0 %v6923
        %7098 = vmatpush1.bf16.msra.mxu0 %v6922
        %7099 = vmatprep.subr.bf16.mxu0 %v6927
        %7100 = vmatpush1.bf16.msra.mxu0 %v6926
        %7101 = vmatprep.subr.bf16.mxu0 %v6931
        %7102 = vmatpush1.bf16.msra.mxu0 %v6930
        %7103 = vmatprep.subr.bf16.mxu0 %v6935
        %7104 = vmatpush1.bf16.msra.mxu0 %v6934
        %7105 = vmatprep.subr.bf16.mxu0 %v6939
        %7106 = vmatpush1.bf16.msra.mxu0 %v6938
        %7107 = vmatprep.subr.bf16.mxu0 %v6943
        %7108 = vmatpush1.bf16.msra.mxu0 %v6942
        %7109 = vmatprep.subr.bf16.mxu0 %v6947
        %7110 = vmatpush1.bf16.msra.mxu0 %v6946
        %7111 = vmatprep.subr.bf16.mxu0 %v6951
        %7112 = vmatpush1.bf16.msra.mxu0 %v6950
        %7113 = vmatprep.subr.bf16.mxu0 %v6955
        %7114 = vmatpush1.bf16.msra.mxu0 %v6954
        %7115 = vmatprep.subr.bf16.mxu0 %v6959
        %7116 = vmatpush1.bf16.msra.mxu0 %v6958
        %7117 = vmatprep.mubr.bf16.mxu0 %v4204
        %7118 = vmatmul.mubr.bf16.gmra.mrb[0].mxu0 %v4203
        %v7119 = vpop.f32.mrb[0].mxu0
        %v7120 = vadd.f32 %v7079, %v7119
        %v7121 = vpop.f32.mrb[0].mxu0
        %v7122 = vadd.f32 %v7081, %v7121
        %v7123 = vpop.f32.mrb[0].mxu0
        %v7124 = vpop.f32.mrb[0].mxu0
        %7125 = vdwg.mxu0
        %7126 = vmatprep.subr.bf16.mxu0 %v6709
        %7127 = vmatpush1.bf16.msra.mxu0 %v6708
        %7128 = vmatprep.subr.bf16.mxu0 %v6713
        %7129 = vmatpush1.bf16.msra.mxu0 %v6712
        %7130 = vmatprep.subr.bf16.mxu0 %v6717
        %7131 = vmatpush1.bf16.msra.mxu0 %v6716
        %7132 = vmatprep.subr.bf16.mxu0 %v6721
        %7133 = vmatpush1.bf16.msra.mxu0 %v6720
        %7134 = vmatprep.subr.bf16.mxu0 %v6725
        %7135 = vmatpush1.bf16.msra.mxu0 %v6724
        %7136 = vmatprep.subr.bf16.mxu0 %v6729
        %7137 = vmatpush1.bf16.msra.mxu0 %v6728
        %7138 = vmatprep.subr.bf16.mxu0 %v6733
        %7139 = vmatpush1.bf16.msra.mxu0 %v6732
        %7140 = vmatprep.subr.bf16.mxu0 %v6737
        %7141 = vmatpush1.bf16.msra.mxu0 %v6736
        %7142 = vmatprep.subr.bf16.mxu0 %v6741
        %7143 = vmatpush1.bf16.msra.mxu0 %v6740
        %7144 = vmatprep.subr.bf16.mxu0 %v6745
        %7145 = vmatpush1.bf16.msra.mxu0 %v6744
        %7146 = vmatprep.subr.bf16.mxu0 %v6749
        %7147 = vmatpush1.bf16.msra.mxu0 %v6748
        %7148 = vmatprep.subr.bf16.mxu0 %v6753
        %7149 = vmatpush1.bf16.msra.mxu0 %v6752
        %7150 = vmatprep.subr.bf16.mxu0 %v6757
        %7151 = vmatpush1.bf16.msra.mxu0 %v6756
        %7152 = vmatprep.subr.bf16.mxu0 %v6761
        %7153 = vmatpush1.bf16.msra.mxu0 %v6760
        %7154 = vmatprep.subr.bf16.mxu0 %v6765
        %7155 = vmatpush1.bf16.msra.mxu0 %v6764
        %7156 = vmatprep.subr.bf16.mxu0 %v6769
        %7157 = vmatpush1.bf16.msra.mxu0 %v6768
        %7158 = vmatprep.mubr.bf16.mxu0 %v4198
        %7159 = vmatmul.mubr.bf16.gmra.mrb[0].mxu0 %v4197
        %v7160 = vpop.f32.mrb[0].mxu0
        %v7161 = vadd.f32 0.0, %v7160
        %v7162 = vpop.f32.mrb[0].mxu0
        %v7163 = vadd.f32 0.0, %v7162
        %v7164 = vpop.f32.mrb[0].mxu0
        %v7165 = vpop.f32.mrb[0].mxu0
        %7166 = vdwg.mxu0
        %7167 = vmatprep.subr.bf16.mxu0 %v6773
        %7168 = vmatpush1.bf16.msra.mxu0 %v6772
        %7169 = vmatprep.subr.bf16.mxu0 %v6777
        %7170 = vmatpush1.bf16.msra.mxu0 %v6776
        %7171 = vmatprep.subr.bf16.mxu0 %v6781
        %7172 = vmatpush1.bf16.msra.mxu0 %v6780
        %7173 = vmatprep.subr.bf16.mxu0 %v6785
        %7174 = vmatpush1.bf16.msra.mxu0 %v6784
        %7175 = vmatprep.subr.bf16.mxu0 %v6789
        %7176 = vmatpush1.bf16.msra.mxu0 %v6788
        %7177 = vmatprep.subr.bf16.mxu0 %v6793
        %7178 = vmatpush1.bf16.msra.mxu0 %v6792
        %7179 = vmatprep.subr.bf16.mxu0 %v6797
        %7180 = vmatpush1.bf16.msra.mxu0 %v6796
        %7181 = vmatprep.subr.bf16.mxu0 %v6801
        %7182 = vmatpush1.bf16.msra.mxu0 %v6800
        %7183 = vmatprep.subr.bf16.mxu0 %v6805
        %7184 = vmatpush1.bf16.msra.mxu0 %v6804
        %7185 = vmatprep.subr.bf16.mxu0 %v6809
        %7186 = vmatpush1.bf16.msra.mxu0 %v6808
        %7187 = vmatprep.subr.bf16.mxu0 %v6813
        %7188 = vmatpush1.bf16.msra.mxu0 %v6812
        %7189 = vmatprep.subr.bf16.mxu0 %v6817
        %7190 = vmatpush1.bf16.msra.mxu0 %v6816
        %7191 = vmatprep.subr.bf16.mxu0 %v6821
        %7192 = vmatpush1.bf16.msra.mxu0 %v6820
        %7193 = vmatprep.subr.bf16.mxu0 %v6825
        %7194 = vmatpush1.bf16.msra.mxu0 %v6824
        %7195 = vmatprep.subr.bf16.mxu0 %v6829
        %7196 = vmatpush1.bf16.msra.mxu0 %v6828
        %7197 = vmatprep.subr.bf16.mxu0 %v6833
        %7198 = vmatpush1.bf16.msra.mxu0 %v6832
        %7199 = vmatprep.mubr.bf16.mxu0 %v4200
        %7200 = vmatmul.mubr.bf16.gmra.mrb[0].mxu0 %v4199
        %v7201 = vpop.f32.mrb[0].mxu0
        %v7202 = vadd.f32 %v7161, %v7201
        %v7203 = vpop.f32.mrb[0].mxu0
        %v7204 = vadd.f32 %v7163, %v7203
        %v7205 = vpop.f32.mrb[0].mxu0
        %v7206 = vpop.f32.mrb[0].mxu0
        %7207 = vdwg.mxu0
        %7208 = vmatprep.subr.bf16.mxu0 %v6837
        %7209 = vmatpush1.bf16.msra.mxu0 %v6836
        %7210 = vmatprep.subr.bf16.mxu0 %v6841
        %7211 = vmatpush1.bf16.msra.mxu0 %v6840
        %7212 = vmatprep.subr.bf16.mxu0 %v6845
        %7213 = vmatpush1.bf16.msra.mxu0 %v6844
        %7214 = vmatprep.subr.bf16.mxu0 %v6849
        %7215 = vmatpush1.bf16.msra.mxu0 %v6848
        %7216 = vmatprep.subr.bf16.mxu0 %v6853
        %7217 = vmatpush1.bf16.msra.mxu0 %v6852
        %7218 = vmatprep.subr.bf16.mxu0 %v6857
        %7219 = vmatpush1.bf16.msra.mxu0 %v6856
        %7220 = vmatprep.subr.bf16.mxu0 %v6861
        %7221 = vmatpush1.bf16.msra.mxu0 %v6860
        %7222 = vmatprep.subr.bf16.mxu0 %v6865
        %7223 = vmatpush1.bf16.msra.mxu0 %v6864
        %7224 = vmatprep.subr.bf16.mxu0 %v6869
        %7225 = vmatpush1.bf16.msra.mxu0 %v6868
        %7226 = vmatprep.subr.bf16.mxu0 %v6873
        %7227 = vmatpush1.bf16.msra.mxu0 %v6872
        %7228 = vmatprep.subr.bf16.mxu0 %v6877
        %7229 = vmatpush1.bf16.msra.mxu0 %v6876
        %7230 = vmatprep.subr.bf16.mxu0 %v6881
        %7231 = vmatpush1.bf16.msra.mxu0 %v6880
        %7232 = vmatprep.subr.bf16.mxu0 %v6885
        %7233 = vmatpush1.bf16.msra.mxu0 %v6884
        %7234 = vmatprep.subr.bf16.mxu0 %v6889
        %7235 = vmatpush1.bf16.msra.mxu0 %v6888
        %7236 = vmatprep.subr.bf16.mxu0 %v6893
        %7237 = vmatpush1.bf16.msra.mxu0 %v6892
        %7238 = vmatprep.subr.bf16.mxu0 %v6897
        %7239 = vmatpush1.bf16.msra.mxu0 %v6896
        %7240 = vmatprep.mubr.bf16.mxu0 %v4202
        %7241 = vmatmul.mubr.bf16.gmra.mrb[0].mxu0 %v4201
        %v7242 = vpop.f32.mrb[0].mxu0
        %v7243 = vadd.f32 %v7202, %v7242
        %v7244 = vpop.f32.mrb[0].mxu0
        %v7245 = vadd.f32 %v7204, %v7244
        %v7246 = vpop.f32.mrb[0].mxu0
        %v7247 = vpop.f32.mrb[0].mxu0
        %7248 = vdwg.mxu0
        %7249 = vmatprep.subr.bf16.mxu0 %v6901
        %7250 = vmatpush1.bf16.msra.mxu0 %v6900
        %7251 = vmatprep.subr.bf16.mxu0 %v6905
        %7252 = vmatpush1.bf16.msra.mxu0 %v6904
        %7253 = vmatprep.subr.bf16.mxu0 %v6909
        %7254 = vmatpush1.bf16.msra.mxu0 %v6908
        %7255 = vmatprep.subr.bf16.mxu0 %v6913
        %7256 = vmatpush1.bf16.msra.mxu0 %v6912
        %7257 = vmatprep.subr.bf16.mxu0 %v6917
        %7258 = vmatpush1.bf16.msra.mxu0 %v6916
        %7259 = vmatprep.subr.bf16.mxu0 %v6921
        %7260 = vmatpush1.bf16.msra.mxu0 %v6920
        %7261 = vmatprep.subr.bf16.mxu0 %v6925
        %7262 = vmatpush1.bf16.msra.mxu0 %v6924
        %7263 = vmatprep.subr.bf16.mxu0 %v6929
        %7264 = vmatpush1.bf16.msra.mxu0 %v6928
        %7265 = vmatprep.subr.bf16.mxu0 %v6933
        %7266 = vmatpush1.bf16.msra.mxu0 %v6932
        %7267 = vmatprep.subr.bf16.mxu0 %v6937
        %7268 = vmatpush1.bf16.msra.mxu0 %v6936
        %7269 = vmatprep.subr.bf16.mxu0 %v6941
        %7270 = vmatpush1.bf16.msra.mxu0 %v6940
        %7271 = vmatprep.subr.bf16.mxu0 %v6945
        %7272 = vmatpush1.bf16.msra.mxu0 %v6944
        %7273 = vmatprep.subr.bf16.mxu0 %v6949
        %7274 = vmatpush1.bf16.msra.mxu0 %v6948
        %7275 = vmatprep.subr.bf16.mxu0 %v6953
        %7276 = vmatpush1.bf16.msra.mxu0 %v6952
        %7277 = vmatprep.subr.bf16.mxu0 %v6957
        %7278 = vmatpush1.bf16.msra.mxu0 %v6956
        %7279 = vmatprep.subr.bf16.mxu0 %v6961
        %7280 = vmatpush1.bf16.msra.mxu0 %v6960
        %7281 = vmatprep.mubr.bf16.mxu0 %v4204
        %7282 = vmatmul.mubr.bf16.gmra.mrb[0].mxu0 %v4203
        %v7283 = vpop.f32.mrb[0].mxu0
        %v7284 = vadd.f32 %v7243, %v7283
        %v7285 = vpop.f32.mrb[0].mxu0
        %v7286 = vadd.f32 %v7245, %v7285
        %v7287 = vpop.f32.mrb[0].mxu0
        %v7288 = vpop.f32.mrb[0].mxu0
        %7289 = vdwg.mxu0
        %v7290 = vld [vmem:[%s398 + $0xc] sm:$0xf]
        %v7292 = vlaneseq
        %v7293 = vshrl.u32 %v7292, 7
        %v7294 = vsub.s32 0, %v7293
        %v7295 = vrot.slane %v7290, %v7294
        %v7296 = vlaneseq
        %v7297 = vshrl.u32 %v7296, 7
        %v7298 = vsub.s32 1, %v7297
        %v7299 = vrot.slane %v7290, %v7298
        %v7300 = vlaneseq
        %v7301 = vshrl.u32 %v7300, 7
        %v7302 = vsub.s32 2, %v7301
        %v7303 = vrot.slane %v7290, %v7302
        %v7304 = vlaneseq
        %v7305 = vshrl.u32 %v7304, 7
        %v7306 = vsub.s32 3, %v7305
        %v7307 = vrot.slane %v7290, %v7306
        %v7312 = vmul.f32 %v7120, %v7295
        %v7313 = vmul.f32 %v7122, %v7299
        %v7314 = vmul.f32 %v7284, %v7303
        %v7315 = vmul.f32 %v7286, %v7307
        %v7316 = vld [vmem:[%s389 + $0xc] sm:$0xf]
        %v7318 = vlaneseq
        %v7319 = vshrl.u32 %v7318, 7
        %v7320 = vsub.s32 0, %v7319
        %v7321 = vrot.slane %v7316, %v7320
        %v7322 = vlaneseq
        %v7323 = vshrl.u32 %v7322, 7
        %v7324 = vsub.s32 1, %v7323
        %v7325 = vrot.slane %v7316, %v7324
        %v7326 = vlaneseq
        %v7327 = vshrl.u32 %v7326, 7
        %v7328 = vsub.s32 2, %v7327
        %v7329 = vrot.slane %v7316, %v7328
        %v7330 = vlaneseq
        %v7331 = vshrl.u32 %v7330, 7
        %v7332 = vsub.s32 3, %v7331
        %v7333 = vrot.slane %v7316, %v7332
        %v7338 = vadd.f32 %v7312, %v7321
        %v7339 = vadd.f32 %v7313, %v7325
        %v7340 = vadd.f32 %v7314, %v7329
        %v7341 = vadd.f32 %v7315, %v7333
        %v7342 = vtanh.pop %v7338
        %v7343 = vtanh.pop %v7339
        %v7344 = vtanh.pop %v7340
        %v7345 = vtanh.pop %v7341
        %7346 = vst [vmem:[%s442 + $0x60] sm:$0xff] %v7342
        %7347 = vst [vmem:[%s442 + $0x68] sm:$0xff] %v7343
        %7348 = vst [vmem:[%s442 + $0x70] sm:$0xff] %v7344
        %7349 = vst [vmem:[%s442 + $0x78] sm:$0xff] %v7345
        %s7350 = smul.u32 16, %s24
        %p7351 = scmp.lt.s32.totalorder %s7350, 31
        %s7352 = scalar_select %p7351, %s7350, 31
        %s7353 = smul.addr %s7352, 8
        %s7354 = scalar_lea.vmem %s9, %s7353
        // Predicated region
        $region101: #{generator_forward.1} parent=51 // pred_check
          %p7355 = pneg %p220
        $region102: #{generator_forward.1} parent=51 // pred_check_branch
          %7357 = sbr.rel (%p7355) target = $region104
        $region103: #{generator_forward.1} parent=51 // pred_region
          %s7358 = smul.u32 16, %s24
        $region104: #{generator_forward.1} parent=51 // pred_fallthru
          _
      $region52: #{generator_forward.1} parent=5 // pred_fallthru
        _
      %p7359 = scmp.le.s32.totalorder 2, %s19
      // Predicated region
      $region105: #{generator_forward.1} parent=5 // pred_check
        %p7360 = pneg %p7359
      $region106: #{generator_forward.1} parent=5 // pred_check_branch
        %7362 = sbr.rel (%p7360) target = $region108
      $region107: #{generator_forward.1} parent=5 // pred_region
        %s7363 = ssub.s32 %s19, 2
        // Predicated region
        $region109: #{generator_forward.1} parent=107 // pred_check
          %p7364 = pneg %p226
        $region110: #{generator_forward.1} parent=107 // pred_check_branch
          %7366 = sbr.rel (%p7364) target = $region112
        $region111: #{generator_forward.1} parent=107 // pred_region
          %s7367 = smul.u32 16, %s25
          %p7368 = scmp.lt.s32.totalorder %s7367, 31
          %s7369 = scalar_select %p7368, %s7367, 31
          %s7370 = smul.addr %s7369, 8
          %s7371 = scalar_lea.vmem %s9, %s7370
        $region112: #{generator_forward.1} parent=107 // pred_fallthru
          _
      $region108: #{generator_forward.1} parent=5 // pred_fallthru
        _
    $region6: #{generator_forward.1} parent=1 // loop_footer
      %s23 = sadd.s32 1, %s19
    $region7: #{generator_forward.1} parent=1 // loop_footer_branch
      %18 = sbr.rel target = $region3
    $region8: #{generator_forward.1} parent=1 // loop_exit
      _
    %7372 = vsyncpa [#allocation5], 1
    %s7373 = scalar_lea.sflag [#allocation5], 1
    %7374 = vsyncpa %s7373, 1
    %7375 = vsyncpa [#allocation7], 1
    %7376 = vsyncpa [#allocation10], 1
    %7377 = vsyncpa [#allocation13], 1
  %7378 = vsyncmov [#allocation3]
  %s7379 = vpop.sfrf %7378
  %p7380 = scmp.eq.s32.totalorder %s7379, 0
  %p7381 = pneg %p7380
  %7383 = shalt.err (%p7381)
  %s7384 = scalar_lea.sflag [#allocation3], 1
  %7385 = vsyncmov %s7384
  %s7386 = vpop.sfrf %7385
  %p7387 = scmp.eq.s32.totalorder %s7386, 0
  %p7388 = pneg %p7387
  %7390 = shalt.err (%p7388)

</llo_original>
